<compile_context>
chip_gen: v7x
topology: tpu7x:2x2x1
jax: 0.10.0
libtpu: 0.0.40
codegen_flags: <defaults>
</compile_context>

<pallas_src>
import functools

import jax
import jax.numpy as jnp
from jax.experimental import pallas as pl
from jax.experimental.pallas import tpu as pltpu


# ----------------------------------------------------------------------------
# Fused kernel: TB whole batch elements (tb*N rows) per grid step
# ----------------------------------------------------------------------------
def block_kernel(x_ref, c_ref, wqkv_ref, wproj_ref, w1ds_ref, sew1_ref,
                 sew2_ref, w3_ref, pool_ref, bcast_ref,
                 out_ref, o_scr, dw_scr, *,
                 num_heads, dim, hidden, hred, n_tok, tb):
    C = dim
    hd = C // num_heads
    N = n_tok
    ROWS = tb * N

    # ---- packed per-channel constants (rows of one (16, W) f32 block) ----
    ln_g  = c_ref[0:1, 0:C]
    ln_b  = c_ref[1:2, 0:C]
    bproj = c_ref[2:3, 0:C]
    b1    = c_ref[3:4, 0:hidden]                 # BN1 shift
    dw0   = c_ref[4:5, 0:hidden]                 # dw tap l-1 (BN2 scale folded)
    dw1   = c_ref[5:6, 0:hidden]                 # dw tap l
    dw2   = c_ref[6:7, 0:hidden]                 # dw tap l+1
    b2    = c_ref[7:8, 0:hidden]                 # BN2 shift
    se_b1 = c_ref[8:9, 0:hred]
    se_b2 = c_ref[9:10, 0:hidden]
    b3    = c_ref[10:11, 0:C]                    # BN3 shift

    x = x_ref[...]                               # (ROWS, C) f32, tb elements x N tokens

    # ---- row-classification masks (compile-time offsets, no vector modulo) ----
    r = jax.lax.broadcasted_iota(jnp.int32, (ROWS, 1), 0)
    is_cls = r == 0
    first_body = r == 1
    last_body = r == (N - 1)
    for b in range(1, tb):
        is_cls = jnp.logical_or(is_cls, r == b * N)
        first_body = jnp.logical_or(first_body, r == b * N + 1)
        last_body = jnp.logical_or(last_body, r == b * N + N - 1)

    # ---- LayerNorm (f32, VPU) ----
    mean = jnp.mean(x, axis=-1, keepdims=True)
    var = jnp.mean(jnp.square(x - mean), axis=-1, keepdims=True)
    xn = (x - mean) * jax.lax.rsqrt(var + 1e-5) * ln_g + ln_b

    # ---- QKV projection for all tb*N rows in one MXU pass (q-scale folded) ----
    qkv = jnp.dot(xn.astype(jnp.bfloat16), wqkv_ref[...],
                  preferred_element_type=jnp.float32)              # (ROWS, 3C)

    # ---- per-element attention (unrolled); heads concatenated on lanes and
    #      staged in a VMEM scratch, projected afterwards with ONE matmul ----
    for b in range(tb):
        r0 = b * N
        qkv_e = qkv[r0:r0 + N, :].astype(jnp.bfloat16)             # (N, 3C)
        heads = []
        for h in range(num_heads):
            qh = qkv_e[:, h * hd:(h + 1) * hd]
            kh = qkv_e[:, C + h * hd:C + (h + 1) * hd]
            vh = qkv_e[:, 2 * C + h * hd:2 * C + (h + 1) * hd]
            s = jax.lax.dot_general(qh, kh, (((1,), (1,)), ((), ())),
                                    preferred_element_type=jnp.float32)  # (N, N)
            s = s - jnp.max(s, axis=-1, keepdims=True)
            p = jnp.exp(s)                                          # un-normalised
            inv_l = pl.reciprocal(jnp.sum(p, axis=-1, keepdims=True),
                                  approx=True)                      # EUP
            oh = jnp.dot(p.astype(jnp.bfloat16), vh,
                         preferred_element_type=jnp.float32)        # (N, hd)
            heads.append(oh * inv_l)                                # deferred norm
        o_scr[pl.ds(r0, N), :] = jnp.concatenate(heads, axis=-1)    # (N, C)

    o = jnp.dot(o_scr[...].astype(jnp.bfloat16), wproj_ref[...],
                preferred_element_type=jnp.float32)                 # (ROWS, C)
    x1 = x + o + bproj                                              # residual
    x1_b = x1.astype(jnp.bfloat16)

    # ---- fused 1x1 expand conv (BN1 folded) + 1x1 downsample conv ----
    hds = jnp.dot(x1_b, w1ds_ref[...],
                  preferred_element_type=jnp.float32)               # (ROWS, hidden+C)
    ds = hds[:, hidden:hidden + C]                                  # downsample branch
    h1 = hds[:, 0:hidden] + b1
    h1 = h1 * (jnp.clip(h1 + 3.0, 0.0, 6.0) * (1.0 / 6.0))          # h_swish

    # ---- depthwise conv k=3, stride 1, zero pad 1 (BN2 folded into the taps);
    #      stage h1 once at an 8-aligned offset, read +/-1 shifted windows ----
    dw_scr[pl.ds(7, 1), :] = jnp.zeros((1, hidden), jnp.float32)    # h[-1] slot
    dw_scr[pl.ds(8, ROWS), :] = h1                                  # aligned store
    h_prev = dw_scr[pl.ds(7, ROWS), :]
    h_next = dw_scr[pl.ds(9, ROWS), :]
    h_prev = jnp.where(first_body, 0.0, h_prev)                     # zero pad at l==0
    h_next = jnp.where(last_body, 0.0, h_next)                      # zero pad at l==L-1
    hdw = dw0 * h_prev + dw1 * h1 + dw2 * h_next + b2
    hdw = hdw * (jnp.clip(hdw + 3.0, 0.0, 6.0) * (1.0 / 6.0))       # h_swish

    # ---- SE: per-element mean over the L body tokens via a matmul with the
    #      pooling matrix, fc -> relu -> fc -> h_sigmoid, broadcast back ----
    pooled = jnp.dot(pool_ref[...], hdw,
                     preferred_element_type=jnp.float32)            # (tb, hidden)
    y = jnp.dot(pooled.astype(jnp.bfloat16), sew1_ref[...],
                preferred_element_type=jnp.float32) + se_b1         # (tb, hred)
    y = jnp.maximum(y, 0.0)
    y = jnp.dot(y.astype(jnp.bfloat16), sew2_ref[...],
                preferred_element_type=jnp.float32) + se_b2         # (tb, hidden)
    y = jnp.clip(y + 3.0, 0.0, 6.0) * (1.0 / 6.0)                   # h_sigmoid
    scale = jnp.dot(bcast_ref[...], y,
                    preferred_element_type=jnp.float32)             # (ROWS, hidden)

    # ---- final 1x1 conv (BN3 folded) + downsample residual; cls rows keep the
    #      attention-residual value (no concatenate, single store) ----
    out_body = jnp.dot((hdw * scale).astype(jnp.bfloat16), w3_ref[...],
                       preferred_element_type=jnp.float32) + b3     # (ROWS, C)
    out_ref[...] = jnp.where(is_cls, x1, ds + out_body)


# ----------------------------------------------------------------------------
# Wrapper
# ----------------------------------------------------------------------------
def _choose_tb(B, N):
    """Largest TB<=8 dividing B with 8-aligned row blocks and >=2 grid steps."""
    cands = [t for t in range(1, min(B, 8) + 1)
             if B % t == 0 and (t * N) % 8 == 0]
    if cands:
        multi = [t for t in cands if B // t >= 2]
        return max(multi) if multi else max(cands)
    return B  # whole batch in one step (block == full array, no alignment needed)


def _make_pool_mats(tb, N):
    rows = tb * N
    r = jnp.arange(rows)
    elem = r // N
    body = (r % N) != 0
    e = jnp.arange(tb)
    pool = ((elem[None, :] == e[:, None]) & body[None, :]).astype(jnp.float32)
    pool = pool / float(N - 1)                       # (tb, rows): mean over body tokens
    bcast = (elem[:, None] == e[None, :]).astype(jnp.float32)   # (rows, tb)
    return pool, bcast


def block_forward(x, kp, *, num_heads, dim, hidden, hred, tb=None):
    B, N, C = x.shape
    assert C == dim
    if tb is None:
        tb = _choose_tb(B, N)
    assert B % tb == 0
    rows = tb * N

    pool_mat, bcast_mat = _make_pool_mats(tb, N)
    weights = [kp['consts'], kp['wqkv'], kp['wproj'], kp['w1ds'], kp['sew1'],
               kp['sew2'], kp['w3'], pool_mat, bcast_mat]

    kernel = functools.partial(block_kernel, num_heads=num_heads, dim=dim,
                               hidden=hidden, hred=hred, n_tok=N, tb=tb)

    def rep(a):  # full array, same block every grid step (fetched once)
        return pl.BlockSpec(a.shape, lambda i, nd=a.ndim: (0,) * nd)

    hd = C // num_heads
    flops = (2 * B * N * (C * 3 * C + C * C + C * (hidden + C) + hidden * C)
             + 4 * B * num_heads * N * N * hd
             + 4 * B * hidden * hred + 10 * B * N * hidden)
    bytes_accessed = 2 * B * N * C * 4 + sum(
        int(w.size) * w.dtype.itemsize for w in weights)
    transcendentals = B * num_heads * N * N

    dw_rows = ((rows + 9 + 7) // 8) * 8

    x_flat = x.reshape(B * N, C)
    out_flat = pl.pallas_call(
        kernel,
        out_shape=jax.ShapeDtypeStruct((B * N, C), jnp.float32),
        grid=(B // tb,),
        in_specs=[pl.BlockSpec((rows, C), lambda i: (i, 0))]
                 + [rep(a) for a in weights],
        out_specs=pl.BlockSpec((rows, C), lambda i: (i, 0)),
        scratch_shapes=[pltpu.VMEM((rows, C), jnp.float32),      # attention stage
                        pltpu.VMEM((dw_rows, hidden), jnp.float32)],  # dw-conv stage
        compiler_params=pltpu.CompilerParams(
            dimension_semantics=("parallel",)),
        cost_estimate=pl.CostEstimate(flops=int(flops),
                                      transcendentals=int(transcendentals),
                                      bytes_accessed=int(bytes_accessed)),
    )(x_flat, *weights)
    return out_flat.reshape(B, N, C)


# ----------------------------------------------------------------------------
# Parameter preparation: fold BN, fuse w1/wds, pack biases, pre-scale q,
# cast matmul weights to bf16.
# ----------------------------------------------------------------------------
def make_kernel_params(p, dim, num_heads, hidden, hred):
    C = dim
    scale = (C // num_heads) ** -0.5
    W = max(C, hidden, 128)

    def row(v):
        v = v.reshape(-1).astype(jnp.float32)
        return jnp.pad(v, (0, W - v.shape[0]))

    rows = [
        row(p['ln_g']), row(p['ln_b']), row(p['bproj']),
        row(p['sh1']),
        row(p['w_dw'][:, 0] * p['s2']),
        row(p['w_dw'][:, 1] * p['s2']),
        row(p['w_dw'][:, 2] * p['s2']),
        row(p['sh2']),
        row(p['se_b1']), row(p['se_b2']),
        row(p['sh3']),
    ]
    n_rows = 16  # sublane-aligned constant block
    consts = jnp.stack(rows + [jnp.zeros((W,), jnp.float32)] * (n_rows - len(rows)))

    w1 = (p['w1'] * p['s1'][:, None]).T            # (C, hidden), BN1 scale folded
    wds = p['w_ds'].T                              # (C, C)
    return {
        'consts': consts,
        # q columns pre-scaled by head_dim**-0.5
        'wqkv': p['wqkv'].at[:, :C].multiply(scale).astype(jnp.bfloat16),  # (C, 3C)
        'wproj': p['wproj'].astype(jnp.bfloat16),                          # (C, C)
        'w1ds': jnp.concatenate([w1, wds], axis=1).astype(jnp.bfloat16),   # (C, hidden+C)
        'sew1': p['se_w1'].T.astype(jnp.bfloat16),                         # (hidden, hred)
        'sew2': p['se_w2'].T.astype(jnp.bfloat16),                         # (hred, hidden)
        'w3': (p['w3'] * p['s3'][:, None]).T.astype(jnp.bfloat16),         # (hidden, C)
    }


# ----------------------------------------------------------------------------
# Deterministic synthetic parameters (eval-mode BN represented as scale/shift)
# ----------------------------------------------------------------------------
def init_params(key, dim, num_heads, mlp_ratio, reduction=4):
    hidden = dim * mlp_ratio
    hred = hidden // reduction
    keys = jax.random.split(key, 16)

    def n(k, shape, s=0.05):
        return jax.random.normal(k, shape, jnp.float32) * s

    def bn(k, c):
        k1, k2, k3, k4 = jax.random.split(k, 4)
        gamma = 1.0 + 0.1 * jax.random.normal(k1, (c,), jnp.float32)
        beta = 0.1 * jax.random.normal(k2, (c,), jnp.float32)
        mean = 0.1 * jax.random.normal(k3, (c,), jnp.float32)
        var = jax.random.uniform(k4, (c,), jnp.float32, minval=0.5, maxval=1.5)
        scl = gamma * jax.lax.rsqrt(var + 1e-5)
        return scl, beta - mean * scl

    p = {}
    p['ln_g'] = 1.0 + 0.1 * jax.random.normal(keys[0], (dim,), jnp.float32)
    p['ln_b'] = 0.1 * jax.random.normal(keys[1], (dim,), jnp.float32)
    p['wqkv'] = n(keys[2], (dim, 3 * dim))     # pre-transposed Linear weight
    p['wproj'] = n(keys[3], (dim, dim))        # pre-transposed Linear weight
    p['bproj'] = n(keys[4], (dim,))
    p['w_ds'] = n(keys[5], (dim, dim))         # downsample 1x1 conv (out, in)
    p['w1'] = n(keys[6], (hidden, dim))        # 1x1 conv (out, in)
    p['w_dw'] = n(keys[7], (hidden, 3))        # depthwise conv k=3
    p['se_w1'] = n(keys[8], (hred, hidden))
    p['se_b1'] = n(keys[9], (hred,))
    p['se_w2'] = n(keys[10], (hidden, hred))
    p['se_b2'] = n(keys[11], (hidden,))
    p['w3'] = n(keys[12], (dim, hidden))       # final 1x1 conv (out, in)
    p['s1'], p['sh1'] = bn(keys[13], hidden)
    p['s2'], p['sh2'] = bn(keys[14], hidden)
    p['s3'], p['sh3'] = bn(keys[15], dim)
    return p


# ----------------------------------------------------------------------------
# Pure-JAX f32 reference (mirrors the PyTorch module)
# ----------------------------------------------------------------------------
def reference_block(x, p, num_heads):
    B, N, C = x.shape
    hd = C // num_heads
    scale = hd ** -0.5
    mean = x.mean(-1, keepdims=True)
    var = ((x - mean) ** 2).mean(-1, keepdims=True)
    xn = (x - mean) / jnp.sqrt(var + 1e-5) * p['ln_g'] + p['ln_b']
    qkv = xn @ p['wqkv']
    q, k, v = jnp.split(qkv, 3, axis=-1)
    q = q.reshape(B, N, num_heads, hd).transpose(0, 2, 1, 3)
    k = k.reshape(B, N, num_heads, hd).transpose(0, 2, 1, 3)
    v = v.reshape(B, N, num_heads, hd).transpose(0, 2, 1, 3)
    att = jnp.einsum('bhnd,bhmd->bhnm', q, k) * scale
    att = jax.nn.softmax(att, axis=-1)
    o = jnp.einsum('bhnm,bhmd->bhnd', att, v).transpose(0, 2, 1, 3).reshape(B, N, C)
    o = o @ p['wproj'] + p['bproj']
    x = x + o
    cls_tok, body = x[:, :1], x[:, 1:]
    xb = body.transpose(0, 2, 1)                                      # (B, C, L)
    ds = jnp.einsum('oc,bcl->bol', p['w_ds'], xb)
    h = jnp.einsum('oc,bcl->bol', p['w1'], xb)
    h = h * p['s1'][None, :, None] + p['sh1'][None, :, None]
    h = h * jnp.clip(h + 3.0, 0.0, 6.0) / 6.0
    hp = jnp.pad(h, ((0, 0), (0, 0), (1, 1)))
    hdw = (p['w_dw'][None, :, 0:1] * hp[:, :, :-2]
           + p['w_dw'][None, :, 1:2] * hp[:, :, 1:-1]
           + p['w_dw'][None, :, 2:3] * hp[:, :, 2:])
    hdw = hdw * p['s2'][None, :, None] + p['sh2'][None, :, None]
    hdw = hdw * jnp.clip(hdw + 3.0, 0.0, 6.0) / 6.0
    y = hdw.mean(-1)                                                  # (B, hidden)
    y = y @ p['se_w1'].T + p['se_b1']
    y = jnp.maximum(y, 0.0)
    y = y @ p['se_w2'].T + p['se_b2']
    y = jnp.clip(y + 3.0, 0.0, 6.0) / 6.0
    hdw = hdw * y[:, :, None]
    out = jnp.einsum('oh,bhl->bol', p['w3'], hdw)
    out = out * p['s3'][None, :, None] + p['sh3'][None, :, None]
    out = (ds + out).transpose(0, 2, 1)
    return jnp.concatenate([cls_tok, out], axis=1)


if __name__ == "__main__":
    dim, num_heads, mlp_ratio, reduction = 32, 4, 4, 4
    hidden, hred = dim * mlp_ratio, (dim * mlp_ratio) // reduction
    B, N = 16, 17                     # 1 cls token + 16 body tokens

    key = jax.random.PRNGKey(0)
    k_x, k_p = jax.random.split(key)
    x = jax.random.normal(k_x, (B, N, dim), jnp.float32)
    params = init_params(k_p, dim, num_heads, mlp_ratio, reduction)
    kparams = make_kernel_params(params, dim, num_heads, hidden, hred)

    out = block_forward(x, kparams, num_heads=num_heads, dim=dim,
                        hidden=hidden, hred=hred)               # TB=8, grid=(2,)
    out = jax.block_until_ready(out)
    ref = reference_block(x, params, num_heads)
    assert out.shape == (B, N, dim), out.shape
    max_err = float(jnp.max(jnp.abs(out - ref)))
    # Tolerance loosened vs a pure-f32 path: matmul operands are bf16 on the MXU.
    assert jnp.allclose(out, ref, atol=1e-2, rtol=1e-2), max_err

    # small-batch fallback path (block == full flattened array, single step)
    x2 = jax.random.normal(jax.random.PRNGKey(1), (2, N, dim), jnp.float32)
    out2 = jax.block_until_ready(
        block_forward(x2, kparams, num_heads=num_heads, dim=dim,
                      hidden=hidden, hred=hred))
    ref2 = reference_block(x2, params, num_heads)
    assert jnp.allclose(out2, ref2, atol=1e-2, rtol=1e-2), \
        float(jnp.max(jnp.abs(out2 - ref2)))

    print("KERNEL_OK")
</pallas_src>

<mosaic_0001>
module attributes {stable_mosaic.version = 11 : i64} {
  func.func @block_kernel(%arg0: i32, %arg1: memref<136x32xf32, #tpu.memory_space<vmem>>, %arg2: memref<16x128xf32, #tpu.memory_space<vmem>>, %arg3: memref<32x96xbf16, #tpu.memory_space<vmem>>, %arg4: memref<32x32xbf16, #tpu.memory_space<vmem>>, %arg5: memref<32x160xbf16, #tpu.memory_space<vmem>>, %arg6: memref<128x32xbf16, #tpu.memory_space<vmem>>, %arg7: memref<32x128xbf16, #tpu.memory_space<vmem>>, %arg8: memref<128x32xbf16, #tpu.memory_space<vmem>>, %arg9: memref<8x136xf32, #tpu.memory_space<vmem>>, %arg10: memref<136x8xf32, #tpu.memory_space<vmem>>, %arg11: memref<136x32xf32, #tpu.memory_space<vmem>>, %arg12: memref<136x32xf32, #tpu.memory_space<vmem>>, %arg13: memref<152x128xf32, #tpu.memory_space<vmem>>) attributes {dimension_semantics = [#tpu.dimension_semantics<parallel>], iteration_bounds = array<i64: 2>, scalar_prefetch = 0 : i64, scratch_operands = 2 : i64, tpu.core_type = #tpu.core_type<tc>, window_params = [{transform_indices = @transform_0, window_bounds = array<i64: 136, 32>}, {pipeline_mode = #tpu.pipeline_mode<synchronous>, transform_indices = @transform_1, window_bounds = array<i64: 16, 128>}, {pipeline_mode = #tpu.pipeline_mode<synchronous>, transform_indices = @transform_2, window_bounds = array<i64: 32, 96>}, {pipeline_mode = #tpu.pipeline_mode<synchronous>, transform_indices = @transform_3, window_bounds = array<i64: 32, 32>}, {pipeline_mode = #tpu.pipeline_mode<synchronous>, transform_indices = @transform_4, window_bounds = array<i64: 32, 160>}, {pipeline_mode = #tpu.pipeline_mode<synchronous>, transform_indices = @transform_5, window_bounds = array<i64: 128, 32>}, {pipeline_mode = #tpu.pipeline_mode<synchronous>, transform_indices = @transform_6, window_bounds = array<i64: 32, 128>}, {pipeline_mode = #tpu.pipeline_mode<synchronous>, transform_indices = @transform_7, window_bounds = array<i64: 128, 32>}, {pipeline_mode = #tpu.pipeline_mode<synchronous>, transform_indices = @transform_8, window_bounds = array<i64: 8, 136>}, {pipeline_mode = #tpu.pipeline_mode<synchronous>, transform_indices = @transform_9, window_bounds = array<i64: 136, 8>}, {transform_indices = @transform_10, window_bounds = array<i64: 136, 32>}]} {
    %c0 = arith.constant 0 : index
    %c0_0 = arith.constant 0 : index
    %0 = vector.load %arg2[%c0, %c0_0] : memref<16x128xf32, #tpu.memory_space<vmem>>, vector<1x32xf32>
    %c1 = arith.constant 1 : index
    %c0_1 = arith.constant 0 : index
    %1 = vector.load %arg2[%c1, %c0_1] : memref<16x128xf32, #tpu.memory_space<vmem>>, vector<1x32xf32>
    %c2 = arith.constant 2 : index
    %c0_2 = arith.constant 0 : index
    %2 = vector.load %arg2[%c2, %c0_2] : memref<16x128xf32, #tpu.memory_space<vmem>>, vector<1x32xf32>
    %c3 = arith.constant 3 : index
    %c0_3 = arith.constant 0 : index
    %3 = vector.load %arg2[%c3, %c0_3] : memref<16x128xf32, #tpu.memory_space<vmem>>, vector<1x128xf32>
    %c4 = arith.constant 4 : index
    %c0_4 = arith.constant 0 : index
    %4 = vector.load %arg2[%c4, %c0_4] : memref<16x128xf32, #tpu.memory_space<vmem>>, vector<1x128xf32>
    %c5 = arith.constant 5 : index
    %c0_5 = arith.constant 0 : index
    %5 = vector.load %arg2[%c5, %c0_5] : memref<16x128xf32, #tpu.memory_space<vmem>>, vector<1x128xf32>
    %c6 = arith.constant 6 : index
    %c0_6 = arith.constant 0 : index
    %6 = vector.load %arg2[%c6, %c0_6] : memref<16x128xf32, #tpu.memory_space<vmem>>, vector<1x128xf32>
    %c7 = arith.constant 7 : index
    %c0_7 = arith.constant 0 : index
    %7 = vector.load %arg2[%c7, %c0_7] : memref<16x128xf32, #tpu.memory_space<vmem>>, vector<1x128xf32>
    %c8 = arith.constant 8 : index
    %c0_8 = arith.constant 0 : index
    %8 = vector.load %arg2[%c8, %c0_8] : memref<16x128xf32, #tpu.memory_space<vmem>>, vector<1x32xf32>
    %c9 = arith.constant 9 : index
    %c0_9 = arith.constant 0 : index
    %9 = vector.load %arg2[%c9, %c0_9] : memref<16x128xf32, #tpu.memory_space<vmem>>, vector<1x128xf32>
    %c10 = arith.constant 10 : index
    %c0_10 = arith.constant 0 : index
    %10 = vector.load %arg2[%c10, %c0_10] : memref<16x128xf32, #tpu.memory_space<vmem>>, vector<1x32xf32>
    %c0_11 = arith.constant 0 : index
    %c0_12 = arith.constant 0 : index
    %11 = vector.load %arg1[%c0_11, %c0_12] : memref<136x32xf32, #tpu.memory_space<vmem>>, vector<136x32xf32>
    %12 = tpu.iota {dimensions = array<i32: 0>} : vector<136x1xi32>
    %c0_i32 = arith.constant 0 : i32
    %13 = vector.broadcast %c0_i32 : i32 to vector<136x1xi32>
    %14 = arith.cmpi eq, %12, %13 : vector<136x1xi32>
    %c1_i32 = arith.constant 1 : i32
    %15 = vector.broadcast %c1_i32 : i32 to vector<136x1xi32>
    %16 = arith.cmpi eq, %12, %15 : vector<136x1xi32>
    %c16_i32 = arith.constant 16 : i32
    %17 = vector.broadcast %c16_i32 : i32 to vector<136x1xi32>
    %18 = arith.cmpi eq, %12, %17 : vector<136x1xi32>
    %c17_i32 = arith.constant 17 : i32
    %19 = vector.broadcast %c17_i32 : i32 to vector<136x1xi32>
    %20 = arith.cmpi eq, %12, %19 : vector<136x1xi32>
    %21 = arith.ori %14, %20 : vector<136x1xi1>
    %c18_i32 = arith.constant 18 : i32
    %22 = vector.broadcast %c18_i32 : i32 to vector<136x1xi32>
    %23 = arith.cmpi eq, %12, %22 : vector<136x1xi32>
    %24 = arith.ori %16, %23 : vector<136x1xi1>
    %c33_i32 = arith.constant 33 : i32
    %25 = vector.broadcast %c33_i32 : i32 to vector<136x1xi32>
    %26 = arith.cmpi eq, %12, %25 : vector<136x1xi32>
    %27 = arith.ori %18, %26 : vector<136x1xi1>
    %c34_i32 = arith.constant 34 : i32
    %28 = vector.broadcast %c34_i32 : i32 to vector<136x1xi32>
    %29 = arith.cmpi eq, %12, %28 : vector<136x1xi32>
    %30 = arith.ori %21, %29 : vector<136x1xi1>
    %c35_i32 = arith.constant 35 : i32
    %31 = vector.broadcast %c35_i32 : i32 to vector<136x1xi32>
    %32 = arith.cmpi eq, %12, %31 : vector<136x1xi32>
    %33 = arith.ori %24, %32 : vector<136x1xi1>
    %c50_i32 = arith.constant 50 : i32
    %34 = vector.broadcast %c50_i32 : i32 to vector<136x1xi32>
    %35 = arith.cmpi eq, %12, %34 : vector<136x1xi32>
    %36 = arith.ori %27, %35 : vector<136x1xi1>
    %c51_i32 = arith.constant 51 : i32
    %37 = vector.broadcast %c51_i32 : i32 to vector<136x1xi32>
    %38 = arith.cmpi eq, %12, %37 : vector<136x1xi32>
    %39 = arith.ori %30, %38 : vector<136x1xi1>
    %c52_i32 = arith.constant 52 : i32
    %40 = vector.broadcast %c52_i32 : i32 to vector<136x1xi32>
    %41 = arith.cmpi eq, %12, %40 : vector<136x1xi32>
    %42 = arith.ori %33, %41 : vector<136x1xi1>
    %c67_i32 = arith.constant 67 : i32
    %43 = vector.broadcast %c67_i32 : i32 to vector<136x1xi32>
    %44 = arith.cmpi eq, %12, %43 : vector<136x1xi32>
    %45 = arith.ori %36, %44 : vector<136x1xi1>
    %c68_i32 = arith.constant 68 : i32
    %46 = vector.broadcast %c68_i32 : i32 to vector<136x1xi32>
    %47 = arith.cmpi eq, %12, %46 : vector<136x1xi32>
    %48 = arith.ori %39, %47 : vector<136x1xi1>
    %c69_i32 = arith.constant 69 : i32
    %49 = vector.broadcast %c69_i32 : i32 to vector<136x1xi32>
    %50 = arith.cmpi eq, %12, %49 : vector<136x1xi32>
    %51 = arith.ori %42, %50 : vector<136x1xi1>
    %c84_i32 = arith.constant 84 : i32
    %52 = vector.broadcast %c84_i32 : i32 to vector<136x1xi32>
    %53 = arith.cmpi eq, %12, %52 : vector<136x1xi32>
    %54 = arith.ori %45, %53 : vector<136x1xi1>
    %c85_i32 = arith.constant 85 : i32
    %55 = vector.broadcast %c85_i32 : i32 to vector<136x1xi32>
    %56 = arith.cmpi eq, %12, %55 : vector<136x1xi32>
    %57 = arith.ori %48, %56 : vector<136x1xi1>
    %c86_i32 = arith.constant 86 : i32
    %58 = vector.broadcast %c86_i32 : i32 to vector<136x1xi32>
    %59 = arith.cmpi eq, %12, %58 : vector<136x1xi32>
    %60 = arith.ori %51, %59 : vector<136x1xi1>
    %c101_i32 = arith.constant 101 : i32
    %61 = vector.broadcast %c101_i32 : i32 to vector<136x1xi32>
    %62 = arith.cmpi eq, %12, %61 : vector<136x1xi32>
    %63 = arith.ori %54, %62 : vector<136x1xi1>
    %c102_i32 = arith.constant 102 : i32
    %64 = vector.broadcast %c102_i32 : i32 to vector<136x1xi32>
    %65 = arith.cmpi eq, %12, %64 : vector<136x1xi32>
    %66 = arith.ori %57, %65 : vector<136x1xi1>
    %c103_i32 = arith.constant 103 : i32
    %67 = vector.broadcast %c103_i32 : i32 to vector<136x1xi32>
    %68 = arith.cmpi eq, %12, %67 : vector<136x1xi32>
    %69 = arith.ori %60, %68 : vector<136x1xi1>
    %c118_i32 = arith.constant 118 : i32
    %70 = vector.broadcast %c118_i32 : i32 to vector<136x1xi32>
    %71 = arith.cmpi eq, %12, %70 : vector<136x1xi32>
    %72 = arith.ori %63, %71 : vector<136x1xi1>
    %c119_i32 = arith.constant 119 : i32
    %73 = vector.broadcast %c119_i32 : i32 to vector<136x1xi32>
    %74 = arith.cmpi eq, %12, %73 : vector<136x1xi32>
    %75 = arith.ori %66, %74 : vector<136x1xi1>
    %c120_i32 = arith.constant 120 : i32
    %76 = vector.broadcast %c120_i32 : i32 to vector<136x1xi32>
    %77 = arith.cmpi eq, %12, %76 : vector<136x1xi32>
    %78 = arith.ori %69, %77 : vector<136x1xi1>
    %c135_i32 = arith.constant 135 : i32
    %79 = vector.broadcast %c135_i32 : i32 to vector<136x1xi32>
    %80 = arith.cmpi eq, %12, %79 : vector<136x1xi32>
    %81 = arith.ori %72, %80 : vector<136x1xi1>
    %cst = arith.constant dense<0.000000e+00> : vector<136xf32>
    %82 = vector.multi_reduction <add>, %11, %cst [1] : vector<136x32xf32> to vector<136xf32>
    %83 = vector.shape_cast %82 : vector<136xf32> to vector<136x1xf32>
    %cst_13 = arith.constant 3.200000e+01 : f32
    %84 = vector.broadcast %cst_13 : f32 to vector<136x1xf32>
    %85 = arith.divf %83, %84 : vector<136x1xf32>
    %86 = vector.broadcast %85 : vector<136x1xf32> to vector<136x32xf32>
    %87 = arith.subf %11, %86 : vector<136x32xf32>
    %88 = arith.mulf %87, %87 : vector<136x32xf32>
    %cst_14 = arith.constant dense<0.000000e+00> : vector<136xf32>
    %89 = vector.multi_reduction <add>, %88, %cst_14 [1] : vector<136x32xf32> to vector<136xf32>
    %90 = vector.shape_cast %89 : vector<136xf32> to vector<136x1xf32>
    %cst_15 = arith.constant 3.200000e+01 : f32
    %91 = vector.broadcast %cst_15 : f32 to vector<136x1xf32>
    %92 = arith.divf %90, %91 : vector<136x1xf32>
    %93 = vector.broadcast %85 : vector<136x1xf32> to vector<136x32xf32>
    %94 = arith.subf %11, %93 : vector<136x32xf32>
    %cst_16 = arith.constant 9.99999974E-6 : f32
    %95 = vector.broadcast %cst_16 : f32 to vector<136x1xf32>
    %96 = arith.addf %92, %95 : vector<136x1xf32>
    %97 = math.rsqrt %96 : vector<136x1xf32>
    %98 = vector.broadcast %97 : vector<136x1xf32> to vector<136x32xf32>
    %99 = arith.mulf %94, %98 : vector<136x32xf32>
    %100 = vector.broadcast %0 : vector<1x32xf32> to vector<136x32xf32>
    %101 = arith.mulf %99, %100 : vector<136x32xf32>
    %102 = vector.broadcast %1 : vector<1x32xf32> to vector<136x32xf32>
    %103 = arith.addf %101, %102 : vector<136x32xf32>
    %104 = arith.truncf %103 : vector<136x32xf32> to vector<136x32xbf16>
    %c0_17 = arith.constant 0 : index
    %c0_18 = arith.constant 0 : index
    %105 = vector.load %arg3[%c0_17, %c0_18] : memref<32x96xbf16, #tpu.memory_space<vmem>>, vector<32x96xbf16>
    %cst_19 = arith.constant dense<0.000000e+00> : vector<136x96xf32>
    %106 = tpu.matmul %104, %105, %cst_19 {dimension_numbers = #tpu.dot_dimension_numbers<[1], [0], [0], [1], [0, 0, 1, 1], [], []>} : vector<136x32xbf16>, vector<32x96xbf16>, vector<136x96xf32> -> vector<136x96xf32>
    %107 = vector.extract_strided_slice %106 {offsets = [0, 0], sizes = [17, 96], strides = [1, 1]} : vector<136x96xf32> to vector<17x96xf32>
    %108 = arith.truncf %107 : vector<17x96xf32> to vector<17x96xbf16>
    %109 = vector.extract_strided_slice %108 {offsets = [0, 0], sizes = [17, 8], strides = [1, 1]} : vector<17x96xbf16> to vector<17x8xbf16>
    %110 = vector.extract_strided_slice %108 {offsets = [0, 32], sizes = [17, 8], strides = [1, 1]} : vector<17x96xbf16> to vector<17x8xbf16>
    %111 = vector.extract_strided_slice %108 {offsets = [0, 64], sizes = [17, 8], strides = [1, 1]} : vector<17x96xbf16> to vector<17x8xbf16>
    %cst_20 = arith.constant dense<0.000000e+00> : vector<17x17xf32>
    %112 = tpu.matmul %109, %110, %cst_20 {dimension_numbers = #tpu.dot_dimension_numbers<[1], [1], [0], [0], [0, 0, 1, 0], [], []>} : vector<17x8xbf16>, vector<17x8xbf16>, vector<17x17xf32> -> vector<17x17xf32>
    %cst_21 = arith.constant dense<0xFF800000> : vector<17xf32>
    %113 = vector.multi_reduction <maximumf>, %112, %cst_21 [1] : vector<17x17xf32> to vector<17xf32>
    %114 = vector.shape_cast %113 : vector<17xf32> to vector<17x1xf32>
    %115 = vector.broadcast %114 : vector<17x1xf32> to vector<17x17xf32>
    %116 = arith.subf %112, %115 : vector<17x17xf32>
    %117 = math.exp %116 : vector<17x17xf32>
    %cst_22 = arith.constant dense<0.000000e+00> : vector<17xf32>
    %118 = vector.multi_reduction <add>, %117, %cst_22 [1] : vector<17x17xf32> to vector<17xf32>
    %119 = vector.shape_cast %118 : vector<17xf32> to vector<17x1xf32>
    %120 = tpu.reciprocal %119 {approx = true} : vector<17x1xf32> -> vector<17x1xf32>
    %121 = arith.truncf %117 : vector<17x17xf32> to vector<17x17xbf16>
    %cst_23 = arith.constant dense<0.000000e+00> : vector<17x8xf32>
    %122 = tpu.matmul %121, %111, %cst_23 {dimension_numbers = #tpu.dot_dimension_numbers<[1], [0], [0], [1], [0, 0, 1, 1], [], []>} : vector<17x17xbf16>, vector<17x8xbf16>, vector<17x8xf32> -> vector<17x8xf32>
    %123 = vector.broadcast %120 : vector<17x1xf32> to vector<17x8xf32>
    %124 = arith.mulf %122, %123 : vector<17x8xf32>
    %125 = vector.extract_strided_slice %108 {offsets = [0, 8], sizes = [17, 8], strides = [1, 1]} : vector<17x96xbf16> to vector<17x8xbf16>
    %126 = vector.extract_strided_slice %108 {offsets = [0, 40], sizes = [17, 8], strides = [1, 1]} : vector<17x96xbf16> to vector<17x8xbf16>
    %127 = vector.extract_strided_slice %108 {offsets = [0, 72], sizes = [17, 8], strides = [1, 1]} : vector<17x96xbf16> to vector<17x8xbf16>
    %cst_24 = arith.constant dense<0.000000e+00> : vector<17x17xf32>
    %128 = tpu.matmul %125, %126, %cst_24 {dimension_numbers = #tpu.dot_dimension_numbers<[1], [1], [0], [0], [0, 0, 1, 0], [], []>} : vector<17x8xbf16>, vector<17x8xbf16>, vector<17x17xf32> -> vector<17x17xf32>
    %cst_25 = arith.constant dense<0xFF800000> : vector<17xf32>
    %129 = vector.multi_reduction <maximumf>, %128, %cst_25 [1] : vector<17x17xf32> to vector<17xf32>
    %130 = vector.shape_cast %129 : vector<17xf32> to vector<17x1xf32>
    %131 = vector.broadcast %130 : vector<17x1xf32> to vector<17x17xf32>
    %132 = arith.subf %128, %131 : vector<17x17xf32>
    %133 = math.exp %132 : vector<17x17xf32>
    %cst_26 = arith.constant dense<0.000000e+00> : vector<17xf32>
    %134 = vector.multi_reduction <add>, %133, %cst_26 [1] : vector<17x17xf32> to vector<17xf32>
    %135 = vector.shape_cast %134 : vector<17xf32> to vector<17x1xf32>
    %136 = tpu.reciprocal %135 {approx = true} : vector<17x1xf32> -> vector<17x1xf32>
    %137 = arith.truncf %133 : vector<17x17xf32> to vector<17x17xbf16>
    %cst_27 = arith.constant dense<0.000000e+00> : vector<17x8xf32>
    %138 = tpu.matmul %137, %127, %cst_27 {dimension_numbers = #tpu.dot_dimension_numbers<[1], [0], [0], [1], [0, 0, 1, 1], [], []>} : vector<17x17xbf16>, vector<17x8xbf16>, vector<17x8xf32> -> vector<17x8xf32>
    %139 = vector.broadcast %136 : vector<17x1xf32> to vector<17x8xf32>
    %140 = arith.mulf %138, %139 : vector<17x8xf32>
    %141 = vector.extract_strided_slice %108 {offsets = [0, 16], sizes = [17, 8], strides = [1, 1]} : vector<17x96xbf16> to vector<17x8xbf16>
    %142 = vector.extract_strided_slice %108 {offsets = [0, 48], sizes = [17, 8], strides = [1, 1]} : vector<17x96xbf16> to vector<17x8xbf16>
    %143 = vector.extract_strided_slice %108 {offsets = [0, 80], sizes = [17, 8], strides = [1, 1]} : vector<17x96xbf16> to vector<17x8xbf16>
    %cst_28 = arith.constant dense<0.000000e+00> : vector<17x17xf32>
    %144 = tpu.matmul %141, %142, %cst_28 {dimension_numbers = #tpu.dot_dimension_numbers<[1], [1], [0], [0], [0, 0, 1, 0], [], []>} : vector<17x8xbf16>, vector<17x8xbf16>, vector<17x17xf32> -> vector<17x17xf32>
    %cst_29 = arith.constant dense<0xFF800000> : vector<17xf32>
    %145 = vector.multi_reduction <maximumf>, %144, %cst_29 [1] : vector<17x17xf32> to vector<17xf32>
    %146 = vector.shape_cast %145 : vector<17xf32> to vector<17x1xf32>
    %147 = vector.broadcast %146 : vector<17x1xf32> to vector<17x17xf32>
    %148 = arith.subf %144, %147 : vector<17x17xf32>
    %149 = math.exp %148 : vector<17x17xf32>
    %cst_30 = arith.constant dense<0.000000e+00> : vector<17xf32>
    %150 = vector.multi_reduction <add>, %149, %cst_30 [1] : vector<17x17xf32> to vector<17xf32>
    %151 = vector.shape_cast %150 : vector<17xf32> to vector<17x1xf32>
    %152 = tpu.reciprocal %151 {approx = true} : vector<17x1xf32> -> vector<17x1xf32>
    %153 = arith.truncf %149 : vector<17x17xf32> to vector<17x17xbf16>
    %cst_31 = arith.constant dense<0.000000e+00> : vector<17x8xf32>
    %154 = tpu.matmul %153, %143, %cst_31 {dimension_numbers = #tpu.dot_dimension_numbers<[1], [0], [0], [1], [0, 0, 1, 1], [], []>} : vector<17x17xbf16>, vector<17x8xbf16>, vector<17x8xf32> -> vector<17x8xf32>
    %155 = vector.broadcast %152 : vector<17x1xf32> to vector<17x8xf32>
    %156 = arith.mulf %154, %155 : vector<17x8xf32>
    %157 = vector.extract_strided_slice %108 {offsets = [0, 24], sizes = [17, 8], strides = [1, 1]} : vector<17x96xbf16> to vector<17x8xbf16>
    %158 = vector.extract_strided_slice %108 {offsets = [0, 56], sizes = [17, 8], strides = [1, 1]} : vector<17x96xbf16> to vector<17x8xbf16>
    %159 = vector.extract_strided_slice %108 {offsets = [0, 88], sizes = [17, 8], strides = [1, 1]} : vector<17x96xbf16> to vector<17x8xbf16>
    %cst_32 = arith.constant dense<0.000000e+00> : vector<17x17xf32>
    %160 = tpu.matmul %157, %158, %cst_32 {dimension_numbers = #tpu.dot_dimension_numbers<[1], [1], [0], [0], [0, 0, 1, 0], [], []>} : vector<17x8xbf16>, vector<17x8xbf16>, vector<17x17xf32> -> vector<17x17xf32>
    %cst_33 = arith.constant dense<0xFF800000> : vector<17xf32>
    %161 = vector.multi_reduction <maximumf>, %160, %cst_33 [1] : vector<17x17xf32> to vector<17xf32>
    %162 = vector.shape_cast %161 : vector<17xf32> to vector<17x1xf32>
    %163 = vector.broadcast %162 : vector<17x1xf32> to vector<17x17xf32>
    %164 = arith.subf %160, %163 : vector<17x17xf32>
    %165 = math.exp %164 : vector<17x17xf32>
    %cst_34 = arith.constant dense<0.000000e+00> : vector<17xf32>
    %166 = vector.multi_reduction <add>, %165, %cst_34 [1] : vector<17x17xf32> to vector<17xf32>
    %167 = vector.shape_cast %166 : vector<17xf32> to vector<17x1xf32>
    %168 = tpu.reciprocal %167 {approx = true} : vector<17x1xf32> -> vector<17x1xf32>
    %169 = arith.truncf %165 : vector<17x17xf32> to vector<17x17xbf16>
    %cst_35 = arith.constant dense<0.000000e+00> : vector<17x8xf32>
    %170 = tpu.matmul %169, %159, %cst_35 {dimension_numbers = #tpu.dot_dimension_numbers<[1], [0], [0], [1], [0, 0, 1, 1], [], []>} : vector<17x17xbf16>, vector<17x8xbf16>, vector<17x8xf32> -> vector<17x8xf32>
    %171 = vector.broadcast %168 : vector<17x1xf32> to vector<17x8xf32>
    %172 = arith.mulf %170, %171 : vector<17x8xf32>
    %173 = tpu.concatenate %124, %140, %156, %172 in 1 : vector<17x8xf32>, vector<17x8xf32>, vector<17x8xf32>, vector<17x8xf32> -> vector<17x32xf32>
    %c0_36 = arith.constant 0 : index
    %c0_37 = arith.constant 0 : index
    %174 = vector.load %arg12[%c0_36, %c0_37] : memref<136x32xf32, #tpu.memory_space<vmem>>, vector<17x32xf32>
    tpu.vector_store %arg12[%c0_36, %c0_37], %173 {strides = array<i32>} : memref<136x32xf32, #tpu.memory_space<vmem>>, vector<17x32xf32>,
    %175 = vector.extract_strided_slice %106 {offsets = [17, 0], sizes = [17, 96], strides = [1, 1]} : vector<136x96xf32> to vector<17x96xf32>
    %176 = arith.truncf %175 : vector<17x96xf32> to vector<17x96xbf16>
    %177 = vector.extract_strided_slice %176 {offsets = [0, 0], sizes = [17, 8], strides = [1, 1]} : vector<17x96xbf16> to vector<17x8xbf16>
    %178 = vector.extract_strided_slice %176 {offsets = [0, 32], sizes = [17, 8], strides = [1, 1]} : vector<17x96xbf16> to vector<17x8xbf16>
    %179 = vector.extract_strided_slice %176 {offsets = [0, 64], sizes = [17, 8], strides = [1, 1]} : vector<17x96xbf16> to vector<17x8xbf16>
    %cst_38 = arith.constant dense<0.000000e+00> : vector<17x17xf32>
    %180 = tpu.matmul %177, %178, %cst_38 {dimension_numbers = #tpu.dot_dimension_numbers<[1], [1], [0], [0], [0, 0, 1, 0], [], []>} : vector<17x8xbf16>, vector<17x8xbf16>, vector<17x17xf32> -> vector<17x17xf32>
    %cst_39 = arith.constant dense<0xFF800000> : vector<17xf32>
    %181 = vector.multi_reduction <maximumf>, %180, %cst_39 [1] : vector<17x17xf32> to vector<17xf32>
    %182 = vector.shape_cast %181 : vector<17xf32> to vector<17x1xf32>
    %183 = vector.broadcast %182 : vector<17x1xf32> to vector<17x17xf32>
    %184 = arith.subf %180, %183 : vector<17x17xf32>
    %185 = math.exp %184 : vector<17x17xf32>
    %cst_40 = arith.constant dense<0.000000e+00> : vector<17xf32>
    %186 = vector.multi_reduction <add>, %185, %cst_40 [1] : vector<17x17xf32> to vector<17xf32>
    %187 = vector.shape_cast %186 : vector<17xf32> to vector<17x1xf32>
    %188 = tpu.reciprocal %187 {approx = true} : vector<17x1xf32> -> vector<17x1xf32>
    %189 = arith.truncf %185 : vector<17x17xf32> to vector<17x17xbf16>
    %cst_41 = arith.constant dense<0.000000e+00> : vector<17x8xf32>
    %190 = tpu.matmul %189, %179, %cst_41 {dimension_numbers = #tpu.dot_dimension_numbers<[1], [0], [0], [1], [0, 0, 1, 1], [], []>} : vector<17x17xbf16>, vector<17x8xbf16>, vector<17x8xf32> -> vector<17x8xf32>
    %191 = vector.broadcast %188 : vector<17x1xf32> to vector<17x8xf32>
    %192 = arith.mulf %190, %191 : vector<17x8xf32>
    %193 = vector.extract_strided_slice %176 {offsets = [0, 8], sizes = [17, 8], strides = [1, 1]} : vector<17x96xbf16> to vector<17x8xbf16>
    %194 = vector.extract_strided_slice %176 {offsets = [0, 40], sizes = [17, 8], strides = [1, 1]} : vector<17x96xbf16> to vector<17x8xbf16>
    %195 = vector.extract_strided_slice %176 {offsets = [0, 72], sizes = [17, 8], strides = [1, 1]} : vector<17x96xbf16> to vector<17x8xbf16>
    %cst_42 = arith.constant dense<0.000000e+00> : vector<17x17xf32>
    %196 = tpu.matmul %193, %194, %cst_42 {dimension_numbers = #tpu.dot_dimension_numbers<[1], [1], [0], [0], [0, 0, 1, 0], [], []>} : vector<17x8xbf16>, vector<17x8xbf16>, vector<17x17xf32> -> vector<17x17xf32>
    %cst_43 = arith.constant dense<0xFF800000> : vector<17xf32>
    %197 = vector.multi_reduction <maximumf>, %196, %cst_43 [1] : vector<17x17xf32> to vector<17xf32>
    %198 = vector.shape_cast %197 : vector<17xf32> to vector<17x1xf32>
    %199 = vector.broadcast %198 : vector<17x1xf32> to vector<17x17xf32>
    %200 = arith.subf %196, %199 : vector<17x17xf32>
    %201 = math.exp %200 : vector<17x17xf32>
    %cst_44 = arith.constant dense<0.000000e+00> : vector<17xf32>
    %202 = vector.multi_reduction <add>, %201, %cst_44 [1] : vector<17x17xf32> to vector<17xf32>
    %203 = vector.shape_cast %202 : vector<17xf32> to vector<17x1xf32>
    %204 = tpu.reciprocal %203 {approx = true} : vector<17x1xf32> -> vector<17x1xf32>
    %205 = arith.truncf %201 : vector<17x17xf32> to vector<17x17xbf16>
    %cst_45 = arith.constant dense<0.000000e+00> : vector<17x8xf32>
    %206 = tpu.matmul %205, %195, %cst_45 {dimension_numbers = #tpu.dot_dimension_numbers<[1], [0], [0], [1], [0, 0, 1, 1], [], []>} : vector<17x17xbf16>, vector<17x8xbf16>, vector<17x8xf32> -> vector<17x8xf32>
    %207 = vector.broadcast %204 : vector<17x1xf32> to vector<17x8xf32>
    %208 = arith.mulf %206, %207 : vector<17x8xf32>
    %209 = vector.extract_strided_slice %176 {offsets = [0, 16], sizes = [17, 8], strides = [1, 1]} : vector<17x96xbf16> to vector<17x8xbf16>
    %210 = vector.extract_strided_slice %176 {offsets = [0, 48], sizes = [17, 8], strides = [1, 1]} : vector<17x96xbf16> to vector<17x8xbf16>
    %211 = vector.extract_strided_slice %176 {offsets = [0, 80], sizes = [17, 8], strides = [1, 1]} : vector<17x96xbf16> to vector<17x8xbf16>
    %cst_46 = arith.constant dense<0.000000e+00> : vector<17x17xf32>
    %212 = tpu.matmul %209, %210, %cst_46 {dimension_numbers = #tpu.dot_dimension_numbers<[1], [1], [0], [0], [0, 0, 1, 0], [], []>} : vector<17x8xbf16>, vector<17x8xbf16>, vector<17x17xf32> -> vector<17x17xf32>
    %cst_47 = arith.constant dense<0xFF800000> : vector<17xf32>
    %213 = vector.multi_reduction <maximumf>, %212, %cst_47 [1] : vector<17x17xf32> to vector<17xf32>
    %214 = vector.shape_cast %213 : vector<17xf32> to vector<17x1xf32>
    %215 = vector.broadcast %214 : vector<17x1xf32> to vector<17x17xf32>
    %216 = arith.subf %212, %215 : vector<17x17xf32>
    %217 = math.exp %216 : vector<17x17xf32>
    %cst_48 = arith.constant dense<0.000000e+00> : vector<17xf32>
    %218 = vector.multi_reduction <add>, %217, %cst_48 [1] : vector<17x17xf32> to vector<17xf32>
    %219 = vector.shape_cast %218 : vector<17xf32> to vector<17x1xf32>
    %220 = tpu.reciprocal %219 {approx = true} : vector<17x1xf32> -> vector<17x1xf32>
    %221 = arith.truncf %217 : vector<17x17xf32> to vector<17x17xbf16>
    %cst_49 = arith.constant dense<0.000000e+00> : vector<17x8xf32>
    %222 = tpu.matmul %221, %211, %cst_49 {dimension_numbers = #tpu.dot_dimension_numbers<[1], [0], [0], [1], [0, 0, 1, 1], [], []>} : vector<17x17xbf16>, vector<17x8xbf16>, vector<17x8xf32> -> vector<17x8xf32>
    %223 = vector.broadcast %220 : vector<17x1xf32> to vector<17x8xf32>
    %224 = arith.mulf %222, %223 : vector<17x8xf32>
    %225 = vector.extract_strided_slice %176 {offsets = [0, 24], sizes = [17, 8], strides = [1, 1]} : vector<17x96xbf16> to vector<17x8xbf16>
    %226 = vector.extract_strided_slice %176 {offsets = [0, 56], sizes = [17, 8], strides = [1, 1]} : vector<17x96xbf16> to vector<17x8xbf16>
    %227 = vector.extract_strided_slice %176 {offsets = [0, 88], sizes = [17, 8], strides = [1, 1]} : vector<17x96xbf16> to vector<17x8xbf16>
    %cst_50 = arith.constant dense<0.000000e+00> : vector<17x17xf32>
    %228 = tpu.matmul %225, %226, %cst_50 {dimension_numbers = #tpu.dot_dimension_numbers<[1], [1], [0], [0], [0, 0, 1, 0], [], []>} : vector<17x8xbf16>, vector<17x8xbf16>, vector<17x17xf32> -> vector<17x17xf32>
    %cst_51 = arith.constant dense<0xFF800000> : vector<17xf32>
    %229 = vector.multi_reduction <maximumf>, %228, %cst_51 [1] : vector<17x17xf32> to vector<17xf32>
    %230 = vector.shape_cast %229 : vector<17xf32> to vector<17x1xf32>
    %231 = vector.broadcast %230 : vector<17x1xf32> to vector<17x17xf32>
    %232 = arith.subf %228, %231 : vector<17x17xf32>
    %233 = math.exp %232 : vector<17x17xf32>
    %cst_52 = arith.constant dense<0.000000e+00> : vector<17xf32>
    %234 = vector.multi_reduction <add>, %233, %cst_52 [1] : vector<17x17xf32> to vector<17xf32>
    %235 = vector.shape_cast %234 : vector<17xf32> to vector<17x1xf32>
    %236 = tpu.reciprocal %235 {approx = true} : vector<17x1xf32> -> vector<17x1xf32>
    %237 = arith.truncf %233 : vector<17x17xf32> to vector<17x17xbf16>
    %cst_53 = arith.constant dense<0.000000e+00> : vector<17x8xf32>
    %238 = tpu.matmul %237, %227, %cst_53 {dimension_numbers = #tpu.dot_dimension_numbers<[1], [0], [0], [1], [0, 0, 1, 1], [], []>} : vector<17x17xbf16>, vector<17x8xbf16>, vector<17x8xf32> -> vector<17x8xf32>
    %239 = vector.broadcast %236 : vector<17x1xf32> to vector<17x8xf32>
    %240 = arith.mulf %238, %239 : vector<17x8xf32>
    %241 = tpu.concatenate %192, %208, %224, %240 in 1 : vector<17x8xf32>, vector<17x8xf32>, vector<17x8xf32>, vector<17x8xf32> -> vector<17x32xf32>
    %c17 = arith.constant 17 : index
    %c0_54 = arith.constant 0 : index
    %242 = vector.load %arg12[%c17, %c0_54] : memref<136x32xf32, #tpu.memory_space<vmem>>, vector<17x32xf32>
    tpu.vector_store %arg12[%c17, %c0_54], %241 {strides = array<i32>} : memref<136x32xf32, #tpu.memory_space<vmem>>, vector<17x32xf32>,
    %243 = vector.extract_strided_slice %106 {offsets = [34, 0], sizes = [17, 96], strides = [1, 1]} : vector<136x96xf32> to vector<17x96xf32>
    %244 = arith.truncf %243 : vector<17x96xf32> to vector<17x96xbf16>
    %245 = vector.extract_strided_slice %244 {offsets = [0, 0], sizes = [17, 8], strides = [1, 1]} : vector<17x96xbf16> to vector<17x8xbf16>
    %246 = vector.extract_strided_slice %244 {offsets = [0, 32], sizes = [17, 8], strides = [1, 1]} : vector<17x96xbf16> to vector<17x8xbf16>
    %247 = vector.extract_strided_slice %244 {offsets = [0, 64], sizes = [17, 8], strides = [1, 1]} : vector<17x96xbf16> to vector<17x8xbf16>
    %cst_55 = arith.constant dense<0.000000e+00> : vector<17x17xf32>
    %248 = tpu.matmul %245, %246, %cst_55 {dimension_numbers = #tpu.dot_dimension_numbers<[1], [1], [0], [0], [0, 0, 1, 0], [], []>} : vector<17x8xbf16>, vector<17x8xbf16>, vector<17x17xf32> -> vector<17x17xf32>
    %cst_56 = arith.constant dense<0xFF800000> : vector<17xf32>
    %249 = vector.multi_reduction <maximumf>, %248, %cst_56 [1] : vector<17x17xf32> to vector<17xf32>
    %250 = vector.shape_cast %249 : vector<17xf32> to vector<17x1xf32>
    %251 = vector.broadcast %250 : vector<17x1xf32> to vector<17x17xf32>
    %252 = arith.subf %248, %251 : vector<17x17xf32>
    %253 = math.exp %252 : vector<17x17xf32>
    %cst_57 = arith.constant dense<0.000000e+00> : vector<17xf32>
    %254 = vector.multi_reduction <add>, %253, %cst_57 [1] : vector<17x17xf32> to vector<17xf32>
    %255 = vector.shape_cast %254 : vector<17xf32> to vector<17x1xf32>
    %256 = tpu.reciprocal %255 {approx = true} : vector<17x1xf32> -> vector<17x1xf32>
    %257 = arith.truncf %253 : vector<17x17xf32> to vector<17x17xbf16>
    %cst_58 = arith.constant dense<0.000000e+00> : vector<17x8xf32>
    %258 = tpu.matmul %257, %247, %cst_58 {dimension_numbers = #tpu.dot_dimension_numbers<[1], [0], [0], [1], [0, 0, 1, 1], [], []>} : vector<17x17xbf16>, vector<17x8xbf16>, vector<17x8xf32> -> vector<17x8xf32>
    %259 = vector.broadcast %256 : vector<17x1xf32> to vector<17x8xf32>
    %260 = arith.mulf %258, %259 : vector<17x8xf32>
    %261 = vector.extract_strided_slice %244 {offsets = [0, 8], sizes = [17, 8], strides = [1, 1]} : vector<17x96xbf16> to vector<17x8xbf16>
    %262 = vector.extract_strided_slice %244 {offsets = [0, 40], sizes = [17, 8], strides = [1, 1]} : vector<17x96xbf16> to vector<17x8xbf16>
    %263 = vector.extract_strided_slice %244 {offsets = [0, 72], sizes = [17, 8], strides = [1, 1]} : vector<17x96xbf16> to vector<17x8xbf16>
    %cst_59 = arith.constant dense<0.000000e+00> : vector<17x17xf32>
    %264 = tpu.matmul %261, %262, %cst_59 {dimension_numbers = #tpu.dot_dimension_numbers<[1], [1], [0], [0], [0, 0, 1, 0], [], []>} : vector<17x8xbf16>, vector<17x8xbf16>, vector<17x17xf32> -> vector<17x17xf32>
    %cst_60 = arith.constant dense<0xFF800000> : vector<17xf32>
    %265 = vector.multi_reduction <maximumf>, %264, %cst_60 [1] : vector<17x17xf32> to vector<17xf32>
    %266 = vector.shape_cast %265 : vector<17xf32> to vector<17x1xf32>
    %267 = vector.broadcast %266 : vector<17x1xf32> to vector<17x17xf32>
    %268 = arith.subf %264, %267 : vector<17x17xf32>
    %269 = math.exp %268 : vector<17x17xf32>
    %cst_61 = arith.constant dense<0.000000e+00> : vector<17xf32>
    %270 = vector.multi_reduction <add>, %269, %cst_61 [1] : vector<17x17xf32> to vector<17xf32>
    %271 = vector.shape_cast %270 : vector<17xf32> to vector<17x1xf32>
    %272 = tpu.reciprocal %271 {approx = true} : vector<17x1xf32> -> vector<17x1xf32>
    %273 = arith.truncf %269 : vector<17x17xf32> to vector<17x17xbf16>
    %cst_62 = arith.constant dense<0.000000e+00> : vector<17x8xf32>
    %274 = tpu.matmul %273, %263, %cst_62 {dimension_numbers = #tpu.dot_dimension_numbers<[1], [0], [0], [1], [0, 0, 1, 1], [], []>} : vector<17x17xbf16>, vector<17x8xbf16>, vector<17x8xf32> -> vector<17x8xf32>
    %275 = vector.broadcast %272 : vector<17x1xf32> to vector<17x8xf32>
    %276 = arith.mulf %274, %275 : vector<17x8xf32>
    %277 = vector.extract_strided_slice %244 {offsets = [0, 16], sizes = [17, 8], strides = [1, 1]} : vector<17x96xbf16> to vector<17x8xbf16>
    %278 = vector.extract_strided_slice %244 {offsets = [0, 48], sizes = [17, 8], strides = [1, 1]} : vector<17x96xbf16> to vector<17x8xbf16>
    %279 = vector.extract_strided_slice %244 {offsets = [0, 80], sizes = [17, 8], strides = [1, 1]} : vector<17x96xbf16> to vector<17x8xbf16>
    %cst_63 = arith.constant dense<0.000000e+00> : vector<17x17xf32>
    %280 = tpu.matmul %277, %278, %cst_63 {dimension_numbers = #tpu.dot_dimension_numbers<[1], [1], [0], [0], [0, 0, 1, 0], [], []>} : vector<17x8xbf16>, vector<17x8xbf16>, vector<17x17xf32> -> vector<17x17xf32>
    %cst_64 = arith.constant dense<0xFF800000> : vector<17xf32>
    %281 = vector.multi_reduction <maximumf>, %280, %cst_64 [1] : vector<17x17xf32> to vector<17xf32>
    %282 = vector.shape_cast %281 : vector<17xf32> to vector<17x1xf32>
    %283 = vector.broadcast %282 : vector<17x1xf32> to vector<17x17xf32>
    %284 = arith.subf %280, %283 : vector<17x17xf32>
    %285 = math.exp %284 : vector<17x17xf32>
    %cst_65 = arith.constant dense<0.000000e+00> : vector<17xf32>
    %286 = vector.multi_reduction <add>, %285, %cst_65 [1] : vector<17x17xf32> to vector<17xf32>
    %287 = vector.shape_cast %286 : vector<17xf32> to vector<17x1xf32>
    %288 = tpu.reciprocal %287 {approx = true} : vector<17x1xf32> -> vector<17x1xf32>
    %289 = arith.truncf %285 : vector<17x17xf32> to vector<17x17xbf16>
    %cst_66 = arith.constant dense<0.000000e+00> : vector<17x8xf32>
    %290 = tpu.matmul %289, %279, %cst_66 {dimension_numbers = #tpu.dot_dimension_numbers<[1], [0], [0], [1], [0, 0, 1, 1], [], []>} : vector<17x17xbf16>, vector<17x8xbf16>, vector<17x8xf32> -> vector<17x8xf32>
    %291 = vector.broadcast %288 : vector<17x1xf32> to vector<17x8xf32>
    %292 = arith.mulf %290, %291 : vector<17x8xf32>
    %293 = vector.extract_strided_slice %244 {offsets = [0, 24], sizes = [17, 8], strides = [1, 1]} : vector<17x96xbf16> to vector<17x8xbf16>
    %294 = vector.extract_strided_slice %244 {offsets = [0, 56], sizes = [17, 8], strides = [1, 1]} : vector<17x96xbf16> to vector<17x8xbf16>
    %295 = vector.extract_strided_slice %244 {offsets = [0, 88], sizes = [17, 8], strides = [1, 1]} : vector<17x96xbf16> to vector<17x8xbf16>
    %cst_67 = arith.constant dense<0.000000e+00> : vector<17x17xf32>
    %296 = tpu.matmul %293, %294, %cst_67 {dimension_numbers = #tpu.dot_dimension_numbers<[1], [1], [0], [0], [0, 0, 1, 0], [], []>} : vector<17x8xbf16>, vector<17x8xbf16>, vector<17x17xf32> -> vector<17x17xf32>
    %cst_68 = arith.constant dense<0xFF800000> : vector<17xf32>
    %297 = vector.multi_reduction <maximumf>, %296, %cst_68 [1] : vector<17x17xf32> to vector<17xf32>
    %298 = vector.shape_cast %297 : vector<17xf32> to vector<17x1xf32>
    %299 = vector.broadcast %298 : vector<17x1xf32> to vector<17x17xf32>
    %300 = arith.subf %296, %299 : vector<17x17xf32>
    %301 = math.exp %300 : vector<17x17xf32>
    %cst_69 = arith.constant dense<0.000000e+00> : vector<17xf32>
    %302 = vector.multi_reduction <add>, %301, %cst_69 [1] : vector<17x17xf32> to vector<17xf32>
    %303 = vector.shape_cast %302 : vector<17xf32> to vector<17x1xf32>
    %304 = tpu.reciprocal %303 {approx = true} : vector<17x1xf32> -> vector<17x1xf32>
    %305 = arith.truncf %301 : vector<17x17xf32> to vector<17x17xbf16>
    %cst_70 = arith.constant dense<0.000000e+00> : vector<17x8xf32>
    %306 = tpu.matmul %305, %295, %cst_70 {dimension_numbers = #tpu.dot_dimension_numbers<[1], [0], [0], [1], [0, 0, 1, 1], [], []>} : vector<17x17xbf16>, vector<17x8xbf16>, vector<17x8xf32> -> vector<17x8xf32>
    %307 = vector.broadcast %304 : vector<17x1xf32> to vector<17x8xf32>
    %308 = arith.mulf %306, %307 : vector<17x8xf32>
    %309 = tpu.concatenate %260, %276, %292, %308 in 1 : vector<17x8xf32>, vector<17x8xf32>, vector<17x8xf32>, vector<17x8xf32> -> vector<17x32xf32>
    %c34 = arith.constant 34 : index
    %c0_71 = arith.constant 0 : index
    %310 = vector.load %arg12[%c34, %c0_71] : memref<136x32xf32, #tpu.memory_space<vmem>>, vector<17x32xf32>
    tpu.vector_store %arg12[%c34, %c0_71], %309 {strides = array<i32>} : memref<136x32xf32, #tpu.memory_space<vmem>>, vector<17x32xf32>,
    %311 = vector.extract_strided_slice %106 {offsets = [51, 0], sizes = [17, 96], strides = [1, 1]} : vector<136x96xf32> to vector<17x96xf32>
    %312 = arith.truncf %311 : vector<17x96xf32> to vector<17x96xbf16>
    %313 = vector.extract_strided_slice %312 {offsets = [0, 0], sizes = [17, 8], strides = [1, 1]} : vector<17x96xbf16> to vector<17x8xbf16>
    %314 = vector.extract_strided_slice %312 {offsets = [0, 32], sizes = [17, 8], strides = [1, 1]} : vector<17x96xbf16> to vector<17x8xbf16>
    %315 = vector.extract_strided_slice %312 {offsets = [0, 64], sizes = [17, 8], strides = [1, 1]} : vector<17x96xbf16> to vector<17x8xbf16>
    %cst_72 = arith.constant dense<0.000000e+00> : vector<17x17xf32>
    %316 = tpu.matmul %313, %314, %cst_72 {dimension_numbers = #tpu.dot_dimension_numbers<[1], [1], [0], [0], [0, 0, 1, 0], [], []>} : vector<17x8xbf16>, vector<17x8xbf16>, vector<17x17xf32> -> vector<17x17xf32>
    %cst_73 = arith.constant dense<0xFF800000> : vector<17xf32>
    %317 = vector.multi_reduction <maximumf>, %316, %cst_73 [1] : vector<17x17xf32> to vector<17xf32>
    %318 = vector.shape_cast %317 : vector<17xf32> to vector<17x1xf32>
    %319 = vector.broadcast %318 : vector<17x1xf32> to vector<17x17xf32>
    %320 = arith.subf %316, %319 : vector<17x17xf32>
    %321 = math.exp %320 : vector<17x17xf32>
    %cst_74 = arith.constant dense<0.000000e+00> : vector<17xf32>
    %322 = vector.multi_reduction <add>, %321, %cst_74 [1] : vector<17x17xf32> to vector<17xf32>
    %323 = vector.shape_cast %322 : vector<17xf32> to vector<17x1xf32>
    %324 = tpu.reciprocal %323 {approx = true} : vector<17x1xf32> -> vector<17x1xf32>
    %325 = arith.truncf %321 : vector<17x17xf32> to vector<17x17xbf16>
    %cst_75 = arith.constant dense<0.000000e+00> : vector<17x8xf32>
    %326 = tpu.matmul %325, %315, %cst_75 {dimension_numbers = #tpu.dot_dimension_numbers<[1], [0], [0], [1], [0, 0, 1, 1], [], []>} : vector<17x17xbf16>, vector<17x8xbf16>, vector<17x8xf32> -> vector<17x8xf32>
    %327 = vector.broadcast %324 : vector<17x1xf32> to vector<17x8xf32>
    %328 = arith.mulf %326, %327 : vector<17x8xf32>
    %329 = vector.extract_strided_slice %312 {offsets = [0, 8], sizes = [17, 8], strides = [1, 1]} : vector<17x96xbf16> to vector<17x8xbf16>
    %330 = vector.extract_strided_slice %312 {offsets = [0, 40], sizes = [17, 8], strides = [1, 1]} : vector<17x96xbf16> to vector<17x8xbf16>
    %331 = vector.extract_strided_slice %312 {offsets = [0, 72], sizes = [17, 8], strides = [1, 1]} : vector<17x96xbf16> to vector<17x8xbf16>
    %cst_76 = arith.constant dense<0.000000e+00> : vector<17x17xf32>
    %332 = tpu.matmul %329, %330, %cst_76 {dimension_numbers = #tpu.dot_dimension_numbers<[1], [1], [0], [0], [0, 0, 1, 0], [], []>} : vector<17x8xbf16>, vector<17x8xbf16>, vector<17x17xf32> -> vector<17x17xf32>
    %cst_77 = arith.constant dense<0xFF800000> : vector<17xf32>
    %333 = vector.multi_reduction <maximumf>, %332, %cst_77 [1] : vector<17x17xf32> to vector<17xf32>
    %334 = vector.shape_cast %333 : vector<17xf32> to vector<17x1xf32>
    %335 = vector.broadcast %334 : vector<17x1xf32> to vector<17x17xf32>
    %336 = arith.subf %332, %335 : vector<17x17xf32>
    %337 = math.exp %336 : vector<17x17xf32>
    %cst_78 = arith.constant dense<0.000000e+00> : vector<17xf32>
    %338 = vector.multi_reduction <add>, %337, %cst_78 [1] : vector<17x17xf32> to vector<17xf32>
    %339 = vector.shape_cast %338 : vector<17xf32> to vector<17x1xf32>
    %340 = tpu.reciprocal %339 {approx = true} : vector<17x1xf32> -> vector<17x1xf32>
    %341 = arith.truncf %337 : vector<17x17xf32> to vector<17x17xbf16>
    %cst_79 = arith.constant dense<0.000000e+00> : vector<17x8xf32>
    %342 = tpu.matmul %341, %331, %cst_79 {dimension_numbers = #tpu.dot_dimension_numbers<[1], [0], [0], [1], [0, 0, 1, 1], [], []>} : vector<17x17xbf16>, vector<17x8xbf16>, vector<17x8xf32> -> vector<17x8xf32>
    %343 = vector.broadcast %340 : vector<17x1xf32> to vector<17x8xf32>
    %344 = arith.mulf %342, %343 : vector<17x8xf32>
    %345 = vector.extract_strided_slice %312 {offsets = [0, 16], sizes = [17, 8], strides = [1, 1]} : vector<17x96xbf16> to vector<17x8xbf16>
    %346 = vector.extract_strided_slice %312 {offsets = [0, 48], sizes = [17, 8], strides = [1, 1]} : vector<17x96xbf16> to vector<17x8xbf16>
    %347 = vector.extract_strided_slice %312 {offsets = [0, 80], sizes = [17, 8], strides = [1, 1]} : vector<17x96xbf16> to vector<17x8xbf16>
    %cst_80 = arith.constant dense<0.000000e+00> : vector<17x17xf32>
    %348 = tpu.matmul %345, %346, %cst_80 {dimension_numbers = #tpu.dot_dimension_numbers<[1], [1], [0], [0], [0, 0, 1, 0], [], []>} : vector<17x8xbf16>, vector<17x8xbf16>, vector<17x17xf32> -> vector<17x17xf32>
    %cst_81 = arith.constant dense<0xFF800000> : vector<17xf32>
    %349 = vector.multi_reduction <maximumf>, %348, %cst_81 [1] : vector<17x17xf32> to vector<17xf32>
    %350 = vector.shape_cast %349 : vector<17xf32> to vector<17x1xf32>
    %351 = vector.broadcast %350 : vector<17x1xf32> to vector<17x17xf32>
    %352 = arith.subf %348, %351 : vector<17x17xf32>
    %353 = math.exp %352 : vector<17x17xf32>
    %cst_82 = arith.constant dense<0.000000e+00> : vector<17xf32>
    %354 = vector.multi_reduction <add>, %353, %cst_82 [1] : vector<17x17xf32> to vector<17xf32>
    %355 = vector.shape_cast %354 : vector<17xf32> to vector<17x1xf32>
    %356 = tpu.reciprocal %355 {approx = true} : vector<17x1xf32> -> vector<17x1xf32>
    %357 = arith.truncf %353 : vector<17x17xf32> to vector<17x17xbf16>
    %cst_83 = arith.constant dense<0.000000e+00> : vector<17x8xf32>
    %358 = tpu.matmul %357, %347, %cst_83 {dimension_numbers = #tpu.dot_dimension_numbers<[1], [0], [0], [1], [0, 0, 1, 1], [], []>} : vector<17x17xbf16>, vector<17x8xbf16>, vector<17x8xf32> -> vector<17x8xf32>
    %359 = vector.broadcast %356 : vector<17x1xf32> to vector<17x8xf32>
    %360 = arith.mulf %358, %359 : vector<17x8xf32>
    %361 = vector.extract_strided_slice %312 {offsets = [0, 24], sizes = [17, 8], strides = [1, 1]} : vector<17x96xbf16> to vector<17x8xbf16>
    %362 = vector.extract_strided_slice %312 {offsets = [0, 56], sizes = [17, 8], strides = [1, 1]} : vector<17x96xbf16> to vector<17x8xbf16>
    %363 = vector.extract_strided_slice %312 {offsets = [0, 88], sizes = [17, 8], strides = [1, 1]} : vector<17x96xbf16> to vector<17x8xbf16>
    %cst_84 = arith.constant dense<0.000000e+00> : vector<17x17xf32>
    %364 = tpu.matmul %361, %362, %cst_84 {dimension_numbers = #tpu.dot_dimension_numbers<[1], [1], [0], [0], [0, 0, 1, 0], [], []>} : vector<17x8xbf16>, vector<17x8xbf16>, vector<17x17xf32> -> vector<17x17xf32>
    %cst_85 = arith.constant dense<0xFF800000> : vector<17xf32>
    %365 = vector.multi_reduction <maximumf>, %364, %cst_85 [1] : vector<17x17xf32> to vector<17xf32>
    %366 = vector.shape_cast %365 : vector<17xf32> to vector<17x1xf32>
    %367 = vector.broadcast %366 : vector<17x1xf32> to vector<17x17xf32>
    %368 = arith.subf %364, %367 : vector<17x17xf32>
    %369 = math.exp %368 : vector<17x17xf32>
    %cst_86 = arith.constant dense<0.000000e+00> : vector<17xf32>
    %370 = vector.multi_reduction <add>, %369, %cst_86 [1] : vector<17x17xf32> to vector<17xf32>
    %371 = vector.shape_cast %370 : vector<17xf32> to vector<17x1xf32>
    %372 = tpu.reciprocal %371 {approx = true} : vector<17x1xf32> -> vector<17x1xf32>
    %373 = arith.truncf %369 : vector<17x17xf32> to vector<17x17xbf16>
    %cst_87 = arith.constant dense<0.000000e+00> : vector<17x8xf32>
    %374 = tpu.matmul %373, %363, %cst_87 {dimension_numbers = #tpu.dot_dimension_numbers<[1], [0], [0], [1], [0, 0, 1, 1], [], []>} : vector<17x17xbf16>, vector<17x8xbf16>, vector<17x8xf32> -> vector<17x8xf32>
    %375 = vector.broadcast %372 : vector<17x1xf32> to vector<17x8xf32>
    %376 = arith.mulf %374, %375 : vector<17x8xf32>
    %377 = tpu.concatenate %328, %344, %360, %376 in 1 : vector<17x8xf32>, vector<17x8xf32>, vector<17x8xf32>, vector<17x8xf32> -> vector<17x32xf32>
    %c51 = arith.constant 51 : index
    %c0_88 = arith.constant 0 : index
    %378 = vector.load %arg12[%c51, %c0_88] : memref<136x32xf32, #tpu.memory_space<vmem>>, vector<17x32xf32>
    tpu.vector_store %arg12[%c51, %c0_88], %377 {strides = array<i32>} : memref<136x32xf32, #tpu.memory_space<vmem>>, vector<17x32xf32>,
    %379 = vector.extract_strided_slice %106 {offsets = [68, 0], sizes = [17, 96], strides = [1, 1]} : vector<136x96xf32> to vector<17x96xf32>
    %380 = arith.truncf %379 : vector<17x96xf32> to vector<17x96xbf16>
    %381 = vector.extract_strided_slice %380 {offsets = [0, 0], sizes = [17, 8], strides = [1, 1]} : vector<17x96xbf16> to vector<17x8xbf16>
    %382 = vector.extract_strided_slice %380 {offsets = [0, 32], sizes = [17, 8], strides = [1, 1]} : vector<17x96xbf16> to vector<17x8xbf16>
    %383 = vector.extract_strided_slice %380 {offsets = [0, 64], sizes = [17, 8], strides = [1, 1]} : vector<17x96xbf16> to vector<17x8xbf16>
    %cst_89 = arith.constant dense<0.000000e+00> : vector<17x17xf32>
    %384 = tpu.matmul %381, %382, %cst_89 {dimension_numbers = #tpu.dot_dimension_numbers<[1], [1], [0], [0], [0, 0, 1, 0], [], []>} : vector<17x8xbf16>, vector<17x8xbf16>, vector<17x17xf32> -> vector<17x17xf32>
    %cst_90 = arith.constant dense<0xFF800000> : vector<17xf32>
    %385 = vector.multi_reduction <maximumf>, %384, %cst_90 [1] : vector<17x17xf32> to vector<17xf32>
    %386 = vector.shape_cast %385 : vector<17xf32> to vector<17x1xf32>
    %387 = vector.broadcast %386 : vector<17x1xf32> to vector<17x17xf32>
    %388 = arith.subf %384, %387 : vector<17x17xf32>
    %389 = math.exp %388 : vector<17x17xf32>
    %cst_91 = arith.constant dense<0.000000e+00> : vector<17xf32>
    %390 = vector.multi_reduction <add>, %389, %cst_91 [1] : vector<17x17xf32> to vector<17xf32>
    %391 = vector.shape_cast %390 : vector<17xf32> to vector<17x1xf32>
    %392 = tpu.reciprocal %391 {approx = true} : vector<17x1xf32> -> vector<17x1xf32>
    %393 = arith.truncf %389 : vector<17x17xf32> to vector<17x17xbf16>
    %cst_92 = arith.constant dense<0.000000e+00> : vector<17x8xf32>
    %394 = tpu.matmul %393, %383, %cst_92 {dimension_numbers = #tpu.dot_dimension_numbers<[1], [0], [0], [1], [0, 0, 1, 1], [], []>} : vector<17x17xbf16>, vector<17x8xbf16>, vector<17x8xf32> -> vector<17x8xf32>
    %395 = vector.broadcast %392 : vector<17x1xf32> to vector<17x8xf32>
    %396 = arith.mulf %394, %395 : vector<17x8xf32>
    %397 = vector.extract_strided_slice %380 {offsets = [0, 8], sizes = [17, 8], strides = [1, 1]} : vector<17x96xbf16> to vector<17x8xbf16>
    %398 = vector.extract_strided_slice %380 {offsets = [0, 40], sizes = [17, 8], strides = [1, 1]} : vector<17x96xbf16> to vector<17x8xbf16>
    %399 = vector.extract_strided_slice %380 {offsets = [0, 72], sizes = [17, 8], strides = [1, 1]} : vector<17x96xbf16> to vector<17x8xbf16>
    %cst_93 = arith.constant dense<0.000000e+00> : vector<17x17xf32>
    %400 = tpu.matmul %397, %398, %cst_93 {dimension_numbers = #tpu.dot_dimension_numbers<[1], [1], [0], [0], [0, 0, 1, 0], [], []>} : vector<17x8xbf16>, vector<17x8xbf16>, vector<17x17xf32> -> vector<17x17xf32>
    %cst_94 = arith.constant dense<0xFF800000> : vector<17xf32>
    %401 = vector.multi_reduction <maximumf>, %400, %cst_94 [1] : vector<17x17xf32> to vector<17xf32>
    %402 = vector.shape_cast %401 : vector<17xf32> to vector<17x1xf32>
    %403 = vector.broadcast %402 : vector<17x1xf32> to vector<17x17xf32>
    %404 = arith.subf %400, %403 : vector<17x17xf32>
    %405 = math.exp %404 : vector<17x17xf32>
    %cst_95 = arith.constant dense<0.000000e+00> : vector<17xf32>
    %406 = vector.multi_reduction <add>, %405, %cst_95 [1] : vector<17x17xf32> to vector<17xf32>
    %407 = vector.shape_cast %406 : vector<17xf32> to vector<17x1xf32>
    %408 = tpu.reciprocal %407 {approx = true} : vector<17x1xf32> -> vector<17x1xf32>
    %409 = arith.truncf %405 : vector<17x17xf32> to vector<17x17xbf16>
    %cst_96 = arith.constant dense<0.000000e+00> : vector<17x8xf32>
    %410 = tpu.matmul %409, %399, %cst_96 {dimension_numbers = #tpu.dot_dimension_numbers<[1], [0], [0], [1], [0, 0, 1, 1], [], []>} : vector<17x17xbf16>, vector<17x8xbf16>, vector<17x8xf32> -> vector<17x8xf32>
    %411 = vector.broadcast %408 : vector<17x1xf32> to vector<17x8xf32>
    %412 = arith.mulf %410, %411 : vector<17x8xf32>
    %413 = vector.extract_strided_slice %380 {offsets = [0, 16], sizes = [17, 8], strides = [1, 1]} : vector<17x96xbf16> to vector<17x8xbf16>
    %414 = vector.extract_strided_slice %380 {offsets = [0, 48], sizes = [17, 8], strides = [1, 1]} : vector<17x96xbf16> to vector<17x8xbf16>
    %415 = vector.extract_strided_slice %380 {offsets = [0, 80], sizes = [17, 8], strides = [1, 1]} : vector<17x96xbf16> to vector<17x8xbf16>
    %cst_97 = arith.constant dense<0.000000e+00> : vector<17x17xf32>
    %416 = tpu.matmul %413, %414, %cst_97 {dimension_numbers = #tpu.dot_dimension_numbers<[1], [1], [0], [0], [0, 0, 1, 0], [], []>} : vector<17x8xbf16>, vector<17x8xbf16>, vector<17x17xf32> -> vector<17x17xf32>
    %cst_98 = arith.constant dense<0xFF800000> : vector<17xf32>
    %417 = vector.multi_reduction <maximumf>, %416, %cst_98 [1] : vector<17x17xf32> to vector<17xf32>
    %418 = vector.shape_cast %417 : vector<17xf32> to vector<17x1xf32>
    %419 = vector.broadcast %418 : vector<17x1xf32> to vector<17x17xf32>
    %420 = arith.subf %416, %419 : vector<17x17xf32>
    %421 = math.exp %420 : vector<17x17xf32>
    %cst_99 = arith.constant dense<0.000000e+00> : vector<17xf32>
    %422 = vector.multi_reduction <add>, %421, %cst_99 [1] : vector<17x17xf32> to vector<17xf32>
    %423 = vector.shape_cast %422 : vector<17xf32> to vector<17x1xf32>
    %424 = tpu.reciprocal %423 {approx = true} : vector<17x1xf32> -> vector<17x1xf32>
    %425 = arith.truncf %421 : vector<17x17xf32> to vector<17x17xbf16>
    %cst_100 = arith.constant dense<0.000000e+00> : vector<17x8xf32>
    %426 = tpu.matmul %425, %415, %cst_100 {dimension_numbers = #tpu.dot_dimension_numbers<[1], [0], [0], [1], [0, 0, 1, 1], [], []>} : vector<17x17xbf16>, vector<17x8xbf16>, vector<17x8xf32> -> vector<17x8xf32>
    %427 = vector.broadcast %424 : vector<17x1xf32> to vector<17x8xf32>
    %428 = arith.mulf %426, %427 : vector<17x8xf32>
    %429 = vector.extract_strided_slice %380 {offsets = [0, 24], sizes = [17, 8], strides = [1, 1]} : vector<17x96xbf16> to vector<17x8xbf16>
    %430 = vector.extract_strided_slice %380 {offsets = [0, 56], sizes = [17, 8], strides = [1, 1]} : vector<17x96xbf16> to vector<17x8xbf16>
    %431 = vector.extract_strided_slice %380 {offsets = [0, 88], sizes = [17, 8], strides = [1, 1]} : vector<17x96xbf16> to vector<17x8xbf16>
    %cst_101 = arith.constant dense<0.000000e+00> : vector<17x17xf32>
    %432 = tpu.matmul %429, %430, %cst_101 {dimension_numbers = #tpu.dot_dimension_numbers<[1], [1], [0], [0], [0, 0, 1, 0], [], []>} : vector<17x8xbf16>, vector<17x8xbf16>, vector<17x17xf32> -> vector<17x17xf32>
    %cst_102 = arith.constant dense<0xFF800000> : vector<17xf32>
    %433 = vector.multi_reduction <maximumf>, %432, %cst_102 [1] : vector<17x17xf32> to vector<17xf32>
    %434 = vector.shape_cast %433 : vector<17xf32> to vector<17x1xf32>
    %435 = vector.broadcast %434 : vector<17x1xf32> to vector<17x17xf32>
    %436 = arith.subf %432, %435 : vector<17x17xf32>
    %437 = math.exp %436 : vector<17x17xf32>
    %cst_103 = arith.constant dense<0.000000e+00> : vector<17xf32>
    %438 = vector.multi_reduction <add>, %437, %cst_103 [1] : vector<17x17xf32> to vector<17xf32>
    %439 = vector.shape_cast %438 : vector<17xf32> to vector<17x1xf32>
    %440 = tpu.reciprocal %439 {approx = true} : vector<17x1xf32> -> vector<17x1xf32>
    %441 = arith.truncf %437 : vector<17x17xf32> to vector<17x17xbf16>
    %cst_104 = arith.constant dense<0.000000e+00> : vector<17x8xf32>
    %442 = tpu.matmul %441, %431, %cst_104 {dimension_numbers = #tpu.dot_dimension_numbers<[1], [0], [0], [1], [0, 0, 1, 1], [], []>} : vector<17x17xbf16>, vector<17x8xbf16>, vector<17x8xf32> -> vector<17x8xf32>
    %443 = vector.broadcast %440 : vector<17x1xf32> to vector<17x8xf32>
    %444 = arith.mulf %442, %443 : vector<17x8xf32>
    %445 = tpu.concatenate %396, %412, %428, %444 in 1 : vector<17x8xf32>, vector<17x8xf32>, vector<17x8xf32>, vector<17x8xf32> -> vector<17x32xf32>
    %c68 = arith.constant 68 : index
    %c0_105 = arith.constant 0 : index
    %446 = vector.load %arg12[%c68, %c0_105] : memref<136x32xf32, #tpu.memory_space<vmem>>, vector<17x32xf32>
    tpu.vector_store %arg12[%c68, %c0_105], %445 {strides = array<i32>} : memref<136x32xf32, #tpu.memory_space<vmem>>, vector<17x32xf32>,
    %447 = vector.extract_strided_slice %106 {offsets = [85, 0], sizes = [17, 96], strides = [1, 1]} : vector<136x96xf32> to vector<17x96xf32>
    %448 = arith.truncf %447 : vector<17x96xf32> to vector<17x96xbf16>
    %449 = vector.extract_strided_slice %448 {offsets = [0, 0], sizes = [17, 8], strides = [1, 1]} : vector<17x96xbf16> to vector<17x8xbf16>
    %450 = vector.extract_strided_slice %448 {offsets = [0, 32], sizes = [17, 8], strides = [1, 1]} : vector<17x96xbf16> to vector<17x8xbf16>
    %451 = vector.extract_strided_slice %448 {offsets = [0, 64], sizes = [17, 8], strides = [1, 1]} : vector<17x96xbf16> to vector<17x8xbf16>
    %cst_106 = arith.constant dense<0.000000e+00> : vector<17x17xf32>
    %452 = tpu.matmul %449, %450, %cst_106 {dimension_numbers = #tpu.dot_dimension_numbers<[1], [1], [0], [0], [0, 0, 1, 0], [], []>} : vector<17x8xbf16>, vector<17x8xbf16>, vector<17x17xf32> -> vector<17x17xf32>
    %cst_107 = arith.constant dense<0xFF800000> : vector<17xf32>
    %453 = vector.multi_reduction <maximumf>, %452, %cst_107 [1] : vector<17x17xf32> to vector<17xf32>
    %454 = vector.shape_cast %453 : vector<17xf32> to vector<17x1xf32>
    %455 = vector.broadcast %454 : vector<17x1xf32> to vector<17x17xf32>
    %456 = arith.subf %452, %455 : vector<17x17xf32>
    %457 = math.exp %456 : vector<17x17xf32>
    %cst_108 = arith.constant dense<0.000000e+00> : vector<17xf32>
    %458 = vector.multi_reduction <add>, %457, %cst_108 [1] : vector<17x17xf32> to vector<17xf32>
    %459 = vector.shape_cast %458 : vector<17xf32> to vector<17x1xf32>
    %460 = tpu.reciprocal %459 {approx = true} : vector<17x1xf32> -> vector<17x1xf32>
    %461 = arith.truncf %457 : vector<17x17xf32> to vector<17x17xbf16>
    %cst_109 = arith.constant dense<0.000000e+00> : vector<17x8xf32>
    %462 = tpu.matmul %461, %451, %cst_109 {dimension_numbers = #tpu.dot_dimension_numbers<[1], [0], [0], [1], [0, 0, 1, 1], [], []>} : vector<17x17xbf16>, vector<17x8xbf16>, vector<17x8xf32> -> vector<17x8xf32>
    %463 = vector.broadcast %460 : vector<17x1xf32> to vector<17x8xf32>
    %464 = arith.mulf %462, %463 : vector<17x8xf32>
    %465 = vector.extract_strided_slice %448 {offsets = [0, 8], sizes = [17, 8], strides = [1, 1]} : vector<17x96xbf16> to vector<17x8xbf16>
    %466 = vector.extract_strided_slice %448 {offsets = [0, 40], sizes = [17, 8], strides = [1, 1]} : vector<17x96xbf16> to vector<17x8xbf16>
    %467 = vector.extract_strided_slice %448 {offsets = [0, 72], sizes = [17, 8], strides = [1, 1]} : vector<17x96xbf16> to vector<17x8xbf16>
    %cst_110 = arith.constant dense<0.000000e+00> : vector<17x17xf32>
    %468 = tpu.matmul %465, %466, %cst_110 {dimension_numbers = #tpu.dot_dimension_numbers<[1], [1], [0], [0], [0, 0, 1, 0], [], []>} : vector<17x8xbf16>, vector<17x8xbf16>, vector<17x17xf32> -> vector<17x17xf32>
    %cst_111 = arith.constant dense<0xFF800000> : vector<17xf32>
    %469 = vector.multi_reduction <maximumf>, %468, %cst_111 [1] : vector<17x17xf32> to vector<17xf32>
    %470 = vector.shape_cast %469 : vector<17xf32> to vector<17x1xf32>
    %471 = vector.broadcast %470 : vector<17x1xf32> to vector<17x17xf32>
    %472 = arith.subf %468, %471 : vector<17x17xf32>
    %473 = math.exp %472 : vector<17x17xf32>
    %cst_112 = arith.constant dense<0.000000e+00> : vector<17xf32>
    %474 = vector.multi_reduction <add>, %473, %cst_112 [1] : vector<17x17xf32> to vector<17xf32>
    %475 = vector.shape_cast %474 : vector<17xf32> to vector<17x1xf32>
    %476 = tpu.reciprocal %475 {approx = true} : vector<17x1xf32> -> vector<17x1xf32>
    %477 = arith.truncf %473 : vector<17x17xf32> to vector<17x17xbf16>
    %cst_113 = arith.constant dense<0.000000e+00> : vector<17x8xf32>
    %478 = tpu.matmul %477, %467, %cst_113 {dimension_numbers = #tpu.dot_dimension_numbers<[1], [0], [0], [1], [0, 0, 1, 1], [], []>} : vector<17x17xbf16>, vector<17x8xbf16>, vector<17x8xf32> -> vector<17x8xf32>
    %479 = vector.broadcast %476 : vector<17x1xf32> to vector<17x8xf32>
    %480 = arith.mulf %478, %479 : vector<17x8xf32>
    %481 = vector.extract_strided_slice %448 {offsets = [0, 16], sizes = [17, 8], strides = [1, 1]} : vector<17x96xbf16> to vector<17x8xbf16>
    %482 = vector.extract_strided_slice %448 {offsets = [0, 48], sizes = [17, 8], strides = [1, 1]} : vector<17x96xbf16> to vector<17x8xbf16>
    %483 = vector.extract_strided_slice %448 {offsets = [0, 80], sizes = [17, 8], strides = [1, 1]} : vector<17x96xbf16> to vector<17x8xbf16>
    %cst_114 = arith.constant dense<0.000000e+00> : vector<17x17xf32>
    %484 = tpu.matmul %481, %482, %cst_114 {dimension_numbers = #tpu.dot_dimension_numbers<[1], [1], [0], [0], [0, 0, 1, 0], [], []>} : vector<17x8xbf16>, vector<17x8xbf16>, vector<17x17xf32> -> vector<17x17xf32>
    %cst_115 = arith.constant dense<0xFF800000> : vector<17xf32>
    %485 = vector.multi_reduction <maximumf>, %484, %cst_115 [1] : vector<17x17xf32> to vector<17xf32>
    %486 = vector.shape_cast %485 : vector<17xf32> to vector<17x1xf32>
    %487 = vector.broadcast %486 : vector<17x1xf32> to vector<17x17xf32>
    %488 = arith.subf %484, %487 : vector<17x17xf32>
    %489 = math.exp %488 : vector<17x17xf32>
    %cst_116 = arith.constant dense<0.000000e+00> : vector<17xf32>
    %490 = vector.multi_reduction <add>, %489, %cst_116 [1] : vector<17x17xf32> to vector<17xf32>
    %491 = vector.shape_cast %490 : vector<17xf32> to vector<17x1xf32>
    %492 = tpu.reciprocal %491 {approx = true} : vector<17x1xf32> -> vector<17x1xf32>
    %493 = arith.truncf %489 : vector<17x17xf32> to vector<17x17xbf16>
    %cst_117 = arith.constant dense<0.000000e+00> : vector<17x8xf32>
    %494 = tpu.matmul %493, %483, %cst_117 {dimension_numbers = #tpu.dot_dimension_numbers<[1], [0], [0], [1], [0, 0, 1, 1], [], []>} : vector<17x17xbf16>, vector<17x8xbf16>, vector<17x8xf32> -> vector<17x8xf32>
    %495 = vector.broadcast %492 : vector<17x1xf32> to vector<17x8xf32>
    %496 = arith.mulf %494, %495 : vector<17x8xf32>
    %497 = vector.extract_strided_slice %448 {offsets = [0, 24], sizes = [17, 8], strides = [1, 1]} : vector<17x96xbf16> to vector<17x8xbf16>
    %498 = vector.extract_strided_slice %448 {offsets = [0, 56], sizes = [17, 8], strides = [1, 1]} : vector<17x96xbf16> to vector<17x8xbf16>
    %499 = vector.extract_strided_slice %448 {offsets = [0, 88], sizes = [17, 8], strides = [1, 1]} : vector<17x96xbf16> to vector<17x8xbf16>
    %cst_118 = arith.constant dense<0.000000e+00> : vector<17x17xf32>
    %500 = tpu.matmul %497, %498, %cst_118 {dimension_numbers = #tpu.dot_dimension_numbers<[1], [1], [0], [0], [0, 0, 1, 0], [], []>} : vector<17x8xbf16>, vector<17x8xbf16>, vector<17x17xf32> -> vector<17x17xf32>
    %cst_119 = arith.constant dense<0xFF800000> : vector<17xf32>
    %501 = vector.multi_reduction <maximumf>, %500, %cst_119 [1] : vector<17x17xf32> to vector<17xf32>
    %502 = vector.shape_cast %501 : vector<17xf32> to vector<17x1xf32>
    %503 = vector.broadcast %502 : vector<17x1xf32> to vector<17x17xf32>
    %504 = arith.subf %500, %503 : vector<17x17xf32>
    %505 = math.exp %504 : vector<17x17xf32>
    %cst_120 = arith.constant dense<0.000000e+00> : vector<17xf32>
    %506 = vector.multi_reduction <add>, %505, %cst_120 [1] : vector<17x17xf32> to vector<17xf32>
    %507 = vector.shape_cast %506 : vector<17xf32> to vector<17x1xf32>
    %508 = tpu.reciprocal %507 {approx = true} : vector<17x1xf32> -> vector<17x1xf32>
    %509 = arith.truncf %505 : vector<17x17xf32> to vector<17x17xbf16>
    %cst_121 = arith.constant dense<0.000000e+00> : vector<17x8xf32>
    %510 = tpu.matmul %509, %499, %cst_121 {dimension_numbers = #tpu.dot_dimension_numbers<[1], [0], [0], [1], [0, 0, 1, 1], [], []>} : vector<17x17xbf16>, vector<17x8xbf16>, vector<17x8xf32> -> vector<17x8xf32>
    %511 = vector.broadcast %508 : vector<17x1xf32> to vector<17x8xf32>
    %512 = arith.mulf %510, %511 : vector<17x8xf32>
    %513 = tpu.concatenate %464, %480, %496, %512 in 1 : vector<17x8xf32>, vector<17x8xf32>, vector<17x8xf32>, vector<17x8xf32> -> vector<17x32xf32>
    %c85 = arith.constant 85 : index
    %c0_122 = arith.constant 0 : index
    %514 = vector.load %arg12[%c85, %c0_122] : memref<136x32xf32, #tpu.memory_space<vmem>>, vector<17x32xf32>
    tpu.vector_store %arg12[%c85, %c0_122], %513 {strides = array<i32>} : memref<136x32xf32, #tpu.memory_space<vmem>>, vector<17x32xf32>,
    %515 = vector.extract_strided_slice %106 {offsets = [102, 0], sizes = [17, 96], strides = [1, 1]} : vector<136x96xf32> to vector<17x96xf32>
    %516 = arith.truncf %515 : vector<17x96xf32> to vector<17x96xbf16>
    %517 = vector.extract_strided_slice %516 {offsets = [0, 0], sizes = [17, 8], strides = [1, 1]} : vector<17x96xbf16> to vector<17x8xbf16>
    %518 = vector.extract_strided_slice %516 {offsets = [0, 32], sizes = [17, 8], strides = [1, 1]} : vector<17x96xbf16> to vector<17x8xbf16>
    %519 = vector.extract_strided_slice %516 {offsets = [0, 64], sizes = [17, 8], strides = [1, 1]} : vector<17x96xbf16> to vector<17x8xbf16>
    %cst_123 = arith.constant dense<0.000000e+00> : vector<17x17xf32>
    %520 = tpu.matmul %517, %518, %cst_123 {dimension_numbers = #tpu.dot_dimension_numbers<[1], [1], [0], [0], [0, 0, 1, 0], [], []>} : vector<17x8xbf16>, vector<17x8xbf16>, vector<17x17xf32> -> vector<17x17xf32>
    %cst_124 = arith.constant dense<0xFF800000> : vector<17xf32>
    %521 = vector.multi_reduction <maximumf>, %520, %cst_124 [1] : vector<17x17xf32> to vector<17xf32>
    %522 = vector.shape_cast %521 : vector<17xf32> to vector<17x1xf32>
    %523 = vector.broadcast %522 : vector<17x1xf32> to vector<17x17xf32>
    %524 = arith.subf %520, %523 : vector<17x17xf32>
    %525 = math.exp %524 : vector<17x17xf32>
    %cst_125 = arith.constant dense<0.000000e+00> : vector<17xf32>
    %526 = vector.multi_reduction <add>, %525, %cst_125 [1] : vector<17x17xf32> to vector<17xf32>
    %527 = vector.shape_cast %526 : vector<17xf32> to vector<17x1xf32>
    %528 = tpu.reciprocal %527 {approx = true} : vector<17x1xf32> -> vector<17x1xf32>
    %529 = arith.truncf %525 : vector<17x17xf32> to vector<17x17xbf16>
    %cst_126 = arith.constant dense<0.000000e+00> : vector<17x8xf32>
    %530 = tpu.matmul %529, %519, %cst_126 {dimension_numbers = #tpu.dot_dimension_numbers<[1], [0], [0], [1], [0, 0, 1, 1], [], []>} : vector<17x17xbf16>, vector<17x8xbf16>, vector<17x8xf32> -> vector<17x8xf32>
    %531 = vector.broadcast %528 : vector<17x1xf32> to vector<17x8xf32>
    %532 = arith.mulf %530, %531 : vector<17x8xf32>
    %533 = vector.extract_strided_slice %516 {offsets = [0, 8], sizes = [17, 8], strides = [1, 1]} : vector<17x96xbf16> to vector<17x8xbf16>
    %534 = vector.extract_strided_slice %516 {offsets = [0, 40], sizes = [17, 8], strides = [1, 1]} : vector<17x96xbf16> to vector<17x8xbf16>
    %535 = vector.extract_strided_slice %516 {offsets = [0, 72], sizes = [17, 8], strides = [1, 1]} : vector<17x96xbf16> to vector<17x8xbf16>
    %cst_127 = arith.constant dense<0.000000e+00> : vector<17x17xf32>
    %536 = tpu.matmul %533, %534, %cst_127 {dimension_numbers = #tpu.dot_dimension_numbers<[1], [1], [0], [0], [0, 0, 1, 0], [], []>} : vector<17x8xbf16>, vector<17x8xbf16>, vector<17x17xf32> -> vector<17x17xf32>
    %cst_128 = arith.constant dense<0xFF800000> : vector<17xf32>
    %537 = vector.multi_reduction <maximumf>, %536, %cst_128 [1] : vector<17x17xf32> to vector<17xf32>
    %538 = vector.shape_cast %537 : vector<17xf32> to vector<17x1xf32>
    %539 = vector.broadcast %538 : vector<17x1xf32> to vector<17x17xf32>
    %540 = arith.subf %536, %539 : vector<17x17xf32>
    %541 = math.exp %540 : vector<17x17xf32>
    %cst_129 = arith.constant dense<0.000000e+00> : vector<17xf32>
    %542 = vector.multi_reduction <add>, %541, %cst_129 [1] : vector<17x17xf32> to vector<17xf32>
    %543 = vector.shape_cast %542 : vector<17xf32> to vector<17x1xf32>
    %544 = tpu.reciprocal %543 {approx = true} : vector<17x1xf32> -> vector<17x1xf32>
    %545 = arith.truncf %541 : vector<17x17xf32> to vector<17x17xbf16>
    %cst_130 = arith.constant dense<0.000000e+00> : vector<17x8xf32>
    %546 = tpu.matmul %545, %535, %cst_130 {dimension_numbers = #tpu.dot_dimension_numbers<[1], [0], [0], [1], [0, 0, 1, 1], [], []>} : vector<17x17xbf16>, vector<17x8xbf16>, vector<17x8xf32> -> vector<17x8xf32>
    %547 = vector.broadcast %544 : vector<17x1xf32> to vector<17x8xf32>
    %548 = arith.mulf %546, %547 : vector<17x8xf32>
    %549 = vector.extract_strided_slice %516 {offsets = [0, 16], sizes = [17, 8], strides = [1, 1]} : vector<17x96xbf16> to vector<17x8xbf16>
    %550 = vector.extract_strided_slice %516 {offsets = [0, 48], sizes = [17, 8], strides = [1, 1]} : vector<17x96xbf16> to vector<17x8xbf16>
    %551 = vector.extract_strided_slice %516 {offsets = [0, 80], sizes = [17, 8], strides = [1, 1]} : vector<17x96xbf16> to vector<17x8xbf16>
    %cst_131 = arith.constant dense<0.000000e+00> : vector<17x17xf32>
    %552 = tpu.matmul %549, %550, %cst_131 {dimension_numbers = #tpu.dot_dimension_numbers<[1], [1], [0], [0], [0, 0, 1, 0], [], []>} : vector<17x8xbf16>, vector<17x8xbf16>, vector<17x17xf32> -> vector<17x17xf32>
    %cst_132 = arith.constant dense<0xFF800000> : vector<17xf32>
    %553 = vector.multi_reduction <maximumf>, %552, %cst_132 [1] : vector<17x17xf32> to vector<17xf32>
    %554 = vector.shape_cast %553 : vector<17xf32> to vector<17x1xf32>
    %555 = vector.broadcast %554 : vector<17x1xf32> to vector<17x17xf32>
    %556 = arith.subf %552, %555 : vector<17x17xf32>
    %557 = math.exp %556 : vector<17x17xf32>
    %cst_133 = arith.constant dense<0.000000e+00> : vector<17xf32>
    %558 = vector.multi_reduction <add>, %557, %cst_133 [1] : vector<17x17xf32> to vector<17xf32>
    %559 = vector.shape_cast %558 : vector<17xf32> to vector<17x1xf32>
    %560 = tpu.reciprocal %559 {approx = true} : vector<17x1xf32> -> vector<17x1xf32>
    %561 = arith.truncf %557 : vector<17x17xf32> to vector<17x17xbf16>
    %cst_134 = arith.constant dense<0.000000e+00> : vector<17x8xf32>
    %562 = tpu.matmul %561, %551, %cst_134 {dimension_numbers = #tpu.dot_dimension_numbers<[1], [0], [0], [1], [0, 0, 1, 1], [], []>} : vector<17x17xbf16>, vector<17x8xbf16>, vector<17x8xf32> -> vector<17x8xf32>
    %563 = vector.broadcast %560 : vector<17x1xf32> to vector<17x8xf32>
    %564 = arith.mulf %562, %563 : vector<17x8xf32>
    %565 = vector.extract_strided_slice %516 {offsets = [0, 24], sizes = [17, 8], strides = [1, 1]} : vector<17x96xbf16> to vector<17x8xbf16>
    %566 = vector.extract_strided_slice %516 {offsets = [0, 56], sizes = [17, 8], strides = [1, 1]} : vector<17x96xbf16> to vector<17x8xbf16>
    %567 = vector.extract_strided_slice %516 {offsets = [0, 88], sizes = [17, 8], strides = [1, 1]} : vector<17x96xbf16> to vector<17x8xbf16>
    %cst_135 = arith.constant dense<0.000000e+00> : vector<17x17xf32>
    %568 = tpu.matmul %565, %566, %cst_135 {dimension_numbers = #tpu.dot_dimension_numbers<[1], [1], [0], [0], [0, 0, 1, 0], [], []>} : vector<17x8xbf16>, vector<17x8xbf16>, vector<17x17xf32> -> vector<17x17xf32>
    %cst_136 = arith.constant dense<0xFF800000> : vector<17xf32>
    %569 = vector.multi_reduction <maximumf>, %568, %cst_136 [1] : vector<17x17xf32> to vector<17xf32>
    %570 = vector.shape_cast %569 : vector<17xf32> to vector<17x1xf32>
    %571 = vector.broadcast %570 : vector<17x1xf32> to vector<17x17xf32>
    %572 = arith.subf %568, %571 : vector<17x17xf32>
    %573 = math.exp %572 : vector<17x17xf32>
    %cst_137 = arith.constant dense<0.000000e+00> : vector<17xf32>
    %574 = vector.multi_reduction <add>, %573, %cst_137 [1] : vector<17x17xf32> to vector<17xf32>
    %575 = vector.shape_cast %574 : vector<17xf32> to vector<17x1xf32>
    %576 = tpu.reciprocal %575 {approx = true} : vector<17x1xf32> -> vector<17x1xf32>
    %577 = arith.truncf %573 : vector<17x17xf32> to vector<17x17xbf16>
    %cst_138 = arith.constant dense<0.000000e+00> : vector<17x8xf32>
    %578 = tpu.matmul %577, %567, %cst_138 {dimension_numbers = #tpu.dot_dimension_numbers<[1], [0], [0], [1], [0, 0, 1, 1], [], []>} : vector<17x17xbf16>, vector<17x8xbf16>, vector<17x8xf32> -> vector<17x8xf32>
    %579 = vector.broadcast %576 : vector<17x1xf32> to vector<17x8xf32>
    %580 = arith.mulf %578, %579 : vector<17x8xf32>
    %581 = tpu.concatenate %532, %548, %564, %580 in 1 : vector<17x8xf32>, vector<17x8xf32>, vector<17x8xf32>, vector<17x8xf32> -> vector<17x32xf32>
    %c102 = arith.constant 102 : index
    %c0_139 = arith.constant 0 : index
    %582 = vector.load %arg12[%c102, %c0_139] : memref<136x32xf32, #tpu.memory_space<vmem>>, vector<17x32xf32>
    tpu.vector_store %arg12[%c102, %c0_139], %581 {strides = array<i32>} : memref<136x32xf32, #tpu.memory_space<vmem>>, vector<17x32xf32>,
    %583 = vector.extract_strided_slice %106 {offsets = [119, 0], sizes = [17, 96], strides = [1, 1]} : vector<136x96xf32> to vector<17x96xf32>
    %584 = arith.truncf %583 : vector<17x96xf32> to vector<17x96xbf16>
    %585 = vector.extract_strided_slice %584 {offsets = [0, 0], sizes = [17, 8], strides = [1, 1]} : vector<17x96xbf16> to vector<17x8xbf16>
    %586 = vector.extract_strided_slice %584 {offsets = [0, 32], sizes = [17, 8], strides = [1, 1]} : vector<17x96xbf16> to vector<17x8xbf16>
    %587 = vector.extract_strided_slice %584 {offsets = [0, 64], sizes = [17, 8], strides = [1, 1]} : vector<17x96xbf16> to vector<17x8xbf16>
    %cst_140 = arith.constant dense<0.000000e+00> : vector<17x17xf32>
    %588 = tpu.matmul %585, %586, %cst_140 {dimension_numbers = #tpu.dot_dimension_numbers<[1], [1], [0], [0], [0, 0, 1, 0], [], []>} : vector<17x8xbf16>, vector<17x8xbf16>, vector<17x17xf32> -> vector<17x17xf32>
    %cst_141 = arith.constant dense<0xFF800000> : vector<17xf32>
    %589 = vector.multi_reduction <maximumf>, %588, %cst_141 [1] : vector<17x17xf32> to vector<17xf32>
    %590 = vector.shape_cast %589 : vector<17xf32> to vector<17x1xf32>
    %591 = vector.broadcast %590 : vector<17x1xf32> to vector<17x17xf32>
    %592 = arith.subf %588, %591 : vector<17x17xf32>
    %593 = math.exp %592 : vector<17x17xf32>
    %cst_142 = arith.constant dense<0.000000e+00> : vector<17xf32>
    %594 = vector.multi_reduction <add>, %593, %cst_142 [1] : vector<17x17xf32> to vector<17xf32>
    %595 = vector.shape_cast %594 : vector<17xf32> to vector<17x1xf32>
    %596 = tpu.reciprocal %595 {approx = true} : vector<17x1xf32> -> vector<17x1xf32>
    %597 = arith.truncf %593 : vector<17x17xf32> to vector<17x17xbf16>
    %cst_143 = arith.constant dense<0.000000e+00> : vector<17x8xf32>
    %598 = tpu.matmul %597, %587, %cst_143 {dimension_numbers = #tpu.dot_dimension_numbers<[1], [0], [0], [1], [0, 0, 1, 1], [], []>} : vector<17x17xbf16>, vector<17x8xbf16>, vector<17x8xf32> -> vector<17x8xf32>
    %599 = vector.broadcast %596 : vector<17x1xf32> to vector<17x8xf32>
    %600 = arith.mulf %598, %599 : vector<17x8xf32>
    %601 = vector.extract_strided_slice %584 {offsets = [0, 8], sizes = [17, 8], strides = [1, 1]} : vector<17x96xbf16> to vector<17x8xbf16>
    %602 = vector.extract_strided_slice %584 {offsets = [0, 40], sizes = [17, 8], strides = [1, 1]} : vector<17x96xbf16> to vector<17x8xbf16>
    %603 = vector.extract_strided_slice %584 {offsets = [0, 72], sizes = [17, 8], strides = [1, 1]} : vector<17x96xbf16> to vector<17x8xbf16>
    %cst_144 = arith.constant dense<0.000000e+00> : vector<17x17xf32>
    %604 = tpu.matmul %601, %602, %cst_144 {dimension_numbers = #tpu.dot_dimension_numbers<[1], [1], [0], [0], [0, 0, 1, 0], [], []>} : vector<17x8xbf16>, vector<17x8xbf16>, vector<17x17xf32> -> vector<17x17xf32>
    %cst_145 = arith.constant dense<0xFF800000> : vector<17xf32>
    %605 = vector.multi_reduction <maximumf>, %604, %cst_145 [1] : vector<17x17xf32> to vector<17xf32>
    %606 = vector.shape_cast %605 : vector<17xf32> to vector<17x1xf32>
    %607 = vector.broadcast %606 : vector<17x1xf32> to vector<17x17xf32>
    %608 = arith.subf %604, %607 : vector<17x17xf32>
    %609 = math.exp %608 : vector<17x17xf32>
    %cst_146 = arith.constant dense<0.000000e+00> : vector<17xf32>
    %610 = vector.multi_reduction <add>, %609, %cst_146 [1] : vector<17x17xf32> to vector<17xf32>
    %611 = vector.shape_cast %610 : vector<17xf32> to vector<17x1xf32>
    %612 = tpu.reciprocal %611 {approx = true} : vector<17x1xf32> -> vector<17x1xf32>
    %613 = arith.truncf %609 : vector<17x17xf32> to vector<17x17xbf16>
    %cst_147 = arith.constant dense<0.000000e+00> : vector<17x8xf32>
    %614 = tpu.matmul %613, %603, %cst_147 {dimension_numbers = #tpu.dot_dimension_numbers<[1], [0], [0], [1], [0, 0, 1, 1], [], []>} : vector<17x17xbf16>, vector<17x8xbf16>, vector<17x8xf32> -> vector<17x8xf32>
    %615 = vector.broadcast %612 : vector<17x1xf32> to vector<17x8xf32>
    %616 = arith.mulf %614, %615 : vector<17x8xf32>
    %617 = vector.extract_strided_slice %584 {offsets = [0, 16], sizes = [17, 8], strides = [1, 1]} : vector<17x96xbf16> to vector<17x8xbf16>
    %618 = vector.extract_strided_slice %584 {offsets = [0, 48], sizes = [17, 8], strides = [1, 1]} : vector<17x96xbf16> to vector<17x8xbf16>
    %619 = vector.extract_strided_slice %584 {offsets = [0, 80], sizes = [17, 8], strides = [1, 1]} : vector<17x96xbf16> to vector<17x8xbf16>
    %cst_148 = arith.constant dense<0.000000e+00> : vector<17x17xf32>
    %620 = tpu.matmul %617, %618, %cst_148 {dimension_numbers = #tpu.dot_dimension_numbers<[1], [1], [0], [0], [0, 0, 1, 0], [], []>} : vector<17x8xbf16>, vector<17x8xbf16>, vector<17x17xf32> -> vector<17x17xf32>
    %cst_149 = arith.constant dense<0xFF800000> : vector<17xf32>
    %621 = vector.multi_reduction <maximumf>, %620, %cst_149 [1] : vector<17x17xf32> to vector<17xf32>
    %622 = vector.shape_cast %621 : vector<17xf32> to vector<17x1xf32>
    %623 = vector.broadcast %622 : vector<17x1xf32> to vector<17x17xf32>
    %624 = arith.subf %620, %623 : vector<17x17xf32>
    %625 = math.exp %624 : vector<17x17xf32>
    %cst_150 = arith.constant dense<0.000000e+00> : vector<17xf32>
    %626 = vector.multi_reduction <add>, %625, %cst_150 [1] : vector<17x17xf32> to vector<17xf32>
    %627 = vector.shape_cast %626 : vector<17xf32> to vector<17x1xf32>
    %628 = tpu.reciprocal %627 {approx = true} : vector<17x1xf32> -> vector<17x1xf32>
    %629 = arith.truncf %625 : vector<17x17xf32> to vector<17x17xbf16>
    %cst_151 = arith.constant dense<0.000000e+00> : vector<17x8xf32>
    %630 = tpu.matmul %629, %619, %cst_151 {dimension_numbers = #tpu.dot_dimension_numbers<[1], [0], [0], [1], [0, 0, 1, 1], [], []>} : vector<17x17xbf16>, vector<17x8xbf16>, vector<17x8xf32> -> vector<17x8xf32>
    %631 = vector.broadcast %628 : vector<17x1xf32> to vector<17x8xf32>
    %632 = arith.mulf %630, %631 : vector<17x8xf32>
    %633 = vector.extract_strided_slice %584 {offsets = [0, 24], sizes = [17, 8], strides = [1, 1]} : vector<17x96xbf16> to vector<17x8xbf16>
    %634 = vector.extract_strided_slice %584 {offsets = [0, 56], sizes = [17, 8], strides = [1, 1]} : vector<17x96xbf16> to vector<17x8xbf16>
    %635 = vector.extract_strided_slice %584 {offsets = [0, 88], sizes = [17, 8], strides = [1, 1]} : vector<17x96xbf16> to vector<17x8xbf16>
    %cst_152 = arith.constant dense<0.000000e+00> : vector<17x17xf32>
    %636 = tpu.matmul %633, %634, %cst_152 {dimension_numbers = #tpu.dot_dimension_numbers<[1], [1], [0], [0], [0, 0, 1, 0], [], []>} : vector<17x8xbf16>, vector<17x8xbf16>, vector<17x17xf32> -> vector<17x17xf32>
    %cst_153 = arith.constant dense<0xFF800000> : vector<17xf32>
    %637 = vector.multi_reduction <maximumf>, %636, %cst_153 [1] : vector<17x17xf32> to vector<17xf32>
    %638 = vector.shape_cast %637 : vector<17xf32> to vector<17x1xf32>
    %639 = vector.broadcast %638 : vector<17x1xf32> to vector<17x17xf32>
    %640 = arith.subf %636, %639 : vector<17x17xf32>
    %641 = math.exp %640 : vector<17x17xf32>
    %cst_154 = arith.constant dense<0.000000e+00> : vector<17xf32>
    %642 = vector.multi_reduction <add>, %641, %cst_154 [1] : vector<17x17xf32> to vector<17xf32>
    %643 = vector.shape_cast %642 : vector<17xf32> to vector<17x1xf32>
    %644 = tpu.reciprocal %643 {approx = true} : vector<17x1xf32> -> vector<17x1xf32>
    %645 = arith.truncf %641 : vector<17x17xf32> to vector<17x17xbf16>
    %cst_155 = arith.constant dense<0.000000e+00> : vector<17x8xf32>
    %646 = tpu.matmul %645, %635, %cst_155 {dimension_numbers = #tpu.dot_dimension_numbers<[1], [0], [0], [1], [0, 0, 1, 1], [], []>} : vector<17x17xbf16>, vector<17x8xbf16>, vector<17x8xf32> -> vector<17x8xf32>
    %647 = vector.broadcast %644 : vector<17x1xf32> to vector<17x8xf32>
    %648 = arith.mulf %646, %647 : vector<17x8xf32>
    %649 = tpu.concatenate %600, %616, %632, %648 in 1 : vector<17x8xf32>, vector<17x8xf32>, vector<17x8xf32>, vector<17x8xf32> -> vector<17x32xf32>
    %c119 = arith.constant 119 : index
    %c0_156 = arith.constant 0 : index
    %650 = vector.load %arg12[%c119, %c0_156] : memref<136x32xf32, #tpu.memory_space<vmem>>, vector<17x32xf32>
    tpu.vector_store %arg12[%c119, %c0_156], %649 {strides = array<i32>} : memref<136x32xf32, #tpu.memory_space<vmem>>, vector<17x32xf32>,
    %c0_157 = arith.constant 0 : index
    %c0_158 = arith.constant 0 : index
    %651 = vector.load %arg12[%c0_157, %c0_158] : memref<136x32xf32, #tpu.memory_space<vmem>>, vector<136x32xf32>
    %652 = arith.truncf %651 : vector<136x32xf32> to vector<136x32xbf16>
    %c0_159 = arith.constant 0 : index
    %c0_160 = arith.constant 0 : index
    %653 = vector.load %arg4[%c0_159, %c0_160] : memref<32x32xbf16, #tpu.memory_space<vmem>>, vector<32x32xbf16>
    %cst_161 = arith.constant dense<0.000000e+00> : vector<136x32xf32>
    %654 = tpu.matmul %652, %653, %cst_161 {dimension_numbers = #tpu.dot_dimension_numbers<[1], [0], [0], [1], [0, 0, 1, 1], [], []>} : vector<136x32xbf16>, vector<32x32xbf16>, vector<136x32xf32> -> vector<136x32xf32>
    %655 = arith.addf %11, %654 : vector<136x32xf32>
    %656 = vector.broadcast %2 : vector<1x32xf32> to vector<136x32xf32>
    %657 = arith.addf %655, %656 : vector<136x32xf32>
    %658 = arith.truncf %657 : vector<136x32xf32> to vector<136x32xbf16>
    %c0_162 = arith.constant 0 : index
    %c0_163 = arith.constant 0 : index
    %659 = vector.load %arg5[%c0_162, %c0_163] : memref<32x160xbf16, #tpu.memory_space<vmem>>, vector<32x160xbf16>
    %cst_164 = arith.constant dense<0.000000e+00> : vector<136x160xf32>
    %660 = tpu.matmul %658, %659, %cst_164 {dimension_numbers = #tpu.dot_dimension_numbers<[1], [0], [0], [1], [0, 0, 1, 1], [], []>} : vector<136x32xbf16>, vector<32x160xbf16>, vector<136x160xf32> -> vector<136x160xf32>
    %661 = vector.extract_strided_slice %660 {offsets = [0, 128], sizes = [136, 32], strides = [1, 1]} : vector<136x160xf32> to vector<136x32xf32>
    %662 = vector.extract_strided_slice %660 {offsets = [0, 0], sizes = [136, 128], strides = [1, 1]} : vector<136x160xf32> to vector<136x128xf32>
    %663 = vector.broadcast %3 : vector<1x128xf32> to vector<136x128xf32>
    %664 = arith.addf %662, %663 : vector<136x128xf32>
    %cst_165 = arith.constant 3.000000e+00 : f32
    %665 = vector.broadcast %cst_165 : f32 to vector<136x128xf32>
    %666 = arith.addf %664, %665 : vector<136x128xf32>
    %cst_166 = arith.constant 0.000000e+00 : f32
    %cst_167 = arith.constant 6.000000e+00 : f32
    %667 = vector.broadcast %cst_166 : f32 to vector<136x128xf32>
    %668 = arith.maximumf %667, %666 : vector<136x128xf32>
    %669 = vector.broadcast %cst_167 : f32 to vector<136x128xf32>
    %670 = arith.minimumf %669, %668 : vector<136x128xf32>
    %cst_168 = arith.constant 0.166666672 : f32
    %671 = vector.broadcast %cst_168 : f32 to vector<136x128xf32>
    %672 = arith.mulf %670, %671 : vector<136x128xf32>
    %673 = arith.mulf %664, %672 : vector<136x128xf32>
    %cst_169 = arith.constant 0.000000e+00 : f32
    %674 = vector.broadcast %cst_169 : f32 to vector<1x128xf32>
    %c7_170 = arith.constant 7 : index
    %c0_171 = arith.constant 0 : index
    %675 = vector.load %arg13[%c7_170, %c0_171] : memref<152x128xf32, #tpu.memory_space<vmem>>, vector<1x128xf32>
    tpu.vector_store %arg13[%c7_170, %c0_171], %674 {strides = array<i32>} : memref<152x128xf32, #tpu.memory_space<vmem>>, vector<1x128xf32>,
    %c8_172 = arith.constant 8 : index
    %c0_173 = arith.constant 0 : index
    %676 = vector.load %arg13[%c8_172, %c0_173] : memref<152x128xf32, #tpu.memory_space<vmem>>, vector<136x128xf32>
    tpu.vector_store %arg13[%c8_172, %c0_173], %673 {strides = array<i32>} : memref<152x128xf32, #tpu.memory_space<vmem>>, vector<136x128xf32>,
    %c7_174 = arith.constant 7 : index
    %c0_175 = arith.constant 0 : index
    %677 = vector.load %arg13[%c7_174, %c0_175] : memref<152x128xf32, #tpu.memory_space<vmem>>, vector<136x128xf32>
    %c9_176 = arith.constant 9 : index
    %c0_177 = arith.constant 0 : index
    %678 = vector.load %arg13[%c9_176, %c0_177] : memref<152x128xf32, #tpu.memory_space<vmem>>, vector<136x128xf32>
    %cst_178 = arith.constant 0.000000e+00 : f32
    %679 = vector.shape_cast %78 : vector<136x1xi1> to vector<136x1xi1>
    %680 = vector.broadcast %679 : vector<136x1xi1> to vector<136x128xi1>
    %681 = vector.broadcast %cst_178 : f32 to vector<136x128xf32>
    %682 = arith.select %680, %681, %677 : vector<136x128xi1>, vector<136x128xf32>
    %cst_179 = arith.constant 0.000000e+00 : f32
    %683 = vector.shape_cast %81 : vector<136x1xi1> to vector<136x1xi1>
    %684 = vector.broadcast %683 : vector<136x1xi1> to vector<136x128xi1>
    %685 = vector.broadcast %cst_179 : f32 to vector<136x128xf32>
    %686 = arith.select %684, %685, %678 : vector<136x128xi1>, vector<136x128xf32>
    %687 = vector.broadcast %4 : vector<1x128xf32> to vector<136x128xf32>
    %688 = arith.mulf %687, %682 : vector<136x128xf32>
    %689 = vector.broadcast %5 : vector<1x128xf32> to vector<136x128xf32>
    %690 = arith.mulf %689, %673 : vector<136x128xf32>
    %691 = arith.addf %688, %690 : vector<136x128xf32>
    %692 = vector.broadcast %6 : vector<1x128xf32> to vector<136x128xf32>
    %693 = arith.mulf %692, %686 : vector<136x128xf32>
    %694 = arith.addf %691, %693 : vector<136x128xf32>
    %695 = vector.broadcast %7 : vector<1x128xf32> to vector<136x128xf32>
    %696 = arith.addf %694, %695 : vector<136x128xf32>
    %cst_180 = arith.constant 3.000000e+00 : f32
    %697 = vector.broadcast %cst_180 : f32 to vector<136x128xf32>
    %698 = arith.addf %696, %697 : vector<136x128xf32>
    %cst_181 = arith.constant 0.000000e+00 : f32
    %cst_182 = arith.constant 6.000000e+00 : f32
    %699 = vector.broadcast %cst_181 : f32 to vector<136x128xf32>
    %700 = arith.maximumf %699, %698 : vector<136x128xf32>
    %701 = vector.broadcast %cst_182 : f32 to vector<136x128xf32>
    %702 = arith.minimumf %701, %700 : vector<136x128xf32>
    %cst_183 = arith.constant 0.166666672 : f32
    %703 = vector.broadcast %cst_183 : f32 to vector<136x128xf32>
    %704 = arith.mulf %702, %703 : vector<136x128xf32>
    %705 = arith.mulf %696, %704 : vector<136x128xf32>
    %c0_184 = arith.constant 0 : index
    %c0_185 = arith.constant 0 : index
    %706 = vector.load %arg9[%c0_184, %c0_185] : memref<8x136xf32, #tpu.memory_space<vmem>>, vector<8x136xf32>
    %cst_186 = arith.constant dense<0.000000e+00> : vector<8x128xf32>
    %707 = tpu.matmul %706, %705, %cst_186 {dimension_numbers = #tpu.dot_dimension_numbers<[1], [0], [0], [1], [0, 0, 1, 1], [], []>} : vector<8x136xf32>, vector<136x128xf32>, vector<8x128xf32> -> vector<8x128xf32>
    %708 = arith.truncf %707 : vector<8x128xf32> to vector<8x128xbf16>
    %c0_187 = arith.constant 0 : index
    %c0_188 = arith.constant 0 : index
    %709 = vector.load %arg6[%c0_187, %c0_188] : memref<128x32xbf16, #tpu.memory_space<vmem>>, vector<128x32xbf16>
    %cst_189 = arith.constant dense<0.000000e+00> : vector<8x32xf32>
    %710 = tpu.matmul %708, %709, %cst_189 {dimension_numbers = #tpu.dot_dimension_numbers<[1], [0], [0], [1], [0, 0, 1, 1], [], []>} : vector<8x128xbf16>, vector<128x32xbf16>, vector<8x32xf32> -> vector<8x32xf32>
    %711 = vector.broadcast %8 : vector<1x32xf32> to vector<8x32xf32>
    %712 = arith.addf %710, %711 : vector<8x32xf32>
    %cst_190 = arith.constant 0.000000e+00 : f32
    %713 = vector.broadcast %cst_190 : f32 to vector<8x32xf32>
    %714 = arith.maximumf %712, %713 : vector<8x32xf32>
    %715 = arith.truncf %714 : vector<8x32xf32> to vector<8x32xbf16>
    %c0_191 = arith.constant 0 : index
    %c0_192 = arith.constant 0 : index
    %716 = vector.load %arg7[%c0_191, %c0_192] : memref<32x128xbf16, #tpu.memory_space<vmem>>, vector<32x128xbf16>
    %cst_193 = arith.constant dense<0.000000e+00> : vector<8x128xf32>
    %717 = tpu.matmul %715, %716, %cst_193 {dimension_numbers = #tpu.dot_dimension_numbers<[1], [0], [0], [1], [0, 0, 1, 1], [], []>} : vector<8x32xbf16>, vector<32x128xbf16>, vector<8x128xf32> -> vector<8x128xf32>
    %718 = vector.broadcast %9 : vector<1x128xf32> to vector<8x128xf32>
    %719 = arith.addf %717, %718 : vector<8x128xf32>
    %cst_194 = arith.constant 3.000000e+00 : f32
    %720 = vector.broadcast %cst_194 : f32 to vector<8x128xf32>
    %721 = arith.addf %719, %720 : vector<8x128xf32>
    %cst_195 = arith.constant 0.000000e+00 : f32
    %cst_196 = arith.constant 6.000000e+00 : f32
    %722 = vector.broadcast %cst_195 : f32 to vector<8x128xf32>
    %723 = arith.maximumf %722, %721 : vector<8x128xf32>
    %724 = vector.broadcast %cst_196 : f32 to vector<8x128xf32>
    %725 = arith.minimumf %724, %723 : vector<8x128xf32>
    %cst_197 = arith.constant 0.166666672 : f32
    %726 = vector.broadcast %cst_197 : f32 to vector<8x128xf32>
    %727 = arith.mulf %725, %726 : vector<8x128xf32>
    %c0_198 = arith.constant 0 : index
    %c0_199 = arith.constant 0 : index
    %728 = vector.load %arg10[%c0_198, %c0_199] : memref<136x8xf32, #tpu.memory_space<vmem>>, vector<136x8xf32>
    %cst_200 = arith.constant dense<0.000000e+00> : vector<136x128xf32>
    %729 = tpu.matmul %728, %727, %cst_200 {dimension_numbers = #tpu.dot_dimension_numbers<[1], [0], [0], [1], [0, 0, 1, 1], [], []>} : vector<136x8xf32>, vector<8x128xf32>, vector<136x128xf32> -> vector<136x128xf32>
    %730 = arith.mulf %705, %729 : vector<136x128xf32>
    %731 = arith.truncf %730 : vector<136x128xf32> to vector<136x128xbf16>
    %c0_201 = arith.constant 0 : index
    %c0_202 = arith.constant 0 : index
    %732 = vector.load %arg8[%c0_201, %c0_202] : memref<128x32xbf16, #tpu.memory_space<vmem>>, vector<128x32xbf16>
    %cst_203 = arith.constant dense<0.000000e+00> : vector<136x32xf32>
    %733 = tpu.matmul %731, %732, %cst_203 {dimension_numbers = #tpu.dot_dimension_numbers<[1], [0], [0], [1], [0, 0, 1, 1], [], []>} : vector<136x128xbf16>, vector<128x32xbf16>, vector<136x32xf32> -> vector<136x32xf32>
    %734 = vector.broadcast %10 : vector<1x32xf32> to vector<136x32xf32>
    %735 = arith.addf %733, %734 : vector<136x32xf32>
    %736 = arith.addf %661, %735 : vector<136x32xf32>
    %737 = vector.shape_cast %75 : vector<136x1xi1> to vector<136x1xi1>
    %738 = vector.broadcast %737 : vector<136x1xi1> to vector<136x32xi1>
    %739 = arith.select %738, %657, %736 : vector<136x32xi1>, vector<136x32xf32>
    %c0_204 = arith.constant 0 : index
    %c0_205 = arith.constant 0 : index
    %740 = vector.load %arg11[%c0_204, %c0_205] : memref<136x32xf32, #tpu.memory_space<vmem>>, vector<136x32xf32>
    tpu.vector_store %arg11[%c0_204, %c0_205], %739 {strides = array<i32>} : memref<136x32xf32, #tpu.memory_space<vmem>>, vector<136x32xf32>,
    return
  }
  func.func @transform_0(%arg0: i32) -> (i32, i32) {
    %c0_i32 = arith.constant 0 : i32
    %c0_i32_0 = arith.constant 0 : i32
    return %arg0, %c0_i32 : i32, i32
  }
  func.func @transform_1(%arg0: i32) -> (i32, i32) {
    %c0_i32 = arith.constant 0 : i32
    %c0_i32_0 = arith.constant 0 : i32
    %c0_i32_1 = arith.constant 0 : i32
    return %c0_i32, %c0_i32_0 : i32, i32
  }
  func.func @transform_2(%arg0: i32) -> (i32, i32) {
    %c0_i32 = arith.constant 0 : i32
    %c0_i32_0 = arith.constant 0 : i32
    %c0_i32_1 = arith.constant 0 : i32
    return %c0_i32, %c0_i32_0 : i32, i32
  }
  func.func @transform_3(%arg0: i32) -> (i32, i32) {
    %c0_i32 = arith.constant 0 : i32
    %c0_i32_0 = arith.constant 0 : i32
    %c0_i32_1 = arith.constant 0 : i32
    return %c0_i32, %c0_i32_0 : i32, i32
  }
  func.func @transform_4(%arg0: i32) -> (i32, i32) {
    %c0_i32 = arith.constant 0 : i32
    %c0_i32_0 = arith.constant 0 : i32
    %c0_i32_1 = arith.constant 0 : i32
    return %c0_i32, %c0_i32_0 : i32, i32
  }
  func.func @transform_5(%arg0: i32) -> (i32, i32) {
    %c0_i32 = arith.constant 0 : i32
    %c0_i32_0 = arith.constant 0 : i32
    %c0_i32_1 = arith.constant 0 : i32
    return %c0_i32, %c0_i32_0 : i32, i32
  }
  func.func @transform_6(%arg0: i32) -> (i32, i32) {
    %c0_i32 = arith.constant 0 : i32
    %c0_i32_0 = arith.constant 0 : i32
    %c0_i32_1 = arith.constant 0 : i32
    return %c0_i32, %c0_i32_0 : i32, i32
  }
  func.func @transform_7(%arg0: i32) -> (i32, i32) {
    %c0_i32 = arith.constant 0 : i32
    %c0_i32_0 = arith.constant 0 : i32
    %c0_i32_1 = arith.constant 0 : i32
    return %c0_i32, %c0_i32_0 : i32, i32
  }
  func.func @transform_8(%arg0: i32) -> (i32, i32) {
    %c0_i32 = arith.constant 0 : i32
    %c0_i32_0 = arith.constant 0 : i32
    %c0_i32_1 = arith.constant 0 : i32
    return %c0_i32, %c0_i32_0 : i32, i32
  }
  func.func @transform_9(%arg0: i32) -> (i32, i32) {
    %c0_i32 = arith.constant 0 : i32
    %c0_i32_0 = arith.constant 0 : i32
    %c0_i32_1 = arith.constant 0 : i32
    return %c0_i32, %c0_i32_0 : i32, i32
  }
  func.func @transform_10(%arg0: i32) -> (i32, i32) {
    %c0_i32 = arith.constant 0 : i32
    %c0_i32_0 = arith.constant 0 : i32
    return %arg0, %c0_i32 : i32, i32
  }
}

</mosaic_0001>

<llo_original>
// kernel: tpu_custom_call.1
$region0: #{tpu_custom_call.1}
  #allocation0 [shape = 'u32[]', space=smem, size = 0x4, offset = 0x4, fixed_abs, tag = 'smem constant byte address 0x4 - core index']
  #allocation1 [shape = 'u32[144,128]{1,0:T(1,128)}', space=vmem, size = 0x12000, scoped, tag = 'internal scratch']
  #allocation2 [shape = 'f32[136,32]{1,0:T(8,128)}', space=vmem, size = 0x11000, scoped, tag = 'scratch operand']
  #allocation3 [shape = 'f32[152,128]{1,0:T(8,128)}', space=vmem, size = 0x13000, scoped, tag = 'scratch operand']
  %s0 = inlined_call_operand.vmem [shape: f32[272,32], index: 0, kind: input, shape index: {}]
  %s1 = inlined_call_operand.vmem [shape: f32[16,128], index: 1, kind: input, shape index: {}]
  %s2 = inlined_call_operand.vmem [shape: bf16[32,96], index: 2, kind: input, shape index: {}]
  %s3 = inlined_call_operand.vmem [shape: bf16[32,32], index: 3, kind: input, shape index: {}]
  %s4 = inlined_call_operand.vmem [shape: bf16[32,160], index: 4, kind: input, shape index: {}]
  %s5 = inlined_call_operand.vmem [shape: bf16[128,32], index: 5, kind: input, shape index: {}]
  %s6 = inlined_call_operand.vmem [shape: bf16[32,128], index: 6, kind: input, shape index: {}]
  %s7 = inlined_call_operand.vmem [shape: bf16[128,32], index: 7, kind: input, shape index: {}]
  %s8 = inlined_call_operand.vmem [shape: f32[8,136], index: 8, kind: input, shape index: {}]
  %s9 = inlined_call_operand.vmem [shape: f32[136,8], index: 9, kind: input, shape index: {}]
  %s10 = inlined_call_operand.vmem [shape: f32[272,32], index: 10, kind: output, shape index: {}]
  %s11 = sld [smem:[#allocation0]]
  $region73: #{tpu_custom_call.1} parent=0
    _
  %s13 = ssub.s32 1, %s11
  %s14 = scalar_select 0, %s13, %s11
  loop: start=0, step=1, limit=4
  $region2: #{tpu_custom_call.1} parent=0 // loop_pre_header
    _
  $region3: #{tpu_custom_call.1} parent=0 // loop_header
    %s16 = sphi 0, %s20
    %p17 = scmp.ge.s32.totalorder %s16, 4
    %s26 = sphi 0, %s28
    %s29 = sphi 0, %s26
    %s30 = sphi 0, %s29
    %s46 = sphi 0, %s30
    %s50 = sphi 0, %s50
    %s52 = sphi 0, %s50
    %s53 = sphi 0, %s52
    %s67 = sphi 0, %s53
    %s71 = sphi 0, %s71
    %s73 = sphi 0, %s71
    %s74 = sphi 0, %s73
    %s88 = sphi 0, %s74
    %s92 = sphi 0, %s92
    %s94 = sphi 0, %s92
    %s95 = sphi 0, %s94
    %s109 = sphi 0, %s95
    %s113 = sphi 0, %s113
    %s115 = sphi 0, %s113
    %s116 = sphi 0, %s115
    %s130 = sphi 0, %s116
    %s134 = sphi 0, %s134
    %s136 = sphi 0, %s134
    %s137 = sphi 0, %s136
    %s151 = sphi 0, %s137
    %s155 = sphi 0, %s155
    %s157 = sphi 0, %s155
    %s158 = sphi 0, %s157
    %s172 = sphi 0, %s158
    %s176 = sphi 0, %s176
    %s178 = sphi 0, %s176
    %s179 = sphi 0, %s178
    %s193 = sphi 0, %s179
    %s197 = sphi 0, %s197
    %s199 = sphi 0, %s197
    %s200 = sphi 0, %s199
    %s214 = sphi 0, %s200
    %s218 = sphi 0, %s218
    %s220 = sphi 0, %s218
    %s221 = sphi 0, %s220
    %s235 = sphi 0, %s221
    %s241 = sphi 0, %s243
    %s244 = sphi 0, %s241
    %s245 = sphi 0, %s244
    %s261 = sphi 0, %s245
  $region4: #{tpu_custom_call.1} parent=0 // loop_header_branch
    %19 = sbr.rel (%p17) target = $region8
  $region5: #{tpu_custom_call.1} parent=0 // loop_body
    %s21 = ssub.s32 %s16, 1
    %s22 = ssub.s32 %s16, 2
    %s23 = sadd.s32 %s16, 1
    %s24 = ssub.s32 %s16, %s23
    %p25 = scmp.eq.s32.totalorder %s24, 0
    %s27 = sadd.s32 %s26, 1
    %s28 = scalar_select %p25, %s26, %s27
    %p31 = pneg %p25
    %p32 = scmp.eq.s32.totalorder %s16, 1
    %p33 = por %p31, %p32
    %p34 = scmp.ne.s32.totalorder %s26, %s29
    %p35 = scmp.eq.s32.totalorder %s16, 0
    %p36 = por %p34, %p35
    %p37 = scmp.ne.s32.totalorder %s26, %s29
    %p38 = scmp.eq.s32.totalorder %s21, 1
    %p39 = por %p37, %p38
    %p40 = scmp.ne.s32.totalorder %s29, %s30
    %p41 = scmp.eq.s32.totalorder %s21, 0
    %p42 = por %p40, %p41
    %p43 = scmp.ne.s32.totalorder %s29, %s30
    %p44 = scmp.eq.s32.totalorder %s22, 1
    %p45 = por %p43, %p44
    %p47 = scmp.ne.s32.totalorder %s30, %s46
    %p48 = scmp.eq.s32.totalorder %s22, 0
    %p49 = por %p47, %p48
    %s51 = sadd.s32 %s50, 1
    %p54 = scmp.eq.s32.totalorder %s16, 1
    %p55 = scmp.ne.s32.totalorder %s50, %s52
    %p56 = scmp.eq.s32.totalorder %s16, 0
    %p57 = por %p55, %p56
    %p58 = scmp.ne.s32.totalorder %s50, %s52
    %p59 = scmp.eq.s32.totalorder %s21, 1
    %p60 = por %p58, %p59
    %p61 = scmp.ne.s32.totalorder %s52, %s53
    %p62 = scmp.eq.s32.totalorder %s21, 0
    %p63 = por %p61, %p62
    %p64 = scmp.ne.s32.totalorder %s52, %s53
    %p65 = scmp.eq.s32.totalorder %s22, 1
    %p66 = por %p64, %p65
    %p68 = scmp.ne.s32.totalorder %s53, %s67
    %p69 = scmp.eq.s32.totalorder %s22, 0
    %p70 = por %p68, %p69
    %s72 = sadd.s32 %s71, 1
    %p75 = scmp.eq.s32.totalorder %s16, 1
    %p76 = scmp.ne.s32.totalorder %s71, %s73
    %p77 = scmp.eq.s32.totalorder %s16, 0
    %p78 = por %p76, %p77
    %p79 = scmp.ne.s32.totalorder %s71, %s73
    %p80 = scmp.eq.s32.totalorder %s21, 1
    %p81 = por %p79, %p80
    %p82 = scmp.ne.s32.totalorder %s73, %s74
    %p83 = scmp.eq.s32.totalorder %s21, 0
    %p84 = por %p82, %p83
    %p85 = scmp.ne.s32.totalorder %s73, %s74
    %p86 = scmp.eq.s32.totalorder %s22, 1
    %p87 = por %p85, %p86
    %p89 = scmp.ne.s32.totalorder %s74, %s88
    %p90 = scmp.eq.s32.totalorder %s22, 0
    %p91 = por %p89, %p90
    %s93 = sadd.s32 %s92, 1
    %p96 = scmp.eq.s32.totalorder %s16, 1
    %p97 = scmp.ne.s32.totalorder %s92, %s94
    %p98 = scmp.eq.s32.totalorder %s16, 0
    %p99 = por %p97, %p98
    %p100 = scmp.ne.s32.totalorder %s92, %s94
    %p101 = scmp.eq.s32.totalorder %s21, 1
    %p102 = por %p100, %p101
    %p103 = scmp.ne.s32.totalorder %s94, %s95
    %p104 = scmp.eq.s32.totalorder %s21, 0
    %p105 = por %p103, %p104
    %p106 = scmp.ne.s32.totalorder %s94, %s95
    %p107 = scmp.eq.s32.totalorder %s22, 1
    %p108 = por %p106, %p107
    %p110 = scmp.ne.s32.totalorder %s95, %s109
    %p111 = scmp.eq.s32.totalorder %s22, 0
    %p112 = por %p110, %p111
    %s114 = sadd.s32 %s113, 1
    %p117 = scmp.eq.s32.totalorder %s16, 1
    %p118 = scmp.ne.s32.totalorder %s113, %s115
    %p119 = scmp.eq.s32.totalorder %s16, 0
    %p120 = por %p118, %p119
    %p121 = scmp.ne.s32.totalorder %s113, %s115
    %p122 = scmp.eq.s32.totalorder %s21, 1
    %p123 = por %p121, %p122
    %p124 = scmp.ne.s32.totalorder %s115, %s116
    %p125 = scmp.eq.s32.totalorder %s21, 0
    %p126 = por %p124, %p125
    %p127 = scmp.ne.s32.totalorder %s115, %s116
    %p128 = scmp.eq.s32.totalorder %s22, 1
    %p129 = por %p127, %p128
    %p131 = scmp.ne.s32.totalorder %s116, %s130
    %p132 = scmp.eq.s32.totalorder %s22, 0
    %p133 = por %p131, %p132
    %s135 = sadd.s32 %s134, 1
    %p138 = scmp.eq.s32.totalorder %s16, 1
    %p139 = scmp.ne.s32.totalorder %s134, %s136
    %p140 = scmp.eq.s32.totalorder %s16, 0
    %p141 = por %p139, %p140
    %p142 = scmp.ne.s32.totalorder %s134, %s136
    %p143 = scmp.eq.s32.totalorder %s21, 1
    %p144 = por %p142, %p143
    %p145 = scmp.ne.s32.totalorder %s136, %s137
    %p146 = scmp.eq.s32.totalorder %s21, 0
    %p147 = por %p145, %p146
    %p148 = scmp.ne.s32.totalorder %s136, %s137
    %p149 = scmp.eq.s32.totalorder %s22, 1
    %p150 = por %p148, %p149
    %p152 = scmp.ne.s32.totalorder %s137, %s151
    %p153 = scmp.eq.s32.totalorder %s22, 0
    %p154 = por %p152, %p153
    %s156 = sadd.s32 %s155, 1
    %p159 = scmp.eq.s32.totalorder %s16, 1
    %p160 = scmp.ne.s32.totalorder %s155, %s157
    %p161 = scmp.eq.s32.totalorder %s16, 0
    %p162 = por %p160, %p161
    %p163 = scmp.ne.s32.totalorder %s155, %s157
    %p164 = scmp.eq.s32.totalorder %s21, 1
    %p165 = por %p163, %p164
    %p166 = scmp.ne.s32.totalorder %s157, %s158
    %p167 = scmp.eq.s32.totalorder %s21, 0
    %p168 = por %p166, %p167
    %p169 = scmp.ne.s32.totalorder %s157, %s158
    %p170 = scmp.eq.s32.totalorder %s22, 1
    %p171 = por %p169, %p170
    %p173 = scmp.ne.s32.totalorder %s158, %s172
    %p174 = scmp.eq.s32.totalorder %s22, 0
    %p175 = por %p173, %p174
    %s177 = sadd.s32 %s176, 1
    %p180 = scmp.eq.s32.totalorder %s16, 1
    %p181 = scmp.ne.s32.totalorder %s176, %s178
    %p182 = scmp.eq.s32.totalorder %s16, 0
    %p183 = por %p181, %p182
    %p184 = scmp.ne.s32.totalorder %s176, %s178
    %p185 = scmp.eq.s32.totalorder %s21, 1
    %p186 = por %p184, %p185
    %p187 = scmp.ne.s32.totalorder %s178, %s179
    %p188 = scmp.eq.s32.totalorder %s21, 0
    %p189 = por %p187, %p188
    %p190 = scmp.ne.s32.totalorder %s178, %s179
    %p191 = scmp.eq.s32.totalorder %s22, 1
    %p192 = por %p190, %p191
    %p194 = scmp.ne.s32.totalorder %s179, %s193
    %p195 = scmp.eq.s32.totalorder %s22, 0
    %p196 = por %p194, %p195
    %s198 = sadd.s32 %s197, 1
    %p201 = scmp.eq.s32.totalorder %s16, 1
    %p202 = scmp.ne.s32.totalorder %s197, %s199
    %p203 = scmp.eq.s32.totalorder %s16, 0
    %p204 = por %p202, %p203
    %p205 = scmp.ne.s32.totalorder %s197, %s199
    %p206 = scmp.eq.s32.totalorder %s21, 1
    %p207 = por %p205, %p206
    %p208 = scmp.ne.s32.totalorder %s199, %s200
    %p209 = scmp.eq.s32.totalorder %s21, 0
    %p210 = por %p208, %p209
    %p211 = scmp.ne.s32.totalorder %s199, %s200
    %p212 = scmp.eq.s32.totalorder %s22, 1
    %p213 = por %p211, %p212
    %p215 = scmp.ne.s32.totalorder %s200, %s214
    %p216 = scmp.eq.s32.totalorder %s22, 0
    %p217 = por %p215, %p216
    %s219 = sadd.s32 %s218, 1
    %p222 = scmp.eq.s32.totalorder %s16, 1
    %p223 = scmp.ne.s32.totalorder %s218, %s220
    %p224 = scmp.eq.s32.totalorder %s16, 0
    %p225 = por %p223, %p224
    %p226 = scmp.ne.s32.totalorder %s218, %s220
    %p227 = scmp.eq.s32.totalorder %s21, 1
    %p228 = por %p226, %p227
    %p229 = scmp.ne.s32.totalorder %s220, %s221
    %p230 = scmp.eq.s32.totalorder %s21, 0
    %p231 = por %p229, %p230
    %p232 = scmp.ne.s32.totalorder %s220, %s221
    %p233 = scmp.eq.s32.totalorder %s22, 1
    %p234 = por %p232, %p233
    %p236 = scmp.ne.s32.totalorder %s221, %s235
    %p237 = scmp.eq.s32.totalorder %s22, 0
    %p238 = por %p236, %p237
    %s239 = ssub.s32 %s16, %s23
    %p240 = scmp.eq.s32.totalorder %s239, 0
    %s242 = sadd.s32 %s241, 1
    %s243 = scalar_select %p240, %s241, %s242
    %p246 = pneg %p240
    %p247 = scmp.eq.s32.totalorder %s16, 1
    %p248 = por %p246, %p247
    %p249 = scmp.ne.s32.totalorder %s241, %s244
    %p250 = scmp.eq.s32.totalorder %s16, 0
    %p251 = por %p249, %p250
    %p252 = scmp.ne.s32.totalorder %s241, %s244
    %p253 = scmp.eq.s32.totalorder %s21, 1
    %p254 = por %p252, %p253
    %p255 = scmp.ne.s32.totalorder %s244, %s245
    %p256 = scmp.eq.s32.totalorder %s21, 0
    %p257 = por %p255, %p256
    %p258 = scmp.ne.s32.totalorder %s244, %s245
    %p259 = scmp.eq.s32.totalorder %s22, 1
    %p260 = por %p258, %p259
    %p262 = scmp.ne.s32.totalorder %s245, %s261
    %p263 = scmp.eq.s32.totalorder %s22, 0
    %p264 = por %p262, %p263
    %p265 = scmp.le.s32.totalorder 1, %s16
    %p266 = scmp.lt.s32.totalorder %s16, 3
    %p267 = pnand %p265, %p266
    %p268 = pneg %p267
    // Predicated region
    $region9: #{tpu_custom_call.1} parent=5 // pred_check
      _
    $region10: #{tpu_custom_call.1} parent=5 // pred_check_branch
      %270 = sbr.rel (%p267) target = $region12
    $region11: #{tpu_custom_call.1} parent=5 // pred_region
      %s271 = ssub.s32 %s16, 1
      // Predicated region
      $region13: #{tpu_custom_call.1} parent=11 // pred_check
        %p272 = pneg %p63
      $region14: #{tpu_custom_call.1} parent=11 // pred_check_branch
        %274 = sbr.rel (%p272) target = $region16
      $region15: #{tpu_custom_call.1} parent=11 // pred_region
        _
      $region16: #{tpu_custom_call.1} parent=11 // pred_fallthru
        _
      // Predicated region
      $region17: #{tpu_custom_call.1} parent=11 // pred_check
        %p275 = pneg %p84
      $region18: #{tpu_custom_call.1} parent=11 // pred_check_branch
        %277 = sbr.rel (%p275) target = $region20
      $region19: #{tpu_custom_call.1} parent=11 // pred_region
        _
      $region20: #{tpu_custom_call.1} parent=11 // pred_fallthru
        _
      // Predicated region
      $region21: #{tpu_custom_call.1} parent=11 // pred_check
        %p278 = pneg %p105
      $region22: #{tpu_custom_call.1} parent=11 // pred_check_branch
        %280 = sbr.rel (%p278) target = $region24
      $region23: #{tpu_custom_call.1} parent=11 // pred_region
        _
      $region24: #{tpu_custom_call.1} parent=11 // pred_fallthru
        _
      // Predicated region
      $region25: #{tpu_custom_call.1} parent=11 // pred_check
        %p281 = pneg %p126
      $region26: #{tpu_custom_call.1} parent=11 // pred_check_branch
        %283 = sbr.rel (%p281) target = $region28
      $region27: #{tpu_custom_call.1} parent=11 // pred_region
        _
      $region28: #{tpu_custom_call.1} parent=11 // pred_fallthru
        _
      // Predicated region
      $region29: #{tpu_custom_call.1} parent=11 // pred_check
        %p284 = pneg %p147
      $region30: #{tpu_custom_call.1} parent=11 // pred_check_branch
        %286 = sbr.rel (%p284) target = $region32
      $region31: #{tpu_custom_call.1} parent=11 // pred_region
        _
      $region32: #{tpu_custom_call.1} parent=11 // pred_fallthru
        _
      // Predicated region
      $region33: #{tpu_custom_call.1} parent=11 // pred_check
        %p287 = pneg %p168
      $region34: #{tpu_custom_call.1} parent=11 // pred_check_branch
        %289 = sbr.rel (%p287) target = $region36
      $region35: #{tpu_custom_call.1} parent=11 // pred_region
        _
      $region36: #{tpu_custom_call.1} parent=11 // pred_fallthru
        _
      // Predicated region
      $region37: #{tpu_custom_call.1} parent=11 // pred_check
        %p290 = pneg %p189
      $region38: #{tpu_custom_call.1} parent=11 // pred_check_branch
        %292 = sbr.rel (%p290) target = $region40
      $region39: #{tpu_custom_call.1} parent=11 // pred_region
        _
      $region40: #{tpu_custom_call.1} parent=11 // pred_fallthru
        _
      // Predicated region
      $region41: #{tpu_custom_call.1} parent=11 // pred_check
        %p293 = pneg %p210
      $region42: #{tpu_custom_call.1} parent=11 // pred_check_branch
        %295 = sbr.rel (%p293) target = $region44
      $region43: #{tpu_custom_call.1} parent=11 // pred_region
        _
      $region44: #{tpu_custom_call.1} parent=11 // pred_fallthru
        _
      // Predicated region
      $region45: #{tpu_custom_call.1} parent=11 // pred_check
        %p296 = pneg %p231
      $region46: #{tpu_custom_call.1} parent=11 // pred_check_branch
        %298 = sbr.rel (%p296) target = $region48
      $region47: #{tpu_custom_call.1} parent=11 // pred_region
        _
      $region48: #{tpu_custom_call.1} parent=11 // pred_fallthru
        _
    $region12: #{tpu_custom_call.1} parent=5 // pred_fallthru
      _
    %p299 = scmp.lt.s32.totalorder %s16, 2
    // Predicated region
    $region49: #{tpu_custom_call.1} parent=5 // pred_check
      %p300 = pneg %p299
    $region50: #{tpu_custom_call.1} parent=5 // pred_check_branch
      %302 = sbr.rel (%p300) target = $region52
    $region51: #{tpu_custom_call.1} parent=5 // pred_region
      // Predicated region
      $region53: #{tpu_custom_call.1} parent=51 // pred_check
        %p303 = pneg %p36
      $region54: #{tpu_custom_call.1} parent=51 // pred_check_branch
        %305 = sbr.rel (%p303) target = $region56
      $region55: #{tpu_custom_call.1} parent=51 // pred_region
        %s306 = smul.u32 17, %s16
        %p307 = scmp.lt.s32.totalorder %s306, 33
        %s308 = scalar_select %p307, %s306, 33
        %s309 = smul.addr %s308, 8
        %s310 = scalar_lea.vmem %s0, %s309
        %s311 = smul.u32 17, %s16
      $region56: #{tpu_custom_call.1} parent=51 // pred_fallthru
        _
    $region52: #{tpu_custom_call.1} parent=5 // pred_fallthru
      _
    %p312 = scmp.le.s32.totalorder 1, %s16
    %p313 = scmp.lt.s32.totalorder %s16, 3
    %p314 = pnand %p312, %p313
    %p315 = pneg %p314
    // Predicated region
    $region57: #{tpu_custom_call.1} parent=5 // pred_check
      _
    $region58: #{tpu_custom_call.1} parent=5 // pred_check_branch
      %317 = sbr.rel (%p314) target = $region60
    $region59: #{tpu_custom_call.1} parent=5 // pred_region
      %s318 = ssub.s32 %s16, 1
      %s319 = smul.u32 17, %s21
      %p320 = scmp.lt.s32.totalorder %s319, 33
      %s321 = scalar_select %p320, %s319, 33
      %s322 = smul.addr %s321, 8
      %s323 = scalar_lea.vmem %s0, %s322
      %p324 = pneg %p42
      %p325 = pneg %p39
      %p326 = pneg %p63
      %p327 = pneg %p60
      %p328 = pneg %p84
      %p329 = pneg %p81
      %p330 = pneg %p105
      %p331 = pneg %p102
      %p332 = pneg %p126
      %p333 = pneg %p123
      %p334 = pneg %p147
      %p335 = pneg %p144
      %p336 = pneg %p168
      %p337 = pneg %p165
      %p338 = pneg %p189
      %p339 = pneg %p186
      %p340 = pneg %p210
      %p341 = pneg %p207
      %p342 = pneg %p231
      %p343 = pneg %p228
      %p344 = pneg %p257
      %p345 = pneg %p254
      %s346 = smul.u32 17, %s21
      %p347 = scmp.lt.s32.totalorder %s346, 33
      %s348 = scalar_select %p347, %s346, 33
      %s349 = smul.addr %s348, 8
      %s350 = scalar_lea.vmem %s10, %s349
      %s351 = smul.u32 17, %s21
      %p352 = scmp.lt.s32.totalorder %s351, 33
      %s353 = scalar_select %p352, %s351, 33
      %s354 = smul.addr %s353, 8
      %s355 = scalar_lea.vmem %s0, %s354
      %s356 = smul.u32 17, %s21
      %s357 = smul.u32 17, %s21
      %p358 = scmp.lt.s32.totalorder %s357, 33
      %s359 = scalar_select %p358, %s357, 33
      %s360 = smul.addr %s359, 8
      %s361 = scalar_lea.vmem %s10, %s360
      %s362 = smul.u32 17, %s21
      %v364 = vld [vmem:[%s1] sm:$0x1]
      %v365 = vld [vmem:[%s1 + $0x1] sm:$0x1]
      %v366 = vld [vmem:[%s1 + $0x2] sm:$0x1]
      %v367 = vld [vmem:[%s1 + $0x3] sm:$0x1]
      %v368 = vld [vmem:[%s1 + $0x4] sm:$0x1]
      %v369 = vld [vmem:[%s1 + $0x5] sm:$0x1]
      %v370 = vld [vmem:[%s1 + $0x6] sm:$0x1]
      %v371 = vld [vmem:[%s1 + $0x7] sm:$0x1]
      %v372 = vld [vmem:[%s1 + $0x8] sm:$0x1]
      %v373 = vld [vmem:[%s1 + $0x9] sm:$0x1]
      %v374 = vld [vmem:[%s1 + $0xa] sm:$0x1]
      %v375 = vld [vmem:[%s355] sm:$0xff]
      %v376 = vld [vmem:[%s355 + $0x8] sm:$0xff]
      %v377 = vld [vmem:[%s355 + $0x10] sm:$0xff]
      %v378 = vld [vmem:[%s355 + $0x18] sm:$0xff]
      %v379 = vld [vmem:[%s355 + $0x20] sm:$0xff]
      %v380 = vld [vmem:[%s355 + $0x28] sm:$0xff]
      %v381 = vld [vmem:[%s355 + $0x30] sm:$0xff]
      %v382 = vld [vmem:[%s355 + $0x38] sm:$0xff]
      %v383 = vld [vmem:[%s355 + $0x40] sm:$0xff]
      %v384 = vld [vmem:[%s355 + $0x48] sm:$0xff]
      %v385 = vld [vmem:[%s355 + $0x50] sm:$0xff]
      %v386 = vld [vmem:[%s355 + $0x58] sm:$0xff]
      %v387 = vld [vmem:[%s355 + $0x60] sm:$0xff]
      %v388 = vld [vmem:[%s355 + $0x68] sm:$0xff]
      %v389 = vld [vmem:[%s355 + $0x70] sm:$0xff]
      %v390 = vld [vmem:[%s355 + $0x78] sm:$0xff]
      %v391 = vld [vmem:[%s355 + $0x80] sm:$0xff]
      %v392 = vlaneseq
      %v393 = vshrl.u32 %v392, 7
      %v394 = vadd.s32 %v393, 8
      %v395 = vadd.s32 %v393, 16
      %v396 = vadd.s32 %v393, 24
      %v397 = vadd.s32 %v393, 32
      %v398 = vadd.s32 %v393, 40
      %v399 = vadd.s32 %v393, 48
      %v400 = vadd.s32 %v393, 56
      %v401 = vadd.s32 %v393, 64
      %v402 = vadd.s32 %v393, 72
      %v403 = vadd.s32 %v393, 80
      %v404 = vadd.s32 %v393, 88
      %v405 = vadd.s32 %v393, 96
      %v406 = vadd.s32 %v393, 104
      %v407 = vadd.s32 %v393, 112
      %v408 = vadd.s32 %v393, 120
      %v409 = vadd.s32 %v393, 128
      %vm410 = vcmp.eq.s32.totalorder %v393, 0
      %vm411 = vcmp.eq.s32.totalorder %v394, 0
      %vm412 = vcmp.eq.s32.totalorder %v395, 0
      %vm413 = vcmp.eq.s32.totalorder %v396, 0
      %vm414 = vcmp.eq.s32.totalorder %v397, 0
      %vm415 = vcmp.eq.s32.totalorder %v398, 0
      %vm416 = vcmp.eq.s32.totalorder %v399, 0
      %vm417 = vcmp.eq.s32.totalorder %v400, 0
      %vm418 = vcmp.eq.s32.totalorder %v401, 0
      %vm419 = vcmp.eq.s32.totalorder %v402, 0
      %vm420 = vcmp.eq.s32.totalorder %v403, 0
      %vm421 = vcmp.eq.s32.totalorder %v404, 0
      %vm422 = vcmp.eq.s32.totalorder %v405, 0
      %vm423 = vcmp.eq.s32.totalorder %v406, 0
      %vm424 = vcmp.eq.s32.totalorder %v407, 0
      %vm425 = vcmp.eq.s32.totalorder %v408, 0
      %vm426 = vcmp.eq.s32.totalorder %v409, 0
      %vm427 = vcmp.eq.s32.totalorder %v393, 1
      %vm428 = vcmp.eq.s32.totalorder %v394, 1
      %vm429 = vcmp.eq.s32.totalorder %v395, 1
      %vm430 = vcmp.eq.s32.totalorder %v396, 1
      %vm431 = vcmp.eq.s32.totalorder %v397, 1
      %vm432 = vcmp.eq.s32.totalorder %v398, 1
      %vm433 = vcmp.eq.s32.totalorder %v399, 1
      %vm434 = vcmp.eq.s32.totalorder %v400, 1
      %vm435 = vcmp.eq.s32.totalorder %v401, 1
      %vm436 = vcmp.eq.s32.totalorder %v402, 1
      %vm437 = vcmp.eq.s32.totalorder %v403, 1
      %vm438 = vcmp.eq.s32.totalorder %v404, 1
      %vm439 = vcmp.eq.s32.totalorder %v405, 1
      %vm440 = vcmp.eq.s32.totalorder %v406, 1
      %vm441 = vcmp.eq.s32.totalorder %v407, 1
      %vm442 = vcmp.eq.s32.totalorder %v408, 1
      %vm443 = vcmp.eq.s32.totalorder %v409, 1
      %vm444 = vcmp.eq.s32.totalorder %v393, 16
      %vm445 = vcmp.eq.s32.totalorder %v394, 16
      %vm446 = vcmp.eq.s32.totalorder %v395, 16
      %vm447 = vcmp.eq.s32.totalorder %v396, 16
      %vm448 = vcmp.eq.s32.totalorder %v397, 16
      %vm449 = vcmp.eq.s32.totalorder %v398, 16
      %vm450 = vcmp.eq.s32.totalorder %v399, 16
      %vm451 = vcmp.eq.s32.totalorder %v400, 16
      %vm452 = vcmp.eq.s32.totalorder %v401, 16
      %vm453 = vcmp.eq.s32.totalorder %v402, 16
      %vm454 = vcmp.eq.s32.totalorder %v403, 16
      %vm455 = vcmp.eq.s32.totalorder %v404, 16
      %vm456 = vcmp.eq.s32.totalorder %v405, 16
      %vm457 = vcmp.eq.s32.totalorder %v406, 16
      %vm458 = vcmp.eq.s32.totalorder %v407, 16
      %vm459 = vcmp.eq.s32.totalorder %v408, 16
      %vm460 = vcmp.eq.s32.totalorder %v409, 16
      %vm461 = vcmp.eq.s32.totalorder %v393, 17
      %vm462 = vcmp.eq.s32.totalorder %v394, 17
      %vm463 = vcmp.eq.s32.totalorder %v395, 17
      %vm464 = vcmp.eq.s32.totalorder %v396, 17
      %vm465 = vcmp.eq.s32.totalorder %v397, 17
      %vm466 = vcmp.eq.s32.totalorder %v398, 17
      %vm467 = vcmp.eq.s32.totalorder %v399, 17
      %vm468 = vcmp.eq.s32.totalorder %v400, 17
      %vm469 = vcmp.eq.s32.totalorder %v401, 17
      %vm470 = vcmp.eq.s32.totalorder %v402, 17
      %vm471 = vcmp.eq.s32.totalorder %v403, 17
      %vm472 = vcmp.eq.s32.totalorder %v404, 17
      %vm473 = vcmp.eq.s32.totalorder %v405, 17
      %vm474 = vcmp.eq.s32.totalorder %v406, 17
      %vm475 = vcmp.eq.s32.totalorder %v407, 17
      %vm476 = vcmp.eq.s32.totalorder %v408, 17
      %vm477 = vcmp.eq.s32.totalorder %v409, 17
      %vm478 = vmor %vm410, %vm461
      %vm479 = vmor %vm411, %vm462
      %vm480 = vmor %vm412, %vm463
      %vm481 = vmor %vm413, %vm464
      %vm482 = vmor %vm414, %vm465
      %vm483 = vmor %vm415, %vm466
      %vm484 = vmor %vm416, %vm467
      %vm485 = vmor %vm417, %vm468
      %vm486 = vmor %vm418, %vm469
      %vm487 = vmor %vm419, %vm470
      %vm488 = vmor %vm420, %vm471
      %vm489 = vmor %vm421, %vm472
      %vm490 = vmor %vm422, %vm473
      %vm491 = vmor %vm423, %vm474
      %vm492 = vmor %vm424, %vm475
      %vm493 = vmor %vm425, %vm476
      %vm494 = vmor %vm426, %vm477
      %vm495 = vcmp.eq.s32.totalorder %v393, 18
      %vm496 = vcmp.eq.s32.totalorder %v394, 18
      %vm497 = vcmp.eq.s32.totalorder %v395, 18
      %vm498 = vcmp.eq.s32.totalorder %v396, 18
      %vm499 = vcmp.eq.s32.totalorder %v397, 18
      %vm500 = vcmp.eq.s32.totalorder %v398, 18
      %vm501 = vcmp.eq.s32.totalorder %v399, 18
      %vm502 = vcmp.eq.s32.totalorder %v400, 18
      %vm503 = vcmp.eq.s32.totalorder %v401, 18
      %vm504 = vcmp.eq.s32.totalorder %v402, 18
      %vm505 = vcmp.eq.s32.totalorder %v403, 18
      %vm506 = vcmp.eq.s32.totalorder %v404, 18
      %vm507 = vcmp.eq.s32.totalorder %v405, 18
      %vm508 = vcmp.eq.s32.totalorder %v406, 18
      %vm509 = vcmp.eq.s32.totalorder %v407, 18
      %vm510 = vcmp.eq.s32.totalorder %v408, 18
      %vm511 = vcmp.eq.s32.totalorder %v409, 18
      %vm512 = vmor %vm427, %vm495
      %vm513 = vmor %vm428, %vm496
      %vm514 = vmor %vm429, %vm497
      %vm515 = vmor %vm430, %vm498
      %vm516 = vmor %vm431, %vm499
      %vm517 = vmor %vm432, %vm500
      %vm518 = vmor %vm433, %vm501
      %vm519 = vmor %vm434, %vm502
      %vm520 = vmor %vm435, %vm503
      %vm521 = vmor %vm436, %vm504
      %vm522 = vmor %vm437, %vm505
      %vm523 = vmor %vm438, %vm506
      %vm524 = vmor %vm439, %vm507
      %vm525 = vmor %vm440, %vm508
      %vm526 = vmor %vm441, %vm509
      %vm527 = vmor %vm442, %vm510
      %vm528 = vmor %vm443, %vm511
      %vm529 = vcmp.eq.s32.totalorder %v393, 33
      %vm530 = vcmp.eq.s32.totalorder %v394, 33
      %vm531 = vcmp.eq.s32.totalorder %v395, 33
      %vm532 = vcmp.eq.s32.totalorder %v396, 33
      %vm533 = vcmp.eq.s32.totalorder %v397, 33
      %vm534 = vcmp.eq.s32.totalorder %v398, 33
      %vm535 = vcmp.eq.s32.totalorder %v399, 33
      %vm536 = vcmp.eq.s32.totalorder %v400, 33
      %vm537 = vcmp.eq.s32.totalorder %v401, 33
      %vm538 = vcmp.eq.s32.totalorder %v402, 33
      %vm539 = vcmp.eq.s32.totalorder %v403, 33
      %vm540 = vcmp.eq.s32.totalorder %v404, 33
      %vm541 = vcmp.eq.s32.totalorder %v405, 33
      %vm542 = vcmp.eq.s32.totalorder %v406, 33
      %vm543 = vcmp.eq.s32.totalorder %v407, 33
      %vm544 = vcmp.eq.s32.totalorder %v408, 33
      %vm545 = vcmp.eq.s32.totalorder %v409, 33
      %vm546 = vmor %vm444, %vm529
      %vm547 = vmor %vm445, %vm530
      %vm548 = vmor %vm446, %vm531
      %vm549 = vmor %vm447, %vm532
      %vm550 = vmor %vm448, %vm533
      %vm551 = vmor %vm449, %vm534
      %vm552 = vmor %vm450, %vm535
      %vm553 = vmor %vm451, %vm536
      %vm554 = vmor %vm452, %vm537
      %vm555 = vmor %vm453, %vm538
      %vm556 = vmor %vm454, %vm539
      %vm557 = vmor %vm455, %vm540
      %vm558 = vmor %vm456, %vm541
      %vm559 = vmor %vm457, %vm542
      %vm560 = vmor %vm458, %vm543
      %vm561 = vmor %vm459, %vm544
      %vm562 = vmor %vm460, %vm545
      %vm563 = vcmp.eq.s32.totalorder %v393, 34
      %vm564 = vcmp.eq.s32.totalorder %v394, 34
      %vm565 = vcmp.eq.s32.totalorder %v395, 34
      %vm566 = vcmp.eq.s32.totalorder %v396, 34
      %vm567 = vcmp.eq.s32.totalorder %v397, 34
      %vm568 = vcmp.eq.s32.totalorder %v398, 34
      %vm569 = vcmp.eq.s32.totalorder %v399, 34
      %vm570 = vcmp.eq.s32.totalorder %v400, 34
      %vm571 = vcmp.eq.s32.totalorder %v401, 34
      %vm572 = vcmp.eq.s32.totalorder %v402, 34
      %vm573 = vcmp.eq.s32.totalorder %v403, 34
      %vm574 = vcmp.eq.s32.totalorder %v404, 34
      %vm575 = vcmp.eq.s32.totalorder %v405, 34
      %vm576 = vcmp.eq.s32.totalorder %v406, 34
      %vm577 = vcmp.eq.s32.totalorder %v407, 34
      %vm578 = vcmp.eq.s32.totalorder %v408, 34
      %vm579 = vcmp.eq.s32.totalorder %v409, 34
      %vm580 = vmor %vm478, %vm563
      %vm581 = vmor %vm479, %vm564
      %vm582 = vmor %vm480, %vm565
      %vm583 = vmor %vm481, %vm566
      %vm584 = vmor %vm482, %vm567
      %vm585 = vmor %vm483, %vm568
      %vm586 = vmor %vm484, %vm569
      %vm587 = vmor %vm485, %vm570
      %vm588 = vmor %vm486, %vm571
      %vm589 = vmor %vm487, %vm572
      %vm590 = vmor %vm488, %vm573
      %vm591 = vmor %vm489, %vm574
      %vm592 = vmor %vm490, %vm575
      %vm593 = vmor %vm491, %vm576
      %vm594 = vmor %vm492, %vm577
      %vm595 = vmor %vm493, %vm578
      %vm596 = vmor %vm494, %vm579
      %vm597 = vcmp.eq.s32.totalorder %v393, 35
      %vm598 = vcmp.eq.s32.totalorder %v394, 35
      %vm599 = vcmp.eq.s32.totalorder %v395, 35
      %vm600 = vcmp.eq.s32.totalorder %v396, 35
      %vm601 = vcmp.eq.s32.totalorder %v397, 35
      %vm602 = vcmp.eq.s32.totalorder %v398, 35
      %vm603 = vcmp.eq.s32.totalorder %v399, 35
      %vm604 = vcmp.eq.s32.totalorder %v400, 35
      %vm605 = vcmp.eq.s32.totalorder %v401, 35
      %vm606 = vcmp.eq.s32.totalorder %v402, 35
      %vm607 = vcmp.eq.s32.totalorder %v403, 35
      %vm608 = vcmp.eq.s32.totalorder %v404, 35
      %vm609 = vcmp.eq.s32.totalorder %v405, 35
      %vm610 = vcmp.eq.s32.totalorder %v406, 35
      %vm611 = vcmp.eq.s32.totalorder %v407, 35
      %vm612 = vcmp.eq.s32.totalorder %v408, 35
      %vm613 = vcmp.eq.s32.totalorder %v409, 35
      %vm614 = vmor %vm512, %vm597
      %vm615 = vmor %vm513, %vm598
      %vm616 = vmor %vm514, %vm599
      %vm617 = vmor %vm515, %vm600
      %vm618 = vmor %vm516, %vm601
      %vm619 = vmor %vm517, %vm602
      %vm620 = vmor %vm518, %vm603
      %vm621 = vmor %vm519, %vm604
      %vm622 = vmor %vm520, %vm605
      %vm623 = vmor %vm521, %vm606
      %vm624 = vmor %vm522, %vm607
      %vm625 = vmor %vm523, %vm608
      %vm626 = vmor %vm524, %vm609
      %vm627 = vmor %vm525, %vm610
      %vm628 = vmor %vm526, %vm611
      %vm629 = vmor %vm527, %vm612
      %vm630 = vmor %vm528, %vm613
      %vm631 = vcmp.eq.s32.totalorder %v393, 50
      %vm632 = vcmp.eq.s32.totalorder %v394, 50
      %vm633 = vcmp.eq.s32.totalorder %v395, 50
      %vm634 = vcmp.eq.s32.totalorder %v396, 50
      %vm635 = vcmp.eq.s32.totalorder %v397, 50
      %vm636 = vcmp.eq.s32.totalorder %v398, 50
      %vm637 = vcmp.eq.s32.totalorder %v399, 50
      %vm638 = vcmp.eq.s32.totalorder %v400, 50
      %vm639 = vcmp.eq.s32.totalorder %v401, 50
      %vm640 = vcmp.eq.s32.totalorder %v402, 50
      %vm641 = vcmp.eq.s32.totalorder %v403, 50
      %vm642 = vcmp.eq.s32.totalorder %v404, 50
      %vm643 = vcmp.eq.s32.totalorder %v405, 50
      %vm644 = vcmp.eq.s32.totalorder %v406, 50
      %vm645 = vcmp.eq.s32.totalorder %v407, 50
      %vm646 = vcmp.eq.s32.totalorder %v408, 50
      %vm647 = vcmp.eq.s32.totalorder %v409, 50
      %vm648 = vmor %vm546, %vm631
      %vm649 = vmor %vm547, %vm632
      %vm650 = vmor %vm548, %vm633
      %vm651 = vmor %vm549, %vm634
      %vm652 = vmor %vm550, %vm635
      %vm653 = vmor %vm551, %vm636
      %vm654 = vmor %vm552, %vm637
      %vm655 = vmor %vm553, %vm638
      %vm656 = vmor %vm554, %vm639
      %vm657 = vmor %vm555, %vm640
      %vm658 = vmor %vm556, %vm641
      %vm659 = vmor %vm557, %vm642
      %vm660 = vmor %vm558, %vm643
      %vm661 = vmor %vm559, %vm644
      %vm662 = vmor %vm560, %vm645
      %vm663 = vmor %vm561, %vm646
      %vm664 = vmor %vm562, %vm647
      %vm665 = vcmp.eq.s32.totalorder %v393, 51
      %vm666 = vcmp.eq.s32.totalorder %v394, 51
      %vm667 = vcmp.eq.s32.totalorder %v395, 51
      %vm668 = vcmp.eq.s32.totalorder %v396, 51
      %vm669 = vcmp.eq.s32.totalorder %v397, 51
      %vm670 = vcmp.eq.s32.totalorder %v398, 51
      %vm671 = vcmp.eq.s32.totalorder %v399, 51
      %vm672 = vcmp.eq.s32.totalorder %v400, 51
      %vm673 = vcmp.eq.s32.totalorder %v401, 51
      %vm674 = vcmp.eq.s32.totalorder %v402, 51
      %vm675 = vcmp.eq.s32.totalorder %v403, 51
      %vm676 = vcmp.eq.s32.totalorder %v404, 51
      %vm677 = vcmp.eq.s32.totalorder %v405, 51
      %vm678 = vcmp.eq.s32.totalorder %v406, 51
      %vm679 = vcmp.eq.s32.totalorder %v407, 51
      %vm680 = vcmp.eq.s32.totalorder %v408, 51
      %vm681 = vcmp.eq.s32.totalorder %v409, 51
      %vm682 = vmor %vm580, %vm665
      %vm683 = vmor %vm581, %vm666
      %vm684 = vmor %vm582, %vm667
      %vm685 = vmor %vm583, %vm668
      %vm686 = vmor %vm584, %vm669
      %vm687 = vmor %vm585, %vm670
      %vm688 = vmor %vm586, %vm671
      %vm689 = vmor %vm587, %vm672
      %vm690 = vmor %vm588, %vm673
      %vm691 = vmor %vm589, %vm674
      %vm692 = vmor %vm590, %vm675
      %vm693 = vmor %vm591, %vm676
      %vm694 = vmor %vm592, %vm677
      %vm695 = vmor %vm593, %vm678
      %vm696 = vmor %vm594, %vm679
      %vm697 = vmor %vm595, %vm680
      %vm698 = vmor %vm596, %vm681
      %vm699 = vcmp.eq.s32.totalorder %v393, 52
      %vm700 = vcmp.eq.s32.totalorder %v394, 52
      %vm701 = vcmp.eq.s32.totalorder %v395, 52
      %vm702 = vcmp.eq.s32.totalorder %v396, 52
      %vm703 = vcmp.eq.s32.totalorder %v397, 52
      %vm704 = vcmp.eq.s32.totalorder %v398, 52
      %vm705 = vcmp.eq.s32.totalorder %v399, 52
      %vm706 = vcmp.eq.s32.totalorder %v400, 52
      %vm707 = vcmp.eq.s32.totalorder %v401, 52
      %vm708 = vcmp.eq.s32.totalorder %v402, 52
      %vm709 = vcmp.eq.s32.totalorder %v403, 52
      %vm710 = vcmp.eq.s32.totalorder %v404, 52
      %vm711 = vcmp.eq.s32.totalorder %v405, 52
      %vm712 = vcmp.eq.s32.totalorder %v406, 52
      %vm713 = vcmp.eq.s32.totalorder %v407, 52
      %vm714 = vcmp.eq.s32.totalorder %v408, 52
      %vm715 = vcmp.eq.s32.totalorder %v409, 52
      %vm716 = vmor %vm614, %vm699
      %vm717 = vmor %vm615, %vm700
      %vm718 = vmor %vm616, %vm701
      %vm719 = vmor %vm617, %vm702
      %vm720 = vmor %vm618, %vm703
      %vm721 = vmor %vm619, %vm704
      %vm722 = vmor %vm620, %vm705
      %vm723 = vmor %vm621, %vm706
      %vm724 = vmor %vm622, %vm707
      %vm725 = vmor %vm623, %vm708
      %vm726 = vmor %vm624, %vm709
      %vm727 = vmor %vm625, %vm710
      %vm728 = vmor %vm626, %vm711
      %vm729 = vmor %vm627, %vm712
      %vm730 = vmor %vm628, %vm713
      %vm731 = vmor %vm629, %vm714
      %vm732 = vmor %vm630, %vm715
      %vm733 = vcmp.eq.s32.totalorder %v393, 67
      %vm734 = vcmp.eq.s32.totalorder %v394, 67
      %vm735 = vcmp.eq.s32.totalorder %v395, 67
      %vm736 = vcmp.eq.s32.totalorder %v396, 67
      %vm737 = vcmp.eq.s32.totalorder %v397, 67
      %vm738 = vcmp.eq.s32.totalorder %v398, 67
      %vm739 = vcmp.eq.s32.totalorder %v399, 67
      %vm740 = vcmp.eq.s32.totalorder %v400, 67
      %vm741 = vcmp.eq.s32.totalorder %v401, 67
      %vm742 = vcmp.eq.s32.totalorder %v402, 67
      %vm743 = vcmp.eq.s32.totalorder %v403, 67
      %vm744 = vcmp.eq.s32.totalorder %v404, 67
      %vm745 = vcmp.eq.s32.totalorder %v405, 67
      %vm746 = vcmp.eq.s32.totalorder %v406, 67
      %vm747 = vcmp.eq.s32.totalorder %v407, 67
      %vm748 = vcmp.eq.s32.totalorder %v408, 67
      %vm749 = vcmp.eq.s32.totalorder %v409, 67
      %vm750 = vmor %vm648, %vm733
      %vm751 = vmor %vm649, %vm734
      %vm752 = vmor %vm650, %vm735
      %vm753 = vmor %vm651, %vm736
      %vm754 = vmor %vm652, %vm737
      %vm755 = vmor %vm653, %vm738
      %vm756 = vmor %vm654, %vm739
      %vm757 = vmor %vm655, %vm740
      %vm758 = vmor %vm656, %vm741
      %vm759 = vmor %vm657, %vm742
      %vm760 = vmor %vm658, %vm743
      %vm761 = vmor %vm659, %vm744
      %vm762 = vmor %vm660, %vm745
      %vm763 = vmor %vm661, %vm746
      %vm764 = vmor %vm662, %vm747
      %vm765 = vmor %vm663, %vm748
      %vm766 = vmor %vm664, %vm749
      %vm767 = vcmp.eq.s32.totalorder %v393, 68
      %vm768 = vcmp.eq.s32.totalorder %v394, 68
      %vm769 = vcmp.eq.s32.totalorder %v395, 68
      %vm770 = vcmp.eq.s32.totalorder %v396, 68
      %vm771 = vcmp.eq.s32.totalorder %v397, 68
      %vm772 = vcmp.eq.s32.totalorder %v398, 68
      %vm773 = vcmp.eq.s32.totalorder %v399, 68
      %vm774 = vcmp.eq.s32.totalorder %v400, 68
      %vm775 = vcmp.eq.s32.totalorder %v401, 68
      %vm776 = vcmp.eq.s32.totalorder %v402, 68
      %vm777 = vcmp.eq.s32.totalorder %v403, 68
      %vm778 = vcmp.eq.s32.totalorder %v404, 68
      %vm779 = vcmp.eq.s32.totalorder %v405, 68
      %vm780 = vcmp.eq.s32.totalorder %v406, 68
      %vm781 = vcmp.eq.s32.totalorder %v407, 68
      %vm782 = vcmp.eq.s32.totalorder %v408, 68
      %vm783 = vcmp.eq.s32.totalorder %v409, 68
      %vm784 = vmor %vm682, %vm767
      %vm785 = vmor %vm683, %vm768
      %vm786 = vmor %vm684, %vm769
      %vm787 = vmor %vm685, %vm770
      %vm788 = vmor %vm686, %vm771
      %vm789 = vmor %vm687, %vm772
      %vm790 = vmor %vm688, %vm773
      %vm791 = vmor %vm689, %vm774
      %vm792 = vmor %vm690, %vm775
      %vm793 = vmor %vm691, %vm776
      %vm794 = vmor %vm692, %vm777
      %vm795 = vmor %vm693, %vm778
      %vm796 = vmor %vm694, %vm779
      %vm797 = vmor %vm695, %vm780
      %vm798 = vmor %vm696, %vm781
      %vm799 = vmor %vm697, %vm782
      %vm800 = vmor %vm698, %vm783
      %vm801 = vcmp.eq.s32.totalorder %v393, 69
      %vm802 = vcmp.eq.s32.totalorder %v394, 69
      %vm803 = vcmp.eq.s32.totalorder %v395, 69
      %vm804 = vcmp.eq.s32.totalorder %v396, 69
      %vm805 = vcmp.eq.s32.totalorder %v397, 69
      %vm806 = vcmp.eq.s32.totalorder %v398, 69
      %vm807 = vcmp.eq.s32.totalorder %v399, 69
      %vm808 = vcmp.eq.s32.totalorder %v400, 69
      %vm809 = vcmp.eq.s32.totalorder %v401, 69
      %vm810 = vcmp.eq.s32.totalorder %v402, 69
      %vm811 = vcmp.eq.s32.totalorder %v403, 69
      %vm812 = vcmp.eq.s32.totalorder %v404, 69
      %vm813 = vcmp.eq.s32.totalorder %v405, 69
      %vm814 = vcmp.eq.s32.totalorder %v406, 69
      %vm815 = vcmp.eq.s32.totalorder %v407, 69
      %vm816 = vcmp.eq.s32.totalorder %v408, 69
      %vm817 = vcmp.eq.s32.totalorder %v409, 69
      %vm818 = vmor %vm716, %vm801
      %vm819 = vmor %vm717, %vm802
      %vm820 = vmor %vm718, %vm803
      %vm821 = vmor %vm719, %vm804
      %vm822 = vmor %vm720, %vm805
      %vm823 = vmor %vm721, %vm806
      %vm824 = vmor %vm722, %vm807
      %vm825 = vmor %vm723, %vm808
      %vm826 = vmor %vm724, %vm809
      %vm827 = vmor %vm725, %vm810
      %vm828 = vmor %vm726, %vm811
      %vm829 = vmor %vm727, %vm812
      %vm830 = vmor %vm728, %vm813
      %vm831 = vmor %vm729, %vm814
      %vm832 = vmor %vm730, %vm815
      %vm833 = vmor %vm731, %vm816
      %vm834 = vmor %vm732, %vm817
      %vm835 = vcmp.eq.s32.totalorder %v393, 84
      %vm836 = vcmp.eq.s32.totalorder %v394, 84
      %vm837 = vcmp.eq.s32.totalorder %v395, 84
      %vm838 = vcmp.eq.s32.totalorder %v396, 84
      %vm839 = vcmp.eq.s32.totalorder %v397, 84
      %vm840 = vcmp.eq.s32.totalorder %v398, 84
      %vm841 = vcmp.eq.s32.totalorder %v399, 84
      %vm842 = vcmp.eq.s32.totalorder %v400, 84
      %vm843 = vcmp.eq.s32.totalorder %v401, 84
      %vm844 = vcmp.eq.s32.totalorder %v402, 84
      %vm845 = vcmp.eq.s32.totalorder %v403, 84
      %vm846 = vcmp.eq.s32.totalorder %v404, 84
      %vm847 = vcmp.eq.s32.totalorder %v405, 84
      %vm848 = vcmp.eq.s32.totalorder %v406, 84
      %vm849 = vcmp.eq.s32.totalorder %v407, 84
      %vm850 = vcmp.eq.s32.totalorder %v408, 84
      %vm851 = vcmp.eq.s32.totalorder %v409, 84
      %vm852 = vmor %vm750, %vm835
      %vm853 = vmor %vm751, %vm836
      %vm854 = vmor %vm752, %vm837
      %vm855 = vmor %vm753, %vm838
      %vm856 = vmor %vm754, %vm839
      %vm857 = vmor %vm755, %vm840
      %vm858 = vmor %vm756, %vm841
      %vm859 = vmor %vm757, %vm842
      %vm860 = vmor %vm758, %vm843
      %vm861 = vmor %vm759, %vm844
      %vm862 = vmor %vm760, %vm845
      %vm863 = vmor %vm761, %vm846
      %vm864 = vmor %vm762, %vm847
      %vm865 = vmor %vm763, %vm848
      %vm866 = vmor %vm764, %vm849
      %vm867 = vmor %vm765, %vm850
      %vm868 = vmor %vm766, %vm851
      %vm869 = vcmp.eq.s32.totalorder %v393, 85
      %vm870 = vcmp.eq.s32.totalorder %v394, 85
      %vm871 = vcmp.eq.s32.totalorder %v395, 85
      %vm872 = vcmp.eq.s32.totalorder %v396, 85
      %vm873 = vcmp.eq.s32.totalorder %v397, 85
      %vm874 = vcmp.eq.s32.totalorder %v398, 85
      %vm875 = vcmp.eq.s32.totalorder %v399, 85
      %vm876 = vcmp.eq.s32.totalorder %v400, 85
      %vm877 = vcmp.eq.s32.totalorder %v401, 85
      %vm878 = vcmp.eq.s32.totalorder %v402, 85
      %vm879 = vcmp.eq.s32.totalorder %v403, 85
      %vm880 = vcmp.eq.s32.totalorder %v404, 85
      %vm881 = vcmp.eq.s32.totalorder %v405, 85
      %vm882 = vcmp.eq.s32.totalorder %v406, 85
      %vm883 = vcmp.eq.s32.totalorder %v407, 85
      %vm884 = vcmp.eq.s32.totalorder %v408, 85
      %vm885 = vcmp.eq.s32.totalorder %v409, 85
      %vm886 = vmor %vm784, %vm869
      %vm887 = vmor %vm785, %vm870
      %vm888 = vmor %vm786, %vm871
      %vm889 = vmor %vm787, %vm872
      %vm890 = vmor %vm788, %vm873
      %vm891 = vmor %vm789, %vm874
      %vm892 = vmor %vm790, %vm875
      %vm893 = vmor %vm791, %vm876
      %vm894 = vmor %vm792, %vm877
      %vm895 = vmor %vm793, %vm878
      %vm896 = vmor %vm794, %vm879
      %vm897 = vmor %vm795, %vm880
      %vm898 = vmor %vm796, %vm881
      %vm899 = vmor %vm797, %vm882
      %vm900 = vmor %vm798, %vm883
      %vm901 = vmor %vm799, %vm884
      %vm902 = vmor %vm800, %vm885
      %vm903 = vcmp.eq.s32.totalorder %v393, 86
      %vm904 = vcmp.eq.s32.totalorder %v394, 86
      %vm905 = vcmp.eq.s32.totalorder %v395, 86
      %vm906 = vcmp.eq.s32.totalorder %v396, 86
      %vm907 = vcmp.eq.s32.totalorder %v397, 86
      %vm908 = vcmp.eq.s32.totalorder %v398, 86
      %vm909 = vcmp.eq.s32.totalorder %v399, 86
      %vm910 = vcmp.eq.s32.totalorder %v400, 86
      %vm911 = vcmp.eq.s32.totalorder %v401, 86
      %vm912 = vcmp.eq.s32.totalorder %v402, 86
      %vm913 = vcmp.eq.s32.totalorder %v403, 86
      %vm914 = vcmp.eq.s32.totalorder %v404, 86
      %vm915 = vcmp.eq.s32.totalorder %v405, 86
      %vm916 = vcmp.eq.s32.totalorder %v406, 86
      %vm917 = vcmp.eq.s32.totalorder %v407, 86
      %vm918 = vcmp.eq.s32.totalorder %v408, 86
      %vm919 = vcmp.eq.s32.totalorder %v409, 86
      %vm920 = vmor %vm818, %vm903
      %vm921 = vmor %vm819, %vm904
      %vm922 = vmor %vm820, %vm905
      %vm923 = vmor %vm821, %vm906
      %vm924 = vmor %vm822, %vm907
      %vm925 = vmor %vm823, %vm908
      %vm926 = vmor %vm824, %vm909
      %vm927 = vmor %vm825, %vm910
      %vm928 = vmor %vm826, %vm911
      %vm929 = vmor %vm827, %vm912
      %vm930 = vmor %vm828, %vm913
      %vm931 = vmor %vm829, %vm914
      %vm932 = vmor %vm830, %vm915
      %vm933 = vmor %vm831, %vm916
      %vm934 = vmor %vm832, %vm917
      %vm935 = vmor %vm833, %vm918
      %vm936 = vmor %vm834, %vm919
      %vm937 = vcmp.eq.s32.totalorder %v393, 101
      %vm938 = vcmp.eq.s32.totalorder %v394, 101
      %vm939 = vcmp.eq.s32.totalorder %v395, 101
      %vm940 = vcmp.eq.s32.totalorder %v396, 101
      %vm941 = vcmp.eq.s32.totalorder %v397, 101
      %vm942 = vcmp.eq.s32.totalorder %v398, 101
      %vm943 = vcmp.eq.s32.totalorder %v399, 101
      %vm944 = vcmp.eq.s32.totalorder %v400, 101
      %vm945 = vcmp.eq.s32.totalorder %v401, 101
      %vm946 = vcmp.eq.s32.totalorder %v402, 101
      %vm947 = vcmp.eq.s32.totalorder %v403, 101
      %vm948 = vcmp.eq.s32.totalorder %v404, 101
      %vm949 = vcmp.eq.s32.totalorder %v405, 101
      %vm950 = vcmp.eq.s32.totalorder %v406, 101
      %vm951 = vcmp.eq.s32.totalorder %v407, 101
      %vm952 = vcmp.eq.s32.totalorder %v408, 101
      %vm953 = vcmp.eq.s32.totalorder %v409, 101
      %vm954 = vmor %vm852, %vm937
      %vm955 = vmor %vm853, %vm938
      %vm956 = vmor %vm854, %vm939
      %vm957 = vmor %vm855, %vm940
      %vm958 = vmor %vm856, %vm941
      %vm959 = vmor %vm857, %vm942
      %vm960 = vmor %vm858, %vm943
      %vm961 = vmor %vm859, %vm944
      %vm962 = vmor %vm860, %vm945
      %vm963 = vmor %vm861, %vm946
      %vm964 = vmor %vm862, %vm947
      %vm965 = vmor %vm863, %vm948
      %vm966 = vmor %vm864, %vm949
      %vm967 = vmor %vm865, %vm950
      %vm968 = vmor %vm866, %vm951
      %vm969 = vmor %vm867, %vm952
      %vm970 = vmor %vm868, %vm953
      %vm971 = vcmp.eq.s32.totalorder %v393, 102
      %vm972 = vcmp.eq.s32.totalorder %v394, 102
      %vm973 = vcmp.eq.s32.totalorder %v395, 102
      %vm974 = vcmp.eq.s32.totalorder %v396, 102
      %vm975 = vcmp.eq.s32.totalorder %v397, 102
      %vm976 = vcmp.eq.s32.totalorder %v398, 102
      %vm977 = vcmp.eq.s32.totalorder %v399, 102
      %vm978 = vcmp.eq.s32.totalorder %v400, 102
      %vm979 = vcmp.eq.s32.totalorder %v401, 102
      %vm980 = vcmp.eq.s32.totalorder %v402, 102
      %vm981 = vcmp.eq.s32.totalorder %v403, 102
      %vm982 = vcmp.eq.s32.totalorder %v404, 102
      %vm983 = vcmp.eq.s32.totalorder %v405, 102
      %vm984 = vcmp.eq.s32.totalorder %v406, 102
      %vm985 = vcmp.eq.s32.totalorder %v407, 102
      %vm986 = vcmp.eq.s32.totalorder %v408, 102
      %vm987 = vcmp.eq.s32.totalorder %v409, 102
      %vm988 = vmor %vm886, %vm971
      %vm989 = vmor %vm887, %vm972
      %vm990 = vmor %vm888, %vm973
      %vm991 = vmor %vm889, %vm974
      %vm992 = vmor %vm890, %vm975
      %vm993 = vmor %vm891, %vm976
      %vm994 = vmor %vm892, %vm977
      %vm995 = vmor %vm893, %vm978
      %vm996 = vmor %vm894, %vm979
      %vm997 = vmor %vm895, %vm980
      %vm998 = vmor %vm896, %vm981
      %vm999 = vmor %vm897, %vm982
      %vm1000 = vmor %vm898, %vm983
      %vm1001 = vmor %vm899, %vm984
      %vm1002 = vmor %vm900, %vm985
      %vm1003 = vmor %vm901, %vm986
      %vm1004 = vmor %vm902, %vm987
      %vm1005 = vcmp.eq.s32.totalorder %v393, 103
      %vm1006 = vcmp.eq.s32.totalorder %v394, 103
      %vm1007 = vcmp.eq.s32.totalorder %v395, 103
      %vm1008 = vcmp.eq.s32.totalorder %v396, 103
      %vm1009 = vcmp.eq.s32.totalorder %v397, 103
      %vm1010 = vcmp.eq.s32.totalorder %v398, 103
      %vm1011 = vcmp.eq.s32.totalorder %v399, 103
      %vm1012 = vcmp.eq.s32.totalorder %v400, 103
      %vm1013 = vcmp.eq.s32.totalorder %v401, 103
      %vm1014 = vcmp.eq.s32.totalorder %v402, 103
      %vm1015 = vcmp.eq.s32.totalorder %v403, 103
      %vm1016 = vcmp.eq.s32.totalorder %v404, 103
      %vm1017 = vcmp.eq.s32.totalorder %v405, 103
      %vm1018 = vcmp.eq.s32.totalorder %v406, 103
      %vm1019 = vcmp.eq.s32.totalorder %v407, 103
      %vm1020 = vcmp.eq.s32.totalorder %v408, 103
      %vm1021 = vcmp.eq.s32.totalorder %v409, 103
      %vm1022 = vmor %vm920, %vm1005
      %vm1023 = vmor %vm921, %vm1006
      %vm1024 = vmor %vm922, %vm1007
      %vm1025 = vmor %vm923, %vm1008
      %vm1026 = vmor %vm924, %vm1009
      %vm1027 = vmor %vm925, %vm1010
      %vm1028 = vmor %vm926, %vm1011
      %vm1029 = vmor %vm927, %vm1012
      %vm1030 = vmor %vm928, %vm1013
      %vm1031 = vmor %vm929, %vm1014
      %vm1032 = vmor %vm930, %vm1015
      %vm1033 = vmor %vm931, %vm1016
      %vm1034 = vmor %vm932, %vm1017
      %vm1035 = vmor %vm933, %vm1018
      %vm1036 = vmor %vm934, %vm1019
      %vm1037 = vmor %vm935, %vm1020
      %vm1038 = vmor %vm936, %vm1021
      %vm1039 = vcmp.eq.s32.totalorder %v393, 118
      %vm1040 = vcmp.eq.s32.totalorder %v394, 118
      %vm1041 = vcmp.eq.s32.totalorder %v395, 118
      %vm1042 = vcmp.eq.s32.totalorder %v396, 118
      %vm1043 = vcmp.eq.s32.totalorder %v397, 118
      %vm1044 = vcmp.eq.s32.totalorder %v398, 118
      %vm1045 = vcmp.eq.s32.totalorder %v399, 118
      %vm1046 = vcmp.eq.s32.totalorder %v400, 118
      %vm1047 = vcmp.eq.s32.totalorder %v401, 118
      %vm1048 = vcmp.eq.s32.totalorder %v402, 118
      %vm1049 = vcmp.eq.s32.totalorder %v403, 118
      %vm1050 = vcmp.eq.s32.totalorder %v404, 118
      %vm1051 = vcmp.eq.s32.totalorder %v405, 118
      %vm1052 = vcmp.eq.s32.totalorder %v406, 118
      %vm1053 = vcmp.eq.s32.totalorder %v407, 118
      %vm1054 = vcmp.eq.s32.totalorder %v408, 118
      %vm1055 = vcmp.eq.s32.totalorder %v409, 118
      %vm1056 = vmor %vm954, %vm1039
      %vm1057 = vmor %vm955, %vm1040
      %vm1058 = vmor %vm956, %vm1041
      %vm1059 = vmor %vm957, %vm1042
      %vm1060 = vmor %vm958, %vm1043
      %vm1061 = vmor %vm959, %vm1044
      %vm1062 = vmor %vm960, %vm1045
      %vm1063 = vmor %vm961, %vm1046
      %vm1064 = vmor %vm962, %vm1047
      %vm1065 = vmor %vm963, %vm1048
      %vm1066 = vmor %vm964, %vm1049
      %vm1067 = vmor %vm965, %vm1050
      %vm1068 = vmor %vm966, %vm1051
      %vm1069 = vmor %vm967, %vm1052
      %vm1070 = vmor %vm968, %vm1053
      %vm1071 = vmor %vm969, %vm1054
      %vm1072 = vmor %vm970, %vm1055
      %vm1073 = vcmp.eq.s32.totalorder %v393, 119
      %vm1074 = vcmp.eq.s32.totalorder %v394, 119
      %vm1075 = vcmp.eq.s32.totalorder %v395, 119
      %vm1076 = vcmp.eq.s32.totalorder %v396, 119
      %vm1077 = vcmp.eq.s32.totalorder %v397, 119
      %vm1078 = vcmp.eq.s32.totalorder %v398, 119
      %vm1079 = vcmp.eq.s32.totalorder %v399, 119
      %vm1080 = vcmp.eq.s32.totalorder %v400, 119
      %vm1081 = vcmp.eq.s32.totalorder %v401, 119
      %vm1082 = vcmp.eq.s32.totalorder %v402, 119
      %vm1083 = vcmp.eq.s32.totalorder %v403, 119
      %vm1084 = vcmp.eq.s32.totalorder %v404, 119
      %vm1085 = vcmp.eq.s32.totalorder %v405, 119
      %vm1086 = vcmp.eq.s32.totalorder %v406, 119
      %vm1087 = vcmp.eq.s32.totalorder %v407, 119
      %vm1088 = vcmp.eq.s32.totalorder %v408, 119
      %vm1089 = vcmp.eq.s32.totalorder %v409, 119
      %vm1090 = vmor %vm988, %vm1073
      %vm1091 = vmor %vm989, %vm1074
      %vm1092 = vmor %vm990, %vm1075
      %vm1093 = vmor %vm991, %vm1076
      %vm1094 = vmor %vm992, %vm1077
      %vm1095 = vmor %vm993, %vm1078
      %vm1096 = vmor %vm994, %vm1079
      %vm1097 = vmor %vm995, %vm1080
      %vm1098 = vmor %vm996, %vm1081
      %vm1099 = vmor %vm997, %vm1082
      %vm1100 = vmor %vm998, %vm1083
      %vm1101 = vmor %vm999, %vm1084
      %vm1102 = vmor %vm1000, %vm1085
      %vm1103 = vmor %vm1001, %vm1086
      %vm1104 = vmor %vm1002, %vm1087
      %vm1105 = vmor %vm1003, %vm1088
      %vm1106 = vmor %vm1004, %vm1089
      %vm1107 = vcmp.eq.s32.totalorder %v393, 120
      %vm1108 = vcmp.eq.s32.totalorder %v394, 120
      %vm1109 = vcmp.eq.s32.totalorder %v395, 120
      %vm1110 = vcmp.eq.s32.totalorder %v396, 120
      %vm1111 = vcmp.eq.s32.totalorder %v397, 120
      %vm1112 = vcmp.eq.s32.totalorder %v398, 120
      %vm1113 = vcmp.eq.s32.totalorder %v399, 120
      %vm1114 = vcmp.eq.s32.totalorder %v400, 120
      %vm1115 = vcmp.eq.s32.totalorder %v401, 120
      %vm1116 = vcmp.eq.s32.totalorder %v402, 120
      %vm1117 = vcmp.eq.s32.totalorder %v403, 120
      %vm1118 = vcmp.eq.s32.totalorder %v404, 120
      %vm1119 = vcmp.eq.s32.totalorder %v405, 120
      %vm1120 = vcmp.eq.s32.totalorder %v406, 120
      %vm1121 = vcmp.eq.s32.totalorder %v407, 120
      %vm1122 = vcmp.eq.s32.totalorder %v408, 120
      %vm1123 = vcmp.eq.s32.totalorder %v409, 120
      %vm1124 = vmor %vm1022, %vm1107
      %vm1125 = vmor %vm1023, %vm1108
      %vm1126 = vmor %vm1024, %vm1109
      %vm1127 = vmor %vm1025, %vm1110
      %vm1128 = vmor %vm1026, %vm1111
      %vm1129 = vmor %vm1027, %vm1112
      %vm1130 = vmor %vm1028, %vm1113
      %vm1131 = vmor %vm1029, %vm1114
      %vm1132 = vmor %vm1030, %vm1115
      %vm1133 = vmor %vm1031, %vm1116
      %vm1134 = vmor %vm1032, %vm1117
      %vm1135 = vmor %vm1033, %vm1118
      %vm1136 = vmor %vm1034, %vm1119
      %vm1137 = vmor %vm1035, %vm1120
      %vm1138 = vmor %vm1036, %vm1121
      %vm1139 = vmor %vm1037, %vm1122
      %vm1140 = vmor %vm1038, %vm1123
      %vm1141 = vcmp.eq.s32.totalorder %v393, 135
      %vm1142 = vcmp.eq.s32.totalorder %v394, 135
      %vm1143 = vcmp.eq.s32.totalorder %v395, 135
      %vm1144 = vcmp.eq.s32.totalorder %v396, 135
      %vm1145 = vcmp.eq.s32.totalorder %v397, 135
      %vm1146 = vcmp.eq.s32.totalorder %v398, 135
      %vm1147 = vcmp.eq.s32.totalorder %v399, 135
      %vm1148 = vcmp.eq.s32.totalorder %v400, 135
      %vm1149 = vcmp.eq.s32.totalorder %v401, 135
      %vm1150 = vcmp.eq.s32.totalorder %v402, 135
      %vm1151 = vcmp.eq.s32.totalorder %v403, 135
      %vm1152 = vcmp.eq.s32.totalorder %v404, 135
      %vm1153 = vcmp.eq.s32.totalorder %v405, 135
      %vm1154 = vcmp.eq.s32.totalorder %v406, 135
      %vm1155 = vcmp.eq.s32.totalorder %v407, 135
      %vm1156 = vcmp.eq.s32.totalorder %v408, 135
      %vm1157 = vcmp.eq.s32.totalorder %v409, 135
      %vm1158 = vmor %vm1056, %vm1141
      %vm1159 = vmor %vm1057, %vm1142
      %vm1160 = vmor %vm1058, %vm1143
      %vm1161 = vmor %vm1059, %vm1144
      %vm1162 = vmor %vm1060, %vm1145
      %vm1163 = vmor %vm1061, %vm1146
      %vm1164 = vmor %vm1062, %vm1147
      %vm1165 = vmor %vm1063, %vm1148
      %vm1166 = vmor %vm1064, %vm1149
      %vm1167 = vmor %vm1065, %vm1150
      %vm1168 = vmor %vm1066, %vm1151
      %vm1169 = vmor %vm1067, %vm1152
      %vm1170 = vmor %vm1068, %vm1153
      %vm1171 = vmor %vm1069, %vm1154
      %vm1172 = vmor %vm1070, %vm1155
      %vm1173 = vmor %vm1071, %vm1156
      %vm1174 = vmor %vm1072, %vm1157
      %vm1175 = vcmask 261120
      %v1176 = vsel %vm1175, %v375, 0.0
      %1177 = vadd.xlane.f32.xlu0 %v1176
      %v1178 = vpop.xlane.xlu0 %1177
      %v1179 = vsel %vm1175, %v376, 0.0
      %1180 = vadd.xlane.f32.xlu0 %v1179
      %v1181 = vpop.xlane.xlu0 %1180
      %v1182 = vsel %vm1175, %v377, 0.0
      %1183 = vadd.xlane.f32.xlu0 %v1182
      %v1184 = vpop.xlane.xlu0 %1183
      %v1185 = vsel %vm1175, %v378, 0.0
      %1186 = vadd.xlane.f32.xlu0 %v1185
      %v1187 = vpop.xlane.xlu0 %1186
      %v1188 = vsel %vm1175, %v379, 0.0
      %1189 = vadd.xlane.f32.xlu0 %v1188
      %v1190 = vpop.xlane.xlu0 %1189
      %v1191 = vsel %vm1175, %v380, 0.0
      %1192 = vadd.xlane.f32.xlu0 %v1191
      %v1193 = vpop.xlane.xlu0 %1192
      %v1194 = vsel %vm1175, %v381, 0.0
      %1195 = vadd.xlane.f32.xlu0 %v1194
      %v1196 = vpop.xlane.xlu0 %1195
      %v1197 = vsel %vm1175, %v382, 0.0
      %1198 = vadd.xlane.f32.xlu0 %v1197
      %v1199 = vpop.xlane.xlu0 %1198
      %v1200 = vsel %vm1175, %v383, 0.0
      %1201 = vadd.xlane.f32.xlu0 %v1200
      %v1202 = vpop.xlane.xlu0 %1201
      %v1203 = vsel %vm1175, %v384, 0.0
      %1204 = vadd.xlane.f32.xlu0 %v1203
      %v1205 = vpop.xlane.xlu0 %1204
      %v1206 = vsel %vm1175, %v385, 0.0
      %1207 = vadd.xlane.f32.xlu0 %v1206
      %v1208 = vpop.xlane.xlu0 %1207
      %v1209 = vsel %vm1175, %v386, 0.0
      %1210 = vadd.xlane.f32.xlu0 %v1209
      %v1211 = vpop.xlane.xlu0 %1210
      %v1212 = vsel %vm1175, %v387, 0.0
      %1213 = vadd.xlane.f32.xlu0 %v1212
      %v1214 = vpop.xlane.xlu0 %1213
      %v1215 = vsel %vm1175, %v388, 0.0
      %1216 = vadd.xlane.f32.xlu0 %v1215
      %v1217 = vpop.xlane.xlu0 %1216
      %v1218 = vsel %vm1175, %v389, 0.0
      %1219 = vadd.xlane.f32.xlu0 %v1218
      %v1220 = vpop.xlane.xlu0 %1219
      %v1221 = vsel %vm1175, %v390, 0.0
      %1222 = vadd.xlane.f32.xlu0 %v1221
      %v1223 = vpop.xlane.xlu0 %1222
      %v1224 = vsel %vm1175, %v391, 0.0
      %1225 = vadd.xlane.f32.xlu0 %v1224
      %v1226 = vpop.xlane.xlu0 %1225
      %v1227 = vrcp.pop 32.0
      %v1228 = vmul.f32 %v1178, %v1227
      %v1229 = vmul.f32 %v1181, %v1227
      %v1230 = vmul.f32 %v1184, %v1227
      %v1231 = vmul.f32 %v1187, %v1227
      %v1232 = vmul.f32 %v1190, %v1227
      %v1233 = vmul.f32 %v1193, %v1227
      %v1234 = vmul.f32 %v1196, %v1227
      %v1235 = vmul.f32 %v1199, %v1227
      %v1236 = vmul.f32 %v1202, %v1227
      %v1237 = vmul.f32 %v1205, %v1227
      %v1238 = vmul.f32 %v1208, %v1227
      %v1239 = vmul.f32 %v1211, %v1227
      %v1240 = vmul.f32 %v1214, %v1227
      %v1241 = vmul.f32 %v1217, %v1227
      %v1242 = vmul.f32 %v1220, %v1227
      %v1243 = vmul.f32 %v1223, %v1227
      %v1244 = vmul.f32 %v1226, %v1227
      %v1245 = vsub.f32 %v375, %v1228
      %v1246 = vsub.f32 %v376, %v1229
      %v1247 = vsub.f32 %v377, %v1230
      %v1248 = vsub.f32 %v378, %v1231
      %v1249 = vsub.f32 %v379, %v1232
      %v1250 = vsub.f32 %v380, %v1233
      %v1251 = vsub.f32 %v381, %v1234
      %v1252 = vsub.f32 %v382, %v1235
      %v1253 = vsub.f32 %v383, %v1236
      %v1254 = vsub.f32 %v384, %v1237
      %v1255 = vsub.f32 %v385, %v1238
      %v1256 = vsub.f32 %v386, %v1239
      %v1257 = vsub.f32 %v387, %v1240
      %v1258 = vsub.f32 %v388, %v1241
      %v1259 = vsub.f32 %v389, %v1242
      %v1260 = vsub.f32 %v390, %v1243
      %v1261 = vsub.f32 %v391, %v1244
      %v1262 = vmul.f32 %v1245, %v1245
      %v1263 = vmul.f32 %v1246, %v1246
      %v1264 = vmul.f32 %v1247, %v1247
      %v1265 = vmul.f32 %v1248, %v1248
      %v1266 = vmul.f32 %v1249, %v1249
      %v1267 = vmul.f32 %v1250, %v1250
      %v1268 = vmul.f32 %v1251, %v1251
      %v1269 = vmul.f32 %v1252, %v1252
      %v1270 = vmul.f32 %v1253, %v1253
      %v1271 = vmul.f32 %v1254, %v1254
      %v1272 = vmul.f32 %v1255, %v1255
      %v1273 = vmul.f32 %v1256, %v1256
      %v1274 = vmul.f32 %v1257, %v1257
      %v1275 = vmul.f32 %v1258, %v1258
      %v1276 = vmul.f32 %v1259, %v1259
      %v1277 = vmul.f32 %v1260, %v1260
      %v1278 = vmul.f32 %v1261, %v1261
      %v1279 = vsel %vm1175, %v1262, 0.0
      %1280 = vadd.xlane.f32.xlu0 %v1279
      %v1281 = vpop.xlane.xlu0 %1280
      %v1282 = vsel %vm1175, %v1263, 0.0
      %1283 = vadd.xlane.f32.xlu0 %v1282
      %v1284 = vpop.xlane.xlu0 %1283
      %v1285 = vsel %vm1175, %v1264, 0.0
      %1286 = vadd.xlane.f32.xlu0 %v1285
      %v1287 = vpop.xlane.xlu0 %1286
      %v1288 = vsel %vm1175, %v1265, 0.0
      %1289 = vadd.xlane.f32.xlu0 %v1288
      %v1290 = vpop.xlane.xlu0 %1289
      %v1291 = vsel %vm1175, %v1266, 0.0
      %1292 = vadd.xlane.f32.xlu0 %v1291
      %v1293 = vpop.xlane.xlu0 %1292
      %v1294 = vsel %vm1175, %v1267, 0.0
      %1295 = vadd.xlane.f32.xlu0 %v1294
      %v1296 = vpop.xlane.xlu0 %1295
      %v1297 = vsel %vm1175, %v1268, 0.0
      %1298 = vadd.xlane.f32.xlu0 %v1297
      %v1299 = vpop.xlane.xlu0 %1298
      %v1300 = vsel %vm1175, %v1269, 0.0
      %1301 = vadd.xlane.f32.xlu0 %v1300
      %v1302 = vpop.xlane.xlu0 %1301
      %v1303 = vsel %vm1175, %v1270, 0.0
      %1304 = vadd.xlane.f32.xlu0 %v1303
      %v1305 = vpop.xlane.xlu0 %1304
      %v1306 = vsel %vm1175, %v1271, 0.0
      %1307 = vadd.xlane.f32.xlu0 %v1306
      %v1308 = vpop.xlane.xlu0 %1307
      %v1309 = vsel %vm1175, %v1272, 0.0
      %1310 = vadd.xlane.f32.xlu0 %v1309
      %v1311 = vpop.xlane.xlu0 %1310
      %v1312 = vsel %vm1175, %v1273, 0.0
      %1313 = vadd.xlane.f32.xlu0 %v1312
      %v1314 = vpop.xlane.xlu0 %1313
      %v1315 = vsel %vm1175, %v1274, 0.0
      %1316 = vadd.xlane.f32.xlu0 %v1315
      %v1317 = vpop.xlane.xlu0 %1316
      %v1318 = vsel %vm1175, %v1275, 0.0
      %1319 = vadd.xlane.f32.xlu0 %v1318
      %v1320 = vpop.xlane.xlu0 %1319
      %v1321 = vsel %vm1175, %v1276, 0.0
      %1322 = vadd.xlane.f32.xlu0 %v1321
      %v1323 = vpop.xlane.xlu0 %1322
      %v1324 = vsel %vm1175, %v1277, 0.0
      %1325 = vadd.xlane.f32.xlu0 %v1324
      %v1326 = vpop.xlane.xlu0 %1325
      %v1327 = vsel %vm1175, %v1278, 0.0
      %1328 = vadd.xlane.f32.xlu0 %v1327
      %v1329 = vpop.xlane.xlu0 %1328
      %v1330 = vmul.f32 %v1281, %v1227
      %v1331 = vmul.f32 %v1284, %v1227
      %v1332 = vmul.f32 %v1287, %v1227
      %v1333 = vmul.f32 %v1290, %v1227
      %v1334 = vmul.f32 %v1293, %v1227
      %v1335 = vmul.f32 %v1296, %v1227
      %v1336 = vmul.f32 %v1299, %v1227
      %v1337 = vmul.f32 %v1302, %v1227
      %v1338 = vmul.f32 %v1305, %v1227
      %v1339 = vmul.f32 %v1308, %v1227
      %v1340 = vmul.f32 %v1311, %v1227
      %v1341 = vmul.f32 %v1314, %v1227
      %v1342 = vmul.f32 %v1317, %v1227
      %v1343 = vmul.f32 %v1320, %v1227
      %v1344 = vmul.f32 %v1323, %v1227
      %v1345 = vmul.f32 %v1326, %v1227
      %v1346 = vmul.f32 %v1329, %v1227
      %v1347 = vadd.f32 %v1330, 1e-05
      %v1348 = vadd.f32 %v1331, 1e-05
      %v1349 = vadd.f32 %v1332, 1e-05
      %v1350 = vadd.f32 %v1333, 1e-05
      %v1351 = vadd.f32 %v1334, 1e-05
      %v1352 = vadd.f32 %v1335, 1e-05
      %v1353 = vadd.f32 %v1336, 1e-05
      %v1354 = vadd.f32 %v1337, 1e-05
      %v1355 = vadd.f32 %v1338, 1e-05
      %v1356 = vadd.f32 %v1339, 1e-05
      %v1357 = vadd.f32 %v1340, 1e-05
      %v1358 = vadd.f32 %v1341, 1e-05
      %v1359 = vadd.f32 %v1342, 1e-05
      %v1360 = vadd.f32 %v1343, 1e-05
      %v1361 = vadd.f32 %v1344, 1e-05
      %v1362 = vadd.f32 %v1345, 1e-05
      %v1363 = vadd.f32 %v1346, 1e-05
      %v1364 = vrsqrt.pop %v1347
      %v1365 = vrsqrt.pop %v1348
      %v1366 = vrsqrt.pop %v1349
      %v1367 = vrsqrt.pop %v1350
      %v1368 = vrsqrt.pop %v1351
      %v1369 = vrsqrt.pop %v1352
      %v1370 = vrsqrt.pop %v1353
      %v1371 = vrsqrt.pop %v1354
      %v1372 = vrsqrt.pop %v1355
      %v1373 = vrsqrt.pop %v1356
      %v1374 = vrsqrt.pop %v1357
      %v1375 = vrsqrt.pop %v1358
      %v1376 = vrsqrt.pop %v1359
      %v1377 = vrsqrt.pop %v1360
      %v1378 = vrsqrt.pop %v1361
      %v1379 = vrsqrt.pop %v1362
      %v1380 = vrsqrt.pop %v1363
      %v1381 = vmul.f32 %v1245, %v1364
      %v1382 = vmul.f32 %v1246, %v1365
      %v1383 = vmul.f32 %v1247, %v1366
      %v1384 = vmul.f32 %v1248, %v1367
      %v1385 = vmul.f32 %v1249, %v1368
      %v1386 = vmul.f32 %v1250, %v1369
      %v1387 = vmul.f32 %v1251, %v1370
      %v1388 = vmul.f32 %v1252, %v1371
      %v1389 = vmul.f32 %v1253, %v1372
      %v1390 = vmul.f32 %v1254, %v1373
      %v1391 = vmul.f32 %v1255, %v1374
      %v1392 = vmul.f32 %v1256, %v1375
      %v1393 = vmul.f32 %v1257, %v1376
      %v1394 = vmul.f32 %v1258, %v1377
      %v1395 = vmul.f32 %v1259, %v1378
      %v1396 = vmul.f32 %v1260, %v1379
      %v1397 = vmul.f32 %v1261, %v1380
      %v1398 = vlaneseq
      %v1399 = vshrl.u32 %v1398, 7
      %v1400 = vsub.s32 0, %v1399
      %v1401 = vrot.slane %v364, %v1400
      %v1402 = vmul.f32 %v1381, %v1401
      %v1403 = vmul.f32 %v1382, %v1401
      %v1404 = vmul.f32 %v1383, %v1401
      %v1405 = vmul.f32 %v1384, %v1401
      %v1406 = vmul.f32 %v1385, %v1401
      %v1407 = vmul.f32 %v1386, %v1401
      %v1408 = vmul.f32 %v1387, %v1401
      %v1409 = vmul.f32 %v1388, %v1401
      %v1410 = vmul.f32 %v1389, %v1401
      %v1411 = vmul.f32 %v1390, %v1401
      %v1412 = vmul.f32 %v1391, %v1401
      %v1413 = vmul.f32 %v1392, %v1401
      %v1414 = vmul.f32 %v1393, %v1401
      %v1415 = vmul.f32 %v1394, %v1401
      %v1416 = vmul.f32 %v1395, %v1401
      %v1417 = vmul.f32 %v1396, %v1401
      %v1418 = vmul.f32 %v1397, %v1401
      %v1419 = vlaneseq
      %v1420 = vshrl.u32 %v1419, 7
      %v1421 = vsub.s32 0, %v1420
      %v1422 = vrot.slane %v365, %v1421
      %v1423 = vadd.f32 %v1402, %v1422
      %v1424 = vadd.f32 %v1403, %v1422
      %v1425 = vadd.f32 %v1404, %v1422
      %v1426 = vadd.f32 %v1405, %v1422
      %v1427 = vadd.f32 %v1406, %v1422
      %v1428 = vadd.f32 %v1407, %v1422
      %v1429 = vadd.f32 %v1408, %v1422
      %v1430 = vadd.f32 %v1409, %v1422
      %v1431 = vadd.f32 %v1410, %v1422
      %v1432 = vadd.f32 %v1411, %v1422
      %v1433 = vadd.f32 %v1412, %v1422
      %v1434 = vadd.f32 %v1413, %v1422
      %v1435 = vadd.f32 %v1414, %v1422
      %v1436 = vadd.f32 %v1415, %v1422
      %v1437 = vadd.f32 %v1416, %v1422
      %v1438 = vadd.f32 %v1417, %v1422
      %v1439 = vadd.f32 %v1418, %v1422
      %v1440 = vpack.c.bf16 %v1424, %v1423
      %v1441 = vpack.c.bf16 %v1426, %v1425
      %v1442 = vpack.c.bf16 %v1428, %v1427
      %v1443 = vpack.c.bf16 %v1430, %v1429
      %v1444 = vpack.c.bf16 %v1432, %v1431
      %v1445 = vpack.c.bf16 %v1434, %v1433
      %v1446 = vpack.c.bf16 %v1436, %v1435
      %v1447 = vpack.c.bf16 %v1438, %v1437
      %v1448 = vpack.c.bf16 %v1439, %v1439
      %v1449 = vld [vmem:[%s2] sm:$0xf]
      %v1450 = vld [vmem:[%s2 + $0x4] sm:$0xf]
      %v1451 = vld [vmem:[%s2 + $0x8] sm:$0xf]
      %v1452 = vld [vmem:[%s2 + $0xc] sm:$0xf]
      %v1457 = vunpack.c.l.b16 %v1449
      %v1458 = vunpack.c.l.b16 %v1450
      %v1459 = vunpack.c.l.b16 %v1451
      %v1460 = vunpack.c.l.b16 %v1452
      %v1461 = vpack.c.b16 %v1458, %v1457
      %v1462 = vpack.c.b16 %v1460, %v1459
      %v1466 = vsel %vm1175, %v1440, 0
      %v1469 = vsel %vm1175, %v1441, 0
      %v1472 = vsel %vm1175, %v1442, 0
      %v1475 = vsel %vm1175, %v1443, 0
      %v1478 = vsel %vm1175, %v1444, 0
      %v1481 = vsel %vm1175, %v1445, 0
      %v1484 = vsel %vm1175, %v1446, 0
      %v1487 = vsel %vm1175, %v1447, 0
      %v1490 = vsel %vm1175, %v1448, 0
      %1492 = vmatprep.subr.bf16.mxu0 0
      %1493 = vmatpush1.bf16.msra.mxu0 %v1461
      %1494 = vmatprep.subr.bf16.mxu0 0
      %1495 = vmatpush1.bf16.msra.mxu0 %v1462
      %1496 = vmatprep.subr.bf16.mxu0 0
      %1497 = vmatpush1.bf16.msra.mxu0 0
      %1498 = vmatprep.subr.bf16.mxu0 0
      %1499 = vmatpush1.bf16.msra.mxu0 0
      %1500 = vmatprep.subr.bf16.mxu0 0
      %1501 = vmatpush1.bf16.msra.mxu0 0
      %1502 = vmatprep.subr.bf16.mxu0 0
      %1503 = vmatpush1.bf16.msra.mxu0 0
      %1504 = vmatprep.subr.bf16.mxu0 0
      %1505 = vmatpush1.bf16.msra.mxu0 0
      %1506 = vmatprep.subr.bf16.mxu0 0
      %1507 = vmatpush1.bf16.msra.mxu0 0
      %1508 = vmatprep.subr.bf16.mxu0 0
      %1509 = vmatpush1.bf16.msra.mxu0 0
      %1510 = vmatprep.subr.bf16.mxu0 0
      %1511 = vmatpush1.bf16.msra.mxu0 0
      %1512 = vmatprep.subr.bf16.mxu0 0
      %1513 = vmatpush1.bf16.msra.mxu0 0
      %1514 = vmatprep.subr.bf16.mxu0 0
      %1515 = vmatpush1.bf16.msra.mxu0 0
      %1516 = vmatprep.subr.bf16.mxu0 0
      %1517 = vmatpush1.bf16.msra.mxu0 0
      %1518 = vmatprep.subr.bf16.mxu0 0
      %1519 = vmatpush1.bf16.msra.mxu0 0
      %1520 = vmatprep.subr.bf16.mxu0 0
      %1521 = vmatpush1.bf16.msra.mxu0 0
      %1522 = vmatprep.subr.bf16.mxu0 0
      %1523 = vmatpush1.bf16.msra.mxu0 0
      %1524 = vmatprep.mubr.bf16.mxu0 0
      %1525 = vmatmul.mubr.bf16.gmra.mrb[0].mxu0 %v1466
      %v1526 = vpop.f32.mrb[0].mxu0
      %v1527 = vadd.f32 0.0, %v1526
      %v1528 = vpop.f32.mrb[0].mxu0
      %v1529 = vpop.f32.mrb[0].mxu0
      %v1530 = vadd.f32 0.0, %v1529
      %v1531 = vpop.f32.mrb[0].mxu0
      %1532 = vmatprep.mubr.bf16.mxu0 0
      %1533 = vmatmul.mubr.bf16.gmra.mrb[0].mxu0 %v1469
      %v1534 = vpop.f32.mrb[0].mxu0
      %v1535 = vadd.f32 0.0, %v1534
      %v1536 = vpop.f32.mrb[0].mxu0
      %v1537 = vpop.f32.mrb[0].mxu0
      %v1538 = vadd.f32 0.0, %v1537
      %v1539 = vpop.f32.mrb[0].mxu0
      %1540 = vmatprep.mubr.bf16.mxu0 0
      %1541 = vmatmul.mubr.bf16.gmra.mrb[0].mxu0 %v1472
      %v1542 = vpop.f32.mrb[0].mxu0
      %v1543 = vadd.f32 0.0, %v1542
      %v1544 = vpop.f32.mrb[0].mxu0
      %v1545 = vpop.f32.mrb[0].mxu0
      %v1546 = vadd.f32 0.0, %v1545
      %v1547 = vpop.f32.mrb[0].mxu0
      %1548 = vmatprep.mubr.bf16.mxu0 0
      %1549 = vmatmul.mubr.bf16.gmra.mrb[0].mxu0 %v1475
      %v1550 = vpop.f32.mrb[0].mxu0
      %v1551 = vadd.f32 0.0, %v1550
      %v1552 = vpop.f32.mrb[0].mxu0
      %v1553 = vpop.f32.mrb[0].mxu0
      %v1554 = vadd.f32 0.0, %v1553
      %v1555 = vpop.f32.mrb[0].mxu0
      %1556 = vmatprep.mubr.bf16.mxu0 0
      %1557 = vmatmul.mubr.bf16.gmra.mrb[0].mxu0 %v1478
      %v1558 = vpop.f32.mrb[0].mxu0
      %v1559 = vadd.f32 0.0, %v1558
      %v1560 = vpop.f32.mrb[0].mxu0
      %v1561 = vpop.f32.mrb[0].mxu0
      %v1562 = vadd.f32 0.0, %v1561
      %v1563 = vpop.f32.mrb[0].mxu0
      %1564 = vmatprep.mubr.bf16.mxu0 0
      %1565 = vmatmul.mubr.bf16.gmra.mrb[0].mxu0 %v1481
      %v1566 = vpop.f32.mrb[0].mxu0
      %v1567 = vadd.f32 0.0, %v1566
      %v1568 = vpop.f32.mrb[0].mxu0
      %v1569 = vpop.f32.mrb[0].mxu0
      %v1570 = vadd.f32 0.0, %v1569
      %v1571 = vpop.f32.mrb[0].mxu0
      %1572 = vmatprep.mubr.bf16.mxu0 0
      %1573 = vmatmul.mubr.bf16.gmra.mrb[0].mxu0 %v1484
      %v1574 = vpop.f32.mrb[0].mxu0
      %v1575 = vadd.f32 0.0, %v1574
      %v1576 = vpop.f32.mrb[0].mxu0
      %v1577 = vpop.f32.mrb[0].mxu0
      %v1578 = vadd.f32 0.0, %v1577
      %v1579 = vpop.f32.mrb[0].mxu0
      %1580 = vmatprep.mubr.bf16.mxu0 0
      %1581 = vmatmul.mubr.bf16.gmra.mrb[0].mxu0 %v1487
      %v1582 = vpop.f32.mrb[0].mxu0
      %v1583 = vadd.f32 0.0, %v1582
      %v1584 = vpop.f32.mrb[0].mxu0
      %v1585 = vpop.f32.mrb[0].mxu0
      %v1586 = vadd.f32 0.0, %v1585
      %v1587 = vpop.f32.mrb[0].mxu0
      %1588 = vmatprep.mubr.bf16.mxu0 0
      %1589 = vmatmul.mubr.bf16.gmra.mrb[0].mxu0 %v1490
      %v1590 = vpop.f32.mrb[0].mxu0
      %v1591 = vadd.f32 0.0, %v1590
      %v1592 = vpop.f32.mrb[0].mxu0
      %v1593 = vpop.f32.mrb[0].mxu0
      %v1594 = vpop.f32.mrb[0].mxu0
      %1595 = vdwg.mxu0
      %v1596 = vpack.c.bf16 %v1530, %v1527
      %v1597 = vpack.c.bf16 %v1535, %v1535
      %1600 = vrot.lane.b32.xlu0 %v1596, 96
      %v1601 = vpop.permute.xlu0 %1600
      %1602 = vrot.lane.b32.xlu0 %v1597, 96
      %v1603 = vpop.permute.xlu0 %1602
      %vm1604 = vcmask 64512
      %v1606 = vsel %vm1604, %v1596, 0
      %v1609 = vsel %vm1604, %v1597, 0
      %v1612 = vsel %vm1604, %v1601, 0
      %v1615 = vsel %vm1604, %v1603, 0
      %1617 = vmatprep.subr.bf16.mxu0 0
      %1618 = vmatpush1.bf16.xpose.msra.mxu0 %v1612
      %1619 = vmatprep.subr.bf16.mxu0 0
      %1620 = vmatpush1.bf16.xpose.msra.mxu0 %v1615
      %1621 = vmatprep.subr.bf16.mxu0 0
      %1622 = vmatpush1.bf16.xpose.msra.mxu0 0
      %1623 = vmatprep.subr.bf16.mxu0 0
      %1624 = vmatpush1.bf16.xpose.msra.mxu0 0
      %1625 = vmatprep.subr.bf16.mxu0 0
      %1626 = vmatpush1.bf16.xpose.msra.mxu0 0
      %1627 = vmatprep.subr.bf16.mxu0 0
      %1628 = vmatpush1.bf16.xpose.msra.mxu0 0
      %1629 = vmatprep.subr.bf16.mxu0 0
      %1630 = vmatpush1.bf16.xpose.msra.mxu0 0
      %1631 = vmatprep.subr.bf16.mxu0 0
      %1632 = vmatpush1.bf16.xpose.msra.mxu0 0
      %1633 = vmatprep.subr.bf16.mxu0 0
      %1634 = vmatpush1.bf16.xpose.msra.mxu0 0
      %1635 = vmatprep.subr.bf16.mxu0 0
      %1636 = vmatpush1.bf16.xpose.msra.mxu0 0
      %1637 = vmatprep.subr.bf16.mxu0 0
      %1638 = vmatpush1.bf16.xpose.msra.mxu0 0
      %1639 = vmatprep.subr.bf16.mxu0 0
      %1640 = vmatpush1.bf16.xpose.msra.mxu0 0
      %1641 = vmatprep.subr.bf16.mxu0 0
      %1642 = vmatpush1.bf16.xpose.msra.mxu0 0
      %1643 = vmatprep.subr.bf16.mxu0 0
      %1644 = vmatpush1.bf16.xpose.msra.mxu0 0
      %1645 = vmatprep.subr.bf16.mxu0 0
      %1646 = vmatpush1.bf16.xpose.msra.mxu0 0
      %1647 = vmatprep.subr.bf16.mxu0 0
      %1648 = vmatpush1.bf16.xpose.msra.mxu0 0
      %1649 = vmatprep.mubr.bf16.mxu0 0
      %1650 = vmatmul.mubr.bf16.gmra.mrb[0].mxu0 %v1606
      %v1651 = vpop.f32.mrb[0].mxu0
      %v1652 = vadd.f32 0.0, %v1651
      %v1653 = vpop.f32.mrb[0].mxu0
      %v1654 = vpop.f32.mrb[0].mxu0
      %v1655 = vadd.f32 0.0, %v1654
      %v1656 = vpop.f32.mrb[0].mxu0
      %1657 = vmatprep.mubr.bf16.mxu0 0
      %1658 = vmatmul.mubr.bf16.gmra.mrb[0].mxu0 %v1609
      %v1659 = vpop.f32.mrb[0].mxu0
      %v1660 = vadd.f32 0.0, %v1659
      %v1661 = vpop.f32.mrb[0].mxu0
      %v1662 = vpop.f32.mrb[0].mxu0
      %v1663 = vpop.f32.mrb[0].mxu0
      %1664 = vdwg.mxu0
      %vm1665 = vcmask 138240
      %v1666 = vsel %vm1665, %v1652, -inf
      %1667 = vmax.xlane.f32.xlu0 %v1666
      %v1668 = vpop.xlane.xlu0 %1667
      %v1669 = vsel %vm1665, %v1655, -inf
      %1670 = vmax.xlane.f32.xlu0 %v1669
      %v1671 = vpop.xlane.xlu0 %1670
      %vm1672 = vcmask 131072
      %v1673 = vsel %vm1672, %v1660, -inf
      %1674 = vmax.xlane.f32.xlu0 %v1673
      %v1675 = vpop.xlane.xlu0 %1674
      %v1676 = vsub.f32 %v1652, %v1668
      %v1677 = vsub.f32 %v1655, %v1671
      %v1678 = vsub.f32 %v1660, %v1675
      %v1679 = vmul.f32 %v1676, 1.442695
      %v1680 = vpow.pop %v1679
      %v1681 = vmul.f32 %v1677, 1.442695
      %v1682 = vpow.pop %v1681
      %v1683 = vmul.f32 %v1678, 1.442695
      %v1684 = vpow.pop %v1683
      %v1685 = vsel %vm1665, %v1680, 0.0
      %1686 = vadd.xlane.f32.xlu0 %v1685
      %v1687 = vpop.xlane.xlu0 %1686
      %v1688 = vsel %vm1665, %v1682, 0.0
      %1689 = vadd.xlane.f32.xlu0 %v1688
      %v1690 = vpop.xlane.xlu0 %1689
      %v1691 = vsel %vm1672, %v1684, 0.0
      %1692 = vadd.xlane.f32.xlu0 %v1691
      %v1693 = vpop.xlane.xlu0 %1692
      %v1694 = vrcp.pop %v1687
      %v1695 = vrcp.pop %v1690
      %v1696 = vrcp.pop %v1693
      %v1697 = vpack.c.bf16 %v1682, %v1680
      %v1698 = vpack.c.bf16 %v1684, %v1684
      %1699 = vrot.lane.b32.xlu0 %v1596, 64
      %v1700 = vpop.permute.xlu0 %1699
      %1701 = vrot.lane.b32.xlu0 %v1597, 64
      %v1702 = vpop.permute.xlu0 %1701
      %v1705 = vsel %vm1665, %v1697, 0
      %v1708 = vsel %vm1665, %v1698, 0
      %vm1710 = vcmask 1040384
      %v1711 = vsel 0, 4294967295, 65535
      %v1712 = vsel %vm1710, %v1711, 0
      %v1714 = vand.u32 %v1702, %v1712
      %1716 = vmatprep.subr.bf16.mxu0 0
      %1717 = vmatpush1.bf16.msra.mxu0 %v1700
      %1718 = vmatprep.subr.bf16.mxu0 0
      %1719 = vmatpush1.bf16.msra.mxu0 %v1714
      %1720 = vmatprep.subr.bf16.mxu0 0
      %1721 = vmatpush1.bf16.msra.mxu0 0
      %1722 = vmatprep.subr.bf16.mxu0 0
      %1723 = vmatpush1.bf16.msra.mxu0 0
      %1724 = vmatprep.subr.bf16.mxu0 0
      %1725 = vmatpush1.bf16.msra.mxu0 0
      %1726 = vmatprep.subr.bf16.mxu0 0
      %1727 = vmatpush1.bf16.msra.mxu0 0
      %1728 = vmatprep.subr.bf16.mxu0 0
      %1729 = vmatpush1.bf16.msra.mxu0 0
      %1730 = vmatprep.subr.bf16.mxu0 0
      %1731 = vmatpush1.bf16.msra.mxu0 0
      %1732 = vmatprep.subr.bf16.mxu0 0
      %1733 = vmatpush1.bf16.msra.mxu0 0
      %1734 = vmatprep.subr.bf16.mxu0 0
      %1735 = vmatpush1.bf16.msra.mxu0 0
      %1736 = vmatprep.subr.bf16.mxu0 0
      %1737 = vmatpush1.bf16.msra.mxu0 0
      %1738 = vmatprep.subr.bf16.mxu0 0
      %1739 = vmatpush1.bf16.msra.mxu0 0
      %1740 = vmatprep.subr.bf16.mxu0 0
      %1741 = vmatpush1.bf16.msra.mxu0 0
      %1742 = vmatprep.subr.bf16.mxu0 0
      %1743 = vmatpush1.bf16.msra.mxu0 0
      %1744 = vmatprep.subr.bf16.mxu0 0
      %1745 = vmatpush1.bf16.msra.mxu0 0
      %1746 = vmatprep.subr.bf16.mxu0 0
      %1747 = vmatpush1.bf16.msra.mxu0 0
      %1748 = vmatprep.mubr.bf16.mxu0 0
      %1749 = vmatmul.mubr.bf16.gmra.mrb[0].mxu0 %v1705
      %v1750 = vpop.f32.mrb[0].mxu0
      %v1751 = vadd.f32 0.0, %v1750
      %v1752 = vpop.f32.mrb[0].mxu0
      %v1753 = vpop.f32.mrb[0].mxu0
      %v1754 = vadd.f32 0.0, %v1753
      %v1755 = vpop.f32.mrb[0].mxu0
      %1756 = vmatprep.mubr.bf16.mxu0 0
      %1757 = vmatmul.mubr.bf16.gmra.mrb[0].mxu0 %v1708
      %v1758 = vpop.f32.mrb[0].mxu0
      %v1759 = vadd.f32 0.0, %v1758
      %v1760 = vpop.f32.mrb[0].mxu0
      %v1761 = vpop.f32.mrb[0].mxu0
      %v1762 = vpop.f32.mrb[0].mxu0
      %1763 = vdwg.mxu0
      %v1764 = vmul.f32 %v1751, %v1694
      %v1765 = vmul.f32 %v1754, %v1695
      %v1766 = vmul.f32 %v1759, %v1696
      %1767 = vrot.lane.b32.xlu0 %v1596, 120
      %v1768 = vpop.permute.xlu0 %1767
      %1769 = vrot.lane.b32.xlu0 %v1597, 120
      %v1770 = vpop.permute.xlu0 %1769
      %1771 = vrot.lane.b32.xlu0 %v1596, 88
      %v1772 = vpop.permute.xlu0 %1771
      %1773 = vrot.lane.b32.xlu0 %v1597, 88
      %v1774 = vpop.permute.xlu0 %1773
      %v1776 = vsel %vm1604, %v1768, 0
      %v1779 = vsel %vm1604, %v1770, 0
      %v1782 = vsel %vm1604, %v1772, 0
      %v1785 = vsel %vm1604, %v1774, 0
      %1787 = vmatprep.subr.bf16.mxu0 0
      %1788 = vmatpush1.bf16.xpose.msra.mxu0 %v1782
      %1789 = vmatprep.subr.bf16.mxu0 0
      %1790 = vmatpush1.bf16.xpose.msra.mxu0 %v1785
      %1791 = vmatprep.subr.bf16.mxu0 0
      %1792 = vmatpush1.bf16.xpose.msra.mxu0 0
      %1793 = vmatprep.subr.bf16.mxu0 0
      %1794 = vmatpush1.bf16.xpose.msra.mxu0 0
      %1795 = vmatprep.subr.bf16.mxu0 0
      %1796 = vmatpush1.bf16.xpose.msra.mxu0 0
      %1797 = vmatprep.subr.bf16.mxu0 0
      %1798 = vmatpush1.bf16.xpose.msra.mxu0 0
      %1799 = vmatprep.subr.bf16.mxu0 0
      %1800 = vmatpush1.bf16.xpose.msra.mxu0 0
      %1801 = vmatprep.subr.bf16.mxu0 0
      %1802 = vmatpush1.bf16.xpose.msra.mxu0 0
      %1803 = vmatprep.subr.bf16.mxu0 0
      %1804 = vmatpush1.bf16.xpose.msra.mxu0 0
      %1805 = vmatprep.subr.bf16.mxu0 0
      %1806 = vmatpush1.bf16.xpose.msra.mxu0 0
      %1807 = vmatprep.subr.bf16.mxu0 0
      %1808 = vmatpush1.bf16.xpose.msra.mxu0 0
      %1809 = vmatprep.subr.bf16.mxu0 0
      %1810 = vmatpush1.bf16.xpose.msra.mxu0 0
      %1811 = vmatprep.subr.bf16.mxu0 0
      %1812 = vmatpush1.bf16.xpose.msra.mxu0 0
      %1813 = vmatprep.subr.bf16.mxu0 0
      %1814 = vmatpush1.bf16.xpose.msra.mxu0 0
      %1815 = vmatprep.subr.bf16.mxu0 0
      %1816 = vmatpush1.bf16.xpose.msra.mxu0 0
      %1817 = vmatprep.subr.bf16.mxu0 0
      %1818 = vmatpush1.bf16.xpose.msra.mxu0 0
      %1819 = vmatprep.mubr.bf16.mxu0 0
      %1820 = vmatmul.mubr.bf16.gmra.mrb[0].mxu0 %v1776
      %v1821 = vpop.f32.mrb[0].mxu0
      %v1822 = vadd.f32 0.0, %v1821
      %v1823 = vpop.f32.mrb[0].mxu0
      %v1824 = vpop.f32.mrb[0].mxu0
      %v1825 = vadd.f32 0.0, %v1824
      %v1826 = vpop.f32.mrb[0].mxu0
      %1827 = vmatprep.mubr.bf16.mxu0 0
      %1828 = vmatmul.mubr.bf16.gmra.mrb[0].mxu0 %v1779
      %v1829 = vpop.f32.mrb[0].mxu0
      %v1830 = vadd.f32 0.0, %v1829
      %v1831 = vpop.f32.mrb[0].mxu0
      %v1832 = vpop.f32.mrb[0].mxu0
      %v1833 = vpop.f32.mrb[0].mxu0
      %1834 = vdwg.mxu0
      %v1835 = vsel %vm1665, %v1822, -inf
      %1836 = vmax.xlane.f32.xlu0 %v1835
      %v1837 = vpop.xlane.xlu0 %1836
      %v1838 = vsel %vm1665, %v1825, -inf
      %1839 = vmax.xlane.f32.xlu0 %v1838
      %v1840 = vpop.xlane.xlu0 %1839
      %v1841 = vsel %vm1672, %v1830, -inf
      %1842 = vmax.xlane.f32.xlu0 %v1841
      %v1843 = vpop.xlane.xlu0 %1842
      %v1844 = vsub.f32 %v1822, %v1837
      %v1845 = vsub.f32 %v1825, %v1840
      %v1846 = vsub.f32 %v1830, %v1843
      %v1847 = vmul.f32 %v1844, 1.442695
      %v1848 = vpow.pop %v1847
      %v1849 = vmul.f32 %v1845, 1.442695
      %v1850 = vpow.pop %v1849
      %v1851 = vmul.f32 %v1846, 1.442695
      %v1852 = vpow.pop %v1851
      %v1853 = vsel %vm1665, %v1848, 0.0
      %1854 = vadd.xlane.f32.xlu0 %v1853
      %v1855 = vpop.xlane.xlu0 %1854
      %v1856 = vsel %vm1665, %v1850, 0.0
      %1857 = vadd.xlane.f32.xlu0 %v1856
      %v1858 = vpop.xlane.xlu0 %1857
      %v1859 = vsel %vm1672, %v1852, 0.0
      %1860 = vadd.xlane.f32.xlu0 %v1859
      %v1861 = vpop.xlane.xlu0 %1860
      %v1862 = vrcp.pop %v1855
      %v1863 = vrcp.pop %v1858
      %v1864 = vrcp.pop %v1861
      %v1865 = vpack.c.bf16 %v1850, %v1848
      %v1866 = vpack.c.bf16 %v1852, %v1852
      %1867 = vrot.lane.b32.xlu0 %v1596, 56
      %v1868 = vpop.permute.xlu0 %1867
      %1869 = vrot.lane.b32.xlu0 %v1597, 56
      %v1870 = vpop.permute.xlu0 %1869
      %v1873 = vsel %vm1665, %v1865, 0
      %v1876 = vsel %vm1665, %v1866, 0
      %v1879 = vand.u32 %v1870, %v1712
      %1881 = vmatprep.subr.bf16.mxu0 0
      %1882 = vmatpush1.bf16.msra.mxu0 %v1868
      %1883 = vmatprep.subr.bf16.mxu0 0
      %1884 = vmatpush1.bf16.msra.mxu0 %v1879
      %1885 = vmatprep.subr.bf16.mxu0 0
      %1886 = vmatpush1.bf16.msra.mxu0 0
      %1887 = vmatprep.subr.bf16.mxu0 0
      %1888 = vmatpush1.bf16.msra.mxu0 0
      %1889 = vmatprep.subr.bf16.mxu0 0
      %1890 = vmatpush1.bf16.msra.mxu0 0
      %1891 = vmatprep.subr.bf16.mxu0 0
      %1892 = vmatpush1.bf16.msra.mxu0 0
      %1893 = vmatprep.subr.bf16.mxu0 0
      %1894 = vmatpush1.bf16.msra.mxu0 0
      %1895 = vmatprep.subr.bf16.mxu0 0
      %1896 = vmatpush1.bf16.msra.mxu0 0
      %1897 = vmatprep.subr.bf16.mxu0 0
      %1898 = vmatpush1.bf16.msra.mxu0 0
      %1899 = vmatprep.subr.bf16.mxu0 0
      %1900 = vmatpush1.bf16.msra.mxu0 0
      %1901 = vmatprep.subr.bf16.mxu0 0
      %1902 = vmatpush1.bf16.msra.mxu0 0
      %1903 = vmatprep.subr.bf16.mxu0 0
      %1904 = vmatpush1.bf16.msra.mxu0 0
      %1905 = vmatprep.subr.bf16.mxu0 0
      %1906 = vmatpush1.bf16.msra.mxu0 0
      %1907 = vmatprep.subr.bf16.mxu0 0
      %1908 = vmatpush1.bf16.msra.mxu0 0
      %1909 = vmatprep.subr.bf16.mxu0 0
      %1910 = vmatpush1.bf16.msra.mxu0 0
      %1911 = vmatprep.subr.bf16.mxu0 0
      %1912 = vmatpush1.bf16.msra.mxu0 0
      %1913 = vmatprep.mubr.bf16.mxu0 0
      %1914 = vmatmul.mubr.bf16.gmra.mrb[0].mxu0 %v1873
      %v1915 = vpop.f32.mrb[0].mxu0
      %v1916 = vadd.f32 0.0, %v1915
      %v1917 = vpop.f32.mrb[0].mxu0
      %v1918 = vpop.f32.mrb[0].mxu0
      %v1919 = vadd.f32 0.0, %v1918
      %v1920 = vpop.f32.mrb[0].mxu0
      %1921 = vmatprep.mubr.bf16.mxu0 0
      %1922 = vmatmul.mubr.bf16.gmra.mrb[0].mxu0 %v1876
      %v1923 = vpop.f32.mrb[0].mxu0
      %v1924 = vadd.f32 0.0, %v1923
      %v1925 = vpop.f32.mrb[0].mxu0
      %v1926 = vpop.f32.mrb[0].mxu0
      %v1927 = vpop.f32.mrb[0].mxu0
      %1928 = vdwg.mxu0
      %v1929 = vmul.f32 %v1916, %v1862
      %v1930 = vmul.f32 %v1919, %v1863
      %v1931 = vmul.f32 %v1924, %v1864
      %1932 = vrot.lane.b32.xlu0 %v1596, 112
      %v1933 = vpop.permute.xlu0 %1932
      %1934 = vrot.lane.b32.xlu0 %v1597, 112
      %v1935 = vpop.permute.xlu0 %1934
      %1936 = vrot.lane.b32.xlu0 %v1596, 80
      %v1937 = vpop.permute.xlu0 %1936
      %1938 = vrot.lane.b32.xlu0 %v1597, 80
      %v1939 = vpop.permute.xlu0 %1938
      %v1941 = vsel %vm1604, %v1933, 0
      %v1944 = vsel %vm1604, %v1935, 0
      %v1947 = vsel %vm1604, %v1937, 0
      %v1950 = vsel %vm1604, %v1939, 0
      %1952 = vmatprep.subr.bf16.mxu0 0
      %1953 = vmatpush1.bf16.xpose.msra.mxu0 %v1947
      %1954 = vmatprep.subr.bf16.mxu0 0
      %1955 = vmatpush1.bf16.xpose.msra.mxu0 %v1950
      %1956 = vmatprep.subr.bf16.mxu0 0
      %1957 = vmatpush1.bf16.xpose.msra.mxu0 0
      %1958 = vmatprep.subr.bf16.mxu0 0
      %1959 = vmatpush1.bf16.xpose.msra.mxu0 0
      %1960 = vmatprep.subr.bf16.mxu0 0
      %1961 = vmatpush1.bf16.xpose.msra.mxu0 0
      %1962 = vmatprep.subr.bf16.mxu0 0
      %1963 = vmatpush1.bf16.xpose.msra.mxu0 0
      %1964 = vmatprep.subr.bf16.mxu0 0
      %1965 = vmatpush1.bf16.xpose.msra.mxu0 0
      %1966 = vmatprep.subr.bf16.mxu0 0
      %1967 = vmatpush1.bf16.xpose.msra.mxu0 0
      %1968 = vmatprep.subr.bf16.mxu0 0
      %1969 = vmatpush1.bf16.xpose.msra.mxu0 0
      %1970 = vmatprep.subr.bf16.mxu0 0
      %1971 = vmatpush1.bf16.xpose.msra.mxu0 0
      %1972 = vmatprep.subr.bf16.mxu0 0
      %1973 = vmatpush1.bf16.xpose.msra.mxu0 0
      %1974 = vmatprep.subr.bf16.mxu0 0
      %1975 = vmatpush1.bf16.xpose.msra.mxu0 0
      %1976 = vmatprep.subr.bf16.mxu0 0
      %1977 = vmatpush1.bf16.xpose.msra.mxu0 0
      %1978 = vmatprep.subr.bf16.mxu0 0
      %1979 = vmatpush1.bf16.xpose.msra.mxu0 0
      %1980 = vmatprep.subr.bf16.mxu0 0
      %1981 = vmatpush1.bf16.xpose.msra.mxu0 0
      %1982 = vmatprep.subr.bf16.mxu0 0
      %1983 = vmatpush1.bf16.xpose.msra.mxu0 0
      %1984 = vmatprep.mubr.bf16.mxu0 0
      %1985 = vmatmul.mubr.bf16.gmra.mrb[0].mxu0 %v1941
      %v1986 = vpop.f32.mrb[0].mxu0
      %v1987 = vadd.f32 0.0, %v1986
      %v1988 = vpop.f32.mrb[0].mxu0
      %v1989 = vpop.f32.mrb[0].mxu0
      %v1990 = vadd.f32 0.0, %v1989
      %v1991 = vpop.f32.mrb[0].mxu0
      %1992 = vmatprep.mubr.bf16.mxu0 0
      %1993 = vmatmul.mubr.bf16.gmra.mrb[0].mxu0 %v1944
      %v1994 = vpop.f32.mrb[0].mxu0
      %v1995 = vadd.f32 0.0, %v1994
      %v1996 = vpop.f32.mrb[0].mxu0
      %v1997 = vpop.f32.mrb[0].mxu0
      %v1998 = vpop.f32.mrb[0].mxu0
      %1999 = vdwg.mxu0
      %v2000 = vsel %vm1665, %v1987, -inf
      %2001 = vmax.xlane.f32.xlu0 %v2000
      %v2002 = vpop.xlane.xlu0 %2001
      %v2003 = vsel %vm1665, %v1990, -inf
      %2004 = vmax.xlane.f32.xlu0 %v2003
      %v2005 = vpop.xlane.xlu0 %2004
      %v2006 = vsel %vm1672, %v1995, -inf
      %2007 = vmax.xlane.f32.xlu0 %v2006
      %v2008 = vpop.xlane.xlu0 %2007
      %v2009 = vsub.f32 %v1987, %v2002
      %v2010 = vsub.f32 %v1990, %v2005
      %v2011 = vsub.f32 %v1995, %v2008
      %v2012 = vmul.f32 %v2009, 1.442695
      %v2013 = vpow.pop %v2012
      %v2014 = vmul.f32 %v2010, 1.442695
      %v2015 = vpow.pop %v2014
      %v2016 = vmul.f32 %v2011, 1.442695
      %v2017 = vpow.pop %v2016
      %v2018 = vsel %vm1665, %v2013, 0.0
      %2019 = vadd.xlane.f32.xlu0 %v2018
      %v2020 = vpop.xlane.xlu0 %2019
      %v2021 = vsel %vm1665, %v2015, 0.0
      %2022 = vadd.xlane.f32.xlu0 %v2021
      %v2023 = vpop.xlane.xlu0 %2022
      %v2024 = vsel %vm1672, %v2017, 0.0
      %2025 = vadd.xlane.f32.xlu0 %v2024
      %v2026 = vpop.xlane.xlu0 %2025
      %v2027 = vrcp.pop %v2020
      %v2028 = vrcp.pop %v2023
      %v2029 = vrcp.pop %v2026
      %v2030 = vpack.c.bf16 %v2015, %v2013
      %v2031 = vpack.c.bf16 %v2017, %v2017
      %2032 = vrot.lane.b32.xlu0 %v1596, 48
      %v2033 = vpop.permute.xlu0 %2032
      %2034 = vrot.lane.b32.xlu0 %v1597, 48
      %v2035 = vpop.permute.xlu0 %2034
      %v2038 = vsel %vm1665, %v2030, 0
      %v2041 = vsel %vm1665, %v2031, 0
      %v2044 = vand.u32 %v2035, %v1712
      %2046 = vmatprep.subr.bf16.mxu0 0
      %2047 = vmatpush1.bf16.msra.mxu0 %v2033
      %2048 = vmatprep.subr.bf16.mxu0 0
      %2049 = vmatpush1.bf16.msra.mxu0 %v2044
      %2050 = vmatprep.subr.bf16.mxu0 0
      %2051 = vmatpush1.bf16.msra.mxu0 0
      %2052 = vmatprep.subr.bf16.mxu0 0
      %2053 = vmatpush1.bf16.msra.mxu0 0
      %2054 = vmatprep.subr.bf16.mxu0 0
      %2055 = vmatpush1.bf16.msra.mxu0 0
      %2056 = vmatprep.subr.bf16.mxu0 0
      %2057 = vmatpush1.bf16.msra.mxu0 0
      %2058 = vmatprep.subr.bf16.mxu0 0
      %2059 = vmatpush1.bf16.msra.mxu0 0
      %2060 = vmatprep.subr.bf16.mxu0 0
      %2061 = vmatpush1.bf16.msra.mxu0 0
      %2062 = vmatprep.subr.bf16.mxu0 0
      %2063 = vmatpush1.bf16.msra.mxu0 0
      %2064 = vmatprep.subr.bf16.mxu0 0
      %2065 = vmatpush1.bf16.msra.mxu0 0
      %2066 = vmatprep.subr.bf16.mxu0 0
      %2067 = vmatpush1.bf16.msra.mxu0 0
      %2068 = vmatprep.subr.bf16.mxu0 0
      %2069 = vmatpush1.bf16.msra.mxu0 0
      %2070 = vmatprep.subr.bf16.mxu0 0
      %2071 = vmatpush1.bf16.msra.mxu0 0
      %2072 = vmatprep.subr.bf16.mxu0 0
      %2073 = vmatpush1.bf16.msra.mxu0 0
      %2074 = vmatprep.subr.bf16.mxu0 0
      %2075 = vmatpush1.bf16.msra.mxu0 0
      %2076 = vmatprep.subr.bf16.mxu0 0
      %2077 = vmatpush1.bf16.msra.mxu0 0
      %2078 = vmatprep.mubr.bf16.mxu0 0
      %2079 = vmatmul.mubr.bf16.gmra.mrb[0].mxu0 %v2038
      %v2080 = vpop.f32.mrb[0].mxu0
      %v2081 = vadd.f32 0.0, %v2080
      %v2082 = vpop.f32.mrb[0].mxu0
      %v2083 = vpop.f32.mrb[0].mxu0
      %v2084 = vadd.f32 0.0, %v2083
      %v2085 = vpop.f32.mrb[0].mxu0
      %2086 = vmatprep.mubr.bf16.mxu0 0
      %2087 = vmatmul.mubr.bf16.gmra.mrb[0].mxu0 %v2041
      %v2088 = vpop.f32.mrb[0].mxu0
      %v2089 = vadd.f32 0.0, %v2088
      %v2090 = vpop.f32.mrb[0].mxu0
      %v2091 = vpop.f32.mrb[0].mxu0
      %v2092 = vpop.f32.mrb[0].mxu0
      %2093 = vdwg.mxu0
      %v2094 = vmul.f32 %v2081, %v2027
      %v2095 = vmul.f32 %v2084, %v2028
      %v2096 = vmul.f32 %v2089, %v2029
      %2097 = vrot.lane.b32.xlu0 %v1596, 104
      %v2098 = vpop.permute.xlu0 %2097
      %2099 = vrot.lane.b32.xlu0 %v1597, 104
      %v2100 = vpop.permute.xlu0 %2099
      %2101 = vrot.lane.b32.xlu0 %v1596, 72
      %v2102 = vpop.permute.xlu0 %2101
      %2103 = vrot.lane.b32.xlu0 %v1597, 72
      %v2104 = vpop.permute.xlu0 %2103
      %v2106 = vsel %vm1604, %v2098, 0
      %v2109 = vsel %vm1604, %v2100, 0
      %v2112 = vsel %vm1604, %v2102, 0
      %v2115 = vsel %vm1604, %v2104, 0
      %2117 = vmatprep.subr.bf16.mxu0 0
      %2118 = vmatpush1.bf16.xpose.msra.mxu0 %v2112
      %2119 = vmatprep.subr.bf16.mxu0 0
      %2120 = vmatpush1.bf16.xpose.msra.mxu0 %v2115
      %2121 = vmatprep.subr.bf16.mxu0 0
      %2122 = vmatpush1.bf16.xpose.msra.mxu0 0
      %2123 = vmatprep.subr.bf16.mxu0 0
      %2124 = vmatpush1.bf16.xpose.msra.mxu0 0
      %2125 = vmatprep.subr.bf16.mxu0 0
      %2126 = vmatpush1.bf16.xpose.msra.mxu0 0
      %2127 = vmatprep.subr.bf16.mxu0 0
      %2128 = vmatpush1.bf16.xpose.msra.mxu0 0
      %2129 = vmatprep.subr.bf16.mxu0 0
      %2130 = vmatpush1.bf16.xpose.msra.mxu0 0
      %2131 = vmatprep.subr.bf16.mxu0 0
      %2132 = vmatpush1.bf16.xpose.msra.mxu0 0
      %2133 = vmatprep.subr.bf16.mxu0 0
      %2134 = vmatpush1.bf16.xpose.msra.mxu0 0
      %2135 = vmatprep.subr.bf16.mxu0 0
      %2136 = vmatpush1.bf16.xpose.msra.mxu0 0
      %2137 = vmatprep.subr.bf16.mxu0 0
      %2138 = vmatpush1.bf16.xpose.msra.mxu0 0
      %2139 = vmatprep.subr.bf16.mxu0 0
      %2140 = vmatpush1.bf16.xpose.msra.mxu0 0
      %2141 = vmatprep.subr.bf16.mxu0 0
      %2142 = vmatpush1.bf16.xpose.msra.mxu0 0
      %2143 = vmatprep.subr.bf16.mxu0 0
      %2144 = vmatpush1.bf16.xpose.msra.mxu0 0
      %2145 = vmatprep.subr.bf16.mxu0 0
      %2146 = vmatpush1.bf16.xpose.msra.mxu0 0
      %2147 = vmatprep.subr.bf16.mxu0 0
      %2148 = vmatpush1.bf16.xpose.msra.mxu0 0
      %2149 = vmatprep.mubr.bf16.mxu0 0
      %2150 = vmatmul.mubr.bf16.gmra.mrb[0].mxu0 %v2106
      %v2151 = vpop.f32.mrb[0].mxu0
      %v2152 = vadd.f32 0.0, %v2151
      %v2153 = vpop.f32.mrb[0].mxu0
      %v2154 = vpop.f32.mrb[0].mxu0
      %v2155 = vadd.f32 0.0, %v2154
      %v2156 = vpop.f32.mrb[0].mxu0
      %2157 = vmatprep.mubr.bf16.mxu0 0
      %2158 = vmatmul.mubr.bf16.gmra.mrb[0].mxu0 %v2109
      %v2159 = vpop.f32.mrb[0].mxu0
      %v2160 = vadd.f32 0.0, %v2159
      %v2161 = vpop.f32.mrb[0].mxu0
      %v2162 = vpop.f32.mrb[0].mxu0
      %v2163 = vpop.f32.mrb[0].mxu0
      %2164 = vdwg.mxu0
      %v2165 = vsel %vm1665, %v2152, -inf
      %2166 = vmax.xlane.f32.xlu0 %v2165
      %v2167 = vpop.xlane.xlu0 %2166
      %v2168 = vsel %vm1665, %v2155, -inf
      %2169 = vmax.xlane.f32.xlu0 %v2168
      %v2170 = vpop.xlane.xlu0 %2169
      %v2171 = vsel %vm1672, %v2160, -inf
      %2172 = vmax.xlane.f32.xlu0 %v2171
      %v2173 = vpop.xlane.xlu0 %2172
      %v2174 = vsub.f32 %v2152, %v2167
      %v2175 = vsub.f32 %v2155, %v2170
      %v2176 = vsub.f32 %v2160, %v2173
      %v2177 = vmul.f32 %v2174, 1.442695
      %v2178 = vpow.pop %v2177
      %v2179 = vmul.f32 %v2175, 1.442695
      %v2180 = vpow.pop %v2179
      %v2181 = vmul.f32 %v2176, 1.442695
      %v2182 = vpow.pop %v2181
      %v2183 = vsel %vm1665, %v2178, 0.0
      %2184 = vadd.xlane.f32.xlu0 %v2183
      %v2185 = vpop.xlane.xlu0 %2184
      %v2186 = vsel %vm1665, %v2180, 0.0
      %2187 = vadd.xlane.f32.xlu0 %v2186
      %v2188 = vpop.xlane.xlu0 %2187
      %v2189 = vsel %vm1672, %v2182, 0.0
      %2190 = vadd.xlane.f32.xlu0 %v2189
      %v2191 = vpop.xlane.xlu0 %2190
      %v2192 = vrcp.pop %v2185
      %v2193 = vrcp.pop %v2188
      %v2194 = vrcp.pop %v2191
      %v2195 = vpack.c.bf16 %v2180, %v2178
      %v2196 = vpack.c.bf16 %v2182, %v2182
      %2197 = vrot.lane.b32.xlu0 %v1596, 40
      %v2198 = vpop.permute.xlu0 %2197
      %2199 = vrot.lane.b32.xlu0 %v1597, 40
      %v2200 = vpop.permute.xlu0 %2199
      %v2203 = vsel %vm1665, %v2195, 0
      %v2206 = vsel %vm1665, %v2196, 0
      %v2209 = vand.u32 %v2200, %v1712
      %2211 = vmatprep.subr.bf16.mxu0 0
      %2212 = vmatpush1.bf16.msra.mxu0 %v2198
      %2213 = vmatprep.subr.bf16.mxu0 0
      %2214 = vmatpush1.bf16.msra.mxu0 %v2209
      %2215 = vmatprep.subr.bf16.mxu0 0
      %2216 = vmatpush1.bf16.msra.mxu0 0
      %2217 = vmatprep.subr.bf16.mxu0 0
      %2218 = vmatpush1.bf16.msra.mxu0 0
      %2219 = vmatprep.subr.bf16.mxu0 0
      %2220 = vmatpush1.bf16.msra.mxu0 0
      %2221 = vmatprep.subr.bf16.mxu0 0
      %2222 = vmatpush1.bf16.msra.mxu0 0
      %2223 = vmatprep.subr.bf16.mxu0 0
      %2224 = vmatpush1.bf16.msra.mxu0 0
      %2225 = vmatprep.subr.bf16.mxu0 0
      %2226 = vmatpush1.bf16.msra.mxu0 0
      %2227 = vmatprep.subr.bf16.mxu0 0
      %2228 = vmatpush1.bf16.msra.mxu0 0
      %2229 = vmatprep.subr.bf16.mxu0 0
      %2230 = vmatpush1.bf16.msra.mxu0 0
      %2231 = vmatprep.subr.bf16.mxu0 0
      %2232 = vmatpush1.bf16.msra.mxu0 0
      %2233 = vmatprep.subr.bf16.mxu0 0
      %2234 = vmatpush1.bf16.msra.mxu0 0
      %2235 = vmatprep.subr.bf16.mxu0 0
      %2236 = vmatpush1.bf16.msra.mxu0 0
      %2237 = vmatprep.subr.bf16.mxu0 0
      %2238 = vmatpush1.bf16.msra.mxu0 0
      %2239 = vmatprep.subr.bf16.mxu0 0
      %2240 = vmatpush1.bf16.msra.mxu0 0
      %2241 = vmatprep.subr.bf16.mxu0 0
      %2242 = vmatpush1.bf16.msra.mxu0 0
      %2243 = vmatprep.mubr.bf16.mxu0 0
      %2244 = vmatmul.mubr.bf16.gmra.mrb[0].mxu0 %v2203
      %v2245 = vpop.f32.mrb[0].mxu0
      %v2246 = vadd.f32 0.0, %v2245
      %v2247 = vpop.f32.mrb[0].mxu0
      %v2248 = vpop.f32.mrb[0].mxu0
      %v2249 = vadd.f32 0.0, %v2248
      %v2250 = vpop.f32.mrb[0].mxu0
      %2251 = vmatprep.mubr.bf16.mxu0 0
      %2252 = vmatmul.mubr.bf16.gmra.mrb[0].mxu0 %v2206
      %v2253 = vpop.f32.mrb[0].mxu0
      %v2254 = vadd.f32 0.0, %v2253
      %v2255 = vpop.f32.mrb[0].mxu0
      %v2256 = vpop.f32.mrb[0].mxu0
      %v2257 = vpop.f32.mrb[0].mxu0
      %2258 = vdwg.mxu0
      %v2259 = vmul.f32 %v2246, %v2192
      %v2260 = vmul.f32 %v2249, %v2193
      %v2261 = vmul.f32 %v2254, %v2194
      %2265 = vrot.lane.b32.xlu0 %v1929, 8
      %v2266 = vpop.permute.xlu0 %2265
      %2267 = vrot.lane.b32.xlu0 %v1930, 8
      %v2268 = vpop.permute.xlu0 %2267
      %2269 = vrot.lane.b32.xlu0 %v1931, 8
      %v2270 = vpop.permute.xlu0 %2269
      %2277 = vrot.lane.b32.xlu0 %v2094, 16
      %v2278 = vpop.permute.xlu0 %2277
      %2279 = vrot.lane.b32.xlu0 %v2095, 16
      %v2280 = vpop.permute.xlu0 %2279
      %2281 = vrot.lane.b32.xlu0 %v2096, 16
      %v2282 = vpop.permute.xlu0 %2281
      %2289 = vrot.lane.b32.xlu0 %v2259, 24
      %v2290 = vpop.permute.xlu0 %2289
      %2291 = vrot.lane.b32.xlu0 %v2260, 24
      %v2292 = vpop.permute.xlu0 %2291
      %2293 = vrot.lane.b32.xlu0 %v2261, 24
      %v2294 = vpop.permute.xlu0 %2293
      %v2298 = vsel %vm1604, %v1764, %v2266
      %v2299 = vsel %vm1604, %v1765, %v2268
      %v2300 = vsel %vm1604, %v1766, %v2270
      %vm2301 = vcmask 130048
      %v2302 = vsel %vm2301, %v2298, %v2278
      %v2303 = vsel %vm2301, %v2299, %v2280
      %v2304 = vsel %vm2301, %v2300, %v2282
      %vm2305 = vcmask 195584
      %v2306 = vsel %vm2305, %v2302, %v2290
      %v2307 = vsel %vm2305, %v2303, %v2292
      %v2308 = vsel %vm2305, %v2304, %v2294
      %2309 = vst.msk [vmem:[#allocation2] sm:$0xff] %vm1175, %v2306
      %2310 = vst.msk [vmem:[#allocation2 + $0x8] sm:$0xff] %vm1175, %v2307
      %vm2311 = vcmask 253952
      %2312 = vst.msk [vmem:[#allocation2 + $0x10] sm:$0x1] %vm2311, %v2308
      %v2313 = vpack.c.bf16 %v1538, %v1535
      %v2314 = vpack.c.bf16 %v1543, %v1543
      %vm2315 = vsmask.f32 7424
      %v2317 = vshrl.u32 %v2313, 16
      %v2319 = vshll.u32 %v2313, 16
      %v2321 = vrot.slane %v2319, 1
      %v2322 = vor.u32 %v2317, %v2321
      %v2324 = vshll.u32 %v2314, 16
      %v2326 = vrot.slane %v2324, 1
      %v2327 = vsel %vm2315, %v2322, %v2326
      %v2328 = vshrl.u32 %v2314, 16
      %2330 = vrot.lane.b32.xlu0 %v2327, 96
      %v2331 = vpop.permute.xlu0 %2330
      %2332 = vrot.lane.b32.xlu0 %v2328, 96
      %v2333 = vpop.permute.xlu0 %2332
      %v2335 = vsel %vm1604, %v2327, 0
      %v2338 = vsel %vm1604, %v2328, 0
      %v2341 = vsel %vm1604, %v2331, 0
      %v2344 = vsel %vm1604, %v2333, 0
      %2346 = vmatprep.subr.bf16.mxu0 0
      %2347 = vmatpush1.bf16.xpose.msra.mxu0 %v2341
      %2348 = vmatprep.subr.bf16.mxu0 0
      %2349 = vmatpush1.bf16.xpose.msra.mxu0 %v2344
      %2350 = vmatprep.subr.bf16.mxu0 0
      %2351 = vmatpush1.bf16.xpose.msra.mxu0 0
      %2352 = vmatprep.subr.bf16.mxu0 0
      %2353 = vmatpush1.bf16.xpose.msra.mxu0 0
      %2354 = vmatprep.subr.bf16.mxu0 0
      %2355 = vmatpush1.bf16.xpose.msra.mxu0 0
      %2356 = vmatprep.subr.bf16.mxu0 0
      %2357 = vmatpush1.bf16.xpose.msra.mxu0 0
      %2358 = vmatprep.subr.bf16.mxu0 0
      %2359 = vmatpush1.bf16.xpose.msra.mxu0 0
      %2360 = vmatprep.subr.bf16.mxu0 0
      %2361 = vmatpush1.bf16.xpose.msra.mxu0 0
      %2362 = vmatprep.subr.bf16.mxu0 0
      %2363 = vmatpush1.bf16.xpose.msra.mxu0 0
      %2364 = vmatprep.subr.bf16.mxu0 0
      %2365 = vmatpush1.bf16.xpose.msra.mxu0 0
      %2366 = vmatprep.subr.bf16.mxu0 0
      %2367 = vmatpush1.bf16.xpose.msra.mxu0 0
      %2368 = vmatprep.subr.bf16.mxu0 0
      %2369 = vmatpush1.bf16.xpose.msra.mxu0 0
      %2370 = vmatprep.subr.bf16.mxu0 0
      %2371 = vmatpush1.bf16.xpose.msra.mxu0 0
      %2372 = vmatprep.subr.bf16.mxu0 0
      %2373 = vmatpush1.bf16.xpose.msra.mxu0 0
      %2374 = vmatprep.subr.bf16.mxu0 0
      %2375 = vmatpush1.bf16.xpose.msra.mxu0 0
      %2376 = vmatprep.subr.bf16.mxu0 0
      %2377 = vmatpush1.bf16.xpose.msra.mxu0 0
      %2378 = vmatprep.mubr.bf16.mxu0 0
      %2379 = vmatmul.mubr.bf16.gmra.mrb[0].mxu0 %v2335
      %v2380 = vpop.f32.mrb[0].mxu0
      %v2381 = vadd.f32 0.0, %v2380
      %v2382 = vpop.f32.mrb[0].mxu0
      %v2383 = vpop.f32.mrb[0].mxu0
      %v2384 = vadd.f32 0.0, %v2383
      %v2385 = vpop.f32.mrb[0].mxu0
      %2386 = vmatprep.mubr.bf16.mxu0 0
      %2387 = vmatmul.mubr.bf16.gmra.mrb[0].mxu0 %v2338
      %v2388 = vpop.f32.mrb[0].mxu0
      %v2389 = vadd.f32 0.0, %v2388
      %v2390 = vpop.f32.mrb[0].mxu0
      %v2391 = vpop.f32.mrb[0].mxu0
      %v2392 = vpop.f32.mrb[0].mxu0
      %2393 = vdwg.mxu0
      %v2394 = vsel %vm1665, %v2381, -inf
      %2395 = vmax.xlane.f32.xlu0 %v2394
      %v2396 = vpop.xlane.xlu0 %2395
      %v2397 = vsel %vm1665, %v2384, -inf
      %2398 = vmax.xlane.f32.xlu0 %v2397
      %v2399 = vpop.xlane.xlu0 %2398
      %v2400 = vsel %vm1672, %v2389, -inf
      %2401 = vmax.xlane.f32.xlu0 %v2400
      %v2402 = vpop.xlane.xlu0 %2401
      %v2403 = vsub.f32 %v2381, %v2396
      %v2404 = vsub.f32 %v2384, %v2399
      %v2405 = vsub.f32 %v2389, %v2402
      %v2406 = vmul.f32 %v2403, 1.442695
      %v2407 = vpow.pop %v2406
      %v2408 = vmul.f32 %v2404, 1.442695
      %v2409 = vpow.pop %v2408
      %v2410 = vmul.f32 %v2405, 1.442695
      %v2411 = vpow.pop %v2410
      %v2412 = vsel %vm1665, %v2407, 0.0
      %2413 = vadd.xlane.f32.xlu0 %v2412
      %v2414 = vpop.xlane.xlu0 %2413
      %v2415 = vsel %vm1665, %v2409, 0.0
      %2416 = vadd.xlane.f32.xlu0 %v2415
      %v2417 = vpop.xlane.xlu0 %2416
      %v2418 = vsel %vm1672, %v2411, 0.0
      %2419 = vadd.xlane.f32.xlu0 %v2418
      %v2420 = vpop.xlane.xlu0 %2419
      %v2421 = vrcp.pop %v2414
      %v2422 = vrcp.pop %v2417
      %v2423 = vrcp.pop %v2420
      %v2424 = vpack.c.bf16 %v2409, %v2407
      %v2425 = vpack.c.bf16 %v2411, %v2411
      %2426 = vrot.lane.b32.xlu0 %v2327, 64
      %v2427 = vpop.permute.xlu0 %2426
      %2428 = vrot.lane.b32.xlu0 %v2328, 64
      %v2429 = vpop.permute.xlu0 %2428
      %v2432 = vsel %vm1665, %v2424, 0
      %v2435 = vsel %vm1665, %v2425, 0
      %v2438 = vand.u32 %v2429, %v1712
      %2440 = vmatprep.subr.bf16.mxu0 0
      %2441 = vmatpush1.bf16.msra.mxu0 %v2427
      %2442 = vmatprep.subr.bf16.mxu0 0
      %2443 = vmatpush1.bf16.msra.mxu0 %v2438
      %2444 = vmatprep.subr.bf16.mxu0 0
      %2445 = vmatpush1.bf16.msra.mxu0 0
      %2446 = vmatprep.subr.bf16.mxu0 0
      %2447 = vmatpush1.bf16.msra.mxu0 0
      %2448 = vmatprep.subr.bf16.mxu0 0
      %2449 = vmatpush1.bf16.msra.mxu0 0
      %2450 = vmatprep.subr.bf16.mxu0 0
      %2451 = vmatpush1.bf16.msra.mxu0 0
      %2452 = vmatprep.subr.bf16.mxu0 0
      %2453 = vmatpush1.bf16.msra.mxu0 0
      %2454 = vmatprep.subr.bf16.mxu0 0
      %2455 = vmatpush1.bf16.msra.mxu0 0
      %2456 = vmatprep.subr.bf16.mxu0 0
      %2457 = vmatpush1.bf16.msra.mxu0 0
      %2458 = vmatprep.subr.bf16.mxu0 0
      %2459 = vmatpush1.bf16.msra.mxu0 0
      %2460 = vmatprep.subr.bf16.mxu0 0
      %2461 = vmatpush1.bf16.msra.mxu0 0
      %2462 = vmatprep.subr.bf16.mxu0 0
      %2463 = vmatpush1.bf16.msra.mxu0 0
      %2464 = vmatprep.subr.bf16.mxu0 0
      %2465 = vmatpush1.bf16.msra.mxu0 0
      %2466 = vmatprep.subr.bf16.mxu0 0
      %2467 = vmatpush1.bf16.msra.mxu0 0
      %2468 = vmatprep.subr.bf16.mxu0 0
      %2469 = vmatpush1.bf16.msra.mxu0 0
      %2470 = vmatprep.subr.bf16.mxu0 0
      %2471 = vmatpush1.bf16.msra.mxu0 0
      %2472 = vmatprep.mubr.bf16.mxu0 0
      %2473 = vmatmul.mubr.bf16.gmra.mrb[0].mxu0 %v2432
      %v2474 = vpop.f32.mrb[0].mxu0
      %v2475 = vadd.f32 0.0, %v2474
      %v2476 = vpop.f32.mrb[0].mxu0
      %v2477 = vpop.f32.mrb[0].mxu0
      %v2478 = vadd.f32 0.0, %v2477
      %v2479 = vpop.f32.mrb[0].mxu0
      %2480 = vmatprep.mubr.bf16.mxu0 0
      %2481 = vmatmul.mubr.bf16.gmra.mrb[0].mxu0 %v2435
      %v2482 = vpop.f32.mrb[0].mxu0
      %v2483 = vadd.f32 0.0, %v2482
      %v2484 = vpop.f32.mrb[0].mxu0
      %v2485 = vpop.f32.mrb[0].mxu0
      %v2486 = vpop.f32.mrb[0].mxu0
      %2487 = vdwg.mxu0
      %v2488 = vmul.f32 %v2475, %v2421
      %v2489 = vmul.f32 %v2478, %v2422
      %v2490 = vmul.f32 %v2483, %v2423
      %2491 = vrot.lane.b32.xlu0 %v2327, 120
      %v2492 = vpop.permute.xlu0 %2491
      %2493 = vrot.lane.b32.xlu0 %v2328, 120
      %v2494 = vpop.permute.xlu0 %2493
      %2495 = vrot.lane.b32.xlu0 %v2327, 88
      %v2496 = vpop.permute.xlu0 %2495
      %2497 = vrot.lane.b32.xlu0 %v2328, 88
      %v2498 = vpop.permute.xlu0 %2497
      %v2500 = vsel %vm1604, %v2492, 0
      %v2503 = vsel %vm1604, %v2494, 0
      %v2506 = vsel %vm1604, %v2496, 0
      %v2509 = vsel %vm1604, %v2498, 0
      %2511 = vmatprep.subr.bf16.mxu0 0
      %2512 = vmatpush1.bf16.xpose.msra.mxu0 %v2506
      %2513 = vmatprep.subr.bf16.mxu0 0
      %2514 = vmatpush1.bf16.xpose.msra.mxu0 %v2509
      %2515 = vmatprep.subr.bf16.mxu0 0
      %2516 = vmatpush1.bf16.xpose.msra.mxu0 0
      %2517 = vmatprep.subr.bf16.mxu0 0
      %2518 = vmatpush1.bf16.xpose.msra.mxu0 0
      %2519 = vmatprep.subr.bf16.mxu0 0
      %2520 = vmatpush1.bf16.xpose.msra.mxu0 0
      %2521 = vmatprep.subr.bf16.mxu0 0
      %2522 = vmatpush1.bf16.xpose.msra.mxu0 0
      %2523 = vmatprep.subr.bf16.mxu0 0
      %2524 = vmatpush1.bf16.xpose.msra.mxu0 0
      %2525 = vmatprep.subr.bf16.mxu0 0
      %2526 = vmatpush1.bf16.xpose.msra.mxu0 0
      %2527 = vmatprep.subr.bf16.mxu0 0
      %2528 = vmatpush1.bf16.xpose.msra.mxu0 0
      %2529 = vmatprep.subr.bf16.mxu0 0
      %2530 = vmatpush1.bf16.xpose.msra.mxu0 0
      %2531 = vmatprep.subr.bf16.mxu0 0
      %2532 = vmatpush1.bf16.xpose.msra.mxu0 0
      %2533 = vmatprep.subr.bf16.mxu0 0
      %2534 = vmatpush1.bf16.xpose.msra.mxu0 0
      %2535 = vmatprep.subr.bf16.mxu0 0
      %2536 = vmatpush1.bf16.xpose.msra.mxu0 0
      %2537 = vmatprep.subr.bf16.mxu0 0
      %2538 = vmatpush1.bf16.xpose.msra.mxu0 0
      %2539 = vmatprep.subr.bf16.mxu0 0
      %2540 = vmatpush1.bf16.xpose.msra.mxu0 0
      %2541 = vmatprep.subr.bf16.mxu0 0
      %2542 = vmatpush1.bf16.xpose.msra.mxu0 0
      %2543 = vmatprep.mubr.bf16.mxu0 0
      %2544 = vmatmul.mubr.bf16.gmra.mrb[0].mxu0 %v2500
      %v2545 = vpop.f32.mrb[0].mxu0
      %v2546 = vadd.f32 0.0, %v2545
      %v2547 = vpop.f32.mrb[0].mxu0
      %v2548 = vpop.f32.mrb[0].mxu0
      %v2549 = vadd.f32 0.0, %v2548
      %v2550 = vpop.f32.mrb[0].mxu0
      %2551 = vmatprep.mubr.bf16.mxu0 0
      %2552 = vmatmul.mubr.bf16.gmra.mrb[0].mxu0 %v2503
      %v2553 = vpop.f32.mrb[0].mxu0
      %v2554 = vadd.f32 0.0, %v2553
      %v2555 = vpop.f32.mrb[0].mxu0
      %v2556 = vpop.f32.mrb[0].mxu0
      %v2557 = vpop.f32.mrb[0].mxu0
      %2558 = vdwg.mxu0
      %v2559 = vsel %vm1665, %v2546, -inf
      %2560 = vmax.xlane.f32.xlu0 %v2559
      %v2561 = vpop.xlane.xlu0 %2560
      %v2562 = vsel %vm1665, %v2549, -inf
      %2563 = vmax.xlane.f32.xlu0 %v2562
      %v2564 = vpop.xlane.xlu0 %2563
      %v2565 = vsel %vm1672, %v2554, -inf
      %2566 = vmax.xlane.f32.xlu0 %v2565
      %v2567 = vpop.xlane.xlu0 %2566
      %v2568 = vsub.f32 %v2546, %v2561
      %v2569 = vsub.f32 %v2549, %v2564
      %v2570 = vsub.f32 %v2554, %v2567
      %v2571 = vmul.f32 %v2568, 1.442695
      %v2572 = vpow.pop %v2571
      %v2573 = vmul.f32 %v2569, 1.442695
      %v2574 = vpow.pop %v2573
      %v2575 = vmul.f32 %v2570, 1.442695
      %v2576 = vpow.pop %v2575
      %v2577 = vsel %vm1665, %v2572, 0.0
      %2578 = vadd.xlane.f32.xlu0 %v2577
      %v2579 = vpop.xlane.xlu0 %2578
      %v2580 = vsel %vm1665, %v2574, 0.0
      %2581 = vadd.xlane.f32.xlu0 %v2580
      %v2582 = vpop.xlane.xlu0 %2581
      %v2583 = vsel %vm1672, %v2576, 0.0
      %2584 = vadd.xlane.f32.xlu0 %v2583
      %v2585 = vpop.xlane.xlu0 %2584
      %v2586 = vrcp.pop %v2579
      %v2587 = vrcp.pop %v2582
      %v2588 = vrcp.pop %v2585
      %v2589 = vpack.c.bf16 %v2574, %v2572
      %v2590 = vpack.c.bf16 %v2576, %v2576
      %2591 = vrot.lane.b32.xlu0 %v2327, 56
      %v2592 = vpop.permute.xlu0 %2591
      %2593 = vrot.lane.b32.xlu0 %v2328, 56
      %v2594 = vpop.permute.xlu0 %2593
      %v2597 = vsel %vm1665, %v2589, 0
      %v2600 = vsel %vm1665, %v2590, 0
      %v2603 = vand.u32 %v2594, %v1712
      %2605 = vmatprep.subr.bf16.mxu0 0
      %2606 = vmatpush1.bf16.msra.mxu0 %v2592
      %2607 = vmatprep.subr.bf16.mxu0 0
      %2608 = vmatpush1.bf16.msra.mxu0 %v2603
      %2609 = vmatprep.subr.bf16.mxu0 0
      %2610 = vmatpush1.bf16.msra.mxu0 0
      %2611 = vmatprep.subr.bf16.mxu0 0
      %2612 = vmatpush1.bf16.msra.mxu0 0
      %2613 = vmatprep.subr.bf16.mxu0 0
      %2614 = vmatpush1.bf16.msra.mxu0 0
      %2615 = vmatprep.subr.bf16.mxu0 0
      %2616 = vmatpush1.bf16.msra.mxu0 0
      %2617 = vmatprep.subr.bf16.mxu0 0
      %2618 = vmatpush1.bf16.msra.mxu0 0
      %2619 = vmatprep.subr.bf16.mxu0 0
      %2620 = vmatpush1.bf16.msra.mxu0 0
      %2621 = vmatprep.subr.bf16.mxu0 0
      %2622 = vmatpush1.bf16.msra.mxu0 0
      %2623 = vmatprep.subr.bf16.mxu0 0
      %2624 = vmatpush1.bf16.msra.mxu0 0
      %2625 = vmatprep.subr.bf16.mxu0 0
      %2626 = vmatpush1.bf16.msra.mxu0 0
      %2627 = vmatprep.subr.bf16.mxu0 0
      %2628 = vmatpush1.bf16.msra.mxu0 0
      %2629 = vmatprep.subr.bf16.mxu0 0
      %2630 = vmatpush1.bf16.msra.mxu0 0
      %2631 = vmatprep.subr.bf16.mxu0 0
      %2632 = vmatpush1.bf16.msra.mxu0 0
      %2633 = vmatprep.subr.bf16.mxu0 0
      %2634 = vmatpush1.bf16.msra.mxu0 0
      %2635 = vmatprep.subr.bf16.mxu0 0
      %2636 = vmatpush1.bf16.msra.mxu0 0
      %2637 = vmatprep.mubr.bf16.mxu0 0
      %2638 = vmatmul.mubr.bf16.gmra.mrb[0].mxu0 %v2597
      %v2639 = vpop.f32.mrb[0].mxu0
      %v2640 = vadd.f32 0.0, %v2639
      %v2641 = vpop.f32.mrb[0].mxu0
      %v2642 = vpop.f32.mrb[0].mxu0
      %v2643 = vadd.f32 0.0, %v2642
      %v2644 = vpop.f32.mrb[0].mxu0
      %2645 = vmatprep.mubr.bf16.mxu0 0
      %2646 = vmatmul.mubr.bf16.gmra.mrb[0].mxu0 %v2600
      %v2647 = vpop.f32.mrb[0].mxu0
      %v2648 = vadd.f32 0.0, %v2647
      %v2649 = vpop.f32.mrb[0].mxu0
      %v2650 = vpop.f32.mrb[0].mxu0
      %v2651 = vpop.f32.mrb[0].mxu0
      %2652 = vdwg.mxu0
      %v2653 = vmul.f32 %v2640, %v2586
      %v2654 = vmul.f32 %v2643, %v2587
      %v2655 = vmul.f32 %v2648, %v2588
      %2656 = vrot.lane.b32.xlu0 %v2327, 112
      %v2657 = vpop.permute.xlu0 %2656
      %2658 = vrot.lane.b32.xlu0 %v2328, 112
      %v2659 = vpop.permute.xlu0 %2658
      %2660 = vrot.lane.b32.xlu0 %v2327, 80
      %v2661 = vpop.permute.xlu0 %2660
      %2662 = vrot.lane.b32.xlu0 %v2328, 80
      %v2663 = vpop.permute.xlu0 %2662
      %v2665 = vsel %vm1604, %v2657, 0
      %v2668 = vsel %vm1604, %v2659, 0
      %v2671 = vsel %vm1604, %v2661, 0
      %v2674 = vsel %vm1604, %v2663, 0
      %2676 = vmatprep.subr.bf16.mxu0 0
      %2677 = vmatpush1.bf16.xpose.msra.mxu0 %v2671
      %2678 = vmatprep.subr.bf16.mxu0 0
      %2679 = vmatpush1.bf16.xpose.msra.mxu0 %v2674
      %2680 = vmatprep.subr.bf16.mxu0 0
      %2681 = vmatpush1.bf16.xpose.msra.mxu0 0
      %2682 = vmatprep.subr.bf16.mxu0 0
      %2683 = vmatpush1.bf16.xpose.msra.mxu0 0
      %2684 = vmatprep.subr.bf16.mxu0 0
      %2685 = vmatpush1.bf16.xpose.msra.mxu0 0
      %2686 = vmatprep.subr.bf16.mxu0 0
      %2687 = vmatpush1.bf16.xpose.msra.mxu0 0
      %2688 = vmatprep.subr.bf16.mxu0 0
      %2689 = vmatpush1.bf16.xpose.msra.mxu0 0
      %2690 = vmatprep.subr.bf16.mxu0 0
      %2691 = vmatpush1.bf16.xpose.msra.mxu0 0
      %2692 = vmatprep.subr.bf16.mxu0 0
      %2693 = vmatpush1.bf16.xpose.msra.mxu0 0
      %2694 = vmatprep.subr.bf16.mxu0 0
      %2695 = vmatpush1.bf16.xpose.msra.mxu0 0
      %2696 = vmatprep.subr.bf16.mxu0 0
      %2697 = vmatpush1.bf16.xpose.msra.mxu0 0
      %2698 = vmatprep.subr.bf16.mxu0 0
      %2699 = vmatpush1.bf16.xpose.msra.mxu0 0
      %2700 = vmatprep.subr.bf16.mxu0 0
      %2701 = vmatpush1.bf16.xpose.msra.mxu0 0
      %2702 = vmatprep.subr.bf16.mxu0 0
      %2703 = vmatpush1.bf16.xpose.msra.mxu0 0
      %2704 = vmatprep.subr.bf16.mxu0 0
      %2705 = vmatpush1.bf16.xpose.msra.mxu0 0
      %2706 = vmatprep.subr.bf16.mxu0 0
      %2707 = vmatpush1.bf16.xpose.msra.mxu0 0
      %2708 = vmatprep.mubr.bf16.mxu0 0
      %2709 = vmatmul.mubr.bf16.gmra.mrb[0].mxu0 %v2665
      %v2710 = vpop.f32.mrb[0].mxu0
      %v2711 = vadd.f32 0.0, %v2710
      %v2712 = vpop.f32.mrb[0].mxu0
      %v2713 = vpop.f32.mrb[0].mxu0
      %v2714 = vadd.f32 0.0, %v2713
      %v2715 = vpop.f32.mrb[0].mxu0
      %2716 = vmatprep.mubr.bf16.mxu0 0
      %2717 = vmatmul.mubr.bf16.gmra.mrb[0].mxu0 %v2668
      %v2718 = vpop.f32.mrb[0].mxu0
      %v2719 = vadd.f32 0.0, %v2718
      %v2720 = vpop.f32.mrb[0].mxu0
      %v2721 = vpop.f32.mrb[0].mxu0
      %v2722 = vpop.f32.mrb[0].mxu0
      %2723 = vdwg.mxu0
      %v2724 = vsel %vm1665, %v2711, -inf
      %2725 = vmax.xlane.f32.xlu0 %v2724
      %v2726 = vpop.xlane.xlu0 %2725
      %v2727 = vsel %vm1665, %v2714, -inf
      %2728 = vmax.xlane.f32.xlu0 %v2727
      %v2729 = vpop.xlane.xlu0 %2728
      %v2730 = vsel %vm1672, %v2719, -inf
      %2731 = vmax.xlane.f32.xlu0 %v2730
      %v2732 = vpop.xlane.xlu0 %2731
      %v2733 = vsub.f32 %v2711, %v2726
      %v2734 = vsub.f32 %v2714, %v2729
      %v2735 = vsub.f32 %v2719, %v2732
      %v2736 = vmul.f32 %v2733, 1.442695
      %v2737 = vpow.pop %v2736
      %v2738 = vmul.f32 %v2734, 1.442695
      %v2739 = vpow.pop %v2738
      %v2740 = vmul.f32 %v2735, 1.442695
      %v2741 = vpow.pop %v2740
      %v2742 = vsel %vm1665, %v2737, 0.0
      %2743 = vadd.xlane.f32.xlu0 %v2742
      %v2744 = vpop.xlane.xlu0 %2743
      %v2745 = vsel %vm1665, %v2739, 0.0
      %2746 = vadd.xlane.f32.xlu0 %v2745
      %v2747 = vpop.xlane.xlu0 %2746
      %v2748 = vsel %vm1672, %v2741, 0.0
      %2749 = vadd.xlane.f32.xlu0 %v2748
      %v2750 = vpop.xlane.xlu0 %2749
      %v2751 = vrcp.pop %v2744
      %v2752 = vrcp.pop %v2747
      %v2753 = vrcp.pop %v2750
      %v2754 = vpack.c.bf16 %v2739, %v2737
      %v2755 = vpack.c.bf16 %v2741, %v2741
      %2756 = vrot.lane.b32.xlu0 %v2327, 48
      %v2757 = vpop.permute.xlu0 %2756
      %2758 = vrot.lane.b32.xlu0 %v2328, 48
      %v2759 = vpop.permute.xlu0 %2758
      %v2762 = vsel %vm1665, %v2754, 0
      %v2765 = vsel %vm1665, %v2755, 0
      %v2768 = vand.u32 %v2759, %v1712
      %2770 = vmatprep.subr.bf16.mxu0 0
      %2771 = vmatpush1.bf16.msra.mxu0 %v2757
      %2772 = vmatprep.subr.bf16.mxu0 0
      %2773 = vmatpush1.bf16.msra.mxu0 %v2768
      %2774 = vmatprep.subr.bf16.mxu0 0
      %2775 = vmatpush1.bf16.msra.mxu0 0
      %2776 = vmatprep.subr.bf16.mxu0 0
      %2777 = vmatpush1.bf16.msra.mxu0 0
      %2778 = vmatprep.subr.bf16.mxu0 0
      %2779 = vmatpush1.bf16.msra.mxu0 0
      %2780 = vmatprep.subr.bf16.mxu0 0
      %2781 = vmatpush1.bf16.msra.mxu0 0
      %2782 = vmatprep.subr.bf16.mxu0 0
      %2783 = vmatpush1.bf16.msra.mxu0 0
      %2784 = vmatprep.subr.bf16.mxu0 0
      %2785 = vmatpush1.bf16.msra.mxu0 0
      %2786 = vmatprep.subr.bf16.mxu0 0
      %2787 = vmatpush1.bf16.msra.mxu0 0
      %2788 = vmatprep.subr.bf16.mxu0 0
      %2789 = vmatpush1.bf16.msra.mxu0 0
      %2790 = vmatprep.subr.bf16.mxu0 0
      %2791 = vmatpush1.bf16.msra.mxu0 0
      %2792 = vmatprep.subr.bf16.mxu0 0
      %2793 = vmatpush1.bf16.msra.mxu0 0
      %2794 = vmatprep.subr.bf16.mxu0 0
      %2795 = vmatpush1.bf16.msra.mxu0 0
      %2796 = vmatprep.subr.bf16.mxu0 0
      %2797 = vmatpush1.bf16.msra.mxu0 0
      %2798 = vmatprep.subr.bf16.mxu0 0
      %2799 = vmatpush1.bf16.msra.mxu0 0
      %2800 = vmatprep.subr.bf16.mxu0 0
      %2801 = vmatpush1.bf16.msra.mxu0 0
      %2802 = vmatprep.mubr.bf16.mxu0 0
      %2803 = vmatmul.mubr.bf16.gmra.mrb[0].mxu0 %v2762
      %v2804 = vpop.f32.mrb[0].mxu0
      %v2805 = vadd.f32 0.0, %v2804
      %v2806 = vpop.f32.mrb[0].mxu0
      %v2807 = vpop.f32.mrb[0].mxu0
      %v2808 = vadd.f32 0.0, %v2807
      %v2809 = vpop.f32.mrb[0].mxu0
      %2810 = vmatprep.mubr.bf16.mxu0 0
      %2811 = vmatmul.mubr.bf16.gmra.mrb[0].mxu0 %v2765
      %v2812 = vpop.f32.mrb[0].mxu0
      %v2813 = vadd.f32 0.0, %v2812
      %v2814 = vpop.f32.mrb[0].mxu0
      %v2815 = vpop.f32.mrb[0].mxu0
      %v2816 = vpop.f32.mrb[0].mxu0
      %2817 = vdwg.mxu0
      %v2818 = vmul.f32 %v2805, %v2751
      %v2819 = vmul.f32 %v2808, %v2752
      %v2820 = vmul.f32 %v2813, %v2753
      %2821 = vrot.lane.b32.xlu0 %v2327, 104
      %v2822 = vpop.permute.xlu0 %2821
      %2823 = vrot.lane.b32.xlu0 %v2328, 104
      %v2824 = vpop.permute.xlu0 %2823
      %2825 = vrot.lane.b32.xlu0 %v2327, 72
      %v2826 = vpop.permute.xlu0 %2825
      %2827 = vrot.lane.b32.xlu0 %v2328, 72
      %v2828 = vpop.permute.xlu0 %2827
      %v2830 = vsel %vm1604, %v2822, 0
      %v2833 = vsel %vm1604, %v2824, 0
      %v2836 = vsel %vm1604, %v2826, 0
      %v2839 = vsel %vm1604, %v2828, 0
      %2841 = vmatprep.subr.bf16.mxu0 0
      %2842 = vmatpush1.bf16.xpose.msra.mxu0 %v2836
      %2843 = vmatprep.subr.bf16.mxu0 0
      %2844 = vmatpush1.bf16.xpose.msra.mxu0 %v2839
      %2845 = vmatprep.subr.bf16.mxu0 0
      %2846 = vmatpush1.bf16.xpose.msra.mxu0 0
      %2847 = vmatprep.subr.bf16.mxu0 0
      %2848 = vmatpush1.bf16.xpose.msra.mxu0 0
      %2849 = vmatprep.subr.bf16.mxu0 0
      %2850 = vmatpush1.bf16.xpose.msra.mxu0 0
      %2851 = vmatprep.subr.bf16.mxu0 0
      %2852 = vmatpush1.bf16.xpose.msra.mxu0 0
      %2853 = vmatprep.subr.bf16.mxu0 0
      %2854 = vmatpush1.bf16.xpose.msra.mxu0 0
      %2855 = vmatprep.subr.bf16.mxu0 0
      %2856 = vmatpush1.bf16.xpose.msra.mxu0 0
      %2857 = vmatprep.subr.bf16.mxu0 0
      %2858 = vmatpush1.bf16.xpose.msra.mxu0 0
      %2859 = vmatprep.subr.bf16.mxu0 0
      %2860 = vmatpush1.bf16.xpose.msra.mxu0 0
      %2861 = vmatprep.subr.bf16.mxu0 0
      %2862 = vmatpush1.bf16.xpose.msra.mxu0 0
      %2863 = vmatprep.subr.bf16.mxu0 0
      %2864 = vmatpush1.bf16.xpose.msra.mxu0 0
      %2865 = vmatprep.subr.bf16.mxu0 0
      %2866 = vmatpush1.bf16.xpose.msra.mxu0 0
      %2867 = vmatprep.subr.bf16.mxu0 0
      %2868 = vmatpush1.bf16.xpose.msra.mxu0 0
      %2869 = vmatprep.subr.bf16.mxu0 0
      %2870 = vmatpush1.bf16.xpose.msra.mxu0 0
      %2871 = vmatprep.subr.bf16.mxu0 0
      %2872 = vmatpush1.bf16.xpose.msra.mxu0 0
      %2873 = vmatprep.mubr.bf16.mxu0 0
      %2874 = vmatmul.mubr.bf16.gmra.mrb[0].mxu0 %v2830
      %v2875 = vpop.f32.mrb[0].mxu0
      %v2876 = vadd.f32 0.0, %v2875
      %v2877 = vpop.f32.mrb[0].mxu0
      %v2878 = vpop.f32.mrb[0].mxu0
      %v2879 = vadd.f32 0.0, %v2878
      %v2880 = vpop.f32.mrb[0].mxu0
      %2881 = vmatprep.mubr.bf16.mxu0 0
      %2882 = vmatmul.mubr.bf16.gmra.mrb[0].mxu0 %v2833
      %v2883 = vpop.f32.mrb[0].mxu0
      %v2884 = vadd.f32 0.0, %v2883
      %v2885 = vpop.f32.mrb[0].mxu0
      %v2886 = vpop.f32.mrb[0].mxu0
      %v2887 = vpop.f32.mrb[0].mxu0
      %2888 = vdwg.mxu0
      %v2889 = vsel %vm1665, %v2876, -inf
      %2890 = vmax.xlane.f32.xlu0 %v2889
      %v2891 = vpop.xlane.xlu0 %2890
      %v2892 = vsel %vm1665, %v2879, -inf
      %2893 = vmax.xlane.f32.xlu0 %v2892
      %v2894 = vpop.xlane.xlu0 %2893
      %v2895 = vsel %vm1672, %v2884, -inf
      %2896 = vmax.xlane.f32.xlu0 %v2895
      %v2897 = vpop.xlane.xlu0 %2896
      %v2898 = vsub.f32 %v2876, %v2891
      %v2899 = vsub.f32 %v2879, %v2894
      %v2900 = vsub.f32 %v2884, %v2897
      %v2901 = vmul.f32 %v2898, 1.442695
      %v2902 = vpow.pop %v2901
      %v2903 = vmul.f32 %v2899, 1.442695
      %v2904 = vpow.pop %v2903
      %v2905 = vmul.f32 %v2900, 1.442695
      %v2906 = vpow.pop %v2905
      %v2907 = vsel %vm1665, %v2902, 0.0
      %2908 = vadd.xlane.f32.xlu0 %v2907
      %v2909 = vpop.xlane.xlu0 %2908
      %v2910 = vsel %vm1665, %v2904, 0.0
      %2911 = vadd.xlane.f32.xlu0 %v2910
      %v2912 = vpop.xlane.xlu0 %2911
      %v2913 = vsel %vm1672, %v2906, 0.0
      %2914 = vadd.xlane.f32.xlu0 %v2913
      %v2915 = vpop.xlane.xlu0 %2914
      %v2916 = vrcp.pop %v2909
      %v2917 = vrcp.pop %v2912
      %v2918 = vrcp.pop %v2915
      %v2919 = vpack.c.bf16 %v2904, %v2902
      %v2920 = vpack.c.bf16 %v2906, %v2906
      %2921 = vrot.lane.b32.xlu0 %v2327, 40
      %v2922 = vpop.permute.xlu0 %2921
      %2923 = vrot.lane.b32.xlu0 %v2328, 40
      %v2924 = vpop.permute.xlu0 %2923
      %v2927 = vsel %vm1665, %v2919, 0
      %v2930 = vsel %vm1665, %v2920, 0
      %v2933 = vand.u32 %v2924, %v1712
      %2935 = vmatprep.subr.bf16.mxu0 0
      %2936 = vmatpush1.bf16.msra.mxu0 %v2922
      %2937 = vmatprep.subr.bf16.mxu0 0
      %2938 = vmatpush1.bf16.msra.mxu0 %v2933
      %2939 = vmatprep.subr.bf16.mxu0 0
      %2940 = vmatpush1.bf16.msra.mxu0 0
      %2941 = vmatprep.subr.bf16.mxu0 0
      %2942 = vmatpush1.bf16.msra.mxu0 0
      %2943 = vmatprep.subr.bf16.mxu0 0
      %2944 = vmatpush1.bf16.msra.mxu0 0
      %2945 = vmatprep.subr.bf16.mxu0 0
      %2946 = vmatpush1.bf16.msra.mxu0 0
      %2947 = vmatprep.subr.bf16.mxu0 0
      %2948 = vmatpush1.bf16.msra.mxu0 0
      %2949 = vmatprep.subr.bf16.mxu0 0
      %2950 = vmatpush1.bf16.msra.mxu0 0
      %2951 = vmatprep.subr.bf16.mxu0 0
      %2952 = vmatpush1.bf16.msra.mxu0 0
      %2953 = vmatprep.subr.bf16.mxu0 0
      %2954 = vmatpush1.bf16.msra.mxu0 0
      %2955 = vmatprep.subr.bf16.mxu0 0
      %2956 = vmatpush1.bf16.msra.mxu0 0
      %2957 = vmatprep.subr.bf16.mxu0 0
      %2958 = vmatpush1.bf16.msra.mxu0 0
      %2959 = vmatprep.subr.bf16.mxu0 0
      %2960 = vmatpush1.bf16.msra.mxu0 0
      %2961 = vmatprep.subr.bf16.mxu0 0
      %2962 = vmatpush1.bf16.msra.mxu0 0
      %2963 = vmatprep.subr.bf16.mxu0 0
      %2964 = vmatpush1.bf16.msra.mxu0 0
      %2965 = vmatprep.subr.bf16.mxu0 0
      %2966 = vmatpush1.bf16.msra.mxu0 0
      %2967 = vmatprep.mubr.bf16.mxu0 0
      %2968 = vmatmul.mubr.bf16.gmra.mrb[0].mxu0 %v2927
      %v2969 = vpop.f32.mrb[0].mxu0
      %v2970 = vadd.f32 0.0, %v2969
      %v2971 = vpop.f32.mrb[0].mxu0
      %v2972 = vpop.f32.mrb[0].mxu0
      %v2973 = vadd.f32 0.0, %v2972
      %v2974 = vpop.f32.mrb[0].mxu0
      %2975 = vmatprep.mubr.bf16.mxu0 0
      %2976 = vmatmul.mubr.bf16.gmra.mrb[0].mxu0 %v2930
      %v2977 = vpop.f32.mrb[0].mxu0
      %v2978 = vadd.f32 0.0, %v2977
      %v2979 = vpop.f32.mrb[0].mxu0
      %v2980 = vpop.f32.mrb[0].mxu0
      %v2981 = vpop.f32.mrb[0].mxu0
      %2982 = vdwg.mxu0
      %v2983 = vmul.f32 %v2970, %v2916
      %v2984 = vmul.f32 %v2973, %v2917
      %v2985 = vmul.f32 %v2978, %v2918
      %2989 = vrot.lane.b32.xlu0 %v2653, 8
      %v2990 = vpop.permute.xlu0 %2989
      %2991 = vrot.lane.b32.xlu0 %v2654, 8
      %v2992 = vpop.permute.xlu0 %2991
      %2993 = vrot.lane.b32.xlu0 %v2655, 8
      %v2994 = vpop.permute.xlu0 %2993
      %3001 = vrot.lane.b32.xlu0 %v2818, 16
      %v3002 = vpop.permute.xlu0 %3001
      %3003 = vrot.lane.b32.xlu0 %v2819, 16
      %v3004 = vpop.permute.xlu0 %3003
      %3005 = vrot.lane.b32.xlu0 %v2820, 16
      %v3006 = vpop.permute.xlu0 %3005
      %3013 = vrot.lane.b32.xlu0 %v2983, 24
      %v3014 = vpop.permute.xlu0 %3013
      %3015 = vrot.lane.b32.xlu0 %v2984, 24
      %v3016 = vpop.permute.xlu0 %3015
      %3017 = vrot.lane.b32.xlu0 %v2985, 24
      %v3018 = vpop.permute.xlu0 %3017
      %v3022 = vsel %vm1604, %v2488, %v2990
      %v3023 = vsel %vm1604, %v2489, %v2992
      %v3024 = vsel %vm1604, %v2490, %v2994
      %v3025 = vsel %vm2301, %v3022, %v3002
      %v3026 = vsel %vm2301, %v3023, %v3004
      %v3027 = vsel %vm2301, %v3024, %v3006
      %v3028 = vsel %vm2305, %v3025, %v3014
      %v3029 = vsel %vm2305, %v3026, %v3016
      %v3030 = vsel %vm2305, %v3027, %v3018
      %3031 = vst.msk [vmem:[#allocation2 + $0x11] sm:$0xff] %vm1175, %v3028
      %3032 = vst.msk [vmem:[#allocation2 + $0x19] sm:$0xff] %vm1175, %v3029
      %3033 = vst.msk [vmem:[#allocation2 + $0x21] sm:$0x1] %vm2311, %v3030
      %v3034 = vpack.c.bf16 %v1546, %v1543
      %v3035 = vpack.c.bf16 %v1551, %v1551
      %vm3038 = vcmask 1046528
      %v3039 = vrot.slane %v3034, 1
      %v3040 = vrot.slane %v3035, 1
      %v3041 = vsel %vm3038, %v3039, %v3040
      %3042 = vrot.lane.b32.xlu0 %v3041, 96
      %v3043 = vpop.permute.xlu0 %3042
      %3044 = vrot.lane.b32.xlu0 %v3040, 96
      %v3045 = vpop.permute.xlu0 %3044
      %v3047 = vsel %vm1604, %v3041, 0
      %v3050 = vsel %vm1604, %v3040, 0
      %v3053 = vsel %vm1604, %v3043, 0
      %v3056 = vsel %vm1604, %v3045, 0
      %3058 = vmatprep.subr.bf16.mxu0 0
      %3059 = vmatpush1.bf16.xpose.msra.mxu0 %v3053
      %3060 = vmatprep.subr.bf16.mxu0 0
      %3061 = vmatpush1.bf16.xpose.msra.mxu0 %v3056
      %3062 = vmatprep.subr.bf16.mxu0 0
      %3063 = vmatpush1.bf16.xpose.msra.mxu0 0
      %3064 = vmatprep.subr.bf16.mxu0 0
      %3065 = vmatpush1.bf16.xpose.msra.mxu0 0
      %3066 = vmatprep.subr.bf16.mxu0 0
      %3067 = vmatpush1.bf16.xpose.msra.mxu0 0
      %3068 = vmatprep.subr.bf16.mxu0 0
      %3069 = vmatpush1.bf16.xpose.msra.mxu0 0
      %3070 = vmatprep.subr.bf16.mxu0 0
      %3071 = vmatpush1.bf16.xpose.msra.mxu0 0
      %3072 = vmatprep.subr.bf16.mxu0 0
      %3073 = vmatpush1.bf16.xpose.msra.mxu0 0
      %3074 = vmatprep.subr.bf16.mxu0 0
      %3075 = vmatpush1.bf16.xpose.msra.mxu0 0
      %3076 = vmatprep.subr.bf16.mxu0 0
      %3077 = vmatpush1.bf16.xpose.msra.mxu0 0
      %3078 = vmatprep.subr.bf16.mxu0 0
      %3079 = vmatpush1.bf16.xpose.msra.mxu0 0
      %3080 = vmatprep.subr.bf16.mxu0 0
      %3081 = vmatpush1.bf16.xpose.msra.mxu0 0
      %3082 = vmatprep.subr.bf16.mxu0 0
      %3083 = vmatpush1.bf16.xpose.msra.mxu0 0
      %3084 = vmatprep.subr.bf16.mxu0 0
      %3085 = vmatpush1.bf16.xpose.msra.mxu0 0
      %3086 = vmatprep.subr.bf16.mxu0 0
      %3087 = vmatpush1.bf16.xpose.msra.mxu0 0
      %3088 = vmatprep.subr.bf16.mxu0 0
      %3089 = vmatpush1.bf16.xpose.msra.mxu0 0
      %3090 = vmatprep.mubr.bf16.mxu0 0
      %3091 = vmatmul.mubr.bf16.gmra.mrb[0].mxu0 %v3047
      %v3092 = vpop.f32.mrb[0].mxu0
      %v3093 = vadd.f32 0.0, %v3092
      %v3094 = vpop.f32.mrb[0].mxu0
      %v3095 = vpop.f32.mrb[0].mxu0
      %v3096 = vadd.f32 0.0, %v3095
      %v3097 = vpop.f32.mrb[0].mxu0
      %3098 = vmatprep.mubr.bf16.mxu0 0
      %3099 = vmatmul.mubr.bf16.gmra.mrb[0].mxu0 %v3050
      %v3100 = vpop.f32.mrb[0].mxu0
      %v3101 = vadd.f32 0.0, %v3100
      %v3102 = vpop.f32.mrb[0].mxu0
      %v3103 = vpop.f32.mrb[0].mxu0
      %v3104 = vpop.f32.mrb[0].mxu0
      %3105 = vdwg.mxu0
      %v3106 = vsel %vm1665, %v3093, -inf
      %3107 = vmax.xlane.f32.xlu0 %v3106
      %v3108 = vpop.xlane.xlu0 %3107
      %v3109 = vsel %vm1665, %v3096, -inf
      %3110 = vmax.xlane.f32.xlu0 %v3109
      %v3111 = vpop.xlane.xlu0 %3110
      %v3112 = vsel %vm1672, %v3101, -inf
      %3113 = vmax.xlane.f32.xlu0 %v3112
      %v3114 = vpop.xlane.xlu0 %3113
      %v3115 = vsub.f32 %v3093, %v3108
      %v3116 = vsub.f32 %v3096, %v3111
      %v3117 = vsub.f32 %v3101, %v3114
      %v3118 = vmul.f32 %v3115, 1.442695
      %v3119 = vpow.pop %v3118
      %v3120 = vmul.f32 %v3116, 1.442695
      %v3121 = vpow.pop %v3120
      %v3122 = vmul.f32 %v3117, 1.442695
      %v3123 = vpow.pop %v3122
      %v3124 = vsel %vm1665, %v3119, 0.0
      %3125 = vadd.xlane.f32.xlu0 %v3124
      %v3126 = vpop.xlane.xlu0 %3125
      %v3127 = vsel %vm1665, %v3121, 0.0
      %3128 = vadd.xlane.f32.xlu0 %v3127
      %v3129 = vpop.xlane.xlu0 %3128
      %v3130 = vsel %vm1672, %v3123, 0.0
      %3131 = vadd.xlane.f32.xlu0 %v3130
      %v3132 = vpop.xlane.xlu0 %3131
      %v3133 = vrcp.pop %v3126
      %v3134 = vrcp.pop %v3129
      %v3135 = vrcp.pop %v3132
      %v3136 = vpack.c.bf16 %v3121, %v3119
      %v3137 = vpack.c.bf16 %v3123, %v3123
      %3138 = vrot.lane.b32.xlu0 %v3041, 64
      %v3139 = vpop.permute.xlu0 %3138
      %3140 = vrot.lane.b32.xlu0 %v3040, 64
      %v3141 = vpop.permute.xlu0 %3140
      %v3144 = vsel %vm1665, %v3136, 0
      %v3147 = vsel %vm1665, %v3137, 0
      %v3150 = vand.u32 %v3141, %v1712
      %3152 = vmatprep.subr.bf16.mxu0 0
      %3153 = vmatpush1.bf16.msra.mxu0 %v3139
      %3154 = vmatprep.subr.bf16.mxu0 0
      %3155 = vmatpush1.bf16.msra.mxu0 %v3150
      %3156 = vmatprep.subr.bf16.mxu0 0
      %3157 = vmatpush1.bf16.msra.mxu0 0
      %3158 = vmatprep.subr.bf16.mxu0 0
      %3159 = vmatpush1.bf16.msra.mxu0 0
      %3160 = vmatprep.subr.bf16.mxu0 0
      %3161 = vmatpush1.bf16.msra.mxu0 0
      %3162 = vmatprep.subr.bf16.mxu0 0
      %3163 = vmatpush1.bf16.msra.mxu0 0
      %3164 = vmatprep.subr.bf16.mxu0 0
      %3165 = vmatpush1.bf16.msra.mxu0 0
      %3166 = vmatprep.subr.bf16.mxu0 0
      %3167 = vmatpush1.bf16.msra.mxu0 0
      %3168 = vmatprep.subr.bf16.mxu0 0
      %3169 = vmatpush1.bf16.msra.mxu0 0
      %3170 = vmatprep.subr.bf16.mxu0 0
      %3171 = vmatpush1.bf16.msra.mxu0 0
      %3172 = vmatprep.subr.bf16.mxu0 0
      %3173 = vmatpush1.bf16.msra.mxu0 0
      %3174 = vmatprep.subr.bf16.mxu0 0
      %3175 = vmatpush1.bf16.msra.mxu0 0
      %3176 = vmatprep.subr.bf16.mxu0 0
      %3177 = vmatpush1.bf16.msra.mxu0 0
      %3178 = vmatprep.subr.bf16.mxu0 0
      %3179 = vmatpush1.bf16.msra.mxu0 0
      %3180 = vmatprep.subr.bf16.mxu0 0
      %3181 = vmatpush1.bf16.msra.mxu0 0
      %3182 = vmatprep.subr.bf16.mxu0 0
      %3183 = vmatpush1.bf16.msra.mxu0 0
      %3184 = vmatprep.mubr.bf16.mxu0 0
      %3185 = vmatmul.mubr.bf16.gmra.mrb[0].mxu0 %v3144
      %v3186 = vpop.f32.mrb[0].mxu0
      %v3187 = vadd.f32 0.0, %v3186
      %v3188 = vpop.f32.mrb[0].mxu0
      %v3189 = vpop.f32.mrb[0].mxu0
      %v3190 = vadd.f32 0.0, %v3189
      %v3191 = vpop.f32.mrb[0].mxu0
      %3192 = vmatprep.mubr.bf16.mxu0 0
      %3193 = vmatmul.mubr.bf16.gmra.mrb[0].mxu0 %v3147
      %v3194 = vpop.f32.mrb[0].mxu0
      %v3195 = vadd.f32 0.0, %v3194
      %v3196 = vpop.f32.mrb[0].mxu0
      %v3197 = vpop.f32.mrb[0].mxu0
      %v3198 = vpop.f32.mrb[0].mxu0
      %3199 = vdwg.mxu0
      %v3200 = vmul.f32 %v3187, %v3133
      %v3201 = vmul.f32 %v3190, %v3134
      %v3202 = vmul.f32 %v3195, %v3135
      %3203 = vrot.lane.b32.xlu0 %v3041, 120
      %v3204 = vpop.permute.xlu0 %3203
      %3205 = vrot.lane.b32.xlu0 %v3040, 120
      %v3206 = vpop.permute.xlu0 %3205
      %3207 = vrot.lane.b32.xlu0 %v3041, 88
      %v3208 = vpop.permute.xlu0 %3207
      %3209 = vrot.lane.b32.xlu0 %v3040, 88
      %v3210 = vpop.permute.xlu0 %3209
      %v3212 = vsel %vm1604, %v3204, 0
      %v3215 = vsel %vm1604, %v3206, 0
      %v3218 = vsel %vm1604, %v3208, 0
      %v3221 = vsel %vm1604, %v3210, 0
      %3223 = vmatprep.subr.bf16.mxu0 0
      %3224 = vmatpush1.bf16.xpose.msra.mxu0 %v3218
      %3225 = vmatprep.subr.bf16.mxu0 0
      %3226 = vmatpush1.bf16.xpose.msra.mxu0 %v3221
      %3227 = vmatprep.subr.bf16.mxu0 0
      %3228 = vmatpush1.bf16.xpose.msra.mxu0 0
      %3229 = vmatprep.subr.bf16.mxu0 0
      %3230 = vmatpush1.bf16.xpose.msra.mxu0 0
      %3231 = vmatprep.subr.bf16.mxu0 0
      %3232 = vmatpush1.bf16.xpose.msra.mxu0 0
      %3233 = vmatprep.subr.bf16.mxu0 0
      %3234 = vmatpush1.bf16.xpose.msra.mxu0 0
      %3235 = vmatprep.subr.bf16.mxu0 0
      %3236 = vmatpush1.bf16.xpose.msra.mxu0 0
      %3237 = vmatprep.subr.bf16.mxu0 0
      %3238 = vmatpush1.bf16.xpose.msra.mxu0 0
      %3239 = vmatprep.subr.bf16.mxu0 0
      %3240 = vmatpush1.bf16.xpose.msra.mxu0 0
      %3241 = vmatprep.subr.bf16.mxu0 0
      %3242 = vmatpush1.bf16.xpose.msra.mxu0 0
      %3243 = vmatprep.subr.bf16.mxu0 0
      %3244 = vmatpush1.bf16.xpose.msra.mxu0 0
      %3245 = vmatprep.subr.bf16.mxu0 0
      %3246 = vmatpush1.bf16.xpose.msra.mxu0 0
      %3247 = vmatprep.subr.bf16.mxu0 0
      %3248 = vmatpush1.bf16.xpose.msra.mxu0 0
      %3249 = vmatprep.subr.bf16.mxu0 0
      %3250 = vmatpush1.bf16.xpose.msra.mxu0 0
      %3251 = vmatprep.subr.bf16.mxu0 0
      %3252 = vmatpush1.bf16.xpose.msra.mxu0 0
      %3253 = vmatprep.subr.bf16.mxu0 0
      %3254 = vmatpush1.bf16.xpose.msra.mxu0 0
      %3255 = vmatprep.mubr.bf16.mxu0 0
      %3256 = vmatmul.mubr.bf16.gmra.mrb[0].mxu0 %v3212
      %v3257 = vpop.f32.mrb[0].mxu0
      %v3258 = vadd.f32 0.0, %v3257
      %v3259 = vpop.f32.mrb[0].mxu0
      %v3260 = vpop.f32.mrb[0].mxu0
      %v3261 = vadd.f32 0.0, %v3260
      %v3262 = vpop.f32.mrb[0].mxu0
      %3263 = vmatprep.mubr.bf16.mxu0 0
      %3264 = vmatmul.mubr.bf16.gmra.mrb[0].mxu0 %v3215
      %v3265 = vpop.f32.mrb[0].mxu0
      %v3266 = vadd.f32 0.0, %v3265
      %v3267 = vpop.f32.mrb[0].mxu0
      %v3268 = vpop.f32.mrb[0].mxu0
      %v3269 = vpop.f32.mrb[0].mxu0
      %3270 = vdwg.mxu0
      %v3271 = vsel %vm1665, %v3258, -inf
      %3272 = vmax.xlane.f32.xlu0 %v3271
      %v3273 = vpop.xlane.xlu0 %3272
      %v3274 = vsel %vm1665, %v3261, -inf
      %3275 = vmax.xlane.f32.xlu0 %v3274
      %v3276 = vpop.xlane.xlu0 %3275
      %v3277 = vsel %vm1672, %v3266, -inf
      %3278 = vmax.xlane.f32.xlu0 %v3277
      %v3279 = vpop.xlane.xlu0 %3278
      %v3280 = vsub.f32 %v3258, %v3273
      %v3281 = vsub.f32 %v3261, %v3276
      %v3282 = vsub.f32 %v3266, %v3279
      %v3283 = vmul.f32 %v3280, 1.442695
      %v3284 = vpow.pop %v3283
      %v3285 = vmul.f32 %v3281, 1.442695
      %v3286 = vpow.pop %v3285
      %v3287 = vmul.f32 %v3282, 1.442695
      %v3288 = vpow.pop %v3287
      %v3289 = vsel %vm1665, %v3284, 0.0
      %3290 = vadd.xlane.f32.xlu0 %v3289
      %v3291 = vpop.xlane.xlu0 %3290
      %v3292 = vsel %vm1665, %v3286, 0.0
      %3293 = vadd.xlane.f32.xlu0 %v3292
      %v3294 = vpop.xlane.xlu0 %3293
      %v3295 = vsel %vm1672, %v3288, 0.0
      %3296 = vadd.xlane.f32.xlu0 %v3295
      %v3297 = vpop.xlane.xlu0 %3296
      %v3298 = vrcp.pop %v3291
      %v3299 = vrcp.pop %v3294
      %v3300 = vrcp.pop %v3297
      %v3301 = vpack.c.bf16 %v3286, %v3284
      %v3302 = vpack.c.bf16 %v3288, %v3288
      %3303 = vrot.lane.b32.xlu0 %v3041, 56
      %v3304 = vpop.permute.xlu0 %3303
      %3305 = vrot.lane.b32.xlu0 %v3040, 56
      %v3306 = vpop.permute.xlu0 %3305
      %v3309 = vsel %vm1665, %v3301, 0
      %v3312 = vsel %vm1665, %v3302, 0
      %v3315 = vand.u32 %v3306, %v1712
      %3317 = vmatprep.subr.bf16.mxu0 0
      %3318 = vmatpush1.bf16.msra.mxu0 %v3304
      %3319 = vmatprep.subr.bf16.mxu0 0
      %3320 = vmatpush1.bf16.msra.mxu0 %v3315
      %3321 = vmatprep.subr.bf16.mxu0 0
      %3322 = vmatpush1.bf16.msra.mxu0 0
      %3323 = vmatprep.subr.bf16.mxu0 0
      %3324 = vmatpush1.bf16.msra.mxu0 0
      %3325 = vmatprep.subr.bf16.mxu0 0
      %3326 = vmatpush1.bf16.msra.mxu0 0
      %3327 = vmatprep.subr.bf16.mxu0 0
      %3328 = vmatpush1.bf16.msra.mxu0 0
      %3329 = vmatprep.subr.bf16.mxu0 0
      %3330 = vmatpush1.bf16.msra.mxu0 0
      %3331 = vmatprep.subr.bf16.mxu0 0
      %3332 = vmatpush1.bf16.msra.mxu0 0
      %3333 = vmatprep.subr.bf16.mxu0 0
      %3334 = vmatpush1.bf16.msra.mxu0 0
      %3335 = vmatprep.subr.bf16.mxu0 0
      %3336 = vmatpush1.bf16.msra.mxu0 0
      %3337 = vmatprep.subr.bf16.mxu0 0
      %3338 = vmatpush1.bf16.msra.mxu0 0
      %3339 = vmatprep.subr.bf16.mxu0 0
      %3340 = vmatpush1.bf16.msra.mxu0 0
      %3341 = vmatprep.subr.bf16.mxu0 0
      %3342 = vmatpush1.bf16.msra.mxu0 0
      %3343 = vmatprep.subr.bf16.mxu0 0
      %3344 = vmatpush1.bf16.msra.mxu0 0
      %3345 = vmatprep.subr.bf16.mxu0 0
      %3346 = vmatpush1.bf16.msra.mxu0 0
      %3347 = vmatprep.subr.bf16.mxu0 0
      %3348 = vmatpush1.bf16.msra.mxu0 0
      %3349 = vmatprep.mubr.bf16.mxu0 0
      %3350 = vmatmul.mubr.bf16.gmra.mrb[0].mxu0 %v3309
      %v3351 = vpop.f32.mrb[0].mxu0
      %v3352 = vadd.f32 0.0, %v3351
      %v3353 = vpop.f32.mrb[0].mxu0
      %v3354 = vpop.f32.mrb[0].mxu0
      %v3355 = vadd.f32 0.0, %v3354
      %v3356 = vpop.f32.mrb[0].mxu0
      %3357 = vmatprep.mubr.bf16.mxu0 0
      %3358 = vmatmul.mubr.bf16.gmra.mrb[0].mxu0 %v3312
      %v3359 = vpop.f32.mrb[0].mxu0
      %v3360 = vadd.f32 0.0, %v3359
      %v3361 = vpop.f32.mrb[0].mxu0
      %v3362 = vpop.f32.mrb[0].mxu0
      %v3363 = vpop.f32.mrb[0].mxu0
      %3364 = vdwg.mxu0
      %v3365 = vmul.f32 %v3352, %v3298
      %v3366 = vmul.f32 %v3355, %v3299
      %v3367 = vmul.f32 %v3360, %v3300
      %3368 = vrot.lane.b32.xlu0 %v3041, 112
      %v3369 = vpop.permute.xlu0 %3368
      %3370 = vrot.lane.b32.xlu0 %v3040, 112
      %v3371 = vpop.permute.xlu0 %3370
      %3372 = vrot.lane.b32.xlu0 %v3041, 80
      %v3373 = vpop.permute.xlu0 %3372
      %3374 = vrot.lane.b32.xlu0 %v3040, 80
      %v3375 = vpop.permute.xlu0 %3374
      %v3377 = vsel %vm1604, %v3369, 0
      %v3380 = vsel %vm1604, %v3371, 0
      %v3383 = vsel %vm1604, %v3373, 0
      %v3386 = vsel %vm1604, %v3375, 0
      %3388 = vmatprep.subr.bf16.mxu0 0
      %3389 = vmatpush1.bf16.xpose.msra.mxu0 %v3383
      %3390 = vmatprep.subr.bf16.mxu0 0
      %3391 = vmatpush1.bf16.xpose.msra.mxu0 %v3386
      %3392 = vmatprep.subr.bf16.mxu0 0
      %3393 = vmatpush1.bf16.xpose.msra.mxu0 0
      %3394 = vmatprep.subr.bf16.mxu0 0
      %3395 = vmatpush1.bf16.xpose.msra.mxu0 0
      %3396 = vmatprep.subr.bf16.mxu0 0
      %3397 = vmatpush1.bf16.xpose.msra.mxu0 0
      %3398 = vmatprep.subr.bf16.mxu0 0
      %3399 = vmatpush1.bf16.xpose.msra.mxu0 0
      %3400 = vmatprep.subr.bf16.mxu0 0
      %3401 = vmatpush1.bf16.xpose.msra.mxu0 0
      %3402 = vmatprep.subr.bf16.mxu0 0
      %3403 = vmatpush1.bf16.xpose.msra.mxu0 0
      %3404 = vmatprep.subr.bf16.mxu0 0
      %3405 = vmatpush1.bf16.xpose.msra.mxu0 0
      %3406 = vmatprep.subr.bf16.mxu0 0
      %3407 = vmatpush1.bf16.xpose.msra.mxu0 0
      %3408 = vmatprep.subr.bf16.mxu0 0
      %3409 = vmatpush1.bf16.xpose.msra.mxu0 0
      %3410 = vmatprep.subr.bf16.mxu0 0
      %3411 = vmatpush1.bf16.xpose.msra.mxu0 0
      %3412 = vmatprep.subr.bf16.mxu0 0
      %3413 = vmatpush1.bf16.xpose.msra.mxu0 0
      %3414 = vmatprep.subr.bf16.mxu0 0
      %3415 = vmatpush1.bf16.xpose.msra.mxu0 0
      %3416 = vmatprep.subr.bf16.mxu0 0
      %3417 = vmatpush1.bf16.xpose.msra.mxu0 0
      %3418 = vmatprep.subr.bf16.mxu0 0
      %3419 = vmatpush1.bf16.xpose.msra.mxu0 0
      %3420 = vmatprep.mubr.bf16.mxu0 0
      %3421 = vmatmul.mubr.bf16.gmra.mrb[0].mxu0 %v3377
      %v3422 = vpop.f32.mrb[0].mxu0
      %v3423 = vadd.f32 0.0, %v3422
      %v3424 = vpop.f32.mrb[0].mxu0
      %v3425 = vpop.f32.mrb[0].mxu0
      %v3426 = vadd.f32 0.0, %v3425
      %v3427 = vpop.f32.mrb[0].mxu0
      %3428 = vmatprep.mubr.bf16.mxu0 0
      %3429 = vmatmul.mubr.bf16.gmra.mrb[0].mxu0 %v3380
      %v3430 = vpop.f32.mrb[0].mxu0
      %v3431 = vadd.f32 0.0, %v3430
      %v3432 = vpop.f32.mrb[0].mxu0
      %v3433 = vpop.f32.mrb[0].mxu0
      %v3434 = vpop.f32.mrb[0].mxu0
      %3435 = vdwg.mxu0
      %v3436 = vsel %vm1665, %v3423, -inf
      %3437 = vmax.xlane.f32.xlu0 %v3436
      %v3438 = vpop.xlane.xlu0 %3437
      %v3439 = vsel %vm1665, %v3426, -inf
      %3440 = vmax.xlane.f32.xlu0 %v3439
      %v3441 = vpop.xlane.xlu0 %3440
      %v3442 = vsel %vm1672, %v3431, -inf
      %3443 = vmax.xlane.f32.xlu0 %v3442
      %v3444 = vpop.xlane.xlu0 %3443
      %v3445 = vsub.f32 %v3423, %v3438
      %v3446 = vsub.f32 %v3426, %v3441
      %v3447 = vsub.f32 %v3431, %v3444
      %v3448 = vmul.f32 %v3445, 1.442695
      %v3449 = vpow.pop %v3448
      %v3450 = vmul.f32 %v3446, 1.442695
      %v3451 = vpow.pop %v3450
      %v3452 = vmul.f32 %v3447, 1.442695
      %v3453 = vpow.pop %v3452
      %v3454 = vsel %vm1665, %v3449, 0.0
      %3455 = vadd.xlane.f32.xlu0 %v3454
      %v3456 = vpop.xlane.xlu0 %3455
      %v3457 = vsel %vm1665, %v3451, 0.0
      %3458 = vadd.xlane.f32.xlu0 %v3457
      %v3459 = vpop.xlane.xlu0 %3458
      %v3460 = vsel %vm1672, %v3453, 0.0
      %3461 = vadd.xlane.f32.xlu0 %v3460
      %v3462 = vpop.xlane.xlu0 %3461
      %v3463 = vrcp.pop %v3456
      %v3464 = vrcp.pop %v3459
      %v3465 = vrcp.pop %v3462
      %v3466 = vpack.c.bf16 %v3451, %v3449
      %v3467 = vpack.c.bf16 %v3453, %v3453
      %3468 = vrot.lane.b32.xlu0 %v3041, 48
      %v3469 = vpop.permute.xlu0 %3468
      %3470 = vrot.lane.b32.xlu0 %v3040, 48
      %v3471 = vpop.permute.xlu0 %3470
      %v3474 = vsel %vm1665, %v3466, 0
      %v3477 = vsel %vm1665, %v3467, 0
      %v3480 = vand.u32 %v3471, %v1712
      %3482 = vmatprep.subr.bf16.mxu0 0
      %3483 = vmatpush1.bf16.msra.mxu0 %v3469
      %3484 = vmatprep.subr.bf16.mxu0 0
      %3485 = vmatpush1.bf16.msra.mxu0 %v3480
      %3486 = vmatprep.subr.bf16.mxu0 0
      %3487 = vmatpush1.bf16.msra.mxu0 0
      %3488 = vmatprep.subr.bf16.mxu0 0
      %3489 = vmatpush1.bf16.msra.mxu0 0
      %3490 = vmatprep.subr.bf16.mxu0 0
      %3491 = vmatpush1.bf16.msra.mxu0 0
      %3492 = vmatprep.subr.bf16.mxu0 0
      %3493 = vmatpush1.bf16.msra.mxu0 0
      %3494 = vmatprep.subr.bf16.mxu0 0
      %3495 = vmatpush1.bf16.msra.mxu0 0
      %3496 = vmatprep.subr.bf16.mxu0 0
      %3497 = vmatpush1.bf16.msra.mxu0 0
      %3498 = vmatprep.subr.bf16.mxu0 0
      %3499 = vmatpush1.bf16.msra.mxu0 0
      %3500 = vmatprep.subr.bf16.mxu0 0
      %3501 = vmatpush1.bf16.msra.mxu0 0
      %3502 = vmatprep.subr.bf16.mxu0 0
      %3503 = vmatpush1.bf16.msra.mxu0 0
      %3504 = vmatprep.subr.bf16.mxu0 0
      %3505 = vmatpush1.bf16.msra.mxu0 0
      %3506 = vmatprep.subr.bf16.mxu0 0
      %3507 = vmatpush1.bf16.msra.mxu0 0
      %3508 = vmatprep.subr.bf16.mxu0 0
      %3509 = vmatpush1.bf16.msra.mxu0 0
      %3510 = vmatprep.subr.bf16.mxu0 0
      %3511 = vmatpush1.bf16.msra.mxu0 0
      %3512 = vmatprep.subr.bf16.mxu0 0
      %3513 = vmatpush1.bf16.msra.mxu0 0
      %3514 = vmatprep.mubr.bf16.mxu0 0
      %3515 = vmatmul.mubr.bf16.gmra.mrb[0].mxu0 %v3474
      %v3516 = vpop.f32.mrb[0].mxu0
      %v3517 = vadd.f32 0.0, %v3516
      %v3518 = vpop.f32.mrb[0].mxu0
      %v3519 = vpop.f32.mrb[0].mxu0
      %v3520 = vadd.f32 0.0, %v3519
      %v3521 = vpop.f32.mrb[0].mxu0
      %3522 = vmatprep.mubr.bf16.mxu0 0
      %3523 = vmatmul.mubr.bf16.gmra.mrb[0].mxu0 %v3477
      %v3524 = vpop.f32.mrb[0].mxu0
      %v3525 = vadd.f32 0.0, %v3524
      %v3526 = vpop.f32.mrb[0].mxu0
      %v3527 = vpop.f32.mrb[0].mxu0
      %v3528 = vpop.f32.mrb[0].mxu0
      %3529 = vdwg.mxu0
      %v3530 = vmul.f32 %v3517, %v3463
      %v3531 = vmul.f32 %v3520, %v3464
      %v3532 = vmul.f32 %v3525, %v3465
      %3533 = vrot.lane.b32.xlu0 %v3041, 104
      %v3534 = vpop.permute.xlu0 %3533
      %3535 = vrot.lane.b32.xlu0 %v3040, 104
      %v3536 = vpop.permute.xlu0 %3535
      %3537 = vrot.lane.b32.xlu0 %v3041, 72
      %v3538 = vpop.permute.xlu0 %3537
      %3539 = vrot.lane.b32.xlu0 %v3040, 72
      %v3540 = vpop.permute.xlu0 %3539
      %v3542 = vsel %vm1604, %v3534, 0
      %v3545 = vsel %vm1604, %v3536, 0
      %v3548 = vsel %vm1604, %v3538, 0
      %v3551 = vsel %vm1604, %v3540, 0
      %3553 = vmatprep.subr.bf16.mxu0 0
      %3554 = vmatpush1.bf16.xpose.msra.mxu0 %v3548
      %3555 = vmatprep.subr.bf16.mxu0 0
      %3556 = vmatpush1.bf16.xpose.msra.mxu0 %v3551
      %3557 = vmatprep.subr.bf16.mxu0 0
      %3558 = vmatpush1.bf16.xpose.msra.mxu0 0
      %3559 = vmatprep.subr.bf16.mxu0 0
      %3560 = vmatpush1.bf16.xpose.msra.mxu0 0
      %3561 = vmatprep.subr.bf16.mxu0 0
      %3562 = vmatpush1.bf16.xpose.msra.mxu0 0
      %3563 = vmatprep.subr.bf16.mxu0 0
      %3564 = vmatpush1.bf16.xpose.msra.mxu0 0
      %3565 = vmatprep.subr.bf16.mxu0 0
      %3566 = vmatpush1.bf16.xpose.msra.mxu0 0
      %3567 = vmatprep.subr.bf16.mxu0 0
      %3568 = vmatpush1.bf16.xpose.msra.mxu0 0
      %3569 = vmatprep.subr.bf16.mxu0 0
      %3570 = vmatpush1.bf16.xpose.msra.mxu0 0
      %3571 = vmatprep.subr.bf16.mxu0 0
      %3572 = vmatpush1.bf16.xpose.msra.mxu0 0
      %3573 = vmatprep.subr.bf16.mxu0 0
      %3574 = vmatpush1.bf16.xpose.msra.mxu0 0
      %3575 = vmatprep.subr.bf16.mxu0 0
      %3576 = vmatpush1.bf16.xpose.msra.mxu0 0
      %3577 = vmatprep.subr.bf16.mxu0 0
      %3578 = vmatpush1.bf16.xpose.msra.mxu0 0
      %3579 = vmatprep.subr.bf16.mxu0 0
      %3580 = vmatpush1.bf16.xpose.msra.mxu0 0
      %3581 = vmatprep.subr.bf16.mxu0 0
      %3582 = vmatpush1.bf16.xpose.msra.mxu0 0
      %3583 = vmatprep.subr.bf16.mxu0 0
      %3584 = vmatpush1.bf16.xpose.msra.mxu0 0
      %3585 = vmatprep.mubr.bf16.mxu0 0
      %3586 = vmatmul.mubr.bf16.gmra.mrb[0].mxu0 %v3542
      %v3587 = vpop.f32.mrb[0].mxu0
      %v3588 = vadd.f32 0.0, %v3587
      %v3589 = vpop.f32.mrb[0].mxu0
      %v3590 = vpop.f32.mrb[0].mxu0
      %v3591 = vadd.f32 0.0, %v3590
      %v3592 = vpop.f32.mrb[0].mxu0
      %3593 = vmatprep.mubr.bf16.mxu0 0
      %3594 = vmatmul.mubr.bf16.gmra.mrb[0].mxu0 %v3545
      %v3595 = vpop.f32.mrb[0].mxu0
      %v3596 = vadd.f32 0.0, %v3595
      %v3597 = vpop.f32.mrb[0].mxu0
      %v3598 = vpop.f32.mrb[0].mxu0
      %v3599 = vpop.f32.mrb[0].mxu0
      %3600 = vdwg.mxu0
      %v3601 = vsel %vm1665, %v3588, -inf
      %3602 = vmax.xlane.f32.xlu0 %v3601
      %v3603 = vpop.xlane.xlu0 %3602
      %v3604 = vsel %vm1665, %v3591, -inf
      %3605 = vmax.xlane.f32.xlu0 %v3604
      %v3606 = vpop.xlane.xlu0 %3605
      %v3607 = vsel %vm1672, %v3596, -inf
      %3608 = vmax.xlane.f32.xlu0 %v3607
      %v3609 = vpop.xlane.xlu0 %3608
      %v3610 = vsub.f32 %v3588, %v3603
      %v3611 = vsub.f32 %v3591, %v3606
      %v3612 = vsub.f32 %v3596, %v3609
      %v3613 = vmul.f32 %v3610, 1.442695
      %v3614 = vpow.pop %v3613
      %v3615 = vmul.f32 %v3611, 1.442695
      %v3616 = vpow.pop %v3615
      %v3617 = vmul.f32 %v3612, 1.442695
      %v3618 = vpow.pop %v3617
      %v3619 = vsel %vm1665, %v3614, 0.0
      %3620 = vadd.xlane.f32.xlu0 %v3619
      %v3621 = vpop.xlane.xlu0 %3620
      %v3622 = vsel %vm1665, %v3616, 0.0
      %3623 = vadd.xlane.f32.xlu0 %v3622
      %v3624 = vpop.xlane.xlu0 %3623
      %v3625 = vsel %vm1672, %v3618, 0.0
      %3626 = vadd.xlane.f32.xlu0 %v3625
      %v3627 = vpop.xlane.xlu0 %3626
      %v3628 = vrcp.pop %v3621
      %v3629 = vrcp.pop %v3624
      %v3630 = vrcp.pop %v3627
      %v3631 = vpack.c.bf16 %v3616, %v3614
      %v3632 = vpack.c.bf16 %v3618, %v3618
      %3633 = vrot.lane.b32.xlu0 %v3041, 40
      %v3634 = vpop.permute.xlu0 %3633
      %3635 = vrot.lane.b32.xlu0 %v3040, 40
      %v3636 = vpop.permute.xlu0 %3635
      %v3639 = vsel %vm1665, %v3631, 0
      %v3642 = vsel %vm1665, %v3632, 0
      %v3645 = vand.u32 %v3636, %v1712
      %3647 = vmatprep.subr.bf16.mxu0 0
      %3648 = vmatpush1.bf16.msra.mxu0 %v3634
      %3649 = vmatprep.subr.bf16.mxu0 0
      %3650 = vmatpush1.bf16.msra.mxu0 %v3645
      %3651 = vmatprep.subr.bf16.mxu0 0
      %3652 = vmatpush1.bf16.msra.mxu0 0
      %3653 = vmatprep.subr.bf16.mxu0 0
      %3654 = vmatpush1.bf16.msra.mxu0 0
      %3655 = vmatprep.subr.bf16.mxu0 0
      %3656 = vmatpush1.bf16.msra.mxu0 0
      %3657 = vmatprep.subr.bf16.mxu0 0
      %3658 = vmatpush1.bf16.msra.mxu0 0
      %3659 = vmatprep.subr.bf16.mxu0 0
      %3660 = vmatpush1.bf16.msra.mxu0 0
      %3661 = vmatprep.subr.bf16.mxu0 0
      %3662 = vmatpush1.bf16.msra.mxu0 0
      %3663 = vmatprep.subr.bf16.mxu0 0
      %3664 = vmatpush1.bf16.msra.mxu0 0
      %3665 = vmatprep.subr.bf16.mxu0 0
      %3666 = vmatpush1.bf16.msra.mxu0 0
      %3667 = vmatprep.subr.bf16.mxu0 0
      %3668 = vmatpush1.bf16.msra.mxu0 0
      %3669 = vmatprep.subr.bf16.mxu0 0
      %3670 = vmatpush1.bf16.msra.mxu0 0
      %3671 = vmatprep.subr.bf16.mxu0 0
      %3672 = vmatpush1.bf16.msra.mxu0 0
      %3673 = vmatprep.subr.bf16.mxu0 0
      %3674 = vmatpush1.bf16.msra.mxu0 0
      %3675 = vmatprep.subr.bf16.mxu0 0
      %3676 = vmatpush1.bf16.msra.mxu0 0
      %3677 = vmatprep.subr.bf16.mxu0 0
      %3678 = vmatpush1.bf16.msra.mxu0 0
      %3679 = vmatprep.mubr.bf16.mxu0 0
      %3680 = vmatmul.mubr.bf16.gmra.mrb[0].mxu0 %v3639
      %v3681 = vpop.f32.mrb[0].mxu0
      %v3682 = vadd.f32 0.0, %v3681
      %v3683 = vpop.f32.mrb[0].mxu0
      %v3684 = vpop.f32.mrb[0].mxu0
      %v3685 = vadd.f32 0.0, %v3684
      %v3686 = vpop.f32.mrb[0].mxu0
      %3687 = vmatprep.mubr.bf16.mxu0 0
      %3688 = vmatmul.mubr.bf16.gmra.mrb[0].mxu0 %v3642
      %v3689 = vpop.f32.mrb[0].mxu0
      %v3690 = vadd.f32 0.0, %v3689
      %v3691 = vpop.f32.mrb[0].mxu0
      %v3692 = vpop.f32.mrb[0].mxu0
      %v3693 = vpop.f32.mrb[0].mxu0
      %3694 = vdwg.mxu0
      %v3695 = vmul.f32 %v3682, %v3628
      %v3696 = vmul.f32 %v3685, %v3629
      %v3697 = vmul.f32 %v3690, %v3630
      %3701 = vrot.lane.b32.xlu0 %v3365, 8
      %v3702 = vpop.permute.xlu0 %3701
      %3703 = vrot.lane.b32.xlu0 %v3366, 8
      %v3704 = vpop.permute.xlu0 %3703
      %3705 = vrot.lane.b32.xlu0 %v3367, 8
      %v3706 = vpop.permute.xlu0 %3705
      %3713 = vrot.lane.b32.xlu0 %v3530, 16
      %v3714 = vpop.permute.xlu0 %3713
      %3715 = vrot.lane.b32.xlu0 %v3531, 16
      %v3716 = vpop.permute.xlu0 %3715
      %3717 = vrot.lane.b32.xlu0 %v3532, 16
      %v3718 = vpop.permute.xlu0 %3717
      %3725 = vrot.lane.b32.xlu0 %v3695, 24
      %v3726 = vpop.permute.xlu0 %3725
      %3727 = vrot.lane.b32.xlu0 %v3696, 24
      %v3728 = vpop.permute.xlu0 %3727
      %3729 = vrot.lane.b32.xlu0 %v3697, 24
      %v3730 = vpop.permute.xlu0 %3729
      %v3734 = vsel %vm1604, %v3200, %v3702
      %v3735 = vsel %vm1604, %v3201, %v3704
      %v3736 = vsel %vm1604, %v3202, %v3706
      %v3737 = vsel %vm2301, %v3734, %v3714
      %v3738 = vsel %vm2301, %v3735, %v3716
      %v3739 = vsel %vm2301, %v3736, %v3718
      %v3740 = vsel %vm2305, %v3737, %v3726
      %v3741 = vsel %vm2305, %v3738, %v3728
      %v3742 = vsel %vm2305, %v3739, %v3730
      %3743 = vst.msk [vmem:[#allocation2 + $0x22] sm:$0xff] %vm1175, %v3740
      %3744 = vst.msk [vmem:[#allocation2 + $0x2a] sm:$0xff] %vm1175, %v3741
      %3745 = vst.msk [vmem:[#allocation2 + $0x32] sm:$0x1] %vm2311, %v3742
      %v3746 = vpack.c.bf16 %v1554, %v1551
      %v3747 = vpack.c.bf16 %v1559, %v1559
      %vm3748 = vsmask.f32 6400
      %v3750 = vshrl.u32 %v3746, 16
      %v3752 = vrot.slane %v3750, 1
      %v3753 = vshll.u32 %v3746, 16
      %v3755 = vrot.slane %v3753, 2
      %v3756 = vor.u32 %v3752, %v3755
      %v3758 = vshrl.u32 %v3747, 16
      %v3760 = vrot.slane %v3758, 1
      %v3761 = vshll.u32 %v3747, 16
      %v3763 = vrot.slane %v3761, 2
      %v3764 = vor.u32 %v3760, %v3763
      %v3765 = vsel %vm3748, %v3756, %v3764
      %3766 = vrot.lane.b32.xlu0 %v3765, 96
      %v3767 = vpop.permute.xlu0 %3766
      %3768 = vrot.lane.b32.xlu0 %v3760, 96
      %v3769 = vpop.permute.xlu0 %3768
      %v3771 = vsel %vm1604, %v3765, 0
      %v3774 = vsel %vm1604, %v3760, 0
      %v3777 = vsel %vm1604, %v3767, 0
      %v3780 = vsel %vm1604, %v3769, 0
      %3782 = vmatprep.subr.bf16.mxu0 0
      %3783 = vmatpush1.bf16.xpose.msra.mxu0 %v3777
      %3784 = vmatprep.subr.bf16.mxu0 0
      %3785 = vmatpush1.bf16.xpose.msra.mxu0 %v3780
      %3786 = vmatprep.subr.bf16.mxu0 0
      %3787 = vmatpush1.bf16.xpose.msra.mxu0 0
      %3788 = vmatprep.subr.bf16.mxu0 0
      %3789 = vmatpush1.bf16.xpose.msra.mxu0 0
      %3790 = vmatprep.subr.bf16.mxu0 0
      %3791 = vmatpush1.bf16.xpose.msra.mxu0 0
      %3792 = vmatprep.subr.bf16.mxu0 0
      %3793 = vmatpush1.bf16.xpose.msra.mxu0 0
      %3794 = vmatprep.subr.bf16.mxu0 0
      %3795 = vmatpush1.bf16.xpose.msra.mxu0 0
      %3796 = vmatprep.subr.bf16.mxu0 0
      %3797 = vmatpush1.bf16.xpose.msra.mxu0 0
      %3798 = vmatprep.subr.bf16.mxu0 0
      %3799 = vmatpush1.bf16.xpose.msra.mxu0 0
      %3800 = vmatprep.subr.bf16.mxu0 0
      %3801 = vmatpush1.bf16.xpose.msra.mxu0 0
      %3802 = vmatprep.subr.bf16.mxu0 0
      %3803 = vmatpush1.bf16.xpose.msra.mxu0 0
      %3804 = vmatprep.subr.bf16.mxu0 0
      %3805 = vmatpush1.bf16.xpose.msra.mxu0 0
      %3806 = vmatprep.subr.bf16.mxu0 0
      %3807 = vmatpush1.bf16.xpose.msra.mxu0 0
      %3808 = vmatprep.subr.bf16.mxu0 0
      %3809 = vmatpush1.bf16.xpose.msra.mxu0 0
      %3810 = vmatprep.subr.bf16.mxu0 0
      %3811 = vmatpush1.bf16.xpose.msra.mxu0 0
      %3812 = vmatprep.subr.bf16.mxu0 0
      %3813 = vmatpush1.bf16.xpose.msra.mxu0 0
      %3814 = vmatprep.mubr.bf16.mxu0 0
      %3815 = vmatmul.mubr.bf16.gmra.mrb[0].mxu0 %v3771
      %v3816 = vpop.f32.mrb[0].mxu0
      %v3817 = vadd.f32 0.0, %v3816
      %v3818 = vpop.f32.mrb[0].mxu0
      %v3819 = vpop.f32.mrb[0].mxu0
      %v3820 = vadd.f32 0.0, %v3819
      %v3821 = vpop.f32.mrb[0].mxu0
      %3822 = vmatprep.mubr.bf16.mxu0 0
      %3823 = vmatmul.mubr.bf16.gmra.mrb[0].mxu0 %v3774
      %v3824 = vpop.f32.mrb[0].mxu0
      %v3825 = vadd.f32 0.0, %v3824
      %v3826 = vpop.f32.mrb[0].mxu0
      %v3827 = vpop.f32.mrb[0].mxu0
      %v3828 = vpop.f32.mrb[0].mxu0
      %3829 = vdwg.mxu0
      %v3830 = vsel %vm1665, %v3817, -inf
      %3831 = vmax.xlane.f32.xlu0 %v3830
      %v3832 = vpop.xlane.xlu0 %3831
      %v3833 = vsel %vm1665, %v3820, -inf
      %3834 = vmax.xlane.f32.xlu0 %v3833
      %v3835 = vpop.xlane.xlu0 %3834
      %v3836 = vsel %vm1672, %v3825, -inf
      %3837 = vmax.xlane.f32.xlu0 %v3836
      %v3838 = vpop.xlane.xlu0 %3837
      %v3839 = vsub.f32 %v3817, %v3832
      %v3840 = vsub.f32 %v3820, %v3835
      %v3841 = vsub.f32 %v3825, %v3838
      %v3842 = vmul.f32 %v3839, 1.442695
      %v3843 = vpow.pop %v3842
      %v3844 = vmul.f32 %v3840, 1.442695
      %v3845 = vpow.pop %v3844
      %v3846 = vmul.f32 %v3841, 1.442695
      %v3847 = vpow.pop %v3846
      %v3848 = vsel %vm1665, %v3843, 0.0
      %3849 = vadd.xlane.f32.xlu0 %v3848
      %v3850 = vpop.xlane.xlu0 %3849
      %v3851 = vsel %vm1665, %v3845, 0.0
      %3852 = vadd.xlane.f32.xlu0 %v3851
      %v3853 = vpop.xlane.xlu0 %3852
      %v3854 = vsel %vm1672, %v3847, 0.0
      %3855 = vadd.xlane.f32.xlu0 %v3854
      %v3856 = vpop.xlane.xlu0 %3855
      %v3857 = vrcp.pop %v3850
      %v3858 = vrcp.pop %v3853
      %v3859 = vrcp.pop %v3856
      %v3860 = vpack.c.bf16 %v3845, %v3843
      %v3861 = vpack.c.bf16 %v3847, %v3847
      %3862 = vrot.lane.b32.xlu0 %v3765, 64
      %v3863 = vpop.permute.xlu0 %3862
      %3864 = vrot.lane.b32.xlu0 %v3760, 64
      %v3865 = vpop.permute.xlu0 %3864
      %v3868 = vsel %vm1665, %v3860, 0
      %v3871 = vsel %vm1665, %v3861, 0
      %v3874 = vand.u32 %v3865, %v1712
      %3876 = vmatprep.subr.bf16.mxu0 0
      %3877 = vmatpush1.bf16.msra.mxu0 %v3863
      %3878 = vmatprep.subr.bf16.mxu0 0
      %3879 = vmatpush1.bf16.msra.mxu0 %v3874
      %3880 = vmatprep.subr.bf16.mxu0 0
      %3881 = vmatpush1.bf16.msra.mxu0 0
      %3882 = vmatprep.subr.bf16.mxu0 0
      %3883 = vmatpush1.bf16.msra.mxu0 0
      %3884 = vmatprep.subr.bf16.mxu0 0
      %3885 = vmatpush1.bf16.msra.mxu0 0
      %3886 = vmatprep.subr.bf16.mxu0 0
      %3887 = vmatpush1.bf16.msra.mxu0 0
      %3888 = vmatprep.subr.bf16.mxu0 0
      %3889 = vmatpush1.bf16.msra.mxu0 0
      %3890 = vmatprep.subr.bf16.mxu0 0
      %3891 = vmatpush1.bf16.msra.mxu0 0
      %3892 = vmatprep.subr.bf16.mxu0 0
      %3893 = vmatpush1.bf16.msra.mxu0 0
      %3894 = vmatprep.subr.bf16.mxu0 0
      %3895 = vmatpush1.bf16.msra.mxu0 0
      %3896 = vmatprep.subr.bf16.mxu0 0
      %3897 = vmatpush1.bf16.msra.mxu0 0
      %3898 = vmatprep.subr.bf16.mxu0 0
      %3899 = vmatpush1.bf16.msra.mxu0 0
      %3900 = vmatprep.subr.bf16.mxu0 0
      %3901 = vmatpush1.bf16.msra.mxu0 0
      %3902 = vmatprep.subr.bf16.mxu0 0
      %3903 = vmatpush1.bf16.msra.mxu0 0
      %3904 = vmatprep.subr.bf16.mxu0 0
      %3905 = vmatpush1.bf16.msra.mxu0 0
      %3906 = vmatprep.subr.bf16.mxu0 0
      %3907 = vmatpush1.bf16.msra.mxu0 0
      %3908 = vmatprep.mubr.bf16.mxu0 0
      %3909 = vmatmul.mubr.bf16.gmra.mrb[0].mxu0 %v3868
      %v3910 = vpop.f32.mrb[0].mxu0
      %v3911 = vadd.f32 0.0, %v3910
      %v3912 = vpop.f32.mrb[0].mxu0
      %v3913 = vpop.f32.mrb[0].mxu0
      %v3914 = vadd.f32 0.0, %v3913
      %v3915 = vpop.f32.mrb[0].mxu0
      %3916 = vmatprep.mubr.bf16.mxu0 0
      %3917 = vmatmul.mubr.bf16.gmra.mrb[0].mxu0 %v3871
      %v3918 = vpop.f32.mrb[0].mxu0
      %v3919 = vadd.f32 0.0, %v3918
      %v3920 = vpop.f32.mrb[0].mxu0
      %v3921 = vpop.f32.mrb[0].mxu0
      %v3922 = vpop.f32.mrb[0].mxu0
      %3923 = vdwg.mxu0
      %v3924 = vmul.f32 %v3911, %v3857
      %v3925 = vmul.f32 %v3914, %v3858
      %v3926 = vmul.f32 %v3919, %v3859
      %3927 = vrot.lane.b32.xlu0 %v3765, 120
      %v3928 = vpop.permute.xlu0 %3927
      %3929 = vrot.lane.b32.xlu0 %v3760, 120
      %v3930 = vpop.permute.xlu0 %3929
      %3931 = vrot.lane.b32.xlu0 %v3765, 88
      %v3932 = vpop.permute.xlu0 %3931
      %3933 = vrot.lane.b32.xlu0 %v3760, 88
      %v3934 = vpop.permute.xlu0 %3933
      %v3936 = vsel %vm1604, %v3928, 0
      %v3939 = vsel %vm1604, %v3930, 0
      %v3942 = vsel %vm1604, %v3932, 0
      %v3945 = vsel %vm1604, %v3934, 0
      %3947 = vmatprep.subr.bf16.mxu0 0
      %3948 = vmatpush1.bf16.xpose.msra.mxu0 %v3942
      %3949 = vmatprep.subr.bf16.mxu0 0
      %3950 = vmatpush1.bf16.xpose.msra.mxu0 %v3945
      %3951 = vmatprep.subr.bf16.mxu0 0
      %3952 = vmatpush1.bf16.xpose.msra.mxu0 0
      %3953 = vmatprep.subr.bf16.mxu0 0
      %3954 = vmatpush1.bf16.xpose.msra.mxu0 0
      %3955 = vmatprep.subr.bf16.mxu0 0
      %3956 = vmatpush1.bf16.xpose.msra.mxu0 0
      %3957 = vmatprep.subr.bf16.mxu0 0
      %3958 = vmatpush1.bf16.xpose.msra.mxu0 0
      %3959 = vmatprep.subr.bf16.mxu0 0
      %3960 = vmatpush1.bf16.xpose.msra.mxu0 0
      %3961 = vmatprep.subr.bf16.mxu0 0
      %3962 = vmatpush1.bf16.xpose.msra.mxu0 0
      %3963 = vmatprep.subr.bf16.mxu0 0
      %3964 = vmatpush1.bf16.xpose.msra.mxu0 0
      %3965 = vmatprep.subr.bf16.mxu0 0
      %3966 = vmatpush1.bf16.xpose.msra.mxu0 0
      %3967 = vmatprep.subr.bf16.mxu0 0
      %3968 = vmatpush1.bf16.xpose.msra.mxu0 0
      %3969 = vmatprep.subr.bf16.mxu0 0
      %3970 = vmatpush1.bf16.xpose.msra.mxu0 0
      %3971 = vmatprep.subr.bf16.mxu0 0
      %3972 = vmatpush1.bf16.xpose.msra.mxu0 0
      %3973 = vmatprep.subr.bf16.mxu0 0
      %3974 = vmatpush1.bf16.xpose.msra.mxu0 0
      %3975 = vmatprep.subr.bf16.mxu0 0
      %3976 = vmatpush1.bf16.xpose.msra.mxu0 0
      %3977 = vmatprep.subr.bf16.mxu0 0
      %3978 = vmatpush1.bf16.xpose.msra.mxu0 0
      %3979 = vmatprep.mubr.bf16.mxu0 0
      %3980 = vmatmul.mubr.bf16.gmra.mrb[0].mxu0 %v3936
      %v3981 = vpop.f32.mrb[0].mxu0
      %v3982 = vadd.f32 0.0, %v3981
      %v3983 = vpop.f32.mrb[0].mxu0
      %v3984 = vpop.f32.mrb[0].mxu0
      %v3985 = vadd.f32 0.0, %v3984
      %v3986 = vpop.f32.mrb[0].mxu0
      %3987 = vmatprep.mubr.bf16.mxu0 0
      %3988 = vmatmul.mubr.bf16.gmra.mrb[0].mxu0 %v3939
      %v3989 = vpop.f32.mrb[0].mxu0
      %v3990 = vadd.f32 0.0, %v3989
      %v3991 = vpop.f32.mrb[0].mxu0
      %v3992 = vpop.f32.mrb[0].mxu0
      %v3993 = vpop.f32.mrb[0].mxu0
      %3994 = vdwg.mxu0
      %v3995 = vsel %vm1665, %v3982, -inf
      %3996 = vmax.xlane.f32.xlu0 %v3995
      %v3997 = vpop.xlane.xlu0 %3996
      %v3998 = vsel %vm1665, %v3985, -inf
      %3999 = vmax.xlane.f32.xlu0 %v3998
      %v4000 = vpop.xlane.xlu0 %3999
      %v4001 = vsel %vm1672, %v3990, -inf
      %4002 = vmax.xlane.f32.xlu0 %v4001
      %v4003 = vpop.xlane.xlu0 %4002
      %v4004 = vsub.f32 %v3982, %v3997
      %v4005 = vsub.f32 %v3985, %v4000
      %v4006 = vsub.f32 %v3990, %v4003
      %v4007 = vmul.f32 %v4004, 1.442695
      %v4008 = vpow.pop %v4007
      %v4009 = vmul.f32 %v4005, 1.442695
      %v4010 = vpow.pop %v4009
      %v4011 = vmul.f32 %v4006, 1.442695
      %v4012 = vpow.pop %v4011
      %v4013 = vsel %vm1665, %v4008, 0.0
      %4014 = vadd.xlane.f32.xlu0 %v4013
      %v4015 = vpop.xlane.xlu0 %4014
      %v4016 = vsel %vm1665, %v4010, 0.0
      %4017 = vadd.xlane.f32.xlu0 %v4016
      %v4018 = vpop.xlane.xlu0 %4017
      %v4019 = vsel %vm1672, %v4012, 0.0
      %4020 = vadd.xlane.f32.xlu0 %v4019
      %v4021 = vpop.xlane.xlu0 %4020
      %v4022 = vrcp.pop %v4015
      %v4023 = vrcp.pop %v4018
      %v4024 = vrcp.pop %v4021
      %v4025 = vpack.c.bf16 %v4010, %v4008
      %v4026 = vpack.c.bf16 %v4012, %v4012
      %4027 = vrot.lane.b32.xlu0 %v3765, 56
      %v4028 = vpop.permute.xlu0 %4027
      %4029 = vrot.lane.b32.xlu0 %v3760, 56
      %v4030 = vpop.permute.xlu0 %4029
      %v4033 = vsel %vm1665, %v4025, 0
      %v4036 = vsel %vm1665, %v4026, 0
      %v4039 = vand.u32 %v4030, %v1712
      %4041 = vmatprep.subr.bf16.mxu0 0
      %4042 = vmatpush1.bf16.msra.mxu0 %v4028
      %4043 = vmatprep.subr.bf16.mxu0 0
      %4044 = vmatpush1.bf16.msra.mxu0 %v4039
      %4045 = vmatprep.subr.bf16.mxu0 0
      %4046 = vmatpush1.bf16.msra.mxu0 0
      %4047 = vmatprep.subr.bf16.mxu0 0
      %4048 = vmatpush1.bf16.msra.mxu0 0
      %4049 = vmatprep.subr.bf16.mxu0 0
      %4050 = vmatpush1.bf16.msra.mxu0 0
      %4051 = vmatprep.subr.bf16.mxu0 0
      %4052 = vmatpush1.bf16.msra.mxu0 0
      %4053 = vmatprep.subr.bf16.mxu0 0
      %4054 = vmatpush1.bf16.msra.mxu0 0
      %4055 = vmatprep.subr.bf16.mxu0 0
      %4056 = vmatpush1.bf16.msra.mxu0 0
      %4057 = vmatprep.subr.bf16.mxu0 0
      %4058 = vmatpush1.bf16.msra.mxu0 0
      %4059 = vmatprep.subr.bf16.mxu0 0
      %4060 = vmatpush1.bf16.msra.mxu0 0
      %4061 = vmatprep.subr.bf16.mxu0 0
      %4062 = vmatpush1.bf16.msra.mxu0 0
      %4063 = vmatprep.subr.bf16.mxu0 0
      %4064 = vmatpush1.bf16.msra.mxu0 0
      %4065 = vmatprep.subr.bf16.mxu0 0
      %4066 = vmatpush1.bf16.msra.mxu0 0
      %4067 = vmatprep.subr.bf16.mxu0 0
      %4068 = vmatpush1.bf16.msra.mxu0 0
      %4069 = vmatprep.subr.bf16.mxu0 0
      %4070 = vmatpush1.bf16.msra.mxu0 0
      %4071 = vmatprep.subr.bf16.mxu0 0
      %4072 = vmatpush1.bf16.msra.mxu0 0
      %4073 = vmatprep.mubr.bf16.mxu0 0
      %4074 = vmatmul.mubr.bf16.gmra.mrb[0].mxu0 %v4033
      %v4075 = vpop.f32.mrb[0].mxu0
      %v4076 = vadd.f32 0.0, %v4075
      %v4077 = vpop.f32.mrb[0].mxu0
      %v4078 = vpop.f32.mrb[0].mxu0
      %v4079 = vadd.f32 0.0, %v4078
      %v4080 = vpop.f32.mrb[0].mxu0
      %4081 = vmatprep.mubr.bf16.mxu0 0
      %4082 = vmatmul.mubr.bf16.gmra.mrb[0].mxu0 %v4036
      %v4083 = vpop.f32.mrb[0].mxu0
      %v4084 = vadd.f32 0.0, %v4083
      %v4085 = vpop.f32.mrb[0].mxu0
      %v4086 = vpop.f32.mrb[0].mxu0
      %v4087 = vpop.f32.mrb[0].mxu0
      %4088 = vdwg.mxu0
      %v4089 = vmul.f32 %v4076, %v4022
      %v4090 = vmul.f32 %v4079, %v4023
      %v4091 = vmul.f32 %v4084, %v4024
      %4092 = vrot.lane.b32.xlu0 %v3765, 112
      %v4093 = vpop.permute.xlu0 %4092
      %4094 = vrot.lane.b32.xlu0 %v3760, 112
      %v4095 = vpop.permute.xlu0 %4094
      %4096 = vrot.lane.b32.xlu0 %v3765, 80
      %v4097 = vpop.permute.xlu0 %4096
      %4098 = vrot.lane.b32.xlu0 %v3760, 80
      %v4099 = vpop.permute.xlu0 %4098
      %v4101 = vsel %vm1604, %v4093, 0
      %v4104 = vsel %vm1604, %v4095, 0
      %v4107 = vsel %vm1604, %v4097, 0
      %v4110 = vsel %vm1604, %v4099, 0
      %4112 = vmatprep.subr.bf16.mxu0 0
      %4113 = vmatpush1.bf16.xpose.msra.mxu0 %v4107
      %4114 = vmatprep.subr.bf16.mxu0 0
      %4115 = vmatpush1.bf16.xpose.msra.mxu0 %v4110
      %4116 = vmatprep.subr.bf16.mxu0 0
      %4117 = vmatpush1.bf16.xpose.msra.mxu0 0
      %4118 = vmatprep.subr.bf16.mxu0 0
      %4119 = vmatpush1.bf16.xpose.msra.mxu0 0
      %4120 = vmatprep.subr.bf16.mxu0 0
      %4121 = vmatpush1.bf16.xpose.msra.mxu0 0
      %4122 = vmatprep.subr.bf16.mxu0 0
      %4123 = vmatpush1.bf16.xpose.msra.mxu0 0
      %4124 = vmatprep.subr.bf16.mxu0 0
      %4125 = vmatpush1.bf16.xpose.msra.mxu0 0
      %4126 = vmatprep.subr.bf16.mxu0 0
      %4127 = vmatpush1.bf16.xpose.msra.mxu0 0
      %4128 = vmatprep.subr.bf16.mxu0 0
      %4129 = vmatpush1.bf16.xpose.msra.mxu0 0
      %4130 = vmatprep.subr.bf16.mxu0 0
      %4131 = vmatpush1.bf16.xpose.msra.mxu0 0
      %4132 = vmatprep.subr.bf16.mxu0 0
      %4133 = vmatpush1.bf16.xpose.msra.mxu0 0
      %4134 = vmatprep.subr.bf16.mxu0 0
      %4135 = vmatpush1.bf16.xpose.msra.mxu0 0
      %4136 = vmatprep.subr.bf16.mxu0 0
      %4137 = vmatpush1.bf16.xpose.msra.mxu0 0
      %4138 = vmatprep.subr.bf16.mxu0 0
      %4139 = vmatpush1.bf16.xpose.msra.mxu0 0
      %4140 = vmatprep.subr.bf16.mxu0 0
      %4141 = vmatpush1.bf16.xpose.msra.mxu0 0
      %4142 = vmatprep.subr.bf16.mxu0 0
      %4143 = vmatpush1.bf16.xpose.msra.mxu0 0
      %4144 = vmatprep.mubr.bf16.mxu0 0
      %4145 = vmatmul.mubr.bf16.gmra.mrb[0].mxu0 %v4101
      %v4146 = vpop.f32.mrb[0].mxu0
      %v4147 = vadd.f32 0.0, %v4146
      %v4148 = vpop.f32.mrb[0].mxu0
      %v4149 = vpop.f32.mrb[0].mxu0
      %v4150 = vadd.f32 0.0, %v4149
      %v4151 = vpop.f32.mrb[0].mxu0
      %4152 = vmatprep.mubr.bf16.mxu0 0
      %4153 = vmatmul.mubr.bf16.gmra.mrb[0].mxu0 %v4104
      %v4154 = vpop.f32.mrb[0].mxu0
      %v4155 = vadd.f32 0.0, %v4154
      %v4156 = vpop.f32.mrb[0].mxu0
      %v4157 = vpop.f32.mrb[0].mxu0
      %v4158 = vpop.f32.mrb[0].mxu0
      %4159 = vdwg.mxu0
      %v4160 = vsel %vm1665, %v4147, -inf
      %4161 = vmax.xlane.f32.xlu0 %v4160
      %v4162 = vpop.xlane.xlu0 %4161
      %v4163 = vsel %vm1665, %v4150, -inf
      %4164 = vmax.xlane.f32.xlu0 %v4163
      %v4165 = vpop.xlane.xlu0 %4164
      %v4166 = vsel %vm1672, %v4155, -inf
      %4167 = vmax.xlane.f32.xlu0 %v4166
      %v4168 = vpop.xlane.xlu0 %4167
      %v4169 = vsub.f32 %v4147, %v4162
      %v4170 = vsub.f32 %v4150, %v4165
      %v4171 = vsub.f32 %v4155, %v4168
      %v4172 = vmul.f32 %v4169, 1.442695
      %v4173 = vpow.pop %v4172
      %v4174 = vmul.f32 %v4170, 1.442695
      %v4175 = vpow.pop %v4174
      %v4176 = vmul.f32 %v4171, 1.442695
      %v4177 = vpow.pop %v4176
      %v4178 = vsel %vm1665, %v4173, 0.0
      %4179 = vadd.xlane.f32.xlu0 %v4178
      %v4180 = vpop.xlane.xlu0 %4179
      %v4181 = vsel %vm1665, %v4175, 0.0
      %4182 = vadd.xlane.f32.xlu0 %v4181
      %v4183 = vpop.xlane.xlu0 %4182
      %v4184 = vsel %vm1672, %v4177, 0.0
      %4185 = vadd.xlane.f32.xlu0 %v4184
      %v4186 = vpop.xlane.xlu0 %4185
      %v4187 = vrcp.pop %v4180
      %v4188 = vrcp.pop %v4183
      %v4189 = vrcp.pop %v4186
      %v4190 = vpack.c.bf16 %v4175, %v4173
      %v4191 = vpack.c.bf16 %v4177, %v4177
      %4192 = vrot.lane.b32.xlu0 %v3765, 48
      %v4193 = vpop.permute.xlu0 %4192
      %4194 = vrot.lane.b32.xlu0 %v3760, 48
      %v4195 = vpop.permute.xlu0 %4194
      %v4198 = vsel %vm1665, %v4190, 0
      %v4201 = vsel %vm1665, %v4191, 0
      %v4204 = vand.u32 %v4195, %v1712
      %4206 = vmatprep.subr.bf16.mxu0 0
      %4207 = vmatpush1.bf16.msra.mxu0 %v4193
      %4208 = vmatprep.subr.bf16.mxu0 0
      %4209 = vmatpush1.bf16.msra.mxu0 %v4204
      %4210 = vmatprep.subr.bf16.mxu0 0
      %4211 = vmatpush1.bf16.msra.mxu0 0
      %4212 = vmatprep.subr.bf16.mxu0 0
      %4213 = vmatpush1.bf16.msra.mxu0 0
      %4214 = vmatprep.subr.bf16.mxu0 0
      %4215 = vmatpush1.bf16.msra.mxu0 0
      %4216 = vmatprep.subr.bf16.mxu0 0
      %4217 = vmatpush1.bf16.msra.mxu0 0
      %4218 = vmatprep.subr.bf16.mxu0 0
      %4219 = vmatpush1.bf16.msra.mxu0 0
      %4220 = vmatprep.subr.bf16.mxu0 0
      %4221 = vmatpush1.bf16.msra.mxu0 0
      %4222 = vmatprep.subr.bf16.mxu0 0
      %4223 = vmatpush1.bf16.msra.mxu0 0
      %4224 = vmatprep.subr.bf16.mxu0 0
      %4225 = vmatpush1.bf16.msra.mxu0 0
      %4226 = vmatprep.subr.bf16.mxu0 0
      %4227 = vmatpush1.bf16.msra.mxu0 0
      %4228 = vmatprep.subr.bf16.mxu0 0
      %4229 = vmatpush1.bf16.msra.mxu0 0
      %4230 = vmatprep.subr.bf16.mxu0 0
      %4231 = vmatpush1.bf16.msra.mxu0 0
      %4232 = vmatprep.subr.bf16.mxu0 0
      %4233 = vmatpush1.bf16.msra.mxu0 0
      %4234 = vmatprep.subr.bf16.mxu0 0
      %4235 = vmatpush1.bf16.msra.mxu0 0
      %4236 = vmatprep.subr.bf16.mxu0 0
      %4237 = vmatpush1.bf16.msra.mxu0 0
      %4238 = vmatprep.mubr.bf16.mxu0 0
      %4239 = vmatmul.mubr.bf16.gmra.mrb[0].mxu0 %v4198
      %v4240 = vpop.f32.mrb[0].mxu0
      %v4241 = vadd.f32 0.0, %v4240
      %v4242 = vpop.f32.mrb[0].mxu0
      %v4243 = vpop.f32.mrb[0].mxu0
      %v4244 = vadd.f32 0.0, %v4243
      %v4245 = vpop.f32.mrb[0].mxu0
      %4246 = vmatprep.mubr.bf16.mxu0 0
      %4247 = vmatmul.mubr.bf16.gmra.mrb[0].mxu0 %v4201
      %v4248 = vpop.f32.mrb[0].mxu0
      %v4249 = vadd.f32 0.0, %v4248
      %v4250 = vpop.f32.mrb[0].mxu0
      %v4251 = vpop.f32.mrb[0].mxu0
      %v4252 = vpop.f32.mrb[0].mxu0
      %4253 = vdwg.mxu0
      %v4254 = vmul.f32 %v4241, %v4187
      %v4255 = vmul.f32 %v4244, %v4188
      %v4256 = vmul.f32 %v4249, %v4189
      %4257 = vrot.lane.b32.xlu0 %v3765, 104
      %v4258 = vpop.permute.xlu0 %4257
      %4259 = vrot.lane.b32.xlu0 %v3760, 104
      %v4260 = vpop.permute.xlu0 %4259
      %4261 = vrot.lane.b32.xlu0 %v3765, 72
      %v4262 = vpop.permute.xlu0 %4261
      %4263 = vrot.lane.b32.xlu0 %v3760, 72
      %v4264 = vpop.permute.xlu0 %4263
      %v4266 = vsel %vm1604, %v4258, 0
      %v4269 = vsel %vm1604, %v4260, 0
      %v4272 = vsel %vm1604, %v4262, 0
      %v4275 = vsel %vm1604, %v4264, 0
      %4277 = vmatprep.subr.bf16.mxu0 0
      %4278 = vmatpush1.bf16.xpose.msra.mxu0 %v4272
      %4279 = vmatprep.subr.bf16.mxu0 0
      %4280 = vmatpush1.bf16.xpose.msra.mxu0 %v4275
      %4281 = vmatprep.subr.bf16.mxu0 0
      %4282 = vmatpush1.bf16.xpose.msra.mxu0 0
      %4283 = vmatprep.subr.bf16.mxu0 0
      %4284 = vmatpush1.bf16.xpose.msra.mxu0 0
      %4285 = vmatprep.subr.bf16.mxu0 0
      %4286 = vmatpush1.bf16.xpose.msra.mxu0 0
      %4287 = vmatprep.subr.bf16.mxu0 0
      %4288 = vmatpush1.bf16.xpose.msra.mxu0 0
      %4289 = vmatprep.subr.bf16.mxu0 0
      %4290 = vmatpush1.bf16.xpose.msra.mxu0 0
      %4291 = vmatprep.subr.bf16.mxu0 0
      %4292 = vmatpush1.bf16.xpose.msra.mxu0 0
      %4293 = vmatprep.subr.bf16.mxu0 0
      %4294 = vmatpush1.bf16.xpose.msra.mxu0 0
      %4295 = vmatprep.subr.bf16.mxu0 0
      %4296 = vmatpush1.bf16.xpose.msra.mxu0 0
      %4297 = vmatprep.subr.bf16.mxu0 0
      %4298 = vmatpush1.bf16.xpose.msra.mxu0 0
      %4299 = vmatprep.subr.bf16.mxu0 0
      %4300 = vmatpush1.bf16.xpose.msra.mxu0 0
      %4301 = vmatprep.subr.bf16.mxu0 0
      %4302 = vmatpush1.bf16.xpose.msra.mxu0 0
      %4303 = vmatprep.subr.bf16.mxu0 0
      %4304 = vmatpush1.bf16.xpose.msra.mxu0 0
      %4305 = vmatprep.subr.bf16.mxu0 0
      %4306 = vmatpush1.bf16.xpose.msra.mxu0 0
      %4307 = vmatprep.subr.bf16.mxu0 0
      %4308 = vmatpush1.bf16.xpose.msra.mxu0 0
      %4309 = vmatprep.mubr.bf16.mxu0 0
      %4310 = vmatmul.mubr.bf16.gmra.mrb[0].mxu0 %v4266
      %v4311 = vpop.f32.mrb[0].mxu0
      %v4312 = vadd.f32 0.0, %v4311
      %v4313 = vpop.f32.mrb[0].mxu0
      %v4314 = vpop.f32.mrb[0].mxu0
      %v4315 = vadd.f32 0.0, %v4314
      %v4316 = vpop.f32.mrb[0].mxu0
      %4317 = vmatprep.mubr.bf16.mxu0 0
      %4318 = vmatmul.mubr.bf16.gmra.mrb[0].mxu0 %v4269
      %v4319 = vpop.f32.mrb[0].mxu0
      %v4320 = vadd.f32 0.0, %v4319
      %v4321 = vpop.f32.mrb[0].mxu0
      %v4322 = vpop.f32.mrb[0].mxu0
      %v4323 = vpop.f32.mrb[0].mxu0
      %4324 = vdwg.mxu0
      %v4325 = vsel %vm1665, %v4312, -inf
      %4326 = vmax.xlane.f32.xlu0 %v4325
      %v4327 = vpop.xlane.xlu0 %4326
      %v4328 = vsel %vm1665, %v4315, -inf
      %4329 = vmax.xlane.f32.xlu0 %v4328
      %v4330 = vpop.xlane.xlu0 %4329
      %v4331 = vsel %vm1672, %v4320, -inf
      %4332 = vmax.xlane.f32.xlu0 %v4331
      %v4333 = vpop.xlane.xlu0 %4332
      %v4334 = vsub.f32 %v4312, %v4327
      %v4335 = vsub.f32 %v4315, %v4330
      %v4336 = vsub.f32 %v4320, %v4333
      %v4337 = vmul.f32 %v4334, 1.442695
      %v4338 = vpow.pop %v4337
      %v4339 = vmul.f32 %v4335, 1.442695
      %v4340 = vpow.pop %v4339
      %v4341 = vmul.f32 %v4336, 1.442695
      %v4342 = vpow.pop %v4341
      %v4343 = vsel %vm1665, %v4338, 0.0
      %4344 = vadd.xlane.f32.xlu0 %v4343
      %v4345 = vpop.xlane.xlu0 %4344
      %v4346 = vsel %vm1665, %v4340, 0.0
      %4347 = vadd.xlane.f32.xlu0 %v4346
      %v4348 = vpop.xlane.xlu0 %4347
      %v4349 = vsel %vm1672, %v4342, 0.0
      %4350 = vadd.xlane.f32.xlu0 %v4349
      %v4351 = vpop.xlane.xlu0 %4350
      %v4352 = vrcp.pop %v4345
      %v4353 = vrcp.pop %v4348
      %v4354 = vrcp.pop %v4351
      %v4355 = vpack.c.bf16 %v4340, %v4338
      %v4356 = vpack.c.bf16 %v4342, %v4342
      %4357 = vrot.lane.b32.xlu0 %v3765, 40
      %v4358 = vpop.permute.xlu0 %4357
      %4359 = vrot.lane.b32.xlu0 %v3760, 40
      %v4360 = vpop.permute.xlu0 %4359
      %v4363 = vsel %vm1665, %v4355, 0
      %v4366 = vsel %vm1665, %v4356, 0
      %v4369 = vand.u32 %v4360, %v1712
      %4371 = vmatprep.subr.bf16.mxu0 0
      %4372 = vmatpush1.bf16.msra.mxu0 %v4358
      %4373 = vmatprep.subr.bf16.mxu0 0
      %4374 = vmatpush1.bf16.msra.mxu0 %v4369
      %4375 = vmatprep.subr.bf16.mxu0 0
      %4376 = vmatpush1.bf16.msra.mxu0 0
      %4377 = vmatprep.subr.bf16.mxu0 0
      %4378 = vmatpush1.bf16.msra.mxu0 0
      %4379 = vmatprep.subr.bf16.mxu0 0
      %4380 = vmatpush1.bf16.msra.mxu0 0
      %4381 = vmatprep.subr.bf16.mxu0 0
      %4382 = vmatpush1.bf16.msra.mxu0 0
      %4383 = vmatprep.subr.bf16.mxu0 0
      %4384 = vmatpush1.bf16.msra.mxu0 0
      %4385 = vmatprep.subr.bf16.mxu0 0
      %4386 = vmatpush1.bf16.msra.mxu0 0
      %4387 = vmatprep.subr.bf16.mxu0 0
      %4388 = vmatpush1.bf16.msra.mxu0 0
      %4389 = vmatprep.subr.bf16.mxu0 0
      %4390 = vmatpush1.bf16.msra.mxu0 0
      %4391 = vmatprep.subr.bf16.mxu0 0
      %4392 = vmatpush1.bf16.msra.mxu0 0
      %4393 = vmatprep.subr.bf16.mxu0 0
      %4394 = vmatpush1.bf16.msra.mxu0 0
      %4395 = vmatprep.subr.bf16.mxu0 0
      %4396 = vmatpush1.bf16.msra.mxu0 0
      %4397 = vmatprep.subr.bf16.mxu0 0
      %4398 = vmatpush1.bf16.msra.mxu0 0
      %4399 = vmatprep.subr.bf16.mxu0 0
      %4400 = vmatpush1.bf16.msra.mxu0 0
      %4401 = vmatprep.subr.bf16.mxu0 0
      %4402 = vmatpush1.bf16.msra.mxu0 0
      %4403 = vmatprep.mubr.bf16.mxu0 0
      %4404 = vmatmul.mubr.bf16.gmra.mrb[0].mxu0 %v4363
      %v4405 = vpop.f32.mrb[0].mxu0
      %v4406 = vadd.f32 0.0, %v4405
      %v4407 = vpop.f32.mrb[0].mxu0
      %v4408 = vpop.f32.mrb[0].mxu0
      %v4409 = vadd.f32 0.0, %v4408
      %v4410 = vpop.f32.mrb[0].mxu0
      %4411 = vmatprep.mubr.bf16.mxu0 0
      %4412 = vmatmul.mubr.bf16.gmra.mrb[0].mxu0 %v4366
      %v4413 = vpop.f32.mrb[0].mxu0
      %v4414 = vadd.f32 0.0, %v4413
      %v4415 = vpop.f32.mrb[0].mxu0
      %v4416 = vpop.f32.mrb[0].mxu0
      %v4417 = vpop.f32.mrb[0].mxu0
      %4418 = vdwg.mxu0
      %v4419 = vmul.f32 %v4406, %v4352
      %v4420 = vmul.f32 %v4409, %v4353
      %v4421 = vmul.f32 %v4414, %v4354
      %4425 = vrot.lane.b32.xlu0 %v4089, 8
      %v4426 = vpop.permute.xlu0 %4425
      %4427 = vrot.lane.b32.xlu0 %v4090, 8
      %v4428 = vpop.permute.xlu0 %4427
      %4429 = vrot.lane.b32.xlu0 %v4091, 8
      %v4430 = vpop.permute.xlu0 %4429
      %4437 = vrot.lane.b32.xlu0 %v4254, 16
      %v4438 = vpop.permute.xlu0 %4437
      %4439 = vrot.lane.b32.xlu0 %v4255, 16
      %v4440 = vpop.permute.xlu0 %4439
      %4441 = vrot.lane.b32.xlu0 %v4256, 16
      %v4442 = vpop.permute.xlu0 %4441
      %4449 = vrot.lane.b32.xlu0 %v4419, 24
      %v4450 = vpop.permute.xlu0 %4449
      %4451 = vrot.lane.b32.xlu0 %v4420, 24
      %v4452 = vpop.permute.xlu0 %4451
      %4453 = vrot.lane.b32.xlu0 %v4421, 24
      %v4454 = vpop.permute.xlu0 %4453
      %v4458 = vsel %vm1604, %v3924, %v4426
      %v4459 = vsel %vm1604, %v3925, %v4428
      %v4460 = vsel %vm1604, %v3926, %v4430
      %v4461 = vsel %vm2301, %v4458, %v4438
      %v4462 = vsel %vm2301, %v4459, %v4440
      %v4463 = vsel %vm2301, %v4460, %v4442
      %v4464 = vsel %vm2305, %v4461, %v4450
      %v4465 = vsel %vm2305, %v4462, %v4452
      %v4466 = vsel %vm2305, %v4463, %v4454
      %4467 = vst.msk [vmem:[#allocation2 + $0x33] sm:$0xff] %vm1175, %v4464
      %4468 = vst.msk [vmem:[#allocation2 + $0x3b] sm:$0xff] %vm1175, %v4465
      %4469 = vst.msk [vmem:[#allocation2 + $0x43] sm:$0x1] %vm2311, %v4466
      %v4470 = vpack.c.bf16 %v1562, %v1559
      %v4471 = vpack.c.bf16 %v1567, %v1567
      %vm4474 = vcmask 1045504
      %v4475 = vrot.slane %v4470, 2
      %v4476 = vrot.slane %v4471, 2
      %v4477 = vsel %vm4474, %v4475, %v4476
      %4478 = vrot.lane.b32.xlu0 %v4477, 96
      %v4479 = vpop.permute.xlu0 %4478
      %4480 = vrot.lane.b32.xlu0 %v4476, 96
      %v4481 = vpop.permute.xlu0 %4480
      %v4483 = vsel %vm1604, %v4477, 0
      %v4486 = vsel %vm1604, %v4476, 0
      %v4489 = vsel %vm1604, %v4479, 0
      %v4492 = vsel %vm1604, %v4481, 0
      %4494 = vmatprep.subr.bf16.mxu0 0
      %4495 = vmatpush1.bf16.xpose.msra.mxu0 %v4489
      %4496 = vmatprep.subr.bf16.mxu0 0
      %4497 = vmatpush1.bf16.xpose.msra.mxu0 %v4492
      %4498 = vmatprep.subr.bf16.mxu0 0
      %4499 = vmatpush1.bf16.xpose.msra.mxu0 0
      %4500 = vmatprep.subr.bf16.mxu0 0
      %4501 = vmatpush1.bf16.xpose.msra.mxu0 0
      %4502 = vmatprep.subr.bf16.mxu0 0
      %4503 = vmatpush1.bf16.xpose.msra.mxu0 0
      %4504 = vmatprep.subr.bf16.mxu0 0
      %4505 = vmatpush1.bf16.xpose.msra.mxu0 0
      %4506 = vmatprep.subr.bf16.mxu0 0
      %4507 = vmatpush1.bf16.xpose.msra.mxu0 0
      %4508 = vmatprep.subr.bf16.mxu0 0
      %4509 = vmatpush1.bf16.xpose.msra.mxu0 0
      %4510 = vmatprep.subr.bf16.mxu0 0
      %4511 = vmatpush1.bf16.xpose.msra.mxu0 0
      %4512 = vmatprep.subr.bf16.mxu0 0
      %4513 = vmatpush1.bf16.xpose.msra.mxu0 0
      %4514 = vmatprep.subr.bf16.mxu0 0
      %4515 = vmatpush1.bf16.xpose.msra.mxu0 0
      %4516 = vmatprep.subr.bf16.mxu0 0
      %4517 = vmatpush1.bf16.xpose.msra.mxu0 0
      %4518 = vmatprep.subr.bf16.mxu0 0
      %4519 = vmatpush1.bf16.xpose.msra.mxu0 0
      %4520 = vmatprep.subr.bf16.mxu0 0
      %4521 = vmatpush1.bf16.xpose.msra.mxu0 0
      %4522 = vmatprep.subr.bf16.mxu0 0
      %4523 = vmatpush1.bf16.xpose.msra.mxu0 0
      %4524 = vmatprep.subr.bf16.mxu0 0
      %4525 = vmatpush1.bf16.xpose.msra.mxu0 0
      %4526 = vmatprep.mubr.bf16.mxu0 0
      %4527 = vmatmul.mubr.bf16.gmra.mrb[0].mxu0 %v4483
      %v4528 = vpop.f32.mrb[0].mxu0
      %v4529 = vadd.f32 0.0, %v4528
      %v4530 = vpop.f32.mrb[0].mxu0
      %v4531 = vpop.f32.mrb[0].mxu0
      %v4532 = vadd.f32 0.0, %v4531
      %v4533 = vpop.f32.mrb[0].mxu0
      %4534 = vmatprep.mubr.bf16.mxu0 0
      %4535 = vmatmul.mubr.bf16.gmra.mrb[0].mxu0 %v4486
      %v4536 = vpop.f32.mrb[0].mxu0
      %v4537 = vadd.f32 0.0, %v4536
      %v4538 = vpop.f32.mrb[0].mxu0
      %v4539 = vpop.f32.mrb[0].mxu0
      %v4540 = vpop.f32.mrb[0].mxu0
      %4541 = vdwg.mxu0
      %v4542 = vsel %vm1665, %v4529, -inf
      %4543 = vmax.xlane.f32.xlu0 %v4542
      %v4544 = vpop.xlane.xlu0 %4543
      %v4545 = vsel %vm1665, %v4532, -inf
      %4546 = vmax.xlane.f32.xlu0 %v4545
      %v4547 = vpop.xlane.xlu0 %4546
      %v4548 = vsel %vm1672, %v4537, -inf
      %4549 = vmax.xlane.f32.xlu0 %v4548
      %v4550 = vpop.xlane.xlu0 %4549
      %v4551 = vsub.f32 %v4529, %v4544
      %v4552 = vsub.f32 %v4532, %v4547
      %v4553 = vsub.f32 %v4537, %v4550
      %v4554 = vmul.f32 %v4551, 1.442695
      %v4555 = vpow.pop %v4554
      %v4556 = vmul.f32 %v4552, 1.442695
      %v4557 = vpow.pop %v4556
      %v4558 = vmul.f32 %v4553, 1.442695
      %v4559 = vpow.pop %v4558
      %v4560 = vsel %vm1665, %v4555, 0.0
      %4561 = vadd.xlane.f32.xlu0 %v4560
      %v4562 = vpop.xlane.xlu0 %4561
      %v4563 = vsel %vm1665, %v4557, 0.0
      %4564 = vadd.xlane.f32.xlu0 %v4563
      %v4565 = vpop.xlane.xlu0 %4564
      %v4566 = vsel %vm1672, %v4559, 0.0
      %4567 = vadd.xlane.f32.xlu0 %v4566
      %v4568 = vpop.xlane.xlu0 %4567
      %v4569 = vrcp.pop %v4562
      %v4570 = vrcp.pop %v4565
      %v4571 = vrcp.pop %v4568
      %v4572 = vpack.c.bf16 %v4557, %v4555
      %v4573 = vpack.c.bf16 %v4559, %v4559
      %4574 = vrot.lane.b32.xlu0 %v4477, 64
      %v4575 = vpop.permute.xlu0 %4574
      %4576 = vrot.lane.b32.xlu0 %v4476, 64
      %v4577 = vpop.permute.xlu0 %4576
      %v4580 = vsel %vm1665, %v4572, 0
      %v4583 = vsel %vm1665, %v4573, 0
      %v4586 = vand.u32 %v4577, %v1712
      %4588 = vmatprep.subr.bf16.mxu0 0
      %4589 = vmatpush1.bf16.msra.mxu0 %v4575
      %4590 = vmatprep.subr.bf16.mxu0 0
      %4591 = vmatpush1.bf16.msra.mxu0 %v4586
      %4592 = vmatprep.subr.bf16.mxu0 0
      %4593 = vmatpush1.bf16.msra.mxu0 0
      %4594 = vmatprep.subr.bf16.mxu0 0
      %4595 = vmatpush1.bf16.msra.mxu0 0
      %4596 = vmatprep.subr.bf16.mxu0 0
      %4597 = vmatpush1.bf16.msra.mxu0 0
      %4598 = vmatprep.subr.bf16.mxu0 0
      %4599 = vmatpush1.bf16.msra.mxu0 0
      %4600 = vmatprep.subr.bf16.mxu0 0
      %4601 = vmatpush1.bf16.msra.mxu0 0
      %4602 = vmatprep.subr.bf16.mxu0 0
      %4603 = vmatpush1.bf16.msra.mxu0 0
      %4604 = vmatprep.subr.bf16.mxu0 0
      %4605 = vmatpush1.bf16.msra.mxu0 0
      %4606 = vmatprep.subr.bf16.mxu0 0
      %4607 = vmatpush1.bf16.msra.mxu0 0
      %4608 = vmatprep.subr.bf16.mxu0 0
      %4609 = vmatpush1.bf16.msra.mxu0 0
      %4610 = vmatprep.subr.bf16.mxu0 0
      %4611 = vmatpush1.bf16.msra.mxu0 0
      %4612 = vmatprep.subr.bf16.mxu0 0
      %4613 = vmatpush1.bf16.msra.mxu0 0
      %4614 = vmatprep.subr.bf16.mxu0 0
      %4615 = vmatpush1.bf16.msra.mxu0 0
      %4616 = vmatprep.subr.bf16.mxu0 0
      %4617 = vmatpush1.bf16.msra.mxu0 0
      %4618 = vmatprep.subr.bf16.mxu0 0
      %4619 = vmatpush1.bf16.msra.mxu0 0
      %4620 = vmatprep.mubr.bf16.mxu0 0
      %4621 = vmatmul.mubr.bf16.gmra.mrb[0].mxu0 %v4580
      %v4622 = vpop.f32.mrb[0].mxu0
      %v4623 = vadd.f32 0.0, %v4622
      %v4624 = vpop.f32.mrb[0].mxu0
      %v4625 = vpop.f32.mrb[0].mxu0
      %v4626 = vadd.f32 0.0, %v4625
      %v4627 = vpop.f32.mrb[0].mxu0
      %4628 = vmatprep.mubr.bf16.mxu0 0
      %4629 = vmatmul.mubr.bf16.gmra.mrb[0].mxu0 %v4583
      %v4630 = vpop.f32.mrb[0].mxu0
      %v4631 = vadd.f32 0.0, %v4630
      %v4632 = vpop.f32.mrb[0].mxu0
      %v4633 = vpop.f32.mrb[0].mxu0
      %v4634 = vpop.f32.mrb[0].mxu0
      %4635 = vdwg.mxu0
      %v4636 = vmul.f32 %v4623, %v4569
      %v4637 = vmul.f32 %v4626, %v4570
      %v4638 = vmul.f32 %v4631, %v4571
      %4639 = vrot.lane.b32.xlu0 %v4477, 120
      %v4640 = vpop.permute.xlu0 %4639
      %4641 = vrot.lane.b32.xlu0 %v4476, 120
      %v4642 = vpop.permute.xlu0 %4641
      %4643 = vrot.lane.b32.xlu0 %v4477, 88
      %v4644 = vpop.permute.xlu0 %4643
      %4645 = vrot.lane.b32.xlu0 %v4476, 88
      %v4646 = vpop.permute.xlu0 %4645
      %v4648 = vsel %vm1604, %v4640, 0
      %v4651 = vsel %vm1604, %v4642, 0
      %v4654 = vsel %vm1604, %v4644, 0
      %v4657 = vsel %vm1604, %v4646, 0
      %4659 = vmatprep.subr.bf16.mxu0 0
      %4660 = vmatpush1.bf16.xpose.msra.mxu0 %v4654
      %4661 = vmatprep.subr.bf16.mxu0 0
      %4662 = vmatpush1.bf16.xpose.msra.mxu0 %v4657
      %4663 = vmatprep.subr.bf16.mxu0 0
      %4664 = vmatpush1.bf16.xpose.msra.mxu0 0
      %4665 = vmatprep.subr.bf16.mxu0 0
      %4666 = vmatpush1.bf16.xpose.msra.mxu0 0
      %4667 = vmatprep.subr.bf16.mxu0 0
      %4668 = vmatpush1.bf16.xpose.msra.mxu0 0
      %4669 = vmatprep.subr.bf16.mxu0 0
      %4670 = vmatpush1.bf16.xpose.msra.mxu0 0
      %4671 = vmatprep.subr.bf16.mxu0 0
      %4672 = vmatpush1.bf16.xpose.msra.mxu0 0
      %4673 = vmatprep.subr.bf16.mxu0 0
      %4674 = vmatpush1.bf16.xpose.msra.mxu0 0
      %4675 = vmatprep.subr.bf16.mxu0 0
      %4676 = vmatpush1.bf16.xpose.msra.mxu0 0
      %4677 = vmatprep.subr.bf16.mxu0 0
      %4678 = vmatpush1.bf16.xpose.msra.mxu0 0
      %4679 = vmatprep.subr.bf16.mxu0 0
      %4680 = vmatpush1.bf16.xpose.msra.mxu0 0
      %4681 = vmatprep.subr.bf16.mxu0 0
      %4682 = vmatpush1.bf16.xpose.msra.mxu0 0
      %4683 = vmatprep.subr.bf16.mxu0 0
      %4684 = vmatpush1.bf16.xpose.msra.mxu0 0
      %4685 = vmatprep.subr.bf16.mxu0 0
      %4686 = vmatpush1.bf16.xpose.msra.mxu0 0
      %4687 = vmatprep.subr.bf16.mxu0 0
      %4688 = vmatpush1.bf16.xpose.msra.mxu0 0
      %4689 = vmatprep.subr.bf16.mxu0 0
      %4690 = vmatpush1.bf16.xpose.msra.mxu0 0
      %4691 = vmatprep.mubr.bf16.mxu0 0
      %4692 = vmatmul.mubr.bf16.gmra.mrb[0].mxu0 %v4648
      %v4693 = vpop.f32.mrb[0].mxu0
      %v4694 = vadd.f32 0.0, %v4693
      %v4695 = vpop.f32.mrb[0].mxu0
      %v4696 = vpop.f32.mrb[0].mxu0
      %v4697 = vadd.f32 0.0, %v4696
      %v4698 = vpop.f32.mrb[0].mxu0
      %4699 = vmatprep.mubr.bf16.mxu0 0
      %4700 = vmatmul.mubr.bf16.gmra.mrb[0].mxu0 %v4651
      %v4701 = vpop.f32.mrb[0].mxu0
      %v4702 = vadd.f32 0.0, %v4701
      %v4703 = vpop.f32.mrb[0].mxu0
      %v4704 = vpop.f32.mrb[0].mxu0
      %v4705 = vpop.f32.mrb[0].mxu0
      %4706 = vdwg.mxu0
      %v4707 = vsel %vm1665, %v4694, -inf
      %4708 = vmax.xlane.f32.xlu0 %v4707
      %v4709 = vpop.xlane.xlu0 %4708
      %v4710 = vsel %vm1665, %v4697, -inf
      %4711 = vmax.xlane.f32.xlu0 %v4710
      %v4712 = vpop.xlane.xlu0 %4711
      %v4713 = vsel %vm1672, %v4702, -inf
      %4714 = vmax.xlane.f32.xlu0 %v4713
      %v4715 = vpop.xlane.xlu0 %4714
      %v4716 = vsub.f32 %v4694, %v4709
      %v4717 = vsub.f32 %v4697, %v4712
      %v4718 = vsub.f32 %v4702, %v4715
      %v4719 = vmul.f32 %v4716, 1.442695
      %v4720 = vpow.pop %v4719
      %v4721 = vmul.f32 %v4717, 1.442695
      %v4722 = vpow.pop %v4721
      %v4723 = vmul.f32 %v4718, 1.442695
      %v4724 = vpow.pop %v4723
      %v4725 = vsel %vm1665, %v4720, 0.0
      %4726 = vadd.xlane.f32.xlu0 %v4725
      %v4727 = vpop.xlane.xlu0 %4726
      %v4728 = vsel %vm1665, %v4722, 0.0
      %4729 = vadd.xlane.f32.xlu0 %v4728
      %v4730 = vpop.xlane.xlu0 %4729
      %v4731 = vsel %vm1672, %v4724, 0.0
      %4732 = vadd.xlane.f32.xlu0 %v4731
      %v4733 = vpop.xlane.xlu0 %4732
      %v4734 = vrcp.pop %v4727
      %v4735 = vrcp.pop %v4730
      %v4736 = vrcp.pop %v4733
      %v4737 = vpack.c.bf16 %v4722, %v4720
      %v4738 = vpack.c.bf16 %v4724, %v4724
      %4739 = vrot.lane.b32.xlu0 %v4477, 56
      %v4740 = vpop.permute.xlu0 %4739
      %4741 = vrot.lane.b32.xlu0 %v4476, 56
      %v4742 = vpop.permute.xlu0 %4741
      %v4745 = vsel %vm1665, %v4737, 0
      %v4748 = vsel %vm1665, %v4738, 0
      %v4751 = vand.u32 %v4742, %v1712
      %4753 = vmatprep.subr.bf16.mxu0 0
      %4754 = vmatpush1.bf16.msra.mxu0 %v4740
      %4755 = vmatprep.subr.bf16.mxu0 0
      %4756 = vmatpush1.bf16.msra.mxu0 %v4751
      %4757 = vmatprep.subr.bf16.mxu0 0
      %4758 = vmatpush1.bf16.msra.mxu0 0
      %4759 = vmatprep.subr.bf16.mxu0 0
      %4760 = vmatpush1.bf16.msra.mxu0 0
      %4761 = vmatprep.subr.bf16.mxu0 0
      %4762 = vmatpush1.bf16.msra.mxu0 0
      %4763 = vmatprep.subr.bf16.mxu0 0
      %4764 = vmatpush1.bf16.msra.mxu0 0
      %4765 = vmatprep.subr.bf16.mxu0 0
      %4766 = vmatpush1.bf16.msra.mxu0 0
      %4767 = vmatprep.subr.bf16.mxu0 0
      %4768 = vmatpush1.bf16.msra.mxu0 0
      %4769 = vmatprep.subr.bf16.mxu0 0
      %4770 = vmatpush1.bf16.msra.mxu0 0
      %4771 = vmatprep.subr.bf16.mxu0 0
      %4772 = vmatpush1.bf16.msra.mxu0 0
      %4773 = vmatprep.subr.bf16.mxu0 0
      %4774 = vmatpush1.bf16.msra.mxu0 0
      %4775 = vmatprep.subr.bf16.mxu0 0
      %4776 = vmatpush1.bf16.msra.mxu0 0
      %4777 = vmatprep.subr.bf16.mxu0 0
      %4778 = vmatpush1.bf16.msra.mxu0 0
      %4779 = vmatprep.subr.bf16.mxu0 0
      %4780 = vmatpush1.bf16.msra.mxu0 0
      %4781 = vmatprep.subr.bf16.mxu0 0
      %4782 = vmatpush1.bf16.msra.mxu0 0
      %4783 = vmatprep.subr.bf16.mxu0 0
      %4784 = vmatpush1.bf16.msra.mxu0 0
      %4785 = vmatprep.mubr.bf16.mxu0 0
      %4786 = vmatmul.mubr.bf16.gmra.mrb[0].mxu0 %v4745
      %v4787 = vpop.f32.mrb[0].mxu0
      %v4788 = vadd.f32 0.0, %v4787
      %v4789 = vpop.f32.mrb[0].mxu0
      %v4790 = vpop.f32.mrb[0].mxu0
      %v4791 = vadd.f32 0.0, %v4790
      %v4792 = vpop.f32.mrb[0].mxu0
      %4793 = vmatprep.mubr.bf16.mxu0 0
      %4794 = vmatmul.mubr.bf16.gmra.mrb[0].mxu0 %v4748
      %v4795 = vpop.f32.mrb[0].mxu0
      %v4796 = vadd.f32 0.0, %v4795
      %v4797 = vpop.f32.mrb[0].mxu0
      %v4798 = vpop.f32.mrb[0].mxu0
      %v4799 = vpop.f32.mrb[0].mxu0
      %4800 = vdwg.mxu0
      %v4801 = vmul.f32 %v4788, %v4734
      %v4802 = vmul.f32 %v4791, %v4735
      %v4803 = vmul.f32 %v4796, %v4736
      %4804 = vrot.lane.b32.xlu0 %v4477, 112
      %v4805 = vpop.permute.xlu0 %4804
      %4806 = vrot.lane.b32.xlu0 %v4476, 112
      %v4807 = vpop.permute.xlu0 %4806
      %4808 = vrot.lane.b32.xlu0 %v4477, 80
      %v4809 = vpop.permute.xlu0 %4808
      %4810 = vrot.lane.b32.xlu0 %v4476, 80
      %v4811 = vpop.permute.xlu0 %4810
      %v4813 = vsel %vm1604, %v4805, 0
      %v4816 = vsel %vm1604, %v4807, 0
      %v4819 = vsel %vm1604, %v4809, 0
      %v4822 = vsel %vm1604, %v4811, 0
      %4824 = vmatprep.subr.bf16.mxu0 0
      %4825 = vmatpush1.bf16.xpose.msra.mxu0 %v4819
      %4826 = vmatprep.subr.bf16.mxu0 0
      %4827 = vmatpush1.bf16.xpose.msra.mxu0 %v4822
      %4828 = vmatprep.subr.bf16.mxu0 0
      %4829 = vmatpush1.bf16.xpose.msra.mxu0 0
      %4830 = vmatprep.subr.bf16.mxu0 0
      %4831 = vmatpush1.bf16.xpose.msra.mxu0 0
      %4832 = vmatprep.subr.bf16.mxu0 0
      %4833 = vmatpush1.bf16.xpose.msra.mxu0 0
      %4834 = vmatprep.subr.bf16.mxu0 0
      %4835 = vmatpush1.bf16.xpose.msra.mxu0 0
      %4836 = vmatprep.subr.bf16.mxu0 0
      %4837 = vmatpush1.bf16.xpose.msra.mxu0 0
      %4838 = vmatprep.subr.bf16.mxu0 0
      %4839 = vmatpush1.bf16.xpose.msra.mxu0 0
      %4840 = vmatprep.subr.bf16.mxu0 0
      %4841 = vmatpush1.bf16.xpose.msra.mxu0 0
      %4842 = vmatprep.subr.bf16.mxu0 0
      %4843 = vmatpush1.bf16.xpose.msra.mxu0 0
      %4844 = vmatprep.subr.bf16.mxu0 0
      %4845 = vmatpush1.bf16.xpose.msra.mxu0 0
      %4846 = vmatprep.subr.bf16.mxu0 0
      %4847 = vmatpush1.bf16.xpose.msra.mxu0 0
      %4848 = vmatprep.subr.bf16.mxu0 0
      %4849 = vmatpush1.bf16.xpose.msra.mxu0 0
      %4850 = vmatprep.subr.bf16.mxu0 0
      %4851 = vmatpush1.bf16.xpose.msra.mxu0 0
      %4852 = vmatprep.subr.bf16.mxu0 0
      %4853 = vmatpush1.bf16.xpose.msra.mxu0 0
      %4854 = vmatprep.subr.bf16.mxu0 0
      %4855 = vmatpush1.bf16.xpose.msra.mxu0 0
      %4856 = vmatprep.mubr.bf16.mxu0 0
      %4857 = vmatmul.mubr.bf16.gmra.mrb[0].mxu0 %v4813
      %v4858 = vpop.f32.mrb[0].mxu0
      %v4859 = vadd.f32 0.0, %v4858
      %v4860 = vpop.f32.mrb[0].mxu0
      %v4861 = vpop.f32.mrb[0].mxu0
      %v4862 = vadd.f32 0.0, %v4861
      %v4863 = vpop.f32.mrb[0].mxu0
      %4864 = vmatprep.mubr.bf16.mxu0 0
      %4865 = vmatmul.mubr.bf16.gmra.mrb[0].mxu0 %v4816
      %v4866 = vpop.f32.mrb[0].mxu0
      %v4867 = vadd.f32 0.0, %v4866
      %v4868 = vpop.f32.mrb[0].mxu0
      %v4869 = vpop.f32.mrb[0].mxu0
      %v4870 = vpop.f32.mrb[0].mxu0
      %4871 = vdwg.mxu0
      %v4872 = vsel %vm1665, %v4859, -inf
      %4873 = vmax.xlane.f32.xlu0 %v4872
      %v4874 = vpop.xlane.xlu0 %4873
      %v4875 = vsel %vm1665, %v4862, -inf
      %4876 = vmax.xlane.f32.xlu0 %v4875
      %v4877 = vpop.xlane.xlu0 %4876
      %v4878 = vsel %vm1672, %v4867, -inf
      %4879 = vmax.xlane.f32.xlu0 %v4878
      %v4880 = vpop.xlane.xlu0 %4879
      %v4881 = vsub.f32 %v4859, %v4874
      %v4882 = vsub.f32 %v4862, %v4877
      %v4883 = vsub.f32 %v4867, %v4880
      %v4884 = vmul.f32 %v4881, 1.442695
      %v4885 = vpow.pop %v4884
      %v4886 = vmul.f32 %v4882, 1.442695
      %v4887 = vpow.pop %v4886
      %v4888 = vmul.f32 %v4883, 1.442695
      %v4889 = vpow.pop %v4888
      %v4890 = vsel %vm1665, %v4885, 0.0
      %4891 = vadd.xlane.f32.xlu0 %v4890
      %v4892 = vpop.xlane.xlu0 %4891
      %v4893 = vsel %vm1665, %v4887, 0.0
      %4894 = vadd.xlane.f32.xlu0 %v4893
      %v4895 = vpop.xlane.xlu0 %4894
      %v4896 = vsel %vm1672, %v4889, 0.0
      %4897 = vadd.xlane.f32.xlu0 %v4896
      %v4898 = vpop.xlane.xlu0 %4897
      %v4899 = vrcp.pop %v4892
      %v4900 = vrcp.pop %v4895
      %v4901 = vrcp.pop %v4898
      %v4902 = vpack.c.bf16 %v4887, %v4885
      %v4903 = vpack.c.bf16 %v4889, %v4889
      %4904 = vrot.lane.b32.xlu0 %v4477, 48
      %v4905 = vpop.permute.xlu0 %4904
      %4906 = vrot.lane.b32.xlu0 %v4476, 48
      %v4907 = vpop.permute.xlu0 %4906
      %v4910 = vsel %vm1665, %v4902, 0
      %v4913 = vsel %vm1665, %v4903, 0
      %v4916 = vand.u32 %v4907, %v1712
      %4918 = vmatprep.subr.bf16.mxu0 0
      %4919 = vmatpush1.bf16.msra.mxu0 %v4905
      %4920 = vmatprep.subr.bf16.mxu0 0
      %4921 = vmatpush1.bf16.msra.mxu0 %v4916
      %4922 = vmatprep.subr.bf16.mxu0 0
      %4923 = vmatpush1.bf16.msra.mxu0 0
      %4924 = vmatprep.subr.bf16.mxu0 0
      %4925 = vmatpush1.bf16.msra.mxu0 0
      %4926 = vmatprep.subr.bf16.mxu0 0
      %4927 = vmatpush1.bf16.msra.mxu0 0
      %4928 = vmatprep.subr.bf16.mxu0 0
      %4929 = vmatpush1.bf16.msra.mxu0 0
      %4930 = vmatprep.subr.bf16.mxu0 0
      %4931 = vmatpush1.bf16.msra.mxu0 0
      %4932 = vmatprep.subr.bf16.mxu0 0
      %4933 = vmatpush1.bf16.msra.mxu0 0
      %4934 = vmatprep.subr.bf16.mxu0 0
      %4935 = vmatpush1.bf16.msra.mxu0 0
      %4936 = vmatprep.subr.bf16.mxu0 0
      %4937 = vmatpush1.bf16.msra.mxu0 0
      %4938 = vmatprep.subr.bf16.mxu0 0
      %4939 = vmatpush1.bf16.msra.mxu0 0
      %4940 = vmatprep.subr.bf16.mxu0 0
      %4941 = vmatpush1.bf16.msra.mxu0 0
      %4942 = vmatprep.subr.bf16.mxu0 0
      %4943 = vmatpush1.bf16.msra.mxu0 0
      %4944 = vmatprep.subr.bf16.mxu0 0
      %4945 = vmatpush1.bf16.msra.mxu0 0
      %4946 = vmatprep.subr.bf16.mxu0 0
      %4947 = vmatpush1.bf16.msra.mxu0 0
      %4948 = vmatprep.subr.bf16.mxu0 0
      %4949 = vmatpush1.bf16.msra.mxu0 0
      %4950 = vmatprep.mubr.bf16.mxu0 0
      %4951 = vmatmul.mubr.bf16.gmra.mrb[0].mxu0 %v4910
      %v4952 = vpop.f32.mrb[0].mxu0
      %v4953 = vadd.f32 0.0, %v4952
      %v4954 = vpop.f32.mrb[0].mxu0
      %v4955 = vpop.f32.mrb[0].mxu0
      %v4956 = vadd.f32 0.0, %v4955
      %v4957 = vpop.f32.mrb[0].mxu0
      %4958 = vmatprep.mubr.bf16.mxu0 0
      %4959 = vmatmul.mubr.bf16.gmra.mrb[0].mxu0 %v4913
      %v4960 = vpop.f32.mrb[0].mxu0
      %v4961 = vadd.f32 0.0, %v4960
      %v4962 = vpop.f32.mrb[0].mxu0
      %v4963 = vpop.f32.mrb[0].mxu0
      %v4964 = vpop.f32.mrb[0].mxu0
      %4965 = vdwg.mxu0
      %v4966 = vmul.f32 %v4953, %v4899
      %v4967 = vmul.f32 %v4956, %v4900
      %v4968 = vmul.f32 %v4961, %v4901
      %4969 = vrot.lane.b32.xlu0 %v4477, 104
      %v4970 = vpop.permute.xlu0 %4969
      %4971 = vrot.lane.b32.xlu0 %v4476, 104
      %v4972 = vpop.permute.xlu0 %4971
      %4973 = vrot.lane.b32.xlu0 %v4477, 72
      %v4974 = vpop.permute.xlu0 %4973
      %4975 = vrot.lane.b32.xlu0 %v4476, 72
      %v4976 = vpop.permute.xlu0 %4975
      %v4978 = vsel %vm1604, %v4970, 0
      %v4981 = vsel %vm1604, %v4972, 0
      %v4984 = vsel %vm1604, %v4974, 0
      %v4987 = vsel %vm1604, %v4976, 0
      %4989 = vmatprep.subr.bf16.mxu0 0
      %4990 = vmatpush1.bf16.xpose.msra.mxu0 %v4984
      %4991 = vmatprep.subr.bf16.mxu0 0
      %4992 = vmatpush1.bf16.xpose.msra.mxu0 %v4987
      %4993 = vmatprep.subr.bf16.mxu0 0
      %4994 = vmatpush1.bf16.xpose.msra.mxu0 0
      %4995 = vmatprep.subr.bf16.mxu0 0
      %4996 = vmatpush1.bf16.xpose.msra.mxu0 0
      %4997 = vmatprep.subr.bf16.mxu0 0
      %4998 = vmatpush1.bf16.xpose.msra.mxu0 0
      %4999 = vmatprep.subr.bf16.mxu0 0
      %5000 = vmatpush1.bf16.xpose.msra.mxu0 0
      %5001 = vmatprep.subr.bf16.mxu0 0
      %5002 = vmatpush1.bf16.xpose.msra.mxu0 0
      %5003 = vmatprep.subr.bf16.mxu0 0
      %5004 = vmatpush1.bf16.xpose.msra.mxu0 0
      %5005 = vmatprep.subr.bf16.mxu0 0
      %5006 = vmatpush1.bf16.xpose.msra.mxu0 0
      %5007 = vmatprep.subr.bf16.mxu0 0
      %5008 = vmatpush1.bf16.xpose.msra.mxu0 0
      %5009 = vmatprep.subr.bf16.mxu0 0
      %5010 = vmatpush1.bf16.xpose.msra.mxu0 0
      %5011 = vmatprep.subr.bf16.mxu0 0
      %5012 = vmatpush1.bf16.xpose.msra.mxu0 0
      %5013 = vmatprep.subr.bf16.mxu0 0
      %5014 = vmatpush1.bf16.xpose.msra.mxu0 0
      %5015 = vmatprep.subr.bf16.mxu0 0
      %5016 = vmatpush1.bf16.xpose.msra.mxu0 0
      %5017 = vmatprep.subr.bf16.mxu0 0
      %5018 = vmatpush1.bf16.xpose.msra.mxu0 0
      %5019 = vmatprep.subr.bf16.mxu0 0
      %5020 = vmatpush1.bf16.xpose.msra.mxu0 0
      %5021 = vmatprep.mubr.bf16.mxu0 0
      %5022 = vmatmul.mubr.bf16.gmra.mrb[0].mxu0 %v4978
      %v5023 = vpop.f32.mrb[0].mxu0
      %v5024 = vadd.f32 0.0, %v5023
      %v5025 = vpop.f32.mrb[0].mxu0
      %v5026 = vpop.f32.mrb[0].mxu0
      %v5027 = vadd.f32 0.0, %v5026
      %v5028 = vpop.f32.mrb[0].mxu0
      %5029 = vmatprep.mubr.bf16.mxu0 0
      %5030 = vmatmul.mubr.bf16.gmra.mrb[0].mxu0 %v4981
      %v5031 = vpop.f32.mrb[0].mxu0
      %v5032 = vadd.f32 0.0, %v5031
      %v5033 = vpop.f32.mrb[0].mxu0
      %v5034 = vpop.f32.mrb[0].mxu0
      %v5035 = vpop.f32.mrb[0].mxu0
      %5036 = vdwg.mxu0
      %v5037 = vsel %vm1665, %v5024, -inf
      %5038 = vmax.xlane.f32.xlu0 %v5037
      %v5039 = vpop.xlane.xlu0 %5038
      %v5040 = vsel %vm1665, %v5027, -inf
      %5041 = vmax.xlane.f32.xlu0 %v5040
      %v5042 = vpop.xlane.xlu0 %5041
      %v5043 = vsel %vm1672, %v5032, -inf
      %5044 = vmax.xlane.f32.xlu0 %v5043
      %v5045 = vpop.xlane.xlu0 %5044
      %v5046 = vsub.f32 %v5024, %v5039
      %v5047 = vsub.f32 %v5027, %v5042
      %v5048 = vsub.f32 %v5032, %v5045
      %v5049 = vmul.f32 %v5046, 1.442695
      %v5050 = vpow.pop %v5049
      %v5051 = vmul.f32 %v5047, 1.442695
      %v5052 = vpow.pop %v5051
      %v5053 = vmul.f32 %v5048, 1.442695
      %v5054 = vpow.pop %v5053
      %v5055 = vsel %vm1665, %v5050, 0.0
      %5056 = vadd.xlane.f32.xlu0 %v5055
      %v5057 = vpop.xlane.xlu0 %5056
      %v5058 = vsel %vm1665, %v5052, 0.0
      %5059 = vadd.xlane.f32.xlu0 %v5058
      %v5060 = vpop.xlane.xlu0 %5059
      %v5061 = vsel %vm1672, %v5054, 0.0
      %5062 = vadd.xlane.f32.xlu0 %v5061
      %v5063 = vpop.xlane.xlu0 %5062
      %v5064 = vrcp.pop %v5057
      %v5065 = vrcp.pop %v5060
      %v5066 = vrcp.pop %v5063
      %v5067 = vpack.c.bf16 %v5052, %v5050
      %v5068 = vpack.c.bf16 %v5054, %v5054
      %5069 = vrot.lane.b32.xlu0 %v4477, 40
      %v5070 = vpop.permute.xlu0 %5069
      %5071 = vrot.lane.b32.xlu0 %v4476, 40
      %v5072 = vpop.permute.xlu0 %5071
      %v5075 = vsel %vm1665, %v5067, 0
      %v5078 = vsel %vm1665, %v5068, 0
      %v5081 = vand.u32 %v5072, %v1712
      %5083 = vmatprep.subr.bf16.mxu0 0
      %5084 = vmatpush1.bf16.msra.mxu0 %v5070
      %5085 = vmatprep.subr.bf16.mxu0 0
      %5086 = vmatpush1.bf16.msra.mxu0 %v5081
      %5087 = vmatprep.subr.bf16.mxu0 0
      %5088 = vmatpush1.bf16.msra.mxu0 0
      %5089 = vmatprep.subr.bf16.mxu0 0
      %5090 = vmatpush1.bf16.msra.mxu0 0
      %5091 = vmatprep.subr.bf16.mxu0 0
      %5092 = vmatpush1.bf16.msra.mxu0 0
      %5093 = vmatprep.subr.bf16.mxu0 0
      %5094 = vmatpush1.bf16.msra.mxu0 0
      %5095 = vmatprep.subr.bf16.mxu0 0
      %5096 = vmatpush1.bf16.msra.mxu0 0
      %5097 = vmatprep.subr.bf16.mxu0 0
      %5098 = vmatpush1.bf16.msra.mxu0 0
      %5099 = vmatprep.subr.bf16.mxu0 0
      %5100 = vmatpush1.bf16.msra.mxu0 0
      %5101 = vmatprep.subr.bf16.mxu0 0
      %5102 = vmatpush1.bf16.msra.mxu0 0
      %5103 = vmatprep.subr.bf16.mxu0 0
      %5104 = vmatpush1.bf16.msra.mxu0 0
      %5105 = vmatprep.subr.bf16.mxu0 0
      %5106 = vmatpush1.bf16.msra.mxu0 0
      %5107 = vmatprep.subr.bf16.mxu0 0
      %5108 = vmatpush1.bf16.msra.mxu0 0
      %5109 = vmatprep.subr.bf16.mxu0 0
      %5110 = vmatpush1.bf16.msra.mxu0 0
      %5111 = vmatprep.subr.bf16.mxu0 0
      %5112 = vmatpush1.bf16.msra.mxu0 0
      %5113 = vmatprep.subr.bf16.mxu0 0
      %5114 = vmatpush1.bf16.msra.mxu0 0
      %5115 = vmatprep.mubr.bf16.mxu0 0
      %5116 = vmatmul.mubr.bf16.gmra.mrb[0].mxu0 %v5075
      %v5117 = vpop.f32.mrb[0].mxu0
      %v5118 = vadd.f32 0.0, %v5117
      %v5119 = vpop.f32.mrb[0].mxu0
      %v5120 = vpop.f32.mrb[0].mxu0
      %v5121 = vadd.f32 0.0, %v5120
      %v5122 = vpop.f32.mrb[0].mxu0
      %5123 = vmatprep.mubr.bf16.mxu0 0
      %5124 = vmatmul.mubr.bf16.gmra.mrb[0].mxu0 %v5078
      %v5125 = vpop.f32.mrb[0].mxu0
      %v5126 = vadd.f32 0.0, %v5125
      %v5127 = vpop.f32.mrb[0].mxu0
      %v5128 = vpop.f32.mrb[0].mxu0
      %v5129 = vpop.f32.mrb[0].mxu0
      %5130 = vdwg.mxu0
      %v5131 = vmul.f32 %v5118, %v5064
      %v5132 = vmul.f32 %v5121, %v5065
      %v5133 = vmul.f32 %v5126, %v5066
      %5137 = vrot.lane.b32.xlu0 %v4801, 8
      %v5138 = vpop.permute.xlu0 %5137
      %5139 = vrot.lane.b32.xlu0 %v4802, 8
      %v5140 = vpop.permute.xlu0 %5139
      %5141 = vrot.lane.b32.xlu0 %v4803, 8
      %v5142 = vpop.permute.xlu0 %5141
      %5149 = vrot.lane.b32.xlu0 %v4966, 16
      %v5150 = vpop.permute.xlu0 %5149
      %5151 = vrot.lane.b32.xlu0 %v4967, 16
      %v5152 = vpop.permute.xlu0 %5151
      %5153 = vrot.lane.b32.xlu0 %v4968, 16
      %v5154 = vpop.permute.xlu0 %5153
      %5161 = vrot.lane.b32.xlu0 %v5131, 24
      %v5162 = vpop.permute.xlu0 %5161
      %5163 = vrot.lane.b32.xlu0 %v5132, 24
      %v5164 = vpop.permute.xlu0 %5163
      %5165 = vrot.lane.b32.xlu0 %v5133, 24
      %v5166 = vpop.permute.xlu0 %5165
      %v5170 = vsel %vm1604, %v4636, %v5138
      %v5171 = vsel %vm1604, %v4637, %v5140
      %v5172 = vsel %vm1604, %v4638, %v5142
      %v5173 = vsel %vm2301, %v5170, %v5150
      %v5174 = vsel %vm2301, %v5171, %v5152
      %v5175 = vsel %vm2301, %v5172, %v5154
      %v5176 = vsel %vm2305, %v5173, %v5162
      %v5177 = vsel %vm2305, %v5174, %v5164
      %v5178 = vsel %vm2305, %v5175, %v5166
      %5179 = vst.msk [vmem:[#allocation2 + $0x44] sm:$0xff] %vm1175, %v5176
      %5180 = vst.msk [vmem:[#allocation2 + $0x4c] sm:$0xff] %vm1175, %v5177
      %5181 = vst.msk [vmem:[#allocation2 + $0x54] sm:$0x1] %vm2311, %v5178
      %v5182 = vpack.c.bf16 %v1570, %v1567
      %v5183 = vpack.c.bf16 %v1575, %v1575
      %vm5184 = vsmask.f32 5376
      %v5186 = vshrl.u32 %v5182, 16
      %v5188 = vrot.slane %v5186, 2
      %v5189 = vshll.u32 %v5182, 16
      %v5191 = vrot.slane %v5189, 3
      %v5192 = vor.u32 %v5188, %v5191
      %v5194 = vshrl.u32 %v5183, 16
      %v5196 = vrot.slane %v5194, 2
      %v5197 = vshll.u32 %v5183, 16
      %v5199 = vrot.slane %v5197, 3
      %v5200 = vor.u32 %v5196, %v5199
      %v5201 = vsel %vm5184, %v5192, %v5200
      %5202 = vrot.lane.b32.xlu0 %v5201, 96
      %v5203 = vpop.permute.xlu0 %5202
      %5204 = vrot.lane.b32.xlu0 %v5196, 96
      %v5205 = vpop.permute.xlu0 %5204
      %v5207 = vsel %vm1604, %v5201, 0
      %v5210 = vsel %vm1604, %v5196, 0
      %v5213 = vsel %vm1604, %v5203, 0
      %v5216 = vsel %vm1604, %v5205, 0
      %5218 = vmatprep.subr.bf16.mxu0 0
      %5219 = vmatpush1.bf16.xpose.msra.mxu0 %v5213
      %5220 = vmatprep.subr.bf16.mxu0 0
      %5221 = vmatpush1.bf16.xpose.msra.mxu0 %v5216
      %5222 = vmatprep.subr.bf16.mxu0 0
      %5223 = vmatpush1.bf16.xpose.msra.mxu0 0
      %5224 = vmatprep.subr.bf16.mxu0 0
      %5225 = vmatpush1.bf16.xpose.msra.mxu0 0
      %5226 = vmatprep.subr.bf16.mxu0 0
      %5227 = vmatpush1.bf16.xpose.msra.mxu0 0
      %5228 = vmatprep.subr.bf16.mxu0 0
      %5229 = vmatpush1.bf16.xpose.msra.mxu0 0
      %5230 = vmatprep.subr.bf16.mxu0 0
      %5231 = vmatpush1.bf16.xpose.msra.mxu0 0
      %5232 = vmatprep.subr.bf16.mxu0 0
      %5233 = vmatpush1.bf16.xpose.msra.mxu0 0
      %5234 = vmatprep.subr.bf16.mxu0 0
      %5235 = vmatpush1.bf16.xpose.msra.mxu0 0
      %5236 = vmatprep.subr.bf16.mxu0 0
      %5237 = vmatpush1.bf16.xpose.msra.mxu0 0
      %5238 = vmatprep.subr.bf16.mxu0 0
      %5239 = vmatpush1.bf16.xpose.msra.mxu0 0
      %5240 = vmatprep.subr.bf16.mxu0 0
      %5241 = vmatpush1.bf16.xpose.msra.mxu0 0
      %5242 = vmatprep.subr.bf16.mxu0 0
      %5243 = vmatpush1.bf16.xpose.msra.mxu0 0
      %5244 = vmatprep.subr.bf16.mxu0 0
      %5245 = vmatpush1.bf16.xpose.msra.mxu0 0
      %5246 = vmatprep.subr.bf16.mxu0 0
      %5247 = vmatpush1.bf16.xpose.msra.mxu0 0
      %5248 = vmatprep.subr.bf16.mxu0 0
      %5249 = vmatpush1.bf16.xpose.msra.mxu0 0
      %5250 = vmatprep.mubr.bf16.mxu0 0
      %5251 = vmatmul.mubr.bf16.gmra.mrb[0].mxu0 %v5207
      %v5252 = vpop.f32.mrb[0].mxu0
      %v5253 = vadd.f32 0.0, %v5252
      %v5254 = vpop.f32.mrb[0].mxu0
      %v5255 = vpop.f32.mrb[0].mxu0
      %v5256 = vadd.f32 0.0, %v5255
      %v5257 = vpop.f32.mrb[0].mxu0
      %5258 = vmatprep.mubr.bf16.mxu0 0
      %5259 = vmatmul.mubr.bf16.gmra.mrb[0].mxu0 %v5210
      %v5260 = vpop.f32.mrb[0].mxu0
      %v5261 = vadd.f32 0.0, %v5260
      %v5262 = vpop.f32.mrb[0].mxu0
      %v5263 = vpop.f32.mrb[0].mxu0
      %v5264 = vpop.f32.mrb[0].mxu0
      %5265 = vdwg.mxu0
      %v5266 = vsel %vm1665, %v5253, -inf
      %5267 = vmax.xlane.f32.xlu0 %v5266
      %v5268 = vpop.xlane.xlu0 %5267
      %v5269 = vsel %vm1665, %v5256, -inf
      %5270 = vmax.xlane.f32.xlu0 %v5269
      %v5271 = vpop.xlane.xlu0 %5270
      %v5272 = vsel %vm1672, %v5261, -inf
      %5273 = vmax.xlane.f32.xlu0 %v5272
      %v5274 = vpop.xlane.xlu0 %5273
      %v5275 = vsub.f32 %v5253, %v5268
      %v5276 = vsub.f32 %v5256, %v5271
      %v5277 = vsub.f32 %v5261, %v5274
      %v5278 = vmul.f32 %v5275, 1.442695
      %v5279 = vpow.pop %v5278
      %v5280 = vmul.f32 %v5276, 1.442695
      %v5281 = vpow.pop %v5280
      %v5282 = vmul.f32 %v5277, 1.442695
      %v5283 = vpow.pop %v5282
      %v5284 = vsel %vm1665, %v5279, 0.0
      %5285 = vadd.xlane.f32.xlu0 %v5284
      %v5286 = vpop.xlane.xlu0 %5285
      %v5287 = vsel %vm1665, %v5281, 0.0
      %5288 = vadd.xlane.f32.xlu0 %v5287
      %v5289 = vpop.xlane.xlu0 %5288
      %v5290 = vsel %vm1672, %v5283, 0.0
      %5291 = vadd.xlane.f32.xlu0 %v5290
      %v5292 = vpop.xlane.xlu0 %5291
      %v5293 = vrcp.pop %v5286
      %v5294 = vrcp.pop %v5289
      %v5295 = vrcp.pop %v5292
      %v5296 = vpack.c.bf16 %v5281, %v5279
      %v5297 = vpack.c.bf16 %v5283, %v5283
      %5298 = vrot.lane.b32.xlu0 %v5201, 64
      %v5299 = vpop.permute.xlu0 %5298
      %5300 = vrot.lane.b32.xlu0 %v5196, 64
      %v5301 = vpop.permute.xlu0 %5300
      %v5304 = vsel %vm1665, %v5296, 0
      %v5307 = vsel %vm1665, %v5297, 0
      %v5310 = vand.u32 %v5301, %v1712
      %5312 = vmatprep.subr.bf16.mxu0 0
      %5313 = vmatpush1.bf16.msra.mxu0 %v5299
      %5314 = vmatprep.subr.bf16.mxu0 0
      %5315 = vmatpush1.bf16.msra.mxu0 %v5310
      %5316 = vmatprep.subr.bf16.mxu0 0
      %5317 = vmatpush1.bf16.msra.mxu0 0
      %5318 = vmatprep.subr.bf16.mxu0 0
      %5319 = vmatpush1.bf16.msra.mxu0 0
      %5320 = vmatprep.subr.bf16.mxu0 0
      %5321 = vmatpush1.bf16.msra.mxu0 0
      %5322 = vmatprep.subr.bf16.mxu0 0
      %5323 = vmatpush1.bf16.msra.mxu0 0
      %5324 = vmatprep.subr.bf16.mxu0 0
      %5325 = vmatpush1.bf16.msra.mxu0 0
      %5326 = vmatprep.subr.bf16.mxu0 0
      %5327 = vmatpush1.bf16.msra.mxu0 0
      %5328 = vmatprep.subr.bf16.mxu0 0
      %5329 = vmatpush1.bf16.msra.mxu0 0
      %5330 = vmatprep.subr.bf16.mxu0 0
      %5331 = vmatpush1.bf16.msra.mxu0 0
      %5332 = vmatprep.subr.bf16.mxu0 0
      %5333 = vmatpush1.bf16.msra.mxu0 0
      %5334 = vmatprep.subr.bf16.mxu0 0
      %5335 = vmatpush1.bf16.msra.mxu0 0
      %5336 = vmatprep.subr.bf16.mxu0 0
      %5337 = vmatpush1.bf16.msra.mxu0 0
      %5338 = vmatprep.subr.bf16.mxu0 0
      %5339 = vmatpush1.bf16.msra.mxu0 0
      %5340 = vmatprep.subr.bf16.mxu0 0
      %5341 = vmatpush1.bf16.msra.mxu0 0
      %5342 = vmatprep.subr.bf16.mxu0 0
      %5343 = vmatpush1.bf16.msra.mxu0 0
      %5344 = vmatprep.mubr.bf16.mxu0 0
      %5345 = vmatmul.mubr.bf16.gmra.mrb[0].mxu0 %v5304
      %v5346 = vpop.f32.mrb[0].mxu0
      %v5347 = vadd.f32 0.0, %v5346
      %v5348 = vpop.f32.mrb[0].mxu0
      %v5349 = vpop.f32.mrb[0].mxu0
      %v5350 = vadd.f32 0.0, %v5349
      %v5351 = vpop.f32.mrb[0].mxu0
      %5352 = vmatprep.mubr.bf16.mxu0 0
      %5353 = vmatmul.mubr.bf16.gmra.mrb[0].mxu0 %v5307
      %v5354 = vpop.f32.mrb[0].mxu0
      %v5355 = vadd.f32 0.0, %v5354
      %v5356 = vpop.f32.mrb[0].mxu0
      %v5357 = vpop.f32.mrb[0].mxu0
      %v5358 = vpop.f32.mrb[0].mxu0
      %5359 = vdwg.mxu0
      %v5360 = vmul.f32 %v5347, %v5293
      %v5361 = vmul.f32 %v5350, %v5294
      %v5362 = vmul.f32 %v5355, %v5295
      %5363 = vrot.lane.b32.xlu0 %v5201, 120
      %v5364 = vpop.permute.xlu0 %5363
      %5365 = vrot.lane.b32.xlu0 %v5196, 120
      %v5366 = vpop.permute.xlu0 %5365
      %5367 = vrot.lane.b32.xlu0 %v5201, 88
      %v5368 = vpop.permute.xlu0 %5367
      %5369 = vrot.lane.b32.xlu0 %v5196, 88
      %v5370 = vpop.permute.xlu0 %5369
      %v5372 = vsel %vm1604, %v5364, 0
      %v5375 = vsel %vm1604, %v5366, 0
      %v5378 = vsel %vm1604, %v5368, 0
      %v5381 = vsel %vm1604, %v5370, 0
      %5383 = vmatprep.subr.bf16.mxu0 0
      %5384 = vmatpush1.bf16.xpose.msra.mxu0 %v5378
      %5385 = vmatprep.subr.bf16.mxu0 0
      %5386 = vmatpush1.bf16.xpose.msra.mxu0 %v5381
      %5387 = vmatprep.subr.bf16.mxu0 0
      %5388 = vmatpush1.bf16.xpose.msra.mxu0 0
      %5389 = vmatprep.subr.bf16.mxu0 0
      %5390 = vmatpush1.bf16.xpose.msra.mxu0 0
      %5391 = vmatprep.subr.bf16.mxu0 0
      %5392 = vmatpush1.bf16.xpose.msra.mxu0 0
      %5393 = vmatprep.subr.bf16.mxu0 0
      %5394 = vmatpush1.bf16.xpose.msra.mxu0 0
      %5395 = vmatprep.subr.bf16.mxu0 0
      %5396 = vmatpush1.bf16.xpose.msra.mxu0 0
      %5397 = vmatprep.subr.bf16.mxu0 0
      %5398 = vmatpush1.bf16.xpose.msra.mxu0 0
      %5399 = vmatprep.subr.bf16.mxu0 0
      %5400 = vmatpush1.bf16.xpose.msra.mxu0 0
      %5401 = vmatprep.subr.bf16.mxu0 0
      %5402 = vmatpush1.bf16.xpose.msra.mxu0 0
      %5403 = vmatprep.subr.bf16.mxu0 0
      %5404 = vmatpush1.bf16.xpose.msra.mxu0 0
      %5405 = vmatprep.subr.bf16.mxu0 0
      %5406 = vmatpush1.bf16.xpose.msra.mxu0 0
      %5407 = vmatprep.subr.bf16.mxu0 0
      %5408 = vmatpush1.bf16.xpose.msra.mxu0 0
      %5409 = vmatprep.subr.bf16.mxu0 0
      %5410 = vmatpush1.bf16.xpose.msra.mxu0 0
      %5411 = vmatprep.subr.bf16.mxu0 0
      %5412 = vmatpush1.bf16.xpose.msra.mxu0 0
      %5413 = vmatprep.subr.bf16.mxu0 0
      %5414 = vmatpush1.bf16.xpose.msra.mxu0 0
      %5415 = vmatprep.mubr.bf16.mxu0 0
      %5416 = vmatmul.mubr.bf16.gmra.mrb[0].mxu0 %v5372
      %v5417 = vpop.f32.mrb[0].mxu0
      %v5418 = vadd.f32 0.0, %v5417
      %v5419 = vpop.f32.mrb[0].mxu0
      %v5420 = vpop.f32.mrb[0].mxu0
      %v5421 = vadd.f32 0.0, %v5420
      %v5422 = vpop.f32.mrb[0].mxu0
      %5423 = vmatprep.mubr.bf16.mxu0 0
      %5424 = vmatmul.mubr.bf16.gmra.mrb[0].mxu0 %v5375
      %v5425 = vpop.f32.mrb[0].mxu0
      %v5426 = vadd.f32 0.0, %v5425
      %v5427 = vpop.f32.mrb[0].mxu0
      %v5428 = vpop.f32.mrb[0].mxu0
      %v5429 = vpop.f32.mrb[0].mxu0
      %5430 = vdwg.mxu0
      %v5431 = vsel %vm1665, %v5418, -inf
      %5432 = vmax.xlane.f32.xlu0 %v5431
      %v5433 = vpop.xlane.xlu0 %5432
      %v5434 = vsel %vm1665, %v5421, -inf
      %5435 = vmax.xlane.f32.xlu0 %v5434
      %v5436 = vpop.xlane.xlu0 %5435
      %v5437 = vsel %vm1672, %v5426, -inf
      %5438 = vmax.xlane.f32.xlu0 %v5437
      %v5439 = vpop.xlane.xlu0 %5438
      %v5440 = vsub.f32 %v5418, %v5433
      %v5441 = vsub.f32 %v5421, %v5436
      %v5442 = vsub.f32 %v5426, %v5439
      %v5443 = vmul.f32 %v5440, 1.442695
      %v5444 = vpow.pop %v5443
      %v5445 = vmul.f32 %v5441, 1.442695
      %v5446 = vpow.pop %v5445
      %v5447 = vmul.f32 %v5442, 1.442695
      %v5448 = vpow.pop %v5447
      %v5449 = vsel %vm1665, %v5444, 0.0
      %5450 = vadd.xlane.f32.xlu0 %v5449
      %v5451 = vpop.xlane.xlu0 %5450
      %v5452 = vsel %vm1665, %v5446, 0.0
      %5453 = vadd.xlane.f32.xlu0 %v5452
      %v5454 = vpop.xlane.xlu0 %5453
      %v5455 = vsel %vm1672, %v5448, 0.0
      %5456 = vadd.xlane.f32.xlu0 %v5455
      %v5457 = vpop.xlane.xlu0 %5456
      %v5458 = vrcp.pop %v5451
      %v5459 = vrcp.pop %v5454
      %v5460 = vrcp.pop %v5457
      %v5461 = vpack.c.bf16 %v5446, %v5444
      %v5462 = vpack.c.bf16 %v5448, %v5448
      %5463 = vrot.lane.b32.xlu0 %v5201, 56
      %v5464 = vpop.permute.xlu0 %5463
      %5465 = vrot.lane.b32.xlu0 %v5196, 56
      %v5466 = vpop.permute.xlu0 %5465
      %v5469 = vsel %vm1665, %v5461, 0
      %v5472 = vsel %vm1665, %v5462, 0
      %v5475 = vand.u32 %v5466, %v1712
      %5477 = vmatprep.subr.bf16.mxu0 0
      %5478 = vmatpush1.bf16.msra.mxu0 %v5464
      %5479 = vmatprep.subr.bf16.mxu0 0
      %5480 = vmatpush1.bf16.msra.mxu0 %v5475
      %5481 = vmatprep.subr.bf16.mxu0 0
      %5482 = vmatpush1.bf16.msra.mxu0 0
      %5483 = vmatprep.subr.bf16.mxu0 0
      %5484 = vmatpush1.bf16.msra.mxu0 0
      %5485 = vmatprep.subr.bf16.mxu0 0
      %5486 = vmatpush1.bf16.msra.mxu0 0
      %5487 = vmatprep.subr.bf16.mxu0 0
      %5488 = vmatpush1.bf16.msra.mxu0 0
      %5489 = vmatprep.subr.bf16.mxu0 0
      %5490 = vmatpush1.bf16.msra.mxu0 0
      %5491 = vmatprep.subr.bf16.mxu0 0
      %5492 = vmatpush1.bf16.msra.mxu0 0
      %5493 = vmatprep.subr.bf16.mxu0 0
      %5494 = vmatpush1.bf16.msra.mxu0 0
      %5495 = vmatprep.subr.bf16.mxu0 0
      %5496 = vmatpush1.bf16.msra.mxu0 0
      %5497 = vmatprep.subr.bf16.mxu0 0
      %5498 = vmatpush1.bf16.msra.mxu0 0
      %5499 = vmatprep.subr.bf16.mxu0 0
      %5500 = vmatpush1.bf16.msra.mxu0 0
      %5501 = vmatprep.subr.bf16.mxu0 0
      %5502 = vmatpush1.bf16.msra.mxu0 0
      %5503 = vmatprep.subr.bf16.mxu0 0
      %5504 = vmatpush1.bf16.msra.mxu0 0
      %5505 = vmatprep.subr.bf16.mxu0 0
      %5506 = vmatpush1.bf16.msra.mxu0 0
      %5507 = vmatprep.subr.bf16.mxu0 0
      %5508 = vmatpush1.bf16.msra.mxu0 0
      %5509 = vmatprep.mubr.bf16.mxu0 0
      %5510 = vmatmul.mubr.bf16.gmra.mrb[0].mxu0 %v5469
      %v5511 = vpop.f32.mrb[0].mxu0
      %v5512 = vadd.f32 0.0, %v5511
      %v5513 = vpop.f32.mrb[0].mxu0
      %v5514 = vpop.f32.mrb[0].mxu0
      %v5515 = vadd.f32 0.0, %v5514
      %v5516 = vpop.f32.mrb[0].mxu0
      %5517 = vmatprep.mubr.bf16.mxu0 0
      %5518 = vmatmul.mubr.bf16.gmra.mrb[0].mxu0 %v5472
      %v5519 = vpop.f32.mrb[0].mxu0
      %v5520 = vadd.f32 0.0, %v5519
      %v5521 = vpop.f32.mrb[0].mxu0
      %v5522 = vpop.f32.mrb[0].mxu0
      %v5523 = vpop.f32.mrb[0].mxu0
      %5524 = vdwg.mxu0
      %v5525 = vmul.f32 %v5512, %v5458
      %v5526 = vmul.f32 %v5515, %v5459
      %v5527 = vmul.f32 %v5520, %v5460
      %5528 = vrot.lane.b32.xlu0 %v5201, 112
      %v5529 = vpop.permute.xlu0 %5528
      %5530 = vrot.lane.b32.xlu0 %v5196, 112
      %v5531 = vpop.permute.xlu0 %5530
      %5532 = vrot.lane.b32.xlu0 %v5201, 80
      %v5533 = vpop.permute.xlu0 %5532
      %5534 = vrot.lane.b32.xlu0 %v5196, 80
      %v5535 = vpop.permute.xlu0 %5534
      %v5537 = vsel %vm1604, %v5529, 0
      %v5540 = vsel %vm1604, %v5531, 0
      %v5543 = vsel %vm1604, %v5533, 0
      %v5546 = vsel %vm1604, %v5535, 0
      %5548 = vmatprep.subr.bf16.mxu0 0
      %5549 = vmatpush1.bf16.xpose.msra.mxu0 %v5543
      %5550 = vmatprep.subr.bf16.mxu0 0
      %5551 = vmatpush1.bf16.xpose.msra.mxu0 %v5546
      %5552 = vmatprep.subr.bf16.mxu0 0
      %5553 = vmatpush1.bf16.xpose.msra.mxu0 0
      %5554 = vmatprep.subr.bf16.mxu0 0
      %5555 = vmatpush1.bf16.xpose.msra.mxu0 0
      %5556 = vmatprep.subr.bf16.mxu0 0
      %5557 = vmatpush1.bf16.xpose.msra.mxu0 0
      %5558 = vmatprep.subr.bf16.mxu0 0
      %5559 = vmatpush1.bf16.xpose.msra.mxu0 0
      %5560 = vmatprep.subr.bf16.mxu0 0
      %5561 = vmatpush1.bf16.xpose.msra.mxu0 0
      %5562 = vmatprep.subr.bf16.mxu0 0
      %5563 = vmatpush1.bf16.xpose.msra.mxu0 0
      %5564 = vmatprep.subr.bf16.mxu0 0
      %5565 = vmatpush1.bf16.xpose.msra.mxu0 0
      %5566 = vmatprep.subr.bf16.mxu0 0
      %5567 = vmatpush1.bf16.xpose.msra.mxu0 0
      %5568 = vmatprep.subr.bf16.mxu0 0
      %5569 = vmatpush1.bf16.xpose.msra.mxu0 0
      %5570 = vmatprep.subr.bf16.mxu0 0
      %5571 = vmatpush1.bf16.xpose.msra.mxu0 0
      %5572 = vmatprep.subr.bf16.mxu0 0
      %5573 = vmatpush1.bf16.xpose.msra.mxu0 0
      %5574 = vmatprep.subr.bf16.mxu0 0
      %5575 = vmatpush1.bf16.xpose.msra.mxu0 0
      %5576 = vmatprep.subr.bf16.mxu0 0
      %5577 = vmatpush1.bf16.xpose.msra.mxu0 0
      %5578 = vmatprep.subr.bf16.mxu0 0
      %5579 = vmatpush1.bf16.xpose.msra.mxu0 0
      %5580 = vmatprep.mubr.bf16.mxu0 0
      %5581 = vmatmul.mubr.bf16.gmra.mrb[0].mxu0 %v5537
      %v5582 = vpop.f32.mrb[0].mxu0
      %v5583 = vadd.f32 0.0, %v5582
      %v5584 = vpop.f32.mrb[0].mxu0
      %v5585 = vpop.f32.mrb[0].mxu0
      %v5586 = vadd.f32 0.0, %v5585
      %v5587 = vpop.f32.mrb[0].mxu0
      %5588 = vmatprep.mubr.bf16.mxu0 0
      %5589 = vmatmul.mubr.bf16.gmra.mrb[0].mxu0 %v5540
      %v5590 = vpop.f32.mrb[0].mxu0
      %v5591 = vadd.f32 0.0, %v5590
      %v5592 = vpop.f32.mrb[0].mxu0
      %v5593 = vpop.f32.mrb[0].mxu0
      %v5594 = vpop.f32.mrb[0].mxu0
      %5595 = vdwg.mxu0
      %v5596 = vsel %vm1665, %v5583, -inf
      %5597 = vmax.xlane.f32.xlu0 %v5596
      %v5598 = vpop.xlane.xlu0 %5597
      %v5599 = vsel %vm1665, %v5586, -inf
      %5600 = vmax.xlane.f32.xlu0 %v5599
      %v5601 = vpop.xlane.xlu0 %5600
      %v5602 = vsel %vm1672, %v5591, -inf
      %5603 = vmax.xlane.f32.xlu0 %v5602
      %v5604 = vpop.xlane.xlu0 %5603
      %v5605 = vsub.f32 %v5583, %v5598
      %v5606 = vsub.f32 %v5586, %v5601
      %v5607 = vsub.f32 %v5591, %v5604
      %v5608 = vmul.f32 %v5605, 1.442695
      %v5609 = vpow.pop %v5608
      %v5610 = vmul.f32 %v5606, 1.442695
      %v5611 = vpow.pop %v5610
      %v5612 = vmul.f32 %v5607, 1.442695
      %v5613 = vpow.pop %v5612
      %v5614 = vsel %vm1665, %v5609, 0.0
      %5615 = vadd.xlane.f32.xlu0 %v5614
      %v5616 = vpop.xlane.xlu0 %5615
      %v5617 = vsel %vm1665, %v5611, 0.0
      %5618 = vadd.xlane.f32.xlu0 %v5617
      %v5619 = vpop.xlane.xlu0 %5618
      %v5620 = vsel %vm1672, %v5613, 0.0
      %5621 = vadd.xlane.f32.xlu0 %v5620
      %v5622 = vpop.xlane.xlu0 %5621
      %v5623 = vrcp.pop %v5616
      %v5624 = vrcp.pop %v5619
      %v5625 = vrcp.pop %v5622
      %v5626 = vpack.c.bf16 %v5611, %v5609
      %v5627 = vpack.c.bf16 %v5613, %v5613
      %5628 = vrot.lane.b32.xlu0 %v5201, 48
      %v5629 = vpop.permute.xlu0 %5628
      %5630 = vrot.lane.b32.xlu0 %v5196, 48
      %v5631 = vpop.permute.xlu0 %5630
      %v5634 = vsel %vm1665, %v5626, 0
      %v5637 = vsel %vm1665, %v5627, 0
      %v5640 = vand.u32 %v5631, %v1712
      %5642 = vmatprep.subr.bf16.mxu0 0
      %5643 = vmatpush1.bf16.msra.mxu0 %v5629
      %5644 = vmatprep.subr.bf16.mxu0 0
      %5645 = vmatpush1.bf16.msra.mxu0 %v5640
      %5646 = vmatprep.subr.bf16.mxu0 0
      %5647 = vmatpush1.bf16.msra.mxu0 0
      %5648 = vmatprep.subr.bf16.mxu0 0
      %5649 = vmatpush1.bf16.msra.mxu0 0
      %5650 = vmatprep.subr.bf16.mxu0 0
      %5651 = vmatpush1.bf16.msra.mxu0 0
      %5652 = vmatprep.subr.bf16.mxu0 0
      %5653 = vmatpush1.bf16.msra.mxu0 0
      %5654 = vmatprep.subr.bf16.mxu0 0
      %5655 = vmatpush1.bf16.msra.mxu0 0
      %5656 = vmatprep.subr.bf16.mxu0 0
      %5657 = vmatpush1.bf16.msra.mxu0 0
      %5658 = vmatprep.subr.bf16.mxu0 0
      %5659 = vmatpush1.bf16.msra.mxu0 0
      %5660 = vmatprep.subr.bf16.mxu0 0
      %5661 = vmatpush1.bf16.msra.mxu0 0
      %5662 = vmatprep.subr.bf16.mxu0 0
      %5663 = vmatpush1.bf16.msra.mxu0 0
      %5664 = vmatprep.subr.bf16.mxu0 0
      %5665 = vmatpush1.bf16.msra.mxu0 0
      %5666 = vmatprep.subr.bf16.mxu0 0
      %5667 = vmatpush1.bf16.msra.mxu0 0
      %5668 = vmatprep.subr.bf16.mxu0 0
      %5669 = vmatpush1.bf16.msra.mxu0 0
      %5670 = vmatprep.subr.bf16.mxu0 0
      %5671 = vmatpush1.bf16.msra.mxu0 0
      %5672 = vmatprep.subr.bf16.mxu0 0
      %5673 = vmatpush1.bf16.msra.mxu0 0
      %5674 = vmatprep.mubr.bf16.mxu0 0
      %5675 = vmatmul.mubr.bf16.gmra.mrb[0].mxu0 %v5634
      %v5676 = vpop.f32.mrb[0].mxu0
      %v5677 = vadd.f32 0.0, %v5676
      %v5678 = vpop.f32.mrb[0].mxu0
      %v5679 = vpop.f32.mrb[0].mxu0
      %v5680 = vadd.f32 0.0, %v5679
      %v5681 = vpop.f32.mrb[0].mxu0
      %5682 = vmatprep.mubr.bf16.mxu0 0
      %5683 = vmatmul.mubr.bf16.gmra.mrb[0].mxu0 %v5637
      %v5684 = vpop.f32.mrb[0].mxu0
      %v5685 = vadd.f32 0.0, %v5684
      %v5686 = vpop.f32.mrb[0].mxu0
      %v5687 = vpop.f32.mrb[0].mxu0
      %v5688 = vpop.f32.mrb[0].mxu0
      %5689 = vdwg.mxu0
      %v5690 = vmul.f32 %v5677, %v5623
      %v5691 = vmul.f32 %v5680, %v5624
      %v5692 = vmul.f32 %v5685, %v5625
      %5693 = vrot.lane.b32.xlu0 %v5201, 104
      %v5694 = vpop.permute.xlu0 %5693
      %5695 = vrot.lane.b32.xlu0 %v5196, 104
      %v5696 = vpop.permute.xlu0 %5695
      %5697 = vrot.lane.b32.xlu0 %v5201, 72
      %v5698 = vpop.permute.xlu0 %5697
      %5699 = vrot.lane.b32.xlu0 %v5196, 72
      %v5700 = vpop.permute.xlu0 %5699
      %v5702 = vsel %vm1604, %v5694, 0
      %v5705 = vsel %vm1604, %v5696, 0
      %v5708 = vsel %vm1604, %v5698, 0
      %v5711 = vsel %vm1604, %v5700, 0
      %5713 = vmatprep.subr.bf16.mxu0 0
      %5714 = vmatpush1.bf16.xpose.msra.mxu0 %v5708
      %5715 = vmatprep.subr.bf16.mxu0 0
      %5716 = vmatpush1.bf16.xpose.msra.mxu0 %v5711
      %5717 = vmatprep.subr.bf16.mxu0 0
      %5718 = vmatpush1.bf16.xpose.msra.mxu0 0
      %5719 = vmatprep.subr.bf16.mxu0 0
      %5720 = vmatpush1.bf16.xpose.msra.mxu0 0
      %5721 = vmatprep.subr.bf16.mxu0 0
      %5722 = vmatpush1.bf16.xpose.msra.mxu0 0
      %5723 = vmatprep.subr.bf16.mxu0 0
      %5724 = vmatpush1.bf16.xpose.msra.mxu0 0
      %5725 = vmatprep.subr.bf16.mxu0 0
      %5726 = vmatpush1.bf16.xpose.msra.mxu0 0
      %5727 = vmatprep.subr.bf16.mxu0 0
      %5728 = vmatpush1.bf16.xpose.msra.mxu0 0
      %5729 = vmatprep.subr.bf16.mxu0 0
      %5730 = vmatpush1.bf16.xpose.msra.mxu0 0
      %5731 = vmatprep.subr.bf16.mxu0 0
      %5732 = vmatpush1.bf16.xpose.msra.mxu0 0
      %5733 = vmatprep.subr.bf16.mxu0 0
      %5734 = vmatpush1.bf16.xpose.msra.mxu0 0
      %5735 = vmatprep.subr.bf16.mxu0 0
      %5736 = vmatpush1.bf16.xpose.msra.mxu0 0
      %5737 = vmatprep.subr.bf16.mxu0 0
      %5738 = vmatpush1.bf16.xpose.msra.mxu0 0
      %5739 = vmatprep.subr.bf16.mxu0 0
      %5740 = vmatpush1.bf16.xpose.msra.mxu0 0
      %5741 = vmatprep.subr.bf16.mxu0 0
      %5742 = vmatpush1.bf16.xpose.msra.mxu0 0
      %5743 = vmatprep.subr.bf16.mxu0 0
      %5744 = vmatpush1.bf16.xpose.msra.mxu0 0
      %5745 = vmatprep.mubr.bf16.mxu0 0
      %5746 = vmatmul.mubr.bf16.gmra.mrb[0].mxu0 %v5702
      %v5747 = vpop.f32.mrb[0].mxu0
      %v5748 = vadd.f32 0.0, %v5747
      %v5749 = vpop.f32.mrb[0].mxu0
      %v5750 = vpop.f32.mrb[0].mxu0
      %v5751 = vadd.f32 0.0, %v5750
      %v5752 = vpop.f32.mrb[0].mxu0
      %5753 = vmatprep.mubr.bf16.mxu0 0
      %5754 = vmatmul.mubr.bf16.gmra.mrb[0].mxu0 %v5705
      %v5755 = vpop.f32.mrb[0].mxu0
      %v5756 = vadd.f32 0.0, %v5755
      %v5757 = vpop.f32.mrb[0].mxu0
      %v5758 = vpop.f32.mrb[0].mxu0
      %v5759 = vpop.f32.mrb[0].mxu0
      %5760 = vdwg.mxu0
      %v5761 = vsel %vm1665, %v5748, -inf
      %5762 = vmax.xlane.f32.xlu0 %v5761
      %v5763 = vpop.xlane.xlu0 %5762
      %v5764 = vsel %vm1665, %v5751, -inf
      %5765 = vmax.xlane.f32.xlu0 %v5764
      %v5766 = vpop.xlane.xlu0 %5765
      %v5767 = vsel %vm1672, %v5756, -inf
      %5768 = vmax.xlane.f32.xlu0 %v5767
      %v5769 = vpop.xlane.xlu0 %5768
      %v5770 = vsub.f32 %v5748, %v5763
      %v5771 = vsub.f32 %v5751, %v5766
      %v5772 = vsub.f32 %v5756, %v5769
      %v5773 = vmul.f32 %v5770, 1.442695
      %v5774 = vpow.pop %v5773
      %v5775 = vmul.f32 %v5771, 1.442695
      %v5776 = vpow.pop %v5775
      %v5777 = vmul.f32 %v5772, 1.442695
      %v5778 = vpow.pop %v5777
      %v5779 = vsel %vm1665, %v5774, 0.0
      %5780 = vadd.xlane.f32.xlu0 %v5779
      %v5781 = vpop.xlane.xlu0 %5780
      %v5782 = vsel %vm1665, %v5776, 0.0
      %5783 = vadd.xlane.f32.xlu0 %v5782
      %v5784 = vpop.xlane.xlu0 %5783
      %v5785 = vsel %vm1672, %v5778, 0.0
      %5786 = vadd.xlane.f32.xlu0 %v5785
      %v5787 = vpop.xlane.xlu0 %5786
      %v5788 = vrcp.pop %v5781
      %v5789 = vrcp.pop %v5784
      %v5790 = vrcp.pop %v5787
      %v5791 = vpack.c.bf16 %v5776, %v5774
      %v5792 = vpack.c.bf16 %v5778, %v5778
      %5793 = vrot.lane.b32.xlu0 %v5201, 40
      %v5794 = vpop.permute.xlu0 %5793
      %5795 = vrot.lane.b32.xlu0 %v5196, 40
      %v5796 = vpop.permute.xlu0 %5795
      %v5799 = vsel %vm1665, %v5791, 0
      %v5802 = vsel %vm1665, %v5792, 0
      %v5805 = vand.u32 %v5796, %v1712
      %5807 = vmatprep.subr.bf16.mxu0 0
      %5808 = vmatpush1.bf16.msra.mxu0 %v5794
      %5809 = vmatprep.subr.bf16.mxu0 0
      %5810 = vmatpush1.bf16.msra.mxu0 %v5805
      %5811 = vmatprep.subr.bf16.mxu0 0
      %5812 = vmatpush1.bf16.msra.mxu0 0
      %5813 = vmatprep.subr.bf16.mxu0 0
      %5814 = vmatpush1.bf16.msra.mxu0 0
      %5815 = vmatprep.subr.bf16.mxu0 0
      %5816 = vmatpush1.bf16.msra.mxu0 0
      %5817 = vmatprep.subr.bf16.mxu0 0
      %5818 = vmatpush1.bf16.msra.mxu0 0
      %5819 = vmatprep.subr.bf16.mxu0 0
      %5820 = vmatpush1.bf16.msra.mxu0 0
      %5821 = vmatprep.subr.bf16.mxu0 0
      %5822 = vmatpush1.bf16.msra.mxu0 0
      %5823 = vmatprep.subr.bf16.mxu0 0
      %5824 = vmatpush1.bf16.msra.mxu0 0
      %5825 = vmatprep.subr.bf16.mxu0 0
      %5826 = vmatpush1.bf16.msra.mxu0 0
      %5827 = vmatprep.subr.bf16.mxu0 0
      %5828 = vmatpush1.bf16.msra.mxu0 0
      %5829 = vmatprep.subr.bf16.mxu0 0
      %5830 = vmatpush1.bf16.msra.mxu0 0
      %5831 = vmatprep.subr.bf16.mxu0 0
      %5832 = vmatpush1.bf16.msra.mxu0 0
      %5833 = vmatprep.subr.bf16.mxu0 0
      %5834 = vmatpush1.bf16.msra.mxu0 0
      %5835 = vmatprep.subr.bf16.mxu0 0
      %5836 = vmatpush1.bf16.msra.mxu0 0
      %5837 = vmatprep.subr.bf16.mxu0 0
      %5838 = vmatpush1.bf16.msra.mxu0 0
      %5839 = vmatprep.mubr.bf16.mxu0 0
      %5840 = vmatmul.mubr.bf16.gmra.mrb[0].mxu0 %v5799
      %v5841 = vpop.f32.mrb[0].mxu0
      %v5842 = vadd.f32 0.0, %v5841
      %v5843 = vpop.f32.mrb[0].mxu0
      %v5844 = vpop.f32.mrb[0].mxu0
      %v5845 = vadd.f32 0.0, %v5844
      %v5846 = vpop.f32.mrb[0].mxu0
      %5847 = vmatprep.mubr.bf16.mxu0 0
      %5848 = vmatmul.mubr.bf16.gmra.mrb[0].mxu0 %v5802
      %v5849 = vpop.f32.mrb[0].mxu0
      %v5850 = vadd.f32 0.0, %v5849
      %v5851 = vpop.f32.mrb[0].mxu0
      %v5852 = vpop.f32.mrb[0].mxu0
      %v5853 = vpop.f32.mrb[0].mxu0
      %5854 = vdwg.mxu0
      %v5855 = vmul.f32 %v5842, %v5788
      %v5856 = vmul.f32 %v5845, %v5789
      %v5857 = vmul.f32 %v5850, %v5790
      %5861 = vrot.lane.b32.xlu0 %v5525, 8
      %v5862 = vpop.permute.xlu0 %5861
      %5863 = vrot.lane.b32.xlu0 %v5526, 8
      %v5864 = vpop.permute.xlu0 %5863
      %5865 = vrot.lane.b32.xlu0 %v5527, 8
      %v5866 = vpop.permute.xlu0 %5865
      %5873 = vrot.lane.b32.xlu0 %v5690, 16
      %v5874 = vpop.permute.xlu0 %5873
      %5875 = vrot.lane.b32.xlu0 %v5691, 16
      %v5876 = vpop.permute.xlu0 %5875
      %5877 = vrot.lane.b32.xlu0 %v5692, 16
      %v5878 = vpop.permute.xlu0 %5877
      %5885 = vrot.lane.b32.xlu0 %v5855, 24
      %v5886 = vpop.permute.xlu0 %5885
      %5887 = vrot.lane.b32.xlu0 %v5856, 24
      %v5888 = vpop.permute.xlu0 %5887
      %5889 = vrot.lane.b32.xlu0 %v5857, 24
      %v5890 = vpop.permute.xlu0 %5889
      %v5894 = vsel %vm1604, %v5360, %v5862
      %v5895 = vsel %vm1604, %v5361, %v5864
      %v5896 = vsel %vm1604, %v5362, %v5866
      %v5897 = vsel %vm2301, %v5894, %v5874
      %v5898 = vsel %vm2301, %v5895, %v5876
      %v5899 = vsel %vm2301, %v5896, %v5878
      %v5900 = vsel %vm2305, %v5897, %v5886
      %v5901 = vsel %vm2305, %v5898, %v5888
      %v5902 = vsel %vm2305, %v5899, %v5890
      %5903 = vst.msk [vmem:[#allocation2 + $0x55] sm:$0xff] %vm1175, %v5900
      %5904 = vst.msk [vmem:[#allocation2 + $0x5d] sm:$0xff] %vm1175, %v5901
      %5905 = vst.msk [vmem:[#allocation2 + $0x65] sm:$0x1] %vm2311, %v5902
      %v5906 = vpack.c.bf16 %v1578, %v1575
      %v5907 = vpack.c.bf16 %v1583, %v1583
      %vm5910 = vcmask 1044480
      %v5911 = vrot.slane %v5906, 3
      %v5912 = vrot.slane %v5907, 3
      %v5913 = vsel %vm5910, %v5911, %v5912
      %5914 = vrot.lane.b32.xlu0 %v5913, 96
      %v5915 = vpop.permute.xlu0 %5914
      %5916 = vrot.lane.b32.xlu0 %v5912, 96
      %v5917 = vpop.permute.xlu0 %5916
      %v5919 = vsel %vm1604, %v5913, 0
      %v5922 = vsel %vm1604, %v5912, 0
      %v5925 = vsel %vm1604, %v5915, 0
      %v5928 = vsel %vm1604, %v5917, 0
      %5930 = vmatprep.subr.bf16.mxu0 0
      %5931 = vmatpush1.bf16.xpose.msra.mxu0 %v5925
      %5932 = vmatprep.subr.bf16.mxu0 0
      %5933 = vmatpush1.bf16.xpose.msra.mxu0 %v5928
      %5934 = vmatprep.subr.bf16.mxu0 0
      %5935 = vmatpush1.bf16.xpose.msra.mxu0 0
      %5936 = vmatprep.subr.bf16.mxu0 0
      %5937 = vmatpush1.bf16.xpose.msra.mxu0 0
      %5938 = vmatprep.subr.bf16.mxu0 0
      %5939 = vmatpush1.bf16.xpose.msra.mxu0 0
      %5940 = vmatprep.subr.bf16.mxu0 0
      %5941 = vmatpush1.bf16.xpose.msra.mxu0 0
      %5942 = vmatprep.subr.bf16.mxu0 0
      %5943 = vmatpush1.bf16.xpose.msra.mxu0 0
      %5944 = vmatprep.subr.bf16.mxu0 0
      %5945 = vmatpush1.bf16.xpose.msra.mxu0 0
      %5946 = vmatprep.subr.bf16.mxu0 0
      %5947 = vmatpush1.bf16.xpose.msra.mxu0 0
      %5948 = vmatprep.subr.bf16.mxu0 0
      %5949 = vmatpush1.bf16.xpose.msra.mxu0 0
      %5950 = vmatprep.subr.bf16.mxu0 0
      %5951 = vmatpush1.bf16.xpose.msra.mxu0 0
      %5952 = vmatprep.subr.bf16.mxu0 0
      %5953 = vmatpush1.bf16.xpose.msra.mxu0 0
      %5954 = vmatprep.subr.bf16.mxu0 0
      %5955 = vmatpush1.bf16.xpose.msra.mxu0 0
      %5956 = vmatprep.subr.bf16.mxu0 0
      %5957 = vmatpush1.bf16.xpose.msra.mxu0 0
      %5958 = vmatprep.subr.bf16.mxu0 0
      %5959 = vmatpush1.bf16.xpose.msra.mxu0 0
      %5960 = vmatprep.subr.bf16.mxu0 0
      %5961 = vmatpush1.bf16.xpose.msra.mxu0 0
      %5962 = vmatprep.mubr.bf16.mxu0 0
      %5963 = vmatmul.mubr.bf16.gmra.mrb[0].mxu0 %v5919
      %v5964 = vpop.f32.mrb[0].mxu0
      %v5965 = vadd.f32 0.0, %v5964
      %v5966 = vpop.f32.mrb[0].mxu0
      %v5967 = vpop.f32.mrb[0].mxu0
      %v5968 = vadd.f32 0.0, %v5967
      %v5969 = vpop.f32.mrb[0].mxu0
      %5970 = vmatprep.mubr.bf16.mxu0 0
      %5971 = vmatmul.mubr.bf16.gmra.mrb[0].mxu0 %v5922
      %v5972 = vpop.f32.mrb[0].mxu0
      %v5973 = vadd.f32 0.0, %v5972
      %v5974 = vpop.f32.mrb[0].mxu0
      %v5975 = vpop.f32.mrb[0].mxu0
      %v5976 = vpop.f32.mrb[0].mxu0
      %5977 = vdwg.mxu0
      %v5978 = vsel %vm1665, %v5965, -inf
      %5979 = vmax.xlane.f32.xlu0 %v5978
      %v5980 = vpop.xlane.xlu0 %5979
      %v5981 = vsel %vm1665, %v5968, -inf
      %5982 = vmax.xlane.f32.xlu0 %v5981
      %v5983 = vpop.xlane.xlu0 %5982
      %v5984 = vsel %vm1672, %v5973, -inf
      %5985 = vmax.xlane.f32.xlu0 %v5984
      %v5986 = vpop.xlane.xlu0 %5985
      %v5987 = vsub.f32 %v5965, %v5980
      %v5988 = vsub.f32 %v5968, %v5983
      %v5989 = vsub.f32 %v5973, %v5986
      %v5990 = vmul.f32 %v5987, 1.442695
      %v5991 = vpow.pop %v5990
      %v5992 = vmul.f32 %v5988, 1.442695
      %v5993 = vpow.pop %v5992
      %v5994 = vmul.f32 %v5989, 1.442695
      %v5995 = vpow.pop %v5994
      %v5996 = vsel %vm1665, %v5991, 0.0
      %5997 = vadd.xlane.f32.xlu0 %v5996
      %v5998 = vpop.xlane.xlu0 %5997
      %v5999 = vsel %vm1665, %v5993, 0.0
      %6000 = vadd.xlane.f32.xlu0 %v5999
      %v6001 = vpop.xlane.xlu0 %6000
      %v6002 = vsel %vm1672, %v5995, 0.0
      %6003 = vadd.xlane.f32.xlu0 %v6002
      %v6004 = vpop.xlane.xlu0 %6003
      %v6005 = vrcp.pop %v5998
      %v6006 = vrcp.pop %v6001
      %v6007 = vrcp.pop %v6004
      %v6008 = vpack.c.bf16 %v5993, %v5991
      %v6009 = vpack.c.bf16 %v5995, %v5995
      %6010 = vrot.lane.b32.xlu0 %v5913, 64
      %v6011 = vpop.permute.xlu0 %6010
      %6012 = vrot.lane.b32.xlu0 %v5912, 64
      %v6013 = vpop.permute.xlu0 %6012
      %v6016 = vsel %vm1665, %v6008, 0
      %v6019 = vsel %vm1665, %v6009, 0
      %v6022 = vand.u32 %v6013, %v1712
      %6024 = vmatprep.subr.bf16.mxu0 0
      %6025 = vmatpush1.bf16.msra.mxu0 %v6011
      %6026 = vmatprep.subr.bf16.mxu0 0
      %6027 = vmatpush1.bf16.msra.mxu0 %v6022
      %6028 = vmatprep.subr.bf16.mxu0 0
      %6029 = vmatpush1.bf16.msra.mxu0 0
      %6030 = vmatprep.subr.bf16.mxu0 0
      %6031 = vmatpush1.bf16.msra.mxu0 0
      %6032 = vmatprep.subr.bf16.mxu0 0
      %6033 = vmatpush1.bf16.msra.mxu0 0
      %6034 = vmatprep.subr.bf16.mxu0 0
      %6035 = vmatpush1.bf16.msra.mxu0 0
      %6036 = vmatprep.subr.bf16.mxu0 0
      %6037 = vmatpush1.bf16.msra.mxu0 0
      %6038 = vmatprep.subr.bf16.mxu0 0
      %6039 = vmatpush1.bf16.msra.mxu0 0
      %6040 = vmatprep.subr.bf16.mxu0 0
      %6041 = vmatpush1.bf16.msra.mxu0 0
      %6042 = vmatprep.subr.bf16.mxu0 0
      %6043 = vmatpush1.bf16.msra.mxu0 0
      %6044 = vmatprep.subr.bf16.mxu0 0
      %6045 = vmatpush1.bf16.msra.mxu0 0
      %6046 = vmatprep.subr.bf16.mxu0 0
      %6047 = vmatpush1.bf16.msra.mxu0 0
      %6048 = vmatprep.subr.bf16.mxu0 0
      %6049 = vmatpush1.bf16.msra.mxu0 0
      %6050 = vmatprep.subr.bf16.mxu0 0
      %6051 = vmatpush1.bf16.msra.mxu0 0
      %6052 = vmatprep.subr.bf16.mxu0 0
      %6053 = vmatpush1.bf16.msra.mxu0 0
      %6054 = vmatprep.subr.bf16.mxu0 0
      %6055 = vmatpush1.bf16.msra.mxu0 0
      %6056 = vmatprep.mubr.bf16.mxu0 0
      %6057 = vmatmul.mubr.bf16.gmra.mrb[0].mxu0 %v6016
      %v6058 = vpop.f32.mrb[0].mxu0
      %v6059 = vadd.f32 0.0, %v6058
      %v6060 = vpop.f32.mrb[0].mxu0
      %v6061 = vpop.f32.mrb[0].mxu0
      %v6062 = vadd.f32 0.0, %v6061
      %v6063 = vpop.f32.mrb[0].mxu0
      %6064 = vmatprep.mubr.bf16.mxu0 0
      %6065 = vmatmul.mubr.bf16.gmra.mrb[0].mxu0 %v6019
      %v6066 = vpop.f32.mrb[0].mxu0
      %v6067 = vadd.f32 0.0, %v6066
      %v6068 = vpop.f32.mrb[0].mxu0
      %v6069 = vpop.f32.mrb[0].mxu0
      %v6070 = vpop.f32.mrb[0].mxu0
      %6071 = vdwg.mxu0
      %v6072 = vmul.f32 %v6059, %v6005
      %v6073 = vmul.f32 %v6062, %v6006
      %v6074 = vmul.f32 %v6067, %v6007
      %6075 = vrot.lane.b32.xlu0 %v5913, 120
      %v6076 = vpop.permute.xlu0 %6075
      %6077 = vrot.lane.b32.xlu0 %v5912, 120
      %v6078 = vpop.permute.xlu0 %6077
      %6079 = vrot.lane.b32.xlu0 %v5913, 88
      %v6080 = vpop.permute.xlu0 %6079
      %6081 = vrot.lane.b32.xlu0 %v5912, 88
      %v6082 = vpop.permute.xlu0 %6081
      %v6084 = vsel %vm1604, %v6076, 0
      %v6087 = vsel %vm1604, %v6078, 0
      %v6090 = vsel %vm1604, %v6080, 0
      %v6093 = vsel %vm1604, %v6082, 0
      %6095 = vmatprep.subr.bf16.mxu0 0
      %6096 = vmatpush1.bf16.xpose.msra.mxu0 %v6090
      %6097 = vmatprep.subr.bf16.mxu0 0
      %6098 = vmatpush1.bf16.xpose.msra.mxu0 %v6093
      %6099 = vmatprep.subr.bf16.mxu0 0
      %6100 = vmatpush1.bf16.xpose.msra.mxu0 0
      %6101 = vmatprep.subr.bf16.mxu0 0
      %6102 = vmatpush1.bf16.xpose.msra.mxu0 0
      %6103 = vmatprep.subr.bf16.mxu0 0
      %6104 = vmatpush1.bf16.xpose.msra.mxu0 0
      %6105 = vmatprep.subr.bf16.mxu0 0
      %6106 = vmatpush1.bf16.xpose.msra.mxu0 0
      %6107 = vmatprep.subr.bf16.mxu0 0
      %6108 = vmatpush1.bf16.xpose.msra.mxu0 0
      %6109 = vmatprep.subr.bf16.mxu0 0
      %6110 = vmatpush1.bf16.xpose.msra.mxu0 0
      %6111 = vmatprep.subr.bf16.mxu0 0
      %6112 = vmatpush1.bf16.xpose.msra.mxu0 0
      %6113 = vmatprep.subr.bf16.mxu0 0
      %6114 = vmatpush1.bf16.xpose.msra.mxu0 0
      %6115 = vmatprep.subr.bf16.mxu0 0
      %6116 = vmatpush1.bf16.xpose.msra.mxu0 0
      %6117 = vmatprep.subr.bf16.mxu0 0
      %6118 = vmatpush1.bf16.xpose.msra.mxu0 0
      %6119 = vmatprep.subr.bf16.mxu0 0
      %6120 = vmatpush1.bf16.xpose.msra.mxu0 0
      %6121 = vmatprep.subr.bf16.mxu0 0
      %6122 = vmatpush1.bf16.xpose.msra.mxu0 0
      %6123 = vmatprep.subr.bf16.mxu0 0
      %6124 = vmatpush1.bf16.xpose.msra.mxu0 0
      %6125 = vmatprep.subr.bf16.mxu0 0
      %6126 = vmatpush1.bf16.xpose.msra.mxu0 0
      %6127 = vmatprep.mubr.bf16.mxu0 0
      %6128 = vmatmul.mubr.bf16.gmra.mrb[0].mxu0 %v6084
      %v6129 = vpop.f32.mrb[0].mxu0
      %v6130 = vadd.f32 0.0, %v6129
      %v6131 = vpop.f32.mrb[0].mxu0
      %v6132 = vpop.f32.mrb[0].mxu0
      %v6133 = vadd.f32 0.0, %v6132
      %v6134 = vpop.f32.mrb[0].mxu0
      %6135 = vmatprep.mubr.bf16.mxu0 0
      %6136 = vmatmul.mubr.bf16.gmra.mrb[0].mxu0 %v6087
      %v6137 = vpop.f32.mrb[0].mxu0
      %v6138 = vadd.f32 0.0, %v6137
      %v6139 = vpop.f32.mrb[0].mxu0
      %v6140 = vpop.f32.mrb[0].mxu0
      %v6141 = vpop.f32.mrb[0].mxu0
      %6142 = vdwg.mxu0
      %v6143 = vsel %vm1665, %v6130, -inf
      %6144 = vmax.xlane.f32.xlu0 %v6143
      %v6145 = vpop.xlane.xlu0 %6144
      %v6146 = vsel %vm1665, %v6133, -inf
      %6147 = vmax.xlane.f32.xlu0 %v6146
      %v6148 = vpop.xlane.xlu0 %6147
      %v6149 = vsel %vm1672, %v6138, -inf
      %6150 = vmax.xlane.f32.xlu0 %v6149
      %v6151 = vpop.xlane.xlu0 %6150
      %v6152 = vsub.f32 %v6130, %v6145
      %v6153 = vsub.f32 %v6133, %v6148
      %v6154 = vsub.f32 %v6138, %v6151
      %v6155 = vmul.f32 %v6152, 1.442695
      %v6156 = vpow.pop %v6155
      %v6157 = vmul.f32 %v6153, 1.442695
      %v6158 = vpow.pop %v6157
      %v6159 = vmul.f32 %v6154, 1.442695
      %v6160 = vpow.pop %v6159
      %v6161 = vsel %vm1665, %v6156, 0.0
      %6162 = vadd.xlane.f32.xlu0 %v6161
      %v6163 = vpop.xlane.xlu0 %6162
      %v6164 = vsel %vm1665, %v6158, 0.0
      %6165 = vadd.xlane.f32.xlu0 %v6164
      %v6166 = vpop.xlane.xlu0 %6165
      %v6167 = vsel %vm1672, %v6160, 0.0
      %6168 = vadd.xlane.f32.xlu0 %v6167
      %v6169 = vpop.xlane.xlu0 %6168
      %v6170 = vrcp.pop %v6163
      %v6171 = vrcp.pop %v6166
      %v6172 = vrcp.pop %v6169
      %v6173 = vpack.c.bf16 %v6158, %v6156
      %v6174 = vpack.c.bf16 %v6160, %v6160
      %6175 = vrot.lane.b32.xlu0 %v5913, 56
      %v6176 = vpop.permute.xlu0 %6175
      %6177 = vrot.lane.b32.xlu0 %v5912, 56
      %v6178 = vpop.permute.xlu0 %6177
      %v6181 = vsel %vm1665, %v6173, 0
      %v6184 = vsel %vm1665, %v6174, 0
      %v6187 = vand.u32 %v6178, %v1712
      %6189 = vmatprep.subr.bf16.mxu0 0
      %6190 = vmatpush1.bf16.msra.mxu0 %v6176
      %6191 = vmatprep.subr.bf16.mxu0 0
      %6192 = vmatpush1.bf16.msra.mxu0 %v6187
      %6193 = vmatprep.subr.bf16.mxu0 0
      %6194 = vmatpush1.bf16.msra.mxu0 0
      %6195 = vmatprep.subr.bf16.mxu0 0
      %6196 = vmatpush1.bf16.msra.mxu0 0
      %6197 = vmatprep.subr.bf16.mxu0 0
      %6198 = vmatpush1.bf16.msra.mxu0 0
      %6199 = vmatprep.subr.bf16.mxu0 0
      %6200 = vmatpush1.bf16.msra.mxu0 0
      %6201 = vmatprep.subr.bf16.mxu0 0
      %6202 = vmatpush1.bf16.msra.mxu0 0
      %6203 = vmatprep.subr.bf16.mxu0 0
      %6204 = vmatpush1.bf16.msra.mxu0 0
      %6205 = vmatprep.subr.bf16.mxu0 0
      %6206 = vmatpush1.bf16.msra.mxu0 0
      %6207 = vmatprep.subr.bf16.mxu0 0
      %6208 = vmatpush1.bf16.msra.mxu0 0
      %6209 = vmatprep.subr.bf16.mxu0 0
      %6210 = vmatpush1.bf16.msra.mxu0 0
      %6211 = vmatprep.subr.bf16.mxu0 0
      %6212 = vmatpush1.bf16.msra.mxu0 0
      %6213 = vmatprep.subr.bf16.mxu0 0
      %6214 = vmatpush1.bf16.msra.mxu0 0
      %6215 = vmatprep.subr.bf16.mxu0 0
      %6216 = vmatpush1.bf16.msra.mxu0 0
      %6217 = vmatprep.subr.bf16.mxu0 0
      %6218 = vmatpush1.bf16.msra.mxu0 0
      %6219 = vmatprep.subr.bf16.mxu0 0
      %6220 = vmatpush1.bf16.msra.mxu0 0
      %6221 = vmatprep.mubr.bf16.mxu0 0
      %6222 = vmatmul.mubr.bf16.gmra.mrb[0].mxu0 %v6181
      %v6223 = vpop.f32.mrb[0].mxu0
      %v6224 = vadd.f32 0.0, %v6223
      %v6225 = vpop.f32.mrb[0].mxu0
      %v6226 = vpop.f32.mrb[0].mxu0
      %v6227 = vadd.f32 0.0, %v6226
      %v6228 = vpop.f32.mrb[0].mxu0
      %6229 = vmatprep.mubr.bf16.mxu0 0
      %6230 = vmatmul.mubr.bf16.gmra.mrb[0].mxu0 %v6184
      %v6231 = vpop.f32.mrb[0].mxu0
      %v6232 = vadd.f32 0.0, %v6231
      %v6233 = vpop.f32.mrb[0].mxu0
      %v6234 = vpop.f32.mrb[0].mxu0
      %v6235 = vpop.f32.mrb[0].mxu0
      %6236 = vdwg.mxu0
      %v6237 = vmul.f32 %v6224, %v6170
      %v6238 = vmul.f32 %v6227, %v6171
      %v6239 = vmul.f32 %v6232, %v6172
      %6240 = vrot.lane.b32.xlu0 %v5913, 112
      %v6241 = vpop.permute.xlu0 %6240
      %6242 = vrot.lane.b32.xlu0 %v5912, 112
      %v6243 = vpop.permute.xlu0 %6242
      %6244 = vrot.lane.b32.xlu0 %v5913, 80
      %v6245 = vpop.permute.xlu0 %6244
      %6246 = vrot.lane.b32.xlu0 %v5912, 80
      %v6247 = vpop.permute.xlu0 %6246
      %v6249 = vsel %vm1604, %v6241, 0
      %v6252 = vsel %vm1604, %v6243, 0
      %v6255 = vsel %vm1604, %v6245, 0
      %v6258 = vsel %vm1604, %v6247, 0
      %6260 = vmatprep.subr.bf16.mxu0 0
      %6261 = vmatpush1.bf16.xpose.msra.mxu0 %v6255
      %6262 = vmatprep.subr.bf16.mxu0 0
      %6263 = vmatpush1.bf16.xpose.msra.mxu0 %v6258
      %6264 = vmatprep.subr.bf16.mxu0 0
      %6265 = vmatpush1.bf16.xpose.msra.mxu0 0
      %6266 = vmatprep.subr.bf16.mxu0 0
      %6267 = vmatpush1.bf16.xpose.msra.mxu0 0
      %6268 = vmatprep.subr.bf16.mxu0 0
      %6269 = vmatpush1.bf16.xpose.msra.mxu0 0
      %6270 = vmatprep.subr.bf16.mxu0 0
      %6271 = vmatpush1.bf16.xpose.msra.mxu0 0
      %6272 = vmatprep.subr.bf16.mxu0 0
      %6273 = vmatpush1.bf16.xpose.msra.mxu0 0
      %6274 = vmatprep.subr.bf16.mxu0 0
      %6275 = vmatpush1.bf16.xpose.msra.mxu0 0
      %6276 = vmatprep.subr.bf16.mxu0 0
      %6277 = vmatpush1.bf16.xpose.msra.mxu0 0
      %6278 = vmatprep.subr.bf16.mxu0 0
      %6279 = vmatpush1.bf16.xpose.msra.mxu0 0
      %6280 = vmatprep.subr.bf16.mxu0 0
      %6281 = vmatpush1.bf16.xpose.msra.mxu0 0
      %6282 = vmatprep.subr.bf16.mxu0 0
      %6283 = vmatpush1.bf16.xpose.msra.mxu0 0
      %6284 = vmatprep.subr.bf16.mxu0 0
      %6285 = vmatpush1.bf16.xpose.msra.mxu0 0
      %6286 = vmatprep.subr.bf16.mxu0 0
      %6287 = vmatpush1.bf16.xpose.msra.mxu0 0
      %6288 = vmatprep.subr.bf16.mxu0 0
      %6289 = vmatpush1.bf16.xpose.msra.mxu0 0
      %6290 = vmatprep.subr.bf16.mxu0 0
      %6291 = vmatpush1.bf16.xpose.msra.mxu0 0
      %6292 = vmatprep.mubr.bf16.mxu0 0
      %6293 = vmatmul.mubr.bf16.gmra.mrb[0].mxu0 %v6249
      %v6294 = vpop.f32.mrb[0].mxu0
      %v6295 = vadd.f32 0.0, %v6294
      %v6296 = vpop.f32.mrb[0].mxu0
      %v6297 = vpop.f32.mrb[0].mxu0
      %v6298 = vadd.f32 0.0, %v6297
      %v6299 = vpop.f32.mrb[0].mxu0
      %6300 = vmatprep.mubr.bf16.mxu0 0
      %6301 = vmatmul.mubr.bf16.gmra.mrb[0].mxu0 %v6252
      %v6302 = vpop.f32.mrb[0].mxu0
      %v6303 = vadd.f32 0.0, %v6302
      %v6304 = vpop.f32.mrb[0].mxu0
      %v6305 = vpop.f32.mrb[0].mxu0
      %v6306 = vpop.f32.mrb[0].mxu0
      %6307 = vdwg.mxu0
      %v6308 = vsel %vm1665, %v6295, -inf
      %6309 = vmax.xlane.f32.xlu0 %v6308
      %v6310 = vpop.xlane.xlu0 %6309
      %v6311 = vsel %vm1665, %v6298, -inf
      %6312 = vmax.xlane.f32.xlu0 %v6311
      %v6313 = vpop.xlane.xlu0 %6312
      %v6314 = vsel %vm1672, %v6303, -inf
      %6315 = vmax.xlane.f32.xlu0 %v6314
      %v6316 = vpop.xlane.xlu0 %6315
      %v6317 = vsub.f32 %v6295, %v6310
      %v6318 = vsub.f32 %v6298, %v6313
      %v6319 = vsub.f32 %v6303, %v6316
      %v6320 = vmul.f32 %v6317, 1.442695
      %v6321 = vpow.pop %v6320
      %v6322 = vmul.f32 %v6318, 1.442695
      %v6323 = vpow.pop %v6322
      %v6324 = vmul.f32 %v6319, 1.442695
      %v6325 = vpow.pop %v6324
      %v6326 = vsel %vm1665, %v6321, 0.0
      %6327 = vadd.xlane.f32.xlu0 %v6326
      %v6328 = vpop.xlane.xlu0 %6327
      %v6329 = vsel %vm1665, %v6323, 0.0
      %6330 = vadd.xlane.f32.xlu0 %v6329
      %v6331 = vpop.xlane.xlu0 %6330
      %v6332 = vsel %vm1672, %v6325, 0.0
      %6333 = vadd.xlane.f32.xlu0 %v6332
      %v6334 = vpop.xlane.xlu0 %6333
      %v6335 = vrcp.pop %v6328
      %v6336 = vrcp.pop %v6331
      %v6337 = vrcp.pop %v6334
      %v6338 = vpack.c.bf16 %v6323, %v6321
      %v6339 = vpack.c.bf16 %v6325, %v6325
      %6340 = vrot.lane.b32.xlu0 %v5913, 48
      %v6341 = vpop.permute.xlu0 %6340
      %6342 = vrot.lane.b32.xlu0 %v5912, 48
      %v6343 = vpop.permute.xlu0 %6342
      %v6346 = vsel %vm1665, %v6338, 0
      %v6349 = vsel %vm1665, %v6339, 0
      %v6352 = vand.u32 %v6343, %v1712
      %6354 = vmatprep.subr.bf16.mxu0 0
      %6355 = vmatpush1.bf16.msra.mxu0 %v6341
      %6356 = vmatprep.subr.bf16.mxu0 0
      %6357 = vmatpush1.bf16.msra.mxu0 %v6352
      %6358 = vmatprep.subr.bf16.mxu0 0
      %6359 = vmatpush1.bf16.msra.mxu0 0
      %6360 = vmatprep.subr.bf16.mxu0 0
      %6361 = vmatpush1.bf16.msra.mxu0 0
      %6362 = vmatprep.subr.bf16.mxu0 0
      %6363 = vmatpush1.bf16.msra.mxu0 0
      %6364 = vmatprep.subr.bf16.mxu0 0
      %6365 = vmatpush1.bf16.msra.mxu0 0
      %6366 = vmatprep.subr.bf16.mxu0 0
      %6367 = vmatpush1.bf16.msra.mxu0 0
      %6368 = vmatprep.subr.bf16.mxu0 0
      %6369 = vmatpush1.bf16.msra.mxu0 0
      %6370 = vmatprep.subr.bf16.mxu0 0
      %6371 = vmatpush1.bf16.msra.mxu0 0
      %6372 = vmatprep.subr.bf16.mxu0 0
      %6373 = vmatpush1.bf16.msra.mxu0 0
      %6374 = vmatprep.subr.bf16.mxu0 0
      %6375 = vmatpush1.bf16.msra.mxu0 0
      %6376 = vmatprep.subr.bf16.mxu0 0
      %6377 = vmatpush1.bf16.msra.mxu0 0
      %6378 = vmatprep.subr.bf16.mxu0 0
      %6379 = vmatpush1.bf16.msra.mxu0 0
      %6380 = vmatprep.subr.bf16.mxu0 0
      %6381 = vmatpush1.bf16.msra.mxu0 0
      %6382 = vmatprep.subr.bf16.mxu0 0
      %6383 = vmatpush1.bf16.msra.mxu0 0
      %6384 = vmatprep.subr.bf16.mxu0 0
      %6385 = vmatpush1.bf16.msra.mxu0 0
      %6386 = vmatprep.mubr.bf16.mxu0 0
      %6387 = vmatmul.mubr.bf16.gmra.mrb[0].mxu0 %v6346
      %v6388 = vpop.f32.mrb[0].mxu0
      %v6389 = vadd.f32 0.0, %v6388
      %v6390 = vpop.f32.mrb[0].mxu0
      %v6391 = vpop.f32.mrb[0].mxu0
      %v6392 = vadd.f32 0.0, %v6391
      %v6393 = vpop.f32.mrb[0].mxu0
      %6394 = vmatprep.mubr.bf16.mxu0 0
      %6395 = vmatmul.mubr.bf16.gmra.mrb[0].mxu0 %v6349
      %v6396 = vpop.f32.mrb[0].mxu0
      %v6397 = vadd.f32 0.0, %v6396
      %v6398 = vpop.f32.mrb[0].mxu0
      %v6399 = vpop.f32.mrb[0].mxu0
      %v6400 = vpop.f32.mrb[0].mxu0
      %6401 = vdwg.mxu0
      %v6402 = vmul.f32 %v6389, %v6335
      %v6403 = vmul.f32 %v6392, %v6336
      %v6404 = vmul.f32 %v6397, %v6337
      %6405 = vrot.lane.b32.xlu0 %v5913, 104
      %v6406 = vpop.permute.xlu0 %6405
      %6407 = vrot.lane.b32.xlu0 %v5912, 104
      %v6408 = vpop.permute.xlu0 %6407
      %6409 = vrot.lane.b32.xlu0 %v5913, 72
      %v6410 = vpop.permute.xlu0 %6409
      %6411 = vrot.lane.b32.xlu0 %v5912, 72
      %v6412 = vpop.permute.xlu0 %6411
      %v6414 = vsel %vm1604, %v6406, 0
      %v6417 = vsel %vm1604, %v6408, 0
      %v6420 = vsel %vm1604, %v6410, 0
      %v6423 = vsel %vm1604, %v6412, 0
      %6425 = vmatprep.subr.bf16.mxu0 0
      %6426 = vmatpush1.bf16.xpose.msra.mxu0 %v6420
      %6427 = vmatprep.subr.bf16.mxu0 0
      %6428 = vmatpush1.bf16.xpose.msra.mxu0 %v6423
      %6429 = vmatprep.subr.bf16.mxu0 0
      %6430 = vmatpush1.bf16.xpose.msra.mxu0 0
      %6431 = vmatprep.subr.bf16.mxu0 0
      %6432 = vmatpush1.bf16.xpose.msra.mxu0 0
      %6433 = vmatprep.subr.bf16.mxu0 0
      %6434 = vmatpush1.bf16.xpose.msra.mxu0 0
      %6435 = vmatprep.subr.bf16.mxu0 0
      %6436 = vmatpush1.bf16.xpose.msra.mxu0 0
      %6437 = vmatprep.subr.bf16.mxu0 0
      %6438 = vmatpush1.bf16.xpose.msra.mxu0 0
      %6439 = vmatprep.subr.bf16.mxu0 0
      %6440 = vmatpush1.bf16.xpose.msra.mxu0 0
      %6441 = vmatprep.subr.bf16.mxu0 0
      %6442 = vmatpush1.bf16.xpose.msra.mxu0 0
      %6443 = vmatprep.subr.bf16.mxu0 0
      %6444 = vmatpush1.bf16.xpose.msra.mxu0 0
      %6445 = vmatprep.subr.bf16.mxu0 0
      %6446 = vmatpush1.bf16.xpose.msra.mxu0 0
      %6447 = vmatprep.subr.bf16.mxu0 0
      %6448 = vmatpush1.bf16.xpose.msra.mxu0 0
      %6449 = vmatprep.subr.bf16.mxu0 0
      %6450 = vmatpush1.bf16.xpose.msra.mxu0 0
      %6451 = vmatprep.subr.bf16.mxu0 0
      %6452 = vmatpush1.bf16.xpose.msra.mxu0 0
      %6453 = vmatprep.subr.bf16.mxu0 0
      %6454 = vmatpush1.bf16.xpose.msra.mxu0 0
      %6455 = vmatprep.subr.bf16.mxu0 0
      %6456 = vmatpush1.bf16.xpose.msra.mxu0 0
      %6457 = vmatprep.mubr.bf16.mxu0 0
      %6458 = vmatmul.mubr.bf16.gmra.mrb[0].mxu0 %v6414
      %v6459 = vpop.f32.mrb[0].mxu0
      %v6460 = vadd.f32 0.0, %v6459
      %v6461 = vpop.f32.mrb[0].mxu0
      %v6462 = vpop.f32.mrb[0].mxu0
      %v6463 = vadd.f32 0.0, %v6462
      %v6464 = vpop.f32.mrb[0].mxu0
      %6465 = vmatprep.mubr.bf16.mxu0 0
      %6466 = vmatmul.mubr.bf16.gmra.mrb[0].mxu0 %v6417
      %v6467 = vpop.f32.mrb[0].mxu0
      %v6468 = vadd.f32 0.0, %v6467
      %v6469 = vpop.f32.mrb[0].mxu0
      %v6470 = vpop.f32.mrb[0].mxu0
      %v6471 = vpop.f32.mrb[0].mxu0
      %6472 = vdwg.mxu0
      %v6473 = vsel %vm1665, %v6460, -inf
      %6474 = vmax.xlane.f32.xlu0 %v6473
      %v6475 = vpop.xlane.xlu0 %6474
      %v6476 = vsel %vm1665, %v6463, -inf
      %6477 = vmax.xlane.f32.xlu0 %v6476
      %v6478 = vpop.xlane.xlu0 %6477
      %v6479 = vsel %vm1672, %v6468, -inf
      %6480 = vmax.xlane.f32.xlu0 %v6479
      %v6481 = vpop.xlane.xlu0 %6480
      %v6482 = vsub.f32 %v6460, %v6475
      %v6483 = vsub.f32 %v6463, %v6478
      %v6484 = vsub.f32 %v6468, %v6481
      %v6485 = vmul.f32 %v6482, 1.442695
      %v6486 = vpow.pop %v6485
      %v6487 = vmul.f32 %v6483, 1.442695
      %v6488 = vpow.pop %v6487
      %v6489 = vmul.f32 %v6484, 1.442695
      %v6490 = vpow.pop %v6489
      %v6491 = vsel %vm1665, %v6486, 0.0
      %6492 = vadd.xlane.f32.xlu0 %v6491
      %v6493 = vpop.xlane.xlu0 %6492
      %v6494 = vsel %vm1665, %v6488, 0.0
      %6495 = vadd.xlane.f32.xlu0 %v6494
      %v6496 = vpop.xlane.xlu0 %6495
      %v6497 = vsel %vm1672, %v6490, 0.0
      %6498 = vadd.xlane.f32.xlu0 %v6497
      %v6499 = vpop.xlane.xlu0 %6498
      %v6500 = vrcp.pop %v6493
      %v6501 = vrcp.pop %v6496
      %v6502 = vrcp.pop %v6499
      %v6503 = vpack.c.bf16 %v6488, %v6486
      %v6504 = vpack.c.bf16 %v6490, %v6490
      %6505 = vrot.lane.b32.xlu0 %v5913, 40
      %v6506 = vpop.permute.xlu0 %6505
      %6507 = vrot.lane.b32.xlu0 %v5912, 40
      %v6508 = vpop.permute.xlu0 %6507
      %v6511 = vsel %vm1665, %v6503, 0
      %v6514 = vsel %vm1665, %v6504, 0
      %v6517 = vand.u32 %v6508, %v1712
      %6519 = vmatprep.subr.bf16.mxu0 0
      %6520 = vmatpush1.bf16.msra.mxu0 %v6506
      %6521 = vmatprep.subr.bf16.mxu0 0
      %6522 = vmatpush1.bf16.msra.mxu0 %v6517
      %6523 = vmatprep.subr.bf16.mxu0 0
      %6524 = vmatpush1.bf16.msra.mxu0 0
      %6525 = vmatprep.subr.bf16.mxu0 0
      %6526 = vmatpush1.bf16.msra.mxu0 0
      %6527 = vmatprep.subr.bf16.mxu0 0
      %6528 = vmatpush1.bf16.msra.mxu0 0
      %6529 = vmatprep.subr.bf16.mxu0 0
      %6530 = vmatpush1.bf16.msra.mxu0 0
      %6531 = vmatprep.subr.bf16.mxu0 0
      %6532 = vmatpush1.bf16.msra.mxu0 0
      %6533 = vmatprep.subr.bf16.mxu0 0
      %6534 = vmatpush1.bf16.msra.mxu0 0
      %6535 = vmatprep.subr.bf16.mxu0 0
      %6536 = vmatpush1.bf16.msra.mxu0 0
      %6537 = vmatprep.subr.bf16.mxu0 0
      %6538 = vmatpush1.bf16.msra.mxu0 0
      %6539 = vmatprep.subr.bf16.mxu0 0
      %6540 = vmatpush1.bf16.msra.mxu0 0
      %6541 = vmatprep.subr.bf16.mxu0 0
      %6542 = vmatpush1.bf16.msra.mxu0 0
      %6543 = vmatprep.subr.bf16.mxu0 0
      %6544 = vmatpush1.bf16.msra.mxu0 0
      %6545 = vmatprep.subr.bf16.mxu0 0
      %6546 = vmatpush1.bf16.msra.mxu0 0
      %6547 = vmatprep.subr.bf16.mxu0 0
      %6548 = vmatpush1.bf16.msra.mxu0 0
      %6549 = vmatprep.subr.bf16.mxu0 0
      %6550 = vmatpush1.bf16.msra.mxu0 0
      %6551 = vmatprep.mubr.bf16.mxu0 0
      %6552 = vmatmul.mubr.bf16.gmra.mrb[0].mxu0 %v6511
      %v6553 = vpop.f32.mrb[0].mxu0
      %v6554 = vadd.f32 0.0, %v6553
      %v6555 = vpop.f32.mrb[0].mxu0
      %v6556 = vpop.f32.mrb[0].mxu0
      %v6557 = vadd.f32 0.0, %v6556
      %v6558 = vpop.f32.mrb[0].mxu0
      %6559 = vmatprep.mubr.bf16.mxu0 0
      %6560 = vmatmul.mubr.bf16.gmra.mrb[0].mxu0 %v6514
      %v6561 = vpop.f32.mrb[0].mxu0
      %v6562 = vadd.f32 0.0, %v6561
      %v6563 = vpop.f32.mrb[0].mxu0
      %v6564 = vpop.f32.mrb[0].mxu0
      %v6565 = vpop.f32.mrb[0].mxu0
      %6566 = vdwg.mxu0
      %v6567 = vmul.f32 %v6554, %v6500
      %v6568 = vmul.f32 %v6557, %v6501
      %v6569 = vmul.f32 %v6562, %v6502
      %6573 = vrot.lane.b32.xlu0 %v6237, 8
      %v6574 = vpop.permute.xlu0 %6573
      %6575 = vrot.lane.b32.xlu0 %v6238, 8
      %v6576 = vpop.permute.xlu0 %6575
      %6577 = vrot.lane.b32.xlu0 %v6239, 8
      %v6578 = vpop.permute.xlu0 %6577
      %6585 = vrot.lane.b32.xlu0 %v6402, 16
      %v6586 = vpop.permute.xlu0 %6585
      %6587 = vrot.lane.b32.xlu0 %v6403, 16
      %v6588 = vpop.permute.xlu0 %6587
      %6589 = vrot.lane.b32.xlu0 %v6404, 16
      %v6590 = vpop.permute.xlu0 %6589
      %6597 = vrot.lane.b32.xlu0 %v6567, 24
      %v6598 = vpop.permute.xlu0 %6597
      %6599 = vrot.lane.b32.xlu0 %v6568, 24
      %v6600 = vpop.permute.xlu0 %6599
      %6601 = vrot.lane.b32.xlu0 %v6569, 24
      %v6602 = vpop.permute.xlu0 %6601
      %v6606 = vsel %vm1604, %v6072, %v6574
      %v6607 = vsel %vm1604, %v6073, %v6576
      %v6608 = vsel %vm1604, %v6074, %v6578
      %v6609 = vsel %vm2301, %v6606, %v6586
      %v6610 = vsel %vm2301, %v6607, %v6588
      %v6611 = vsel %vm2301, %v6608, %v6590
      %v6612 = vsel %vm2305, %v6609, %v6598
      %v6613 = vsel %vm2305, %v6610, %v6600
      %v6614 = vsel %vm2305, %v6611, %v6602
      %6615 = vst.msk [vmem:[#allocation2 + $0x66] sm:$0xff] %vm1175, %v6612
      %6616 = vst.msk [vmem:[#allocation2 + $0x6e] sm:$0xff] %vm1175, %v6613
      %6617 = vst.msk [vmem:[#allocation2 + $0x76] sm:$0x1] %vm2311, %v6614
      %v6618 = vpack.c.bf16 %v1586, %v1583
      %v6619 = vpack.c.bf16 %v1591, %v1591
      %vm6620 = vsmask.f32 4352
      %v6622 = vshrl.u32 %v6618, 16
      %v6624 = vrot.slane %v6622, 3
      %v6625 = vshll.u32 %v6618, 16
      %v6627 = vrot.slane %v6625, 4
      %v6628 = vor.u32 %v6624, %v6627
      %v6630 = vshrl.u32 %v6619, 16
      %v6632 = vrot.slane %v6630, 3
      %v6633 = vshll.u32 %v6619, 16
      %v6635 = vrot.slane %v6633, 4
      %v6636 = vor.u32 %v6632, %v6635
      %v6637 = vsel %vm6620, %v6628, %v6636
      %6638 = vrot.lane.b32.xlu0 %v6637, 96
      %v6639 = vpop.permute.xlu0 %6638
      %6640 = vrot.lane.b32.xlu0 %v6632, 96
      %v6641 = vpop.permute.xlu0 %6640
      %v6643 = vsel %vm1604, %v6637, 0
      %v6646 = vsel %vm1604, %v6632, 0
      %v6649 = vsel %vm1604, %v6639, 0
      %v6652 = vsel %vm1604, %v6641, 0
      %6654 = vmatprep.subr.bf16.mxu0 0
      %6655 = vmatpush1.bf16.xpose.msra.mxu0 %v6649
      %6656 = vmatprep.subr.bf16.mxu0 0
      %6657 = vmatpush1.bf16.xpose.msra.mxu0 %v6652
      %6658 = vmatprep.subr.bf16.mxu0 0
      %6659 = vmatpush1.bf16.xpose.msra.mxu0 0
      %6660 = vmatprep.subr.bf16.mxu0 0
      %6661 = vmatpush1.bf16.xpose.msra.mxu0 0
      %6662 = vmatprep.subr.bf16.mxu0 0
      %6663 = vmatpush1.bf16.xpose.msra.mxu0 0
      %6664 = vmatprep.subr.bf16.mxu0 0
      %6665 = vmatpush1.bf16.xpose.msra.mxu0 0
      %6666 = vmatprep.subr.bf16.mxu0 0
      %6667 = vmatpush1.bf16.xpose.msra.mxu0 0
      %6668 = vmatprep.subr.bf16.mxu0 0
      %6669 = vmatpush1.bf16.xpose.msra.mxu0 0
      %6670 = vmatprep.subr.bf16.mxu0 0
      %6671 = vmatpush1.bf16.xpose.msra.mxu0 0
      %6672 = vmatprep.subr.bf16.mxu0 0
      %6673 = vmatpush1.bf16.xpose.msra.mxu0 0
      %6674 = vmatprep.subr.bf16.mxu0 0
      %6675 = vmatpush1.bf16.xpose.msra.mxu0 0
      %6676 = vmatprep.subr.bf16.mxu0 0
      %6677 = vmatpush1.bf16.xpose.msra.mxu0 0
      %6678 = vmatprep.subr.bf16.mxu0 0
      %6679 = vmatpush1.bf16.xpose.msra.mxu0 0
      %6680 = vmatprep.subr.bf16.mxu0 0
      %6681 = vmatpush1.bf16.xpose.msra.mxu0 0
      %6682 = vmatprep.subr.bf16.mxu0 0
      %6683 = vmatpush1.bf16.xpose.msra.mxu0 0
      %6684 = vmatprep.subr.bf16.mxu0 0
      %6685 = vmatpush1.bf16.xpose.msra.mxu0 0
      %6686 = vmatprep.mubr.bf16.mxu0 0
      %6687 = vmatmul.mubr.bf16.gmra.mrb[0].mxu0 %v6643
      %v6688 = vpop.f32.mrb[0].mxu0
      %v6689 = vadd.f32 0.0, %v6688
      %v6690 = vpop.f32.mrb[0].mxu0
      %v6691 = vpop.f32.mrb[0].mxu0
      %v6692 = vadd.f32 0.0, %v6691
      %v6693 = vpop.f32.mrb[0].mxu0
      %6694 = vmatprep.mubr.bf16.mxu0 0
      %6695 = vmatmul.mubr.bf16.gmra.mrb[0].mxu0 %v6646
      %v6696 = vpop.f32.mrb[0].mxu0
      %v6697 = vadd.f32 0.0, %v6696
      %v6698 = vpop.f32.mrb[0].mxu0
      %v6699 = vpop.f32.mrb[0].mxu0
      %v6700 = vpop.f32.mrb[0].mxu0
      %6701 = vdwg.mxu0
      %v6702 = vsel %vm1665, %v6689, -inf
      %6703 = vmax.xlane.f32.xlu0 %v6702
      %v6704 = vpop.xlane.xlu0 %6703
      %v6705 = vsel %vm1665, %v6692, -inf
      %6706 = vmax.xlane.f32.xlu0 %v6705
      %v6707 = vpop.xlane.xlu0 %6706
      %v6708 = vsel %vm1672, %v6697, -inf
      %6709 = vmax.xlane.f32.xlu0 %v6708
      %v6710 = vpop.xlane.xlu0 %6709
      %v6711 = vsub.f32 %v6689, %v6704
      %v6712 = vsub.f32 %v6692, %v6707
      %v6713 = vsub.f32 %v6697, %v6710
      %v6714 = vmul.f32 %v6711, 1.442695
      %v6715 = vpow.pop %v6714
      %v6716 = vmul.f32 %v6712, 1.442695
      %v6717 = vpow.pop %v6716
      %v6718 = vmul.f32 %v6713, 1.442695
      %v6719 = vpow.pop %v6718
      %v6720 = vsel %vm1665, %v6715, 0.0
      %6721 = vadd.xlane.f32.xlu0 %v6720
      %v6722 = vpop.xlane.xlu0 %6721
      %v6723 = vsel %vm1665, %v6717, 0.0
      %6724 = vadd.xlane.f32.xlu0 %v6723
      %v6725 = vpop.xlane.xlu0 %6724
      %v6726 = vsel %vm1672, %v6719, 0.0
      %6727 = vadd.xlane.f32.xlu0 %v6726
      %v6728 = vpop.xlane.xlu0 %6727
      %v6729 = vrcp.pop %v6722
      %v6730 = vrcp.pop %v6725
      %v6731 = vrcp.pop %v6728
      %v6732 = vpack.c.bf16 %v6717, %v6715
      %v6733 = vpack.c.bf16 %v6719, %v6719
      %6734 = vrot.lane.b32.xlu0 %v6637, 64
      %v6735 = vpop.permute.xlu0 %6734
      %6736 = vrot.lane.b32.xlu0 %v6632, 64
      %v6737 = vpop.permute.xlu0 %6736
      %v6740 = vsel %vm1665, %v6732, 0
      %v6743 = vsel %vm1665, %v6733, 0
      %v6746 = vand.u32 %v6737, %v1712
      %6748 = vmatprep.subr.bf16.mxu0 0
      %6749 = vmatpush1.bf16.msra.mxu0 %v6735
      %6750 = vmatprep.subr.bf16.mxu0 0
      %6751 = vmatpush1.bf16.msra.mxu0 %v6746
      %6752 = vmatprep.subr.bf16.mxu0 0
      %6753 = vmatpush1.bf16.msra.mxu0 0
      %6754 = vmatprep.subr.bf16.mxu0 0
      %6755 = vmatpush1.bf16.msra.mxu0 0
      %6756 = vmatprep.subr.bf16.mxu0 0
      %6757 = vmatpush1.bf16.msra.mxu0 0
      %6758 = vmatprep.subr.bf16.mxu0 0
      %6759 = vmatpush1.bf16.msra.mxu0 0
      %6760 = vmatprep.subr.bf16.mxu0 0
      %6761 = vmatpush1.bf16.msra.mxu0 0
      %6762 = vmatprep.subr.bf16.mxu0 0
      %6763 = vmatpush1.bf16.msra.mxu0 0
      %6764 = vmatprep.subr.bf16.mxu0 0
      %6765 = vmatpush1.bf16.msra.mxu0 0
      %6766 = vmatprep.subr.bf16.mxu0 0
      %6767 = vmatpush1.bf16.msra.mxu0 0
      %6768 = vmatprep.subr.bf16.mxu0 0
      %6769 = vmatpush1.bf16.msra.mxu0 0
      %6770 = vmatprep.subr.bf16.mxu0 0
      %6771 = vmatpush1.bf16.msra.mxu0 0
      %6772 = vmatprep.subr.bf16.mxu0 0
      %6773 = vmatpush1.bf16.msra.mxu0 0
      %6774 = vmatprep.subr.bf16.mxu0 0
      %6775 = vmatpush1.bf16.msra.mxu0 0
      %6776 = vmatprep.subr.bf16.mxu0 0
      %6777 = vmatpush1.bf16.msra.mxu0 0
      %6778 = vmatprep.subr.bf16.mxu0 0
      %6779 = vmatpush1.bf16.msra.mxu0 0
      %6780 = vmatprep.mubr.bf16.mxu0 0
      %6781 = vmatmul.mubr.bf16.gmra.mrb[0].mxu0 %v6740
      %v6782 = vpop.f32.mrb[0].mxu0
      %v6783 = vadd.f32 0.0, %v6782
      %v6784 = vpop.f32.mrb[0].mxu0
      %v6785 = vpop.f32.mrb[0].mxu0
      %v6786 = vadd.f32 0.0, %v6785
      %v6787 = vpop.f32.mrb[0].mxu0
      %6788 = vmatprep.mubr.bf16.mxu0 0
      %6789 = vmatmul.mubr.bf16.gmra.mrb[0].mxu0 %v6743
      %v6790 = vpop.f32.mrb[0].mxu0
      %v6791 = vadd.f32 0.0, %v6790
      %v6792 = vpop.f32.mrb[0].mxu0
      %v6793 = vpop.f32.mrb[0].mxu0
      %v6794 = vpop.f32.mrb[0].mxu0
      %6795 = vdwg.mxu0
      %v6796 = vmul.f32 %v6783, %v6729
      %v6797 = vmul.f32 %v6786, %v6730
      %v6798 = vmul.f32 %v6791, %v6731
      %6799 = vrot.lane.b32.xlu0 %v6637, 120
      %v6800 = vpop.permute.xlu0 %6799
      %6801 = vrot.lane.b32.xlu0 %v6632, 120
      %v6802 = vpop.permute.xlu0 %6801
      %6803 = vrot.lane.b32.xlu0 %v6637, 88
      %v6804 = vpop.permute.xlu0 %6803
      %6805 = vrot.lane.b32.xlu0 %v6632, 88
      %v6806 = vpop.permute.xlu0 %6805
      %v6808 = vsel %vm1604, %v6800, 0
      %v6811 = vsel %vm1604, %v6802, 0
      %v6814 = vsel %vm1604, %v6804, 0
      %v6817 = vsel %vm1604, %v6806, 0
      %6819 = vmatprep.subr.bf16.mxu0 0
      %6820 = vmatpush1.bf16.xpose.msra.mxu0 %v6814
      %6821 = vmatprep.subr.bf16.mxu0 0
      %6822 = vmatpush1.bf16.xpose.msra.mxu0 %v6817
      %6823 = vmatprep.subr.bf16.mxu0 0
      %6824 = vmatpush1.bf16.xpose.msra.mxu0 0
      %6825 = vmatprep.subr.bf16.mxu0 0
      %6826 = vmatpush1.bf16.xpose.msra.mxu0 0
      %6827 = vmatprep.subr.bf16.mxu0 0
      %6828 = vmatpush1.bf16.xpose.msra.mxu0 0
      %6829 = vmatprep.subr.bf16.mxu0 0
      %6830 = vmatpush1.bf16.xpose.msra.mxu0 0
      %6831 = vmatprep.subr.bf16.mxu0 0
      %6832 = vmatpush1.bf16.xpose.msra.mxu0 0
      %6833 = vmatprep.subr.bf16.mxu0 0
      %6834 = vmatpush1.bf16.xpose.msra.mxu0 0
      %6835 = vmatprep.subr.bf16.mxu0 0
      %6836 = vmatpush1.bf16.xpose.msra.mxu0 0
      %6837 = vmatprep.subr.bf16.mxu0 0
      %6838 = vmatpush1.bf16.xpose.msra.mxu0 0
      %6839 = vmatprep.subr.bf16.mxu0 0
      %6840 = vmatpush1.bf16.xpose.msra.mxu0 0
      %6841 = vmatprep.subr.bf16.mxu0 0
      %6842 = vmatpush1.bf16.xpose.msra.mxu0 0
      %6843 = vmatprep.subr.bf16.mxu0 0
      %6844 = vmatpush1.bf16.xpose.msra.mxu0 0
      %6845 = vmatprep.subr.bf16.mxu0 0
      %6846 = vmatpush1.bf16.xpose.msra.mxu0 0
      %6847 = vmatprep.subr.bf16.mxu0 0
      %6848 = vmatpush1.bf16.xpose.msra.mxu0 0
      %6849 = vmatprep.subr.bf16.mxu0 0
      %6850 = vmatpush1.bf16.xpose.msra.mxu0 0
      %6851 = vmatprep.mubr.bf16.mxu0 0
      %6852 = vmatmul.mubr.bf16.gmra.mrb[0].mxu0 %v6808
      %v6853 = vpop.f32.mrb[0].mxu0
      %v6854 = vadd.f32 0.0, %v6853
      %v6855 = vpop.f32.mrb[0].mxu0
      %v6856 = vpop.f32.mrb[0].mxu0
      %v6857 = vadd.f32 0.0, %v6856
      %v6858 = vpop.f32.mrb[0].mxu0
      %6859 = vmatprep.mubr.bf16.mxu0 0
      %6860 = vmatmul.mubr.bf16.gmra.mrb[0].mxu0 %v6811
      %v6861 = vpop.f32.mrb[0].mxu0
      %v6862 = vadd.f32 0.0, %v6861
      %v6863 = vpop.f32.mrb[0].mxu0
      %v6864 = vpop.f32.mrb[0].mxu0
      %v6865 = vpop.f32.mrb[0].mxu0
      %6866 = vdwg.mxu0
      %v6867 = vsel %vm1665, %v6854, -inf
      %6868 = vmax.xlane.f32.xlu0 %v6867
      %v6869 = vpop.xlane.xlu0 %6868
      %v6870 = vsel %vm1665, %v6857, -inf
      %6871 = vmax.xlane.f32.xlu0 %v6870
      %v6872 = vpop.xlane.xlu0 %6871
      %v6873 = vsel %vm1672, %v6862, -inf
      %6874 = vmax.xlane.f32.xlu0 %v6873
      %v6875 = vpop.xlane.xlu0 %6874
      %v6876 = vsub.f32 %v6854, %v6869
      %v6877 = vsub.f32 %v6857, %v6872
      %v6878 = vsub.f32 %v6862, %v6875
      %v6879 = vmul.f32 %v6876, 1.442695
      %v6880 = vpow.pop %v6879
      %v6881 = vmul.f32 %v6877, 1.442695
      %v6882 = vpow.pop %v6881
      %v6883 = vmul.f32 %v6878, 1.442695
      %v6884 = vpow.pop %v6883
      %v6885 = vsel %vm1665, %v6880, 0.0
      %6886 = vadd.xlane.f32.xlu0 %v6885
      %v6887 = vpop.xlane.xlu0 %6886
      %v6888 = vsel %vm1665, %v6882, 0.0
      %6889 = vadd.xlane.f32.xlu0 %v6888
      %v6890 = vpop.xlane.xlu0 %6889
      %v6891 = vsel %vm1672, %v6884, 0.0
      %6892 = vadd.xlane.f32.xlu0 %v6891
      %v6893 = vpop.xlane.xlu0 %6892
      %v6894 = vrcp.pop %v6887
      %v6895 = vrcp.pop %v6890
      %v6896 = vrcp.pop %v6893
      %v6897 = vpack.c.bf16 %v6882, %v6880
      %v6898 = vpack.c.bf16 %v6884, %v6884
      %6899 = vrot.lane.b32.xlu0 %v6637, 56
      %v6900 = vpop.permute.xlu0 %6899
      %6901 = vrot.lane.b32.xlu0 %v6632, 56
      %v6902 = vpop.permute.xlu0 %6901
      %v6905 = vsel %vm1665, %v6897, 0
      %v6908 = vsel %vm1665, %v6898, 0
      %v6911 = vand.u32 %v6902, %v1712
      %6913 = vmatprep.subr.bf16.mxu0 0
      %6914 = vmatpush1.bf16.msra.mxu0 %v6900
      %6915 = vmatprep.subr.bf16.mxu0 0
      %6916 = vmatpush1.bf16.msra.mxu0 %v6911
      %6917 = vmatprep.subr.bf16.mxu0 0
      %6918 = vmatpush1.bf16.msra.mxu0 0
      %6919 = vmatprep.subr.bf16.mxu0 0
      %6920 = vmatpush1.bf16.msra.mxu0 0
      %6921 = vmatprep.subr.bf16.mxu0 0
      %6922 = vmatpush1.bf16.msra.mxu0 0
      %6923 = vmatprep.subr.bf16.mxu0 0
      %6924 = vmatpush1.bf16.msra.mxu0 0
      %6925 = vmatprep.subr.bf16.mxu0 0
      %6926 = vmatpush1.bf16.msra.mxu0 0
      %6927 = vmatprep.subr.bf16.mxu0 0
      %6928 = vmatpush1.bf16.msra.mxu0 0
      %6929 = vmatprep.subr.bf16.mxu0 0
      %6930 = vmatpush1.bf16.msra.mxu0 0
      %6931 = vmatprep.subr.bf16.mxu0 0
      %6932 = vmatpush1.bf16.msra.mxu0 0
      %6933 = vmatprep.subr.bf16.mxu0 0
      %6934 = vmatpush1.bf16.msra.mxu0 0
      %6935 = vmatprep.subr.bf16.mxu0 0
      %6936 = vmatpush1.bf16.msra.mxu0 0
      %6937 = vmatprep.subr.bf16.mxu0 0
      %6938 = vmatpush1.bf16.msra.mxu0 0
      %6939 = vmatprep.subr.bf16.mxu0 0
      %6940 = vmatpush1.bf16.msra.mxu0 0
      %6941 = vmatprep.subr.bf16.mxu0 0
      %6942 = vmatpush1.bf16.msra.mxu0 0
      %6943 = vmatprep.subr.bf16.mxu0 0
      %6944 = vmatpush1.bf16.msra.mxu0 0
      %6945 = vmatprep.mubr.bf16.mxu0 0
      %6946 = vmatmul.mubr.bf16.gmra.mrb[0].mxu0 %v6905
      %v6947 = vpop.f32.mrb[0].mxu0
      %v6948 = vadd.f32 0.0, %v6947
      %v6949 = vpop.f32.mrb[0].mxu0
      %v6950 = vpop.f32.mrb[0].mxu0
      %v6951 = vadd.f32 0.0, %v6950
      %v6952 = vpop.f32.mrb[0].mxu0
      %6953 = vmatprep.mubr.bf16.mxu0 0
      %6954 = vmatmul.mubr.bf16.gmra.mrb[0].mxu0 %v6908
      %v6955 = vpop.f32.mrb[0].mxu0
      %v6956 = vadd.f32 0.0, %v6955
      %v6957 = vpop.f32.mrb[0].mxu0
      %v6958 = vpop.f32.mrb[0].mxu0
      %v6959 = vpop.f32.mrb[0].mxu0
      %6960 = vdwg.mxu0
      %v6961 = vmul.f32 %v6948, %v6894
      %v6962 = vmul.f32 %v6951, %v6895
      %v6963 = vmul.f32 %v6956, %v6896
      %6964 = vrot.lane.b32.xlu0 %v6637, 112
      %v6965 = vpop.permute.xlu0 %6964
      %6966 = vrot.lane.b32.xlu0 %v6632, 112
      %v6967 = vpop.permute.xlu0 %6966
      %6968 = vrot.lane.b32.xlu0 %v6637, 80
      %v6969 = vpop.permute.xlu0 %6968
      %6970 = vrot.lane.b32.xlu0 %v6632, 80
      %v6971 = vpop.permute.xlu0 %6970
      %v6973 = vsel %vm1604, %v6965, 0
      %v6976 = vsel %vm1604, %v6967, 0
      %v6979 = vsel %vm1604, %v6969, 0
      %v6982 = vsel %vm1604, %v6971, 0
      %6984 = vmatprep.subr.bf16.mxu0 0
      %6985 = vmatpush1.bf16.xpose.msra.mxu0 %v6979
      %6986 = vmatprep.subr.bf16.mxu0 0
      %6987 = vmatpush1.bf16.xpose.msra.mxu0 %v6982
      %6988 = vmatprep.subr.bf16.mxu0 0
      %6989 = vmatpush1.bf16.xpose.msra.mxu0 0
      %6990 = vmatprep.subr.bf16.mxu0 0
      %6991 = vmatpush1.bf16.xpose.msra.mxu0 0
      %6992 = vmatprep.subr.bf16.mxu0 0
      %6993 = vmatpush1.bf16.xpose.msra.mxu0 0
      %6994 = vmatprep.subr.bf16.mxu0 0
      %6995 = vmatpush1.bf16.xpose.msra.mxu0 0
      %6996 = vmatprep.subr.bf16.mxu0 0
      %6997 = vmatpush1.bf16.xpose.msra.mxu0 0
      %6998 = vmatprep.subr.bf16.mxu0 0
      %6999 = vmatpush1.bf16.xpose.msra.mxu0 0
      %7000 = vmatprep.subr.bf16.mxu0 0
      %7001 = vmatpush1.bf16.xpose.msra.mxu0 0
      %7002 = vmatprep.subr.bf16.mxu0 0
      %7003 = vmatpush1.bf16.xpose.msra.mxu0 0
      %7004 = vmatprep.subr.bf16.mxu0 0
      %7005 = vmatpush1.bf16.xpose.msra.mxu0 0
      %7006 = vmatprep.subr.bf16.mxu0 0
      %7007 = vmatpush1.bf16.xpose.msra.mxu0 0
      %7008 = vmatprep.subr.bf16.mxu0 0
      %7009 = vmatpush1.bf16.xpose.msra.mxu0 0
      %7010 = vmatprep.subr.bf16.mxu0 0
      %7011 = vmatpush1.bf16.xpose.msra.mxu0 0
      %7012 = vmatprep.subr.bf16.mxu0 0
      %7013 = vmatpush1.bf16.xpose.msra.mxu0 0
      %7014 = vmatprep.subr.bf16.mxu0 0
      %7015 = vmatpush1.bf16.xpose.msra.mxu0 0
      %7016 = vmatprep.mubr.bf16.mxu0 0
      %7017 = vmatmul.mubr.bf16.gmra.mrb[0].mxu0 %v6973
      %v7018 = vpop.f32.mrb[0].mxu0
      %v7019 = vadd.f32 0.0, %v7018
      %v7020 = vpop.f32.mrb[0].mxu0
      %v7021 = vpop.f32.mrb[0].mxu0
      %v7022 = vadd.f32 0.0, %v7021
      %v7023 = vpop.f32.mrb[0].mxu0
      %7024 = vmatprep.mubr.bf16.mxu0 0
      %7025 = vmatmul.mubr.bf16.gmra.mrb[0].mxu0 %v6976
      %v7026 = vpop.f32.mrb[0].mxu0
      %v7027 = vadd.f32 0.0, %v7026
      %v7028 = vpop.f32.mrb[0].mxu0
      %v7029 = vpop.f32.mrb[0].mxu0
      %v7030 = vpop.f32.mrb[0].mxu0
      %7031 = vdwg.mxu0
      %v7032 = vsel %vm1665, %v7019, -inf
      %7033 = vmax.xlane.f32.xlu0 %v7032
      %v7034 = vpop.xlane.xlu0 %7033
      %v7035 = vsel %vm1665, %v7022, -inf
      %7036 = vmax.xlane.f32.xlu0 %v7035
      %v7037 = vpop.xlane.xlu0 %7036
      %v7038 = vsel %vm1672, %v7027, -inf
      %7039 = vmax.xlane.f32.xlu0 %v7038
      %v7040 = vpop.xlane.xlu0 %7039
      %v7041 = vsub.f32 %v7019, %v7034
      %v7042 = vsub.f32 %v7022, %v7037
      %v7043 = vsub.f32 %v7027, %v7040
      %v7044 = vmul.f32 %v7041, 1.442695
      %v7045 = vpow.pop %v7044
      %v7046 = vmul.f32 %v7042, 1.442695
      %v7047 = vpow.pop %v7046
      %v7048 = vmul.f32 %v7043, 1.442695
      %v7049 = vpow.pop %v7048
      %v7050 = vsel %vm1665, %v7045, 0.0
      %7051 = vadd.xlane.f32.xlu0 %v7050
      %v7052 = vpop.xlane.xlu0 %7051
      %v7053 = vsel %vm1665, %v7047, 0.0
      %7054 = vadd.xlane.f32.xlu0 %v7053
      %v7055 = vpop.xlane.xlu0 %7054
      %v7056 = vsel %vm1672, %v7049, 0.0
      %7057 = vadd.xlane.f32.xlu0 %v7056
      %v7058 = vpop.xlane.xlu0 %7057
      %v7059 = vrcp.pop %v7052
      %v7060 = vrcp.pop %v7055
      %v7061 = vrcp.pop %v7058
      %v7062 = vpack.c.bf16 %v7047, %v7045
      %v7063 = vpack.c.bf16 %v7049, %v7049
      %7064 = vrot.lane.b32.xlu0 %v6637, 48
      %v7065 = vpop.permute.xlu0 %7064
      %7066 = vrot.lane.b32.xlu0 %v6632, 48
      %v7067 = vpop.permute.xlu0 %7066
      %v7070 = vsel %vm1665, %v7062, 0
      %v7073 = vsel %vm1665, %v7063, 0
      %v7076 = vand.u32 %v7067, %v1712
      %7078 = vmatprep.subr.bf16.mxu0 0
      %7079 = vmatpush1.bf16.msra.mxu0 %v7065
      %7080 = vmatprep.subr.bf16.mxu0 0
      %7081 = vmatpush1.bf16.msra.mxu0 %v7076
      %7082 = vmatprep.subr.bf16.mxu0 0
      %7083 = vmatpush1.bf16.msra.mxu0 0
      %7084 = vmatprep.subr.bf16.mxu0 0
      %7085 = vmatpush1.bf16.msra.mxu0 0
      %7086 = vmatprep.subr.bf16.mxu0 0
      %7087 = vmatpush1.bf16.msra.mxu0 0
      %7088 = vmatprep.subr.bf16.mxu0 0
      %7089 = vmatpush1.bf16.msra.mxu0 0
      %7090 = vmatprep.subr.bf16.mxu0 0
      %7091 = vmatpush1.bf16.msra.mxu0 0
      %7092 = vmatprep.subr.bf16.mxu0 0
      %7093 = vmatpush1.bf16.msra.mxu0 0
      %7094 = vmatprep.subr.bf16.mxu0 0
      %7095 = vmatpush1.bf16.msra.mxu0 0
      %7096 = vmatprep.subr.bf16.mxu0 0
      %7097 = vmatpush1.bf16.msra.mxu0 0
      %7098 = vmatprep.subr.bf16.mxu0 0
      %7099 = vmatpush1.bf16.msra.mxu0 0
      %7100 = vmatprep.subr.bf16.mxu0 0
      %7101 = vmatpush1.bf16.msra.mxu0 0
      %7102 = vmatprep.subr.bf16.mxu0 0
      %7103 = vmatpush1.bf16.msra.mxu0 0
      %7104 = vmatprep.subr.bf16.mxu0 0
      %7105 = vmatpush1.bf16.msra.mxu0 0
      %7106 = vmatprep.subr.bf16.mxu0 0
      %7107 = vmatpush1.bf16.msra.mxu0 0
      %7108 = vmatprep.subr.bf16.mxu0 0
      %7109 = vmatpush1.bf16.msra.mxu0 0
      %7110 = vmatprep.mubr.bf16.mxu0 0
      %7111 = vmatmul.mubr.bf16.gmra.mrb[0].mxu0 %v7070
      %v7112 = vpop.f32.mrb[0].mxu0
      %v7113 = vadd.f32 0.0, %v7112
      %v7114 = vpop.f32.mrb[0].mxu0
      %v7115 = vpop.f32.mrb[0].mxu0
      %v7116 = vadd.f32 0.0, %v7115
      %v7117 = vpop.f32.mrb[0].mxu0
      %7118 = vmatprep.mubr.bf16.mxu0 0
      %7119 = vmatmul.mubr.bf16.gmra.mrb[0].mxu0 %v7073
      %v7120 = vpop.f32.mrb[0].mxu0
      %v7121 = vadd.f32 0.0, %v7120
      %v7122 = vpop.f32.mrb[0].mxu0
      %v7123 = vpop.f32.mrb[0].mxu0
      %v7124 = vpop.f32.mrb[0].mxu0
      %7125 = vdwg.mxu0
      %v7126 = vmul.f32 %v7113, %v7059
      %v7127 = vmul.f32 %v7116, %v7060
      %v7128 = vmul.f32 %v7121, %v7061
      %7129 = vrot.lane.b32.xlu0 %v6637, 104
      %v7130 = vpop.permute.xlu0 %7129
      %7131 = vrot.lane.b32.xlu0 %v6632, 104
      %v7132 = vpop.permute.xlu0 %7131
      %7133 = vrot.lane.b32.xlu0 %v6637, 72
      %v7134 = vpop.permute.xlu0 %7133
      %7135 = vrot.lane.b32.xlu0 %v6632, 72
      %v7136 = vpop.permute.xlu0 %7135
      %v7138 = vsel %vm1604, %v7130, 0
      %v7141 = vsel %vm1604, %v7132, 0
      %v7144 = vsel %vm1604, %v7134, 0
      %v7147 = vsel %vm1604, %v7136, 0
      %7149 = vmatprep.subr.bf16.mxu0 0
      %7150 = vmatpush1.bf16.xpose.msra.mxu0 %v7144
      %7151 = vmatprep.subr.bf16.mxu0 0
      %7152 = vmatpush1.bf16.xpose.msra.mxu0 %v7147
      %7153 = vmatprep.subr.bf16.mxu0 0
      %7154 = vmatpush1.bf16.xpose.msra.mxu0 0
      %7155 = vmatprep.subr.bf16.mxu0 0
      %7156 = vmatpush1.bf16.xpose.msra.mxu0 0
      %7157 = vmatprep.subr.bf16.mxu0 0
      %7158 = vmatpush1.bf16.xpose.msra.mxu0 0
      %7159 = vmatprep.subr.bf16.mxu0 0
      %7160 = vmatpush1.bf16.xpose.msra.mxu0 0
      %7161 = vmatprep.subr.bf16.mxu0 0
      %7162 = vmatpush1.bf16.xpose.msra.mxu0 0
      %7163 = vmatprep.subr.bf16.mxu0 0
      %7164 = vmatpush1.bf16.xpose.msra.mxu0 0
      %7165 = vmatprep.subr.bf16.mxu0 0
      %7166 = vmatpush1.bf16.xpose.msra.mxu0 0
      %7167 = vmatprep.subr.bf16.mxu0 0
      %7168 = vmatpush1.bf16.xpose.msra.mxu0 0
      %7169 = vmatprep.subr.bf16.mxu0 0
      %7170 = vmatpush1.bf16.xpose.msra.mxu0 0
      %7171 = vmatprep.subr.bf16.mxu0 0
      %7172 = vmatpush1.bf16.xpose.msra.mxu0 0
      %7173 = vmatprep.subr.bf16.mxu0 0
      %7174 = vmatpush1.bf16.xpose.msra.mxu0 0
      %7175 = vmatprep.subr.bf16.mxu0 0
      %7176 = vmatpush1.bf16.xpose.msra.mxu0 0
      %7177 = vmatprep.subr.bf16.mxu0 0
      %7178 = vmatpush1.bf16.xpose.msra.mxu0 0
      %7179 = vmatprep.subr.bf16.mxu0 0
      %7180 = vmatpush1.bf16.xpose.msra.mxu0 0
      %7181 = vmatprep.mubr.bf16.mxu0 0
      %7182 = vmatmul.mubr.bf16.gmra.mrb[0].mxu0 %v7138
      %v7183 = vpop.f32.mrb[0].mxu0
      %v7184 = vadd.f32 0.0, %v7183
      %v7185 = vpop.f32.mrb[0].mxu0
      %v7186 = vpop.f32.mrb[0].mxu0
      %v7187 = vadd.f32 0.0, %v7186
      %v7188 = vpop.f32.mrb[0].mxu0
      %7189 = vmatprep.mubr.bf16.mxu0 0
      %7190 = vmatmul.mubr.bf16.gmra.mrb[0].mxu0 %v7141
      %v7191 = vpop.f32.mrb[0].mxu0
      %v7192 = vadd.f32 0.0, %v7191
      %v7193 = vpop.f32.mrb[0].mxu0
      %v7194 = vpop.f32.mrb[0].mxu0
      %v7195 = vpop.f32.mrb[0].mxu0
      %7196 = vdwg.mxu0
      %v7197 = vsel %vm1665, %v7184, -inf
      %7198 = vmax.xlane.f32.xlu0 %v7197
      %v7199 = vpop.xlane.xlu0 %7198
      %v7200 = vsel %vm1665, %v7187, -inf
      %7201 = vmax.xlane.f32.xlu0 %v7200
      %v7202 = vpop.xlane.xlu0 %7201
      %v7203 = vsel %vm1672, %v7192, -inf
      %7204 = vmax.xlane.f32.xlu0 %v7203
      %v7205 = vpop.xlane.xlu0 %7204
      %v7206 = vsub.f32 %v7184, %v7199
      %v7207 = vsub.f32 %v7187, %v7202
      %v7208 = vsub.f32 %v7192, %v7205
      %v7209 = vmul.f32 %v7206, 1.442695
      %v7210 = vpow.pop %v7209
      %v7211 = vmul.f32 %v7207, 1.442695
      %v7212 = vpow.pop %v7211
      %v7213 = vmul.f32 %v7208, 1.442695
      %v7214 = vpow.pop %v7213
      %v7215 = vsel %vm1665, %v7210, 0.0
      %7216 = vadd.xlane.f32.xlu0 %v7215
      %v7217 = vpop.xlane.xlu0 %7216
      %v7218 = vsel %vm1665, %v7212, 0.0
      %7219 = vadd.xlane.f32.xlu0 %v7218
      %v7220 = vpop.xlane.xlu0 %7219
      %v7221 = vsel %vm1672, %v7214, 0.0
      %7222 = vadd.xlane.f32.xlu0 %v7221
      %v7223 = vpop.xlane.xlu0 %7222
      %v7224 = vrcp.pop %v7217
      %v7225 = vrcp.pop %v7220
      %v7226 = vrcp.pop %v7223
      %v7227 = vpack.c.bf16 %v7212, %v7210
      %v7228 = vpack.c.bf16 %v7214, %v7214
      %7229 = vrot.lane.b32.xlu0 %v6637, 40
      %v7230 = vpop.permute.xlu0 %7229
      %7231 = vrot.lane.b32.xlu0 %v6632, 40
      %v7232 = vpop.permute.xlu0 %7231
      %v7235 = vsel %vm1665, %v7227, 0
      %v7238 = vsel %vm1665, %v7228, 0
      %v7241 = vand.u32 %v7232, %v1712
      %7243 = vmatprep.subr.bf16.mxu0 0
      %7244 = vmatpush1.bf16.msra.mxu0 %v7230
      %7245 = vmatprep.subr.bf16.mxu0 0
      %7246 = vmatpush1.bf16.msra.mxu0 %v7241
      %7247 = vmatprep.subr.bf16.mxu0 0
      %7248 = vmatpush1.bf16.msra.mxu0 0
      %7249 = vmatprep.subr.bf16.mxu0 0
      %7250 = vmatpush1.bf16.msra.mxu0 0
      %7251 = vmatprep.subr.bf16.mxu0 0
      %7252 = vmatpush1.bf16.msra.mxu0 0
      %7253 = vmatprep.subr.bf16.mxu0 0
      %7254 = vmatpush1.bf16.msra.mxu0 0
      %7255 = vmatprep.subr.bf16.mxu0 0
      %7256 = vmatpush1.bf16.msra.mxu0 0
      %7257 = vmatprep.subr.bf16.mxu0 0
      %7258 = vmatpush1.bf16.msra.mxu0 0
      %7259 = vmatprep.subr.bf16.mxu0 0
      %7260 = vmatpush1.bf16.msra.mxu0 0
      %7261 = vmatprep.subr.bf16.mxu0 0
      %7262 = vmatpush1.bf16.msra.mxu0 0
      %7263 = vmatprep.subr.bf16.mxu0 0
      %7264 = vmatpush1.bf16.msra.mxu0 0
      %7265 = vmatprep.subr.bf16.mxu0 0
      %7266 = vmatpush1.bf16.msra.mxu0 0
      %7267 = vmatprep.subr.bf16.mxu0 0
      %7268 = vmatpush1.bf16.msra.mxu0 0
      %7269 = vmatprep.subr.bf16.mxu0 0
      %7270 = vmatpush1.bf16.msra.mxu0 0
      %7271 = vmatprep.subr.bf16.mxu0 0
      %7272 = vmatpush1.bf16.msra.mxu0 0
      %7273 = vmatprep.subr.bf16.mxu0 0
      %7274 = vmatpush1.bf16.msra.mxu0 0
      %7275 = vmatprep.mubr.bf16.mxu0 0
      %7276 = vmatmul.mubr.bf16.gmra.mrb[0].mxu0 %v7235
      %v7277 = vpop.f32.mrb[0].mxu0
      %v7278 = vadd.f32 0.0, %v7277
      %v7279 = vpop.f32.mrb[0].mxu0
      %v7280 = vpop.f32.mrb[0].mxu0
      %v7281 = vadd.f32 0.0, %v7280
      %v7282 = vpop.f32.mrb[0].mxu0
      %7283 = vmatprep.mubr.bf16.mxu0 0
      %7284 = vmatmul.mubr.bf16.gmra.mrb[0].mxu0 %v7238
      %v7285 = vpop.f32.mrb[0].mxu0
      %v7286 = vadd.f32 0.0, %v7285
      %v7287 = vpop.f32.mrb[0].mxu0
      %v7288 = vpop.f32.mrb[0].mxu0
      %v7289 = vpop.f32.mrb[0].mxu0
      %7290 = vdwg.mxu0
      %v7291 = vmul.f32 %v7278, %v7224
      %v7292 = vmul.f32 %v7281, %v7225
      %v7293 = vmul.f32 %v7286, %v7226
      %7297 = vrot.lane.b32.xlu0 %v6961, 8
      %v7298 = vpop.permute.xlu0 %7297
      %7299 = vrot.lane.b32.xlu0 %v6962, 8
      %v7300 = vpop.permute.xlu0 %7299
      %7301 = vrot.lane.b32.xlu0 %v6963, 8
      %v7302 = vpop.permute.xlu0 %7301
      %7309 = vrot.lane.b32.xlu0 %v7126, 16
      %v7310 = vpop.permute.xlu0 %7309
      %7311 = vrot.lane.b32.xlu0 %v7127, 16
      %v7312 = vpop.permute.xlu0 %7311
      %7313 = vrot.lane.b32.xlu0 %v7128, 16
      %v7314 = vpop.permute.xlu0 %7313
      %7321 = vrot.lane.b32.xlu0 %v7291, 24
      %v7322 = vpop.permute.xlu0 %7321
      %7323 = vrot.lane.b32.xlu0 %v7292, 24
      %v7324 = vpop.permute.xlu0 %7323
      %7325 = vrot.lane.b32.xlu0 %v7293, 24
      %v7326 = vpop.permute.xlu0 %7325
      %v7330 = vsel %vm1604, %v6796, %v7298
      %v7331 = vsel %vm1604, %v6797, %v7300
      %v7332 = vsel %vm1604, %v6798, %v7302
      %v7333 = vsel %vm2301, %v7330, %v7310
      %v7334 = vsel %vm2301, %v7331, %v7312
      %v7335 = vsel %vm2301, %v7332, %v7314
      %v7336 = vsel %vm2305, %v7333, %v7322
      %v7337 = vsel %vm2305, %v7334, %v7324
      %v7338 = vsel %vm2305, %v7335, %v7326
      %7339 = vst.msk [vmem:[#allocation2 + $0x77] sm:$0xff] %vm1175, %v7336
      %7340 = vst.msk [vmem:[#allocation2 + $0x7f] sm:$0xff] %vm1175, %v7337
      %7341 = vst.msk [vmem:[#allocation2 + $0x87] sm:$0x1] %vm2311, %v7338
      %v7342 = vld [vmem:[#allocation2] sm:$0xff]
      %v7343 = vld [vmem:[#allocation2 + $0x8] sm:$0xff]
      %v7344 = vld [vmem:[#allocation2 + $0x10] sm:$0xff]
      %v7345 = vld [vmem:[#allocation2 + $0x18] sm:$0xff]
      %v7346 = vld [vmem:[#allocation2 + $0x20] sm:$0xff]
      %v7347 = vld [vmem:[#allocation2 + $0x28] sm:$0xff]
      %v7348 = vld [vmem:[#allocation2 + $0x30] sm:$0xff]
      %v7349 = vld [vmem:[#allocation2 + $0x38] sm:$0xff]
      %v7350 = vld [vmem:[#allocation2 + $0x40] sm:$0xff]
      %v7351 = vld [vmem:[#allocation2 + $0x48] sm:$0xff]
      %v7352 = vld [vmem:[#allocation2 + $0x50] sm:$0xff]
      %v7353 = vld [vmem:[#allocation2 + $0x58] sm:$0xff]
      %v7354 = vld [vmem:[#allocation2 + $0x60] sm:$0xff]
      %v7355 = vld [vmem:[#allocation2 + $0x68] sm:$0xff]
      %v7356 = vld [vmem:[#allocation2 + $0x70] sm:$0xff]
      %v7357 = vld [vmem:[#allocation2 + $0x78] sm:$0xff]
      %v7358 = vld [vmem:[#allocation2 + $0x80] sm:$0xff]
      %v7359 = vpack.c.bf16 %v7343, %v7342
      %v7360 = vpack.c.bf16 %v7345, %v7344
      %v7361 = vpack.c.bf16 %v7347, %v7346
      %v7362 = vpack.c.bf16 %v7349, %v7348
      %v7363 = vpack.c.bf16 %v7351, %v7350
      %v7364 = vpack.c.bf16 %v7353, %v7352
      %v7365 = vpack.c.bf16 %v7355, %v7354
      %v7366 = vpack.c.bf16 %v7357, %v7356
      %v7367 = vpack.c.bf16 %v7358, %v7358
      %v7368 = vld [vmem:[%s3] sm:$0xf]
      %v7369 = vld [vmem:[%s3 + $0x4] sm:$0xf]
      %v7370 = vld [vmem:[%s3 + $0x8] sm:$0xf]
      %v7371 = vld [vmem:[%s3 + $0xc] sm:$0xf]
      %v7376 = vunpack.c.l.b16 %v7368
      %v7377 = vunpack.c.l.b16 %v7369
      %v7378 = vunpack.c.l.b16 %v7370
      %v7379 = vunpack.c.l.b16 %v7371
      %v7380 = vpack.c.b16 %v7377, %v7376
      %v7381 = vpack.c.b16 %v7379, %v7378
      %v7385 = vsel %vm1175, %v7359, 0
      %v7388 = vsel %vm1175, %v7360, 0
      %v7391 = vsel %vm1175, %v7361, 0
      %v7394 = vsel %vm1175, %v7362, 0
      %v7397 = vsel %vm1175, %v7363, 0
      %v7400 = vsel %vm1175, %v7364, 0
      %v7403 = vsel %vm1175, %v7365, 0
      %v7406 = vsel %vm1175, %v7366, 0
      %v7409 = vsel %vm1175, %v7367, 0
      %7411 = vmatprep.subr.bf16.mxu0 0
      %7412 = vmatpush1.bf16.msra.mxu0 %v7380
      %7413 = vmatprep.subr.bf16.mxu0 0
      %7414 = vmatpush1.bf16.msra.mxu0 %v7381
      %7415 = vmatprep.subr.bf16.mxu0 0
      %7416 = vmatpush1.bf16.msra.mxu0 0
      %7417 = vmatprep.subr.bf16.mxu0 0
      %7418 = vmatpush1.bf16.msra.mxu0 0
      %7419 = vmatprep.subr.bf16.mxu0 0
      %7420 = vmatpush1.bf16.msra.mxu0 0
      %7421 = vmatprep.subr.bf16.mxu0 0
      %7422 = vmatpush1.bf16.msra.mxu0 0
      %7423 = vmatprep.subr.bf16.mxu0 0
      %7424 = vmatpush1.bf16.msra.mxu0 0
      %7425 = vmatprep.subr.bf16.mxu0 0
      %7426 = vmatpush1.bf16.msra.mxu0 0
      %7427 = vmatprep.subr.bf16.mxu0 0
      %7428 = vmatpush1.bf16.msra.mxu0 0
      %7429 = vmatprep.subr.bf16.mxu0 0
      %7430 = vmatpush1.bf16.msra.mxu0 0
      %7431 = vmatprep.subr.bf16.mxu0 0
      %7432 = vmatpush1.bf16.msra.mxu0 0
      %7433 = vmatprep.subr.bf16.mxu0 0
      %7434 = vmatpush1.bf16.msra.mxu0 0
      %7435 = vmatprep.subr.bf16.mxu0 0
      %7436 = vmatpush1.bf16.msra.mxu0 0
      %7437 = vmatprep.subr.bf16.mxu0 0
      %7438 = vmatpush1.bf16.msra.mxu0 0
      %7439 = vmatprep.subr.bf16.mxu0 0
      %7440 = vmatpush1.bf16.msra.mxu0 0
      %7441 = vmatprep.subr.bf16.mxu0 0
      %7442 = vmatpush1.bf16.msra.mxu0 0
      %7443 = vmatprep.mubr.bf16.mxu0 0
      %7444 = vmatmul.mubr.bf16.gmra.mrb[0].mxu0 %v7385
      %v7445 = vpop.f32.mrb[0].mxu0
      %v7446 = vadd.f32 0.0, %v7445
      %v7447 = vpop.f32.mrb[0].mxu0
      %v7448 = vpop.f32.mrb[0].mxu0
      %v7449 = vadd.f32 0.0, %v7448
      %v7450 = vpop.f32.mrb[0].mxu0
      %7451 = vmatprep.mubr.bf16.mxu0 0
      %7452 = vmatmul.mubr.bf16.gmra.mrb[0].mxu0 %v7388
      %v7453 = vpop.f32.mrb[0].mxu0
      %v7454 = vadd.f32 0.0, %v7453
      %v7455 = vpop.f32.mrb[0].mxu0
      %v7456 = vpop.f32.mrb[0].mxu0
      %v7457 = vadd.f32 0.0, %v7456
      %v7458 = vpop.f32.mrb[0].mxu0
      %7459 = vmatprep.mubr.bf16.mxu0 0
      %7460 = vmatmul.mubr.bf16.gmra.mrb[0].mxu0 %v7391
      %v7461 = vpop.f32.mrb[0].mxu0
      %v7462 = vadd.f32 0.0, %v7461
      %v7463 = vpop.f32.mrb[0].mxu0
      %v7464 = vpop.f32.mrb[0].mxu0
      %v7465 = vadd.f32 0.0, %v7464
      %v7466 = vpop.f32.mrb[0].mxu0
      %7467 = vmatprep.mubr.bf16.mxu0 0
      %7468 = vmatmul.mubr.bf16.gmra.mrb[0].mxu0 %v7394
      %v7469 = vpop.f32.mrb[0].mxu0
      %v7470 = vadd.f32 0.0, %v7469
      %v7471 = vpop.f32.mrb[0].mxu0
      %v7472 = vpop.f32.mrb[0].mxu0
      %v7473 = vadd.f32 0.0, %v7472
      %v7474 = vpop.f32.mrb[0].mxu0
      %7475 = vmatprep.mubr.bf16.mxu0 0
      %7476 = vmatmul.mubr.bf16.gmra.mrb[0].mxu0 %v7397
      %v7477 = vpop.f32.mrb[0].mxu0
      %v7478 = vadd.f32 0.0, %v7477
      %v7479 = vpop.f32.mrb[0].mxu0
      %v7480 = vpop.f32.mrb[0].mxu0
      %v7481 = vadd.f32 0.0, %v7480
      %v7482 = vpop.f32.mrb[0].mxu0
      %7483 = vmatprep.mubr.bf16.mxu0 0
      %7484 = vmatmul.mubr.bf16.gmra.mrb[0].mxu0 %v7400
      %v7485 = vpop.f32.mrb[0].mxu0
      %v7486 = vadd.f32 0.0, %v7485
      %v7487 = vpop.f32.mrb[0].mxu0
      %v7488 = vpop.f32.mrb[0].mxu0
      %v7489 = vadd.f32 0.0, %v7488
      %v7490 = vpop.f32.mrb[0].mxu0
      %7491 = vmatprep.mubr.bf16.mxu0 0
      %7492 = vmatmul.mubr.bf16.gmra.mrb[0].mxu0 %v7403
      %v7493 = vpop.f32.mrb[0].mxu0
      %v7494 = vadd.f32 0.0, %v7493
      %v7495 = vpop.f32.mrb[0].mxu0
      %v7496 = vpop.f32.mrb[0].mxu0
      %v7497 = vadd.f32 0.0, %v7496
      %v7498 = vpop.f32.mrb[0].mxu0
      %7499 = vmatprep.mubr.bf16.mxu0 0
      %7500 = vmatmul.mubr.bf16.gmra.mrb[0].mxu0 %v7406
      %v7501 = vpop.f32.mrb[0].mxu0
      %v7502 = vadd.f32 0.0, %v7501
      %v7503 = vpop.f32.mrb[0].mxu0
      %v7504 = vpop.f32.mrb[0].mxu0
      %v7505 = vadd.f32 0.0, %v7504
      %v7506 = vpop.f32.mrb[0].mxu0
      %7507 = vmatprep.mubr.bf16.mxu0 0
      %7508 = vmatmul.mubr.bf16.gmra.mrb[0].mxu0 %v7409
      %v7509 = vpop.f32.mrb[0].mxu0
      %v7510 = vadd.f32 0.0, %v7509
      %v7511 = vpop.f32.mrb[0].mxu0
      %v7512 = vpop.f32.mrb[0].mxu0
      %v7513 = vpop.f32.mrb[0].mxu0
      %7514 = vdwg.mxu0
      %v7515 = vadd.f32 %v375, %v7446
      %v7516 = vadd.f32 %v376, %v7449
      %v7517 = vadd.f32 %v377, %v7454
      %v7518 = vadd.f32 %v378, %v7457
      %v7519 = vadd.f32 %v379, %v7462
      %v7520 = vadd.f32 %v380, %v7465
      %v7521 = vadd.f32 %v381, %v7470
      %v7522 = vadd.f32 %v382, %v7473
      %v7523 = vadd.f32 %v383, %v7478
      %v7524 = vadd.f32 %v384, %v7481
      %v7525 = vadd.f32 %v385, %v7486
      %v7526 = vadd.f32 %v386, %v7489
      %v7527 = vadd.f32 %v387, %v7494
      %v7528 = vadd.f32 %v388, %v7497
      %v7529 = vadd.f32 %v389, %v7502
      %v7530 = vadd.f32 %v390, %v7505
      %v7531 = vadd.f32 %v391, %v7510
      %v7532 = vlaneseq
      %v7533 = vshrl.u32 %v7532, 7
      %v7534 = vsub.s32 0, %v7533
      %v7535 = vrot.slane %v366, %v7534
      %v7536 = vadd.f32 %v7515, %v7535
      %v7537 = vadd.f32 %v7516, %v7535
      %v7538 = vadd.f32 %v7517, %v7535
      %v7539 = vadd.f32 %v7518, %v7535
      %v7540 = vadd.f32 %v7519, %v7535
      %v7541 = vadd.f32 %v7520, %v7535
      %v7542 = vadd.f32 %v7521, %v7535
      %v7543 = vadd.f32 %v7522, %v7535
      %v7544 = vadd.f32 %v7523, %v7535
      %v7545 = vadd.f32 %v7524, %v7535
      %v7546 = vadd.f32 %v7525, %v7535
      %v7547 = vadd.f32 %v7526, %v7535
      %v7548 = vadd.f32 %v7527, %v7535
      %v7549 = vadd.f32 %v7528, %v7535
      %v7550 = vadd.f32 %v7529, %v7535
      %v7551 = vadd.f32 %v7530, %v7535
      %v7552 = vadd.f32 %v7531, %v7535
      %v7553 = vpack.c.bf16 %v7537, %v7536
      %v7554 = vpack.c.bf16 %v7539, %v7538
      %v7555 = vpack.c.bf16 %v7541, %v7540
      %v7556 = vpack.c.bf16 %v7543, %v7542
      %v7557 = vpack.c.bf16 %v7545, %v7544
      %v7558 = vpack.c.bf16 %v7547, %v7546
      %v7559 = vpack.c.bf16 %v7549, %v7548
      %v7560 = vpack.c.bf16 %v7551, %v7550
      %v7561 = vpack.c.bf16 %v7552, %v7552
      %v7562 = vld [vmem:[%s4] sm:$0xff]
      %v7563 = vld [vmem:[%s4 + $0x8] sm:$0xff]
      %v7564 = vld [vmem:[%s4 + $0x10] sm:$0xff]
      %v7565 = vld [vmem:[%s4 + $0x18] sm:$0xff]
      %v7570 = vunpack.c.l.b16 %v7562
      %v7571 = vunpack.c.h.b16 %v7562
      %v7572 = vunpack.c.l.b16 %v7563
      %v7573 = vunpack.c.h.b16 %v7563
      %v7574 = vunpack.c.l.b16 %v7564
      %v7575 = vunpack.c.h.b16 %v7564
      %v7576 = vunpack.c.l.b16 %v7565
      %v7577 = vunpack.c.h.b16 %v7565
      %v7578 = vpack.c.b16 %v7572, %v7570
      %v7579 = vpack.c.b16 %v7573, %v7571
      %v7580 = vpack.c.b16 %v7576, %v7574
      %v7581 = vpack.c.b16 %v7577, %v7575
      %v7587 = vsel %vm1175, %v7553, 0
      %v7590 = vsel %vm1175, %v7554, 0
      %v7593 = vsel %vm1175, %v7555, 0
      %v7596 = vsel %vm1175, %v7556, 0
      %v7599 = vsel %vm1175, %v7557, 0
      %v7602 = vsel %vm1175, %v7558, 0
      %v7605 = vsel %vm1175, %v7559, 0
      %v7608 = vsel %vm1175, %v7560, 0
      %v7611 = vsel %vm1175, %v7561, 0
      %7613 = vmatprep.subr.bf16.mxu0 %v7579
      %7614 = vmatpush1.bf16.msra.mxu0 %v7578
      %7615 = vmatprep.subr.bf16.mxu0 %v7581
      %7616 = vmatpush1.bf16.msra.mxu0 %v7580
      %7617 = vmatprep.subr.bf16.mxu0 0
      %7618 = vmatpush1.bf16.msra.mxu0 0
      %7619 = vmatprep.subr.bf16.mxu0 0
      %7620 = vmatpush1.bf16.msra.mxu0 0
      %7621 = vmatprep.subr.bf16.mxu0 0
      %7622 = vmatpush1.bf16.msra.mxu0 0
      %7623 = vmatprep.subr.bf16.mxu0 0
      %7624 = vmatpush1.bf16.msra.mxu0 0
      %7625 = vmatprep.subr.bf16.mxu0 0
      %7626 = vmatpush1.bf16.msra.mxu0 0
      %7627 = vmatprep.subr.bf16.mxu0 0
      %7628 = vmatpush1.bf16.msra.mxu0 0
      %7629 = vmatprep.subr.bf16.mxu0 0
      %7630 = vmatpush1.bf16.msra.mxu0 0
      %7631 = vmatprep.subr.bf16.mxu0 0
      %7632 = vmatpush1.bf16.msra.mxu0 0
      %7633 = vmatprep.subr.bf16.mxu0 0
      %7634 = vmatpush1.bf16.msra.mxu0 0
      %7635 = vmatprep.subr.bf16.mxu0 0
      %7636 = vmatpush1.bf16.msra.mxu0 0
      %7637 = vmatprep.subr.bf16.mxu0 0
      %7638 = vmatpush1.bf16.msra.mxu0 0
      %7639 = vmatprep.subr.bf16.mxu0 0
      %7640 = vmatpush1.bf16.msra.mxu0 0
      %7641 = vmatprep.subr.bf16.mxu0 0
      %7642 = vmatpush1.bf16.msra.mxu0 0
      %7643 = vmatprep.subr.bf16.mxu0 0
      %7644 = vmatpush1.bf16.msra.mxu0 0
      %7645 = vmatprep.mubr.bf16.mxu0 0
      %7646 = vmatmul.mubr.bf16.gmra.mrb[0].mxu0 %v7587
      %v7647 = vpop.f32.mrb[0].mxu0
      %v7648 = vadd.f32 0.0, %v7647
      %v7649 = vpop.f32.mrb[0].mxu0
      %v7650 = vadd.f32 0.0, %v7649
      %v7651 = vpop.f32.mrb[0].mxu0
      %v7652 = vadd.f32 0.0, %v7651
      %v7653 = vpop.f32.mrb[0].mxu0
      %v7654 = vadd.f32 0.0, %v7653
      %7655 = vmatprep.mubr.bf16.mxu0 0
      %7656 = vmatmul.mubr.bf16.gmra.mrb[0].mxu0 %v7590
      %v7657 = vpop.f32.mrb[0].mxu0
      %v7658 = vadd.f32 0.0, %v7657
      %v7659 = vpop.f32.mrb[0].mxu0
      %v7660 = vadd.f32 0.0, %v7659
      %v7661 = vpop.f32.mrb[0].mxu0
      %v7662 = vadd.f32 0.0, %v7661
      %v7663 = vpop.f32.mrb[0].mxu0
      %v7664 = vadd.f32 0.0, %v7663
      %7665 = vmatprep.mubr.bf16.mxu0 0
      %7666 = vmatmul.mubr.bf16.gmra.mrb[0].mxu0 %v7593
      %v7667 = vpop.f32.mrb[0].mxu0
      %v7668 = vadd.f32 0.0, %v7667
      %v7669 = vpop.f32.mrb[0].mxu0
      %v7670 = vadd.f32 0.0, %v7669
      %v7671 = vpop.f32.mrb[0].mxu0
      %v7672 = vadd.f32 0.0, %v7671
      %v7673 = vpop.f32.mrb[0].mxu0
      %v7674 = vadd.f32 0.0, %v7673
      %7675 = vmatprep.mubr.bf16.mxu0 0
      %7676 = vmatmul.mubr.bf16.gmra.mrb[0].mxu0 %v7596
      %v7677 = vpop.f32.mrb[0].mxu0
      %v7678 = vadd.f32 0.0, %v7677
      %v7679 = vpop.f32.mrb[0].mxu0
      %v7680 = vadd.f32 0.0, %v7679
      %v7681 = vpop.f32.mrb[0].mxu0
      %v7682 = vadd.f32 0.0, %v7681
      %v7683 = vpop.f32.mrb[0].mxu0
      %v7684 = vadd.f32 0.0, %v7683
      %7685 = vmatprep.mubr.bf16.mxu0 0
      %7686 = vmatmul.mubr.bf16.gmra.mrb[0].mxu0 %v7599
      %v7687 = vpop.f32.mrb[0].mxu0
      %v7688 = vadd.f32 0.0, %v7687
      %v7689 = vpop.f32.mrb[0].mxu0
      %v7690 = vadd.f32 0.0, %v7689
      %v7691 = vpop.f32.mrb[0].mxu0
      %v7692 = vadd.f32 0.0, %v7691
      %v7693 = vpop.f32.mrb[0].mxu0
      %v7694 = vadd.f32 0.0, %v7693
      %7695 = vmatprep.mubr.bf16.mxu0 0
      %7696 = vmatmul.mubr.bf16.gmra.mrb[0].mxu0 %v7602
      %v7697 = vpop.f32.mrb[0].mxu0
      %v7698 = vadd.f32 0.0, %v7697
      %v7699 = vpop.f32.mrb[0].mxu0
      %v7700 = vadd.f32 0.0, %v7699
      %v7701 = vpop.f32.mrb[0].mxu0
      %v7702 = vadd.f32 0.0, %v7701
      %v7703 = vpop.f32.mrb[0].mxu0
      %v7704 = vadd.f32 0.0, %v7703
      %7705 = vmatprep.mubr.bf16.mxu0 0
      %7706 = vmatmul.mubr.bf16.gmra.mrb[0].mxu0 %v7605
      %v7707 = vpop.f32.mrb[0].mxu0
      %v7708 = vadd.f32 0.0, %v7707
      %v7709 = vpop.f32.mrb[0].mxu0
      %v7710 = vadd.f32 0.0, %v7709
      %v7711 = vpop.f32.mrb[0].mxu0
      %v7712 = vadd.f32 0.0, %v7711
      %v7713 = vpop.f32.mrb[0].mxu0
      %v7714 = vadd.f32 0.0, %v7713
      %7715 = vmatprep.mubr.bf16.mxu0 0
      %7716 = vmatmul.mubr.bf16.gmra.mrb[0].mxu0 %v7608
      %v7717 = vpop.f32.mrb[0].mxu0
      %v7718 = vadd.f32 0.0, %v7717
      %v7719 = vpop.f32.mrb[0].mxu0
      %v7720 = vadd.f32 0.0, %v7719
      %v7721 = vpop.f32.mrb[0].mxu0
      %v7722 = vadd.f32 0.0, %v7721
      %v7723 = vpop.f32.mrb[0].mxu0
      %v7724 = vadd.f32 0.0, %v7723
      %7725 = vmatprep.mubr.bf16.mxu0 0
      %7726 = vmatmul.mubr.bf16.gmra.mrb[0].mxu0 %v7611
      %v7727 = vpop.f32.mrb[0].mxu0
      %v7728 = vadd.f32 0.0, %v7727
      %v7729 = vpop.f32.mrb[0].mxu0
      %v7730 = vadd.f32 0.0, %v7729
      %v7731 = vpop.f32.mrb[0].mxu0
      %v7732 = vpop.f32.mrb[0].mxu0
      %7733 = vdwg.mxu0
      %v7734 = vlaneseq
      %v7735 = vshrl.u32 %v7734, 7
      %v7736 = vsub.s32 0, %v7735
      %v7737 = vrot.slane %v367, %v7736
      %v7738 = vadd.f32 %v7648, %v7737
      %v7739 = vadd.f32 %v7652, %v7737
      %v7740 = vadd.f32 %v7658, %v7737
      %v7741 = vadd.f32 %v7662, %v7737
      %v7742 = vadd.f32 %v7668, %v7737
      %v7743 = vadd.f32 %v7672, %v7737
      %v7744 = vadd.f32 %v7678, %v7737
      %v7745 = vadd.f32 %v7682, %v7737
      %v7746 = vadd.f32 %v7688, %v7737
      %v7747 = vadd.f32 %v7692, %v7737
      %v7748 = vadd.f32 %v7698, %v7737
      %v7749 = vadd.f32 %v7702, %v7737
      %v7750 = vadd.f32 %v7708, %v7737
      %v7751 = vadd.f32 %v7712, %v7737
      %v7752 = vadd.f32 %v7718, %v7737
      %v7753 = vadd.f32 %v7722, %v7737
      %v7754 = vadd.f32 %v7728, %v7737
      %v7755 = vadd.f32 %v7738, 3.0
      %v7756 = vadd.f32 %v7739, 3.0
      %v7757 = vadd.f32 %v7740, 3.0
      %v7758 = vadd.f32 %v7741, 3.0
      %v7759 = vadd.f32 %v7742, 3.0
      %v7760 = vadd.f32 %v7743, 3.0
      %v7761 = vadd.f32 %v7744, 3.0
      %v7762 = vadd.f32 %v7745, 3.0
      %v7763 = vadd.f32 %v7746, 3.0
      %v7764 = vadd.f32 %v7747, 3.0
      %v7765 = vadd.f32 %v7748, 3.0
      %v7766 = vadd.f32 %v7749, 3.0
      %v7767 = vadd.f32 %v7750, 3.0
      %v7768 = vadd.f32 %v7751, 3.0
      %v7769 = vadd.f32 %v7752, 3.0
      %v7770 = vadd.f32 %v7753, 3.0
      %v7771 = vadd.f32 %v7754, 3.0
      %v7772 = vmax.f32 %v7755, 0.0
      %v7773 = vmax.f32 %v7756, 0.0
      %v7774 = vmax.f32 %v7757, 0.0
      %v7775 = vmax.f32 %v7758, 0.0
      %v7776 = vmax.f32 %v7759, 0.0
      %v7777 = vmax.f32 %v7760, 0.0
      %v7778 = vmax.f32 %v7761, 0.0
      %v7779 = vmax.f32 %v7762, 0.0
      %v7780 = vmax.f32 %v7763, 0.0
      %v7781 = vmax.f32 %v7764, 0.0
      %v7782 = vmax.f32 %v7765, 0.0
      %v7783 = vmax.f32 %v7766, 0.0
      %v7784 = vmax.f32 %v7767, 0.0
      %v7785 = vmax.f32 %v7768, 0.0
      %v7786 = vmax.f32 %v7769, 0.0
      %v7787 = vmax.f32 %v7770, 0.0
      %v7788 = vmax.f32 %v7771, 0.0
      %v7789 = vmin.f32 %v7772, 6.0
      %v7790 = vmin.f32 %v7773, 6.0
      %v7791 = vmin.f32 %v7774, 6.0
      %v7792 = vmin.f32 %v7775, 6.0
      %v7793 = vmin.f32 %v7776, 6.0
      %v7794 = vmin.f32 %v7777, 6.0
      %v7795 = vmin.f32 %v7778, 6.0
      %v7796 = vmin.f32 %v7779, 6.0
      %v7797 = vmin.f32 %v7780, 6.0
      %v7798 = vmin.f32 %v7781, 6.0
      %v7799 = vmin.f32 %v7782, 6.0
      %v7800 = vmin.f32 %v7783, 6.0
      %v7801 = vmin.f32 %v7784, 6.0
      %v7802 = vmin.f32 %v7785, 6.0
      %v7803 = vmin.f32 %v7786, 6.0
      %v7804 = vmin.f32 %v7787, 6.0
      %v7805 = vmin.f32 %v7788, 6.0
      %v7806 = vmul.f32 %v7789, 0.16666667
      %v7807 = vmul.f32 %v7790, 0.16666667
      %v7808 = vmul.f32 %v7791, 0.16666667
      %v7809 = vmul.f32 %v7792, 0.16666667
      %v7810 = vmul.f32 %v7793, 0.16666667
      %v7811 = vmul.f32 %v7794, 0.16666667
      %v7812 = vmul.f32 %v7795, 0.16666667
      %v7813 = vmul.f32 %v7796, 0.16666667
      %v7814 = vmul.f32 %v7797, 0.16666667
      %v7815 = vmul.f32 %v7798, 0.16666667
      %v7816 = vmul.f32 %v7799, 0.16666667
      %v7817 = vmul.f32 %v7800, 0.16666667
      %v7818 = vmul.f32 %v7801, 0.16666667
      %v7819 = vmul.f32 %v7802, 0.16666667
      %v7820 = vmul.f32 %v7803, 0.16666667
      %v7821 = vmul.f32 %v7804, 0.16666667
      %v7822 = vmul.f32 %v7805, 0.16666667
      %v7823 = vmul.f32 %v7738, %v7806
      %v7824 = vmul.f32 %v7739, %v7807
      %v7825 = vmul.f32 %v7740, %v7808
      %v7826 = vmul.f32 %v7741, %v7809
      %v7827 = vmul.f32 %v7742, %v7810
      %v7828 = vmul.f32 %v7743, %v7811
      %v7829 = vmul.f32 %v7744, %v7812
      %v7830 = vmul.f32 %v7745, %v7813
      %v7831 = vmul.f32 %v7746, %v7814
      %v7832 = vmul.f32 %v7747, %v7815
      %v7833 = vmul.f32 %v7748, %v7816
      %v7834 = vmul.f32 %v7749, %v7817
      %v7835 = vmul.f32 %v7750, %v7818
      %v7836 = vmul.f32 %v7751, %v7819
      %v7837 = vmul.f32 %v7752, %v7820
      %v7838 = vmul.f32 %v7753, %v7821
      %v7839 = vmul.f32 %v7754, %v7822
      %7840 = vst [vmem:[#allocation3 + $0x7] sm:$0x1] 0.0
      %7841 = vst [vmem:[#allocation3 + $0x8] sm:$0xff] %v7823
      %7842 = vst [vmem:[#allocation3 + $0x10] sm:$0xff] %v7824
      %7843 = vst [vmem:[#allocation3 + $0x18] sm:$0xff] %v7825
      %7844 = vst [vmem:[#allocation3 + $0x20] sm:$0xff] %v7826
      %7845 = vst [vmem:[#allocation3 + $0x28] sm:$0xff] %v7827
      %7846 = vst [vmem:[#allocation3 + $0x30] sm:$0xff] %v7828
      %7847 = vst [vmem:[#allocation3 + $0x38] sm:$0xff] %v7829
      %7848 = vst [vmem:[#allocation3 + $0x40] sm:$0xff] %v7830
      %7849 = vst [vmem:[#allocation3 + $0x48] sm:$0xff] %v7831
      %7850 = vst [vmem:[#allocation3 + $0x50] sm:$0xff] %v7832
      %7851 = vst [vmem:[#allocation3 + $0x58] sm:$0xff] %v7833
      %7852 = vst [vmem:[#allocation3 + $0x60] sm:$0xff] %v7834
      %7853 = vst [vmem:[#allocation3 + $0x68] sm:$0xff] %v7835
      %7854 = vst [vmem:[#allocation3 + $0x70] sm:$0xff] %v7836
      %7855 = vst [vmem:[#allocation3 + $0x78] sm:$0xff] %v7837
      %7856 = vst [vmem:[#allocation3 + $0x80] sm:$0xff] %v7838
      %7857 = vst [vmem:[#allocation3 + $0x88] sm:$0xff] %v7839
      %v7858 = vld [vmem:[#allocation3 + $0x7] sm:$0xff]
      %v7859 = vld [vmem:[#allocation3 + $0xf] sm:$0xff]
      %v7860 = vld [vmem:[#allocation3 + $0x17] sm:$0xff]
      %v7861 = vld [vmem:[#allocation3 + $0x1f] sm:$0xff]
      %v7862 = vld [vmem:[#allocation3 + $0x27] sm:$0xff]
      %v7863 = vld [vmem:[#allocation3 + $0x2f] sm:$0xff]
      %v7864 = vld [vmem:[#allocation3 + $0x37] sm:$0xff]
      %v7865 = vld [vmem:[#allocation3 + $0x3f] sm:$0xff]
      %v7866 = vld [vmem:[#allocation3 + $0x47] sm:$0xff]
      %v7867 = vld [vmem:[#allocation3 + $0x4f] sm:$0xff]
      %v7868 = vld [vmem:[#allocation3 + $0x57] sm:$0xff]
      %v7869 = vld [vmem:[#allocation3 + $0x5f] sm:$0xff]
      %v7870 = vld [vmem:[#allocation3 + $0x67] sm:$0xff]
      %v7871 = vld [vmem:[#allocation3 + $0x6f] sm:$0xff]
      %v7872 = vld [vmem:[#allocation3 + $0x77] sm:$0xff]
      %v7873 = vld [vmem:[#allocation3 + $0x7f] sm:$0xff]
      %v7874 = vld [vmem:[#allocation3 + $0x87] sm:$0xff]
      %v7875 = vld [vmem:[#allocation3 + $0x9] sm:$0xff]
      %v7876 = vld [vmem:[#allocation3 + $0x11] sm:$0xff]
      %v7877 = vld [vmem:[#allocation3 + $0x19] sm:$0xff]
      %v7878 = vld [vmem:[#allocation3 + $0x21] sm:$0xff]
      %v7879 = vld [vmem:[#allocation3 + $0x29] sm:$0xff]
      %v7880 = vld [vmem:[#allocation3 + $0x31] sm:$0xff]
      %v7881 = vld [vmem:[#allocation3 + $0x39] sm:$0xff]
      %v7882 = vld [vmem:[#allocation3 + $0x41] sm:$0xff]
      %v7883 = vld [vmem:[#allocation3 + $0x49] sm:$0xff]
      %v7884 = vld [vmem:[#allocation3 + $0x51] sm:$0xff]
      %v7885 = vld [vmem:[#allocation3 + $0x59] sm:$0xff]
      %v7886 = vld [vmem:[#allocation3 + $0x61] sm:$0xff]
      %v7887 = vld [vmem:[#allocation3 + $0x69] sm:$0xff]
      %v7888 = vld [vmem:[#allocation3 + $0x71] sm:$0xff]
      %v7889 = vld [vmem:[#allocation3 + $0x79] sm:$0xff]
      %v7890 = vld [vmem:[#allocation3 + $0x81] sm:$0xff]
      %v7891 = vld [vmem:[#allocation3 + $0x89] sm:$0xff]
      %v7892 = vsel %vm1124, 1, 0
      %v7893 = vsel %vm1125, 1, 0
      %v7894 = vsel %vm1126, 1, 0
      %v7895 = vsel %vm1127, 1, 0
      %v7896 = vsel %vm1128, 1, 0
      %v7897 = vsel %vm1129, 1, 0
      %v7898 = vsel %vm1130, 1, 0
      %v7899 = vsel %vm1131, 1, 0
      %v7900 = vsel %vm1132, 1, 0
      %v7901 = vsel %vm1133, 1, 0
      %v7902 = vsel %vm1134, 1, 0
      %v7903 = vsel %vm1135, 1, 0
      %v7904 = vsel %vm1136, 1, 0
      %v7905 = vsel %vm1137, 1, 0
      %v7906 = vsel %vm1138, 1, 0
      %v7907 = vsel %vm1139, 1, 0
      %v7908 = vsel %vm1140, 1, 0
      %vm7909 = vcmp.eq.s32.totalorder %v7892, 1
      %vm7910 = vcmp.eq.s32.totalorder %v7893, 1
      %vm7911 = vcmp.eq.s32.totalorder %v7894, 1
      %vm7912 = vcmp.eq.s32.totalorder %v7895, 1
      %vm7913 = vcmp.eq.s32.totalorder %v7896, 1
      %vm7914 = vcmp.eq.s32.totalorder %v7897, 1
      %vm7915 = vcmp.eq.s32.totalorder %v7898, 1
      %vm7916 = vcmp.eq.s32.totalorder %v7899, 1
      %vm7917 = vcmp.eq.s32.totalorder %v7900, 1
      %vm7918 = vcmp.eq.s32.totalorder %v7901, 1
      %vm7919 = vcmp.eq.s32.totalorder %v7902, 1
      %vm7920 = vcmp.eq.s32.totalorder %v7903, 1
      %vm7921 = vcmp.eq.s32.totalorder %v7904, 1
      %vm7922 = vcmp.eq.s32.totalorder %v7905, 1
      %vm7923 = vcmp.eq.s32.totalorder %v7906, 1
      %vm7924 = vcmp.eq.s32.totalorder %v7907, 1
      %vm7925 = vcmp.eq.s32.totalorder %v7908, 1
      %v7926 = vsel %vm7909, 0.0, %v7858
      %v7927 = vsel %vm7910, 0.0, %v7859
      %v7928 = vsel %vm7911, 0.0, %v7860
      %v7929 = vsel %vm7912, 0.0, %v7861
      %v7930 = vsel %vm7913, 0.0, %v7862
      %v7931 = vsel %vm7914, 0.0, %v7863
      %v7932 = vsel %vm7915, 0.0, %v7864
      %v7933 = vsel %vm7916, 0.0, %v7865
      %v7934 = vsel %vm7917, 0.0, %v7866
      %v7935 = vsel %vm7918, 0.0, %v7867
      %v7936 = vsel %vm7919, 0.0, %v7868
      %v7937 = vsel %vm7920, 0.0, %v7869
      %v7938 = vsel %vm7921, 0.0, %v7870
      %v7939 = vsel %vm7922, 0.0, %v7871
      %v7940 = vsel %vm7923, 0.0, %v7872
      %v7941 = vsel %vm7924, 0.0, %v7873
      %v7942 = vsel %vm7925, 0.0, %v7874
      %v7943 = vsel %vm1158, 1, 0
      %v7944 = vsel %vm1159, 1, 0
      %v7945 = vsel %vm1160, 1, 0
      %v7946 = vsel %vm1161, 1, 0
      %v7947 = vsel %vm1162, 1, 0
      %v7948 = vsel %vm1163, 1, 0
      %v7949 = vsel %vm1164, 1, 0
      %v7950 = vsel %vm1165, 1, 0
      %v7951 = vsel %vm1166, 1, 0
      %v7952 = vsel %vm1167, 1, 0
      %v7953 = vsel %vm1168, 1, 0
      %v7954 = vsel %vm1169, 1, 0
      %v7955 = vsel %vm1170, 1, 0
      %v7956 = vsel %vm1171, 1, 0
      %v7957 = vsel %vm1172, 1, 0
      %v7958 = vsel %vm1173, 1, 0
      %v7959 = vsel %vm1174, 1, 0
      %vm7960 = vcmp.eq.s32.totalorder %v7943, 1
      %vm7961 = vcmp.eq.s32.totalorder %v7944, 1
      %vm7962 = vcmp.eq.s32.totalorder %v7945, 1
      %vm7963 = vcmp.eq.s32.totalorder %v7946, 1
      %vm7964 = vcmp.eq.s32.totalorder %v7947, 1
      %vm7965 = vcmp.eq.s32.totalorder %v7948, 1
      %vm7966 = vcmp.eq.s32.totalorder %v7949, 1
      %vm7967 = vcmp.eq.s32.totalorder %v7950, 1
      %vm7968 = vcmp.eq.s32.totalorder %v7951, 1
      %vm7969 = vcmp.eq.s32.totalorder %v7952, 1
      %vm7970 = vcmp.eq.s32.totalorder %v7953, 1
      %vm7971 = vcmp.eq.s32.totalorder %v7954, 1
      %vm7972 = vcmp.eq.s32.totalorder %v7955, 1
      %vm7973 = vcmp.eq.s32.totalorder %v7956, 1
      %vm7974 = vcmp.eq.s32.totalorder %v7957, 1
      %vm7975 = vcmp.eq.s32.totalorder %v7958, 1
      %vm7976 = vcmp.eq.s32.totalorder %v7959, 1
      %v7977 = vsel %vm7960, 0.0, %v7875
      %v7978 = vsel %vm7961, 0.0, %v7876
      %v7979 = vsel %vm7962, 0.0, %v7877
      %v7980 = vsel %vm7963, 0.0, %v7878
      %v7981 = vsel %vm7964, 0.0, %v7879
      %v7982 = vsel %vm7965, 0.0, %v7880
      %v7983 = vsel %vm7966, 0.0, %v7881
      %v7984 = vsel %vm7967, 0.0, %v7882
      %v7985 = vsel %vm7968, 0.0, %v7883
      %v7986 = vsel %vm7969, 0.0, %v7884
      %v7987 = vsel %vm7970, 0.0, %v7885
      %v7988 = vsel %vm7971, 0.0, %v7886
      %v7989 = vsel %vm7972, 0.0, %v7887
      %v7990 = vsel %vm7973, 0.0, %v7888
      %v7991 = vsel %vm7974, 0.0, %v7889
      %v7992 = vsel %vm7975, 0.0, %v7890
      %v7993 = vsel %vm7976, 0.0, %v7891
      %v7994 = vlaneseq
      %v7995 = vshrl.u32 %v7994, 7
      %v7996 = vsub.s32 0, %v7995
      %v7997 = vrot.slane %v368, %v7996
      %v7998 = vmul.f32 %v7997, %v7926
      %v7999 = vmul.f32 %v7997, %v7927
      %v8000 = vmul.f32 %v7997, %v7928
      %v8001 = vmul.f32 %v7997, %v7929
      %v8002 = vmul.f32 %v7997, %v7930
      %v8003 = vmul.f32 %v7997, %v7931
      %v8004 = vmul.f32 %v7997, %v7932
      %v8005 = vmul.f32 %v7997, %v7933
      %v8006 = vmul.f32 %v7997, %v7934
      %v8007 = vmul.f32 %v7997, %v7935
      %v8008 = vmul.f32 %v7997, %v7936
      %v8009 = vmul.f32 %v7997, %v7937
      %v8010 = vmul.f32 %v7997, %v7938
      %v8011 = vmul.f32 %v7997, %v7939
      %v8012 = vmul.f32 %v7997, %v7940
      %v8013 = vmul.f32 %v7997, %v7941
      %v8014 = vmul.f32 %v7997, %v7942
      %v8015 = vlaneseq
      %v8016 = vshrl.u32 %v8015, 7
      %v8017 = vsub.s32 0, %v8016
      %v8018 = vrot.slane %v369, %v8017
      %v8019 = vmul.f32 %v8018, %v7823
      %v8020 = vmul.f32 %v8018, %v7824
      %v8021 = vmul.f32 %v8018, %v7825
      %v8022 = vmul.f32 %v8018, %v7826
      %v8023 = vmul.f32 %v8018, %v7827
      %v8024 = vmul.f32 %v8018, %v7828
      %v8025 = vmul.f32 %v8018, %v7829
      %v8026 = vmul.f32 %v8018, %v7830
      %v8027 = vmul.f32 %v8018, %v7831
      %v8028 = vmul.f32 %v8018, %v7832
      %v8029 = vmul.f32 %v8018, %v7833
      %v8030 = vmul.f32 %v8018, %v7834
      %v8031 = vmul.f32 %v8018, %v7835
      %v8032 = vmul.f32 %v8018, %v7836
      %v8033 = vmul.f32 %v8018, %v7837
      %v8034 = vmul.f32 %v8018, %v7838
      %v8035 = vmul.f32 %v8018, %v7839
      %v8036 = vadd.f32 %v7998, %v8019
      %v8037 = vadd.f32 %v7999, %v8020
      %v8038 = vadd.f32 %v8000, %v8021
      %v8039 = vadd.f32 %v8001, %v8022
      %v8040 = vadd.f32 %v8002, %v8023
      %v8041 = vadd.f32 %v8003, %v8024
      %v8042 = vadd.f32 %v8004, %v8025
      %v8043 = vadd.f32 %v8005, %v8026
      %v8044 = vadd.f32 %v8006, %v8027
      %v8045 = vadd.f32 %v8007, %v8028
      %v8046 = vadd.f32 %v8008, %v8029
      %v8047 = vadd.f32 %v8009, %v8030
      %v8048 = vadd.f32 %v8010, %v8031
      %v8049 = vadd.f32 %v8011, %v8032
      %v8050 = vadd.f32 %v8012, %v8033
      %v8051 = vadd.f32 %v8013, %v8034
      %v8052 = vadd.f32 %v8014, %v8035
      %v8053 = vlaneseq
      %v8054 = vshrl.u32 %v8053, 7
      %v8055 = vsub.s32 0, %v8054
      %v8056 = vrot.slane %v370, %v8055
      %v8057 = vmul.f32 %v8056, %v7977
      %v8058 = vmul.f32 %v8056, %v7978
      %v8059 = vmul.f32 %v8056, %v7979
      %v8060 = vmul.f32 %v8056, %v7980
      %v8061 = vmul.f32 %v8056, %v7981
      %v8062 = vmul.f32 %v8056, %v7982
      %v8063 = vmul.f32 %v8056, %v7983
      %v8064 = vmul.f32 %v8056, %v7984
      %v8065 = vmul.f32 %v8056, %v7985
      %v8066 = vmul.f32 %v8056, %v7986
      %v8067 = vmul.f32 %v8056, %v7987
      %v8068 = vmul.f32 %v8056, %v7988
      %v8069 = vmul.f32 %v8056, %v7989
      %v8070 = vmul.f32 %v8056, %v7990
      %v8071 = vmul.f32 %v8056, %v7991
      %v8072 = vmul.f32 %v8056, %v7992
      %v8073 = vmul.f32 %v8056, %v7993
      %v8074 = vadd.f32 %v8036, %v8057
      %v8075 = vadd.f32 %v8037, %v8058
      %v8076 = vadd.f32 %v8038, %v8059
      %v8077 = vadd.f32 %v8039, %v8060
      %v8078 = vadd.f32 %v8040, %v8061
      %v8079 = vadd.f32 %v8041, %v8062
      %v8080 = vadd.f32 %v8042, %v8063
      %v8081 = vadd.f32 %v8043, %v8064
      %v8082 = vadd.f32 %v8044, %v8065
      %v8083 = vadd.f32 %v8045, %v8066
      %v8084 = vadd.f32 %v8046, %v8067
      %v8085 = vadd.f32 %v8047, %v8068
      %v8086 = vadd.f32 %v8048, %v8069
      %v8087 = vadd.f32 %v8049, %v8070
      %v8088 = vadd.f32 %v8050, %v8071
      %v8089 = vadd.f32 %v8051, %v8072
      %v8090 = vadd.f32 %v8052, %v8073
      %v8091 = vlaneseq
      %v8092 = vshrl.u32 %v8091, 7
      %v8093 = vsub.s32 0, %v8092
      %v8094 = vrot.slane %v371, %v8093
      %v8095 = vadd.f32 %v8074, %v8094
      %v8096 = vadd.f32 %v8075, %v8094
      %v8097 = vadd.f32 %v8076, %v8094
      %v8098 = vadd.f32 %v8077, %v8094
      %v8099 = vadd.f32 %v8078, %v8094
      %v8100 = vadd.f32 %v8079, %v8094
      %v8101 = vadd.f32 %v8080, %v8094
      %v8102 = vadd.f32 %v8081, %v8094
      %v8103 = vadd.f32 %v8082, %v8094
      %v8104 = vadd.f32 %v8083, %v8094
      %v8105 = vadd.f32 %v8084, %v8094
      %v8106 = vadd.f32 %v8085, %v8094
      %v8107 = vadd.f32 %v8086, %v8094
      %v8108 = vadd.f32 %v8087, %v8094
      %v8109 = vadd.f32 %v8088, %v8094
      %v8110 = vadd.f32 %v8089, %v8094
      %v8111 = vadd.f32 %v8090, %v8094
      %v8112 = vadd.f32 %v8095, 3.0
      %v8113 = vadd.f32 %v8096, 3.0
      %v8114 = vadd.f32 %v8097, 3.0
      %v8115 = vadd.f32 %v8098, 3.0
      %v8116 = vadd.f32 %v8099, 3.0
      %v8117 = vadd.f32 %v8100, 3.0
      %v8118 = vadd.f32 %v8101, 3.0
      %v8119 = vadd.f32 %v8102, 3.0
      %v8120 = vadd.f32 %v8103, 3.0
      %v8121 = vadd.f32 %v8104, 3.0
      %v8122 = vadd.f32 %v8105, 3.0
      %v8123 = vadd.f32 %v8106, 3.0
      %v8124 = vadd.f32 %v8107, 3.0
      %v8125 = vadd.f32 %v8108, 3.0
      %v8126 = vadd.f32 %v8109, 3.0
      %v8127 = vadd.f32 %v8110, 3.0
      %v8128 = vadd.f32 %v8111, 3.0
      %v8129 = vmax.f32 %v8112, 0.0
      %v8130 = vmax.f32 %v8113, 0.0
      %v8131 = vmax.f32 %v8114, 0.0
      %v8132 = vmax.f32 %v8115, 0.0
      %v8133 = vmax.f32 %v8116, 0.0
      %v8134 = vmax.f32 %v8117, 0.0
      %v8135 = vmax.f32 %v8118, 0.0
      %v8136 = vmax.f32 %v8119, 0.0
      %v8137 = vmax.f32 %v8120, 0.0
      %v8138 = vmax.f32 %v8121, 0.0
      %v8139 = vmax.f32 %v8122, 0.0
      %v8140 = vmax.f32 %v8123, 0.0
      %v8141 = vmax.f32 %v8124, 0.0
      %v8142 = vmax.f32 %v8125, 0.0
      %v8143 = vmax.f32 %v8126, 0.0
      %v8144 = vmax.f32 %v8127, 0.0
      %v8145 = vmax.f32 %v8128, 0.0
      %v8146 = vmin.f32 %v8129, 6.0
      %v8147 = vmin.f32 %v8130, 6.0
      %v8148 = vmin.f32 %v8131, 6.0
      %v8149 = vmin.f32 %v8132, 6.0
      %v8150 = vmin.f32 %v8133, 6.0
      %v8151 = vmin.f32 %v8134, 6.0
      %v8152 = vmin.f32 %v8135, 6.0
      %v8153 = vmin.f32 %v8136, 6.0
      %v8154 = vmin.f32 %v8137, 6.0
      %v8155 = vmin.f32 %v8138, 6.0
      %v8156 = vmin.f32 %v8139, 6.0
      %v8157 = vmin.f32 %v8140, 6.0
      %v8158 = vmin.f32 %v8141, 6.0
      %v8159 = vmin.f32 %v8142, 6.0
      %v8160 = vmin.f32 %v8143, 6.0
      %v8161 = vmin.f32 %v8144, 6.0
      %v8162 = vmin.f32 %v8145, 6.0
      %v8163 = vmul.f32 %v8146, 0.16666667
      %v8164 = vmul.f32 %v8147, 0.16666667
      %v8165 = vmul.f32 %v8148, 0.16666667
      %v8166 = vmul.f32 %v8149, 0.16666667
      %v8167 = vmul.f32 %v8150, 0.16666667
      %v8168 = vmul.f32 %v8151, 0.16666667
      %v8169 = vmul.f32 %v8152, 0.16666667
      %v8170 = vmul.f32 %v8153, 0.16666667
      %v8171 = vmul.f32 %v8154, 0.16666667
      %v8172 = vmul.f32 %v8155, 0.16666667
      %v8173 = vmul.f32 %v8156, 0.16666667
      %v8174 = vmul.f32 %v8157, 0.16666667
      %v8175 = vmul.f32 %v8158, 0.16666667
      %v8176 = vmul.f32 %v8159, 0.16666667
      %v8177 = vmul.f32 %v8160, 0.16666667
      %v8178 = vmul.f32 %v8161, 0.16666667
      %v8179 = vmul.f32 %v8162, 0.16666667
      %v8180 = vmul.f32 %v8095, %v8163
      %v8181 = vmul.f32 %v8096, %v8164
      %v8182 = vmul.f32 %v8097, %v8165
      %v8183 = vmul.f32 %v8098, %v8166
      %v8184 = vmul.f32 %v8099, %v8167
      %v8185 = vmul.f32 %v8100, %v8168
      %v8186 = vmul.f32 %v8101, %v8169
      %v8187 = vmul.f32 %v8102, %v8170
      %v8188 = vmul.f32 %v8103, %v8171
      %v8189 = vmul.f32 %v8104, %v8172
      %v8190 = vmul.f32 %v8105, %v8173
      %v8191 = vmul.f32 %v8106, %v8174
      %v8192 = vmul.f32 %v8107, %v8175
      %v8193 = vmul.f32 %v8108, %v8176
      %v8194 = vmul.f32 %v8109, %v8177
      %v8195 = vmul.f32 %v8110, %v8178
      %v8196 = vmul.f32 %v8111, %v8179
      %v8197 = vld [vmem:[%s8] sm:$0xff]
      %v8198 = vld [vmem:[%s8 + $0x8] sm:$0xff]
      %v8200 = vsel %vm1604, %v8198, 0
      %8202 = vmatprep.subr.mxu0 0.0
      %8203 = vmatpush1.msra.mxu0 %v8180
      %8204 = vmatprep.subr.mxu0 0.0
      %8205 = vmatpush1.msra.mxu0 %v8181
      %8206 = vmatprep.subr.mxu0 0.0
      %8207 = vmatpush1.msra.mxu0 %v8182
      %8208 = vmatprep.subr.mxu0 0.0
      %8209 = vmatpush1.msra.mxu0 %v8183
      %8210 = vmatprep.subr.mxu0 0.0
      %8211 = vmatpush1.msra.mxu0 %v8184
      %8212 = vmatprep.subr.mxu0 0.0
      %8213 = vmatpush1.msra.mxu0 %v8185
      %8214 = vmatprep.subr.mxu0 0.0
      %8215 = vmatpush1.msra.mxu0 %v8186
      %8216 = vmatprep.subr.mxu0 0.0
      %8217 = vmatpush1.msra.mxu0 %v8187
      %8218 = vmatprep.subr.mxu0 0.0
      %8219 = vmatpush1.msra.mxu0 %v8188
      %8220 = vmatprep.subr.mxu0 0.0
      %8221 = vmatpush1.msra.mxu0 %v8189
      %8222 = vmatprep.subr.mxu0 0.0
      %8223 = vmatpush1.msra.mxu0 %v8190
      %8224 = vmatprep.subr.mxu0 0.0
      %8225 = vmatpush1.msra.mxu0 %v8191
      %8226 = vmatprep.subr.mxu0 0.0
      %8227 = vmatpush1.msra.mxu0 %v8192
      %8228 = vmatprep.subr.mxu0 0.0
      %8229 = vmatpush1.msra.mxu0 %v8193
      %8230 = vmatprep.subr.mxu0 0.0
      %8231 = vmatpush1.msra.mxu0 %v8194
      %8232 = vmatprep.subr.mxu0 0.0
      %8233 = vmatpush1.msra.mxu0 %v8195
      %8234 = vmatprep.subr.mxu0 0.0
      %8235 = vmatpush1.msra.mxu0 %v8196
      %8236 = vmatprep.subr.mxu0 0.0
      %8237 = vmatpush1.msra.mxu0 0.0
      %8238 = vmatprep.subr.mxu0 0.0
      %8239 = vmatpush1.msra.mxu0 0.0
      %8240 = vmatprep.subr.mxu0 0.0
      %8241 = vmatpush1.msra.mxu0 0.0
      %8242 = vmatprep.subr.mxu0 0.0
      %8243 = vmatpush1.msra.mxu0 0.0
      %8244 = vmatprep.subr.mxu0 0.0
      %8245 = vmatpush1.msra.mxu0 0.0
      %8246 = vmatprep.subr.mxu0 0.0
      %8247 = vmatpush1.msra.mxu0 0.0
      %8248 = vmatprep.subr.mxu0 0.0
      %8249 = vmatpush1.msra.mxu0 0.0
      %8250 = vmatprep.subr.mxu0 0.0
      %8251 = vmatpush1.msra.mxu0 0.0
      %8252 = vmatprep.subr.mxu0 0.0
      %8253 = vmatpush1.msra.mxu0 0.0
      %8254 = vmatprep.subr.mxu0 0.0
      %8255 = vmatpush1.msra.mxu0 0.0
      %8256 = vmatprep.subr.mxu0 0.0
      %8257 = vmatpush1.msra.mxu0 0.0
      %8258 = vmatprep.subr.mxu0 0.0
      %8259 = vmatpush1.msra.mxu0 0.0
      %8260 = vmatprep.subr.mxu0 0.0
      %8261 = vmatpush1.msra.mxu0 0.0
      %8262 = vmatprep.subr.mxu0 0.0
      %8263 = vmatpush1.msra.mxu0 0.0
      %8264 = vmatprep.subr.mxu0 0.0
      %8265 = vmatpush1.msra.mxu0 0.0
      %8266 = vmatprep.mubr.f32.mxu0 %v8200
      %8267 = vmatmul.mubr.f32.gmra.mrb[0].mxu0 %v8197
      %v8268 = vpop.f32.mrb[0].mxu0
      %v8269 = vadd.f32 0.0, %v8268
      %v8270 = vpop.f32.mrb[0].mxu0
      %8271 = vdwg.mxu0
      %v8272 = vpack.c.bf16 %v8269, %v8269
      %v8273 = vld [vmem:[%s5] sm:$0xf]
      %v8274 = vld [vmem:[%s5 + $0x4] sm:$0xf]
      %v8275 = vld [vmem:[%s5 + $0x8] sm:$0xf]
      %v8276 = vld [vmem:[%s5 + $0xc] sm:$0xf]
      %v8277 = vld [vmem:[%s5 + $0x10] sm:$0xf]
      %v8278 = vld [vmem:[%s5 + $0x14] sm:$0xf]
      %v8279 = vld [vmem:[%s5 + $0x18] sm:$0xf]
      %v8280 = vld [vmem:[%s5 + $0x1c] sm:$0xf]
      %v8281 = vld [vmem:[%s5 + $0x20] sm:$0xf]
      %v8282 = vld [vmem:[%s5 + $0x24] sm:$0xf]
      %v8283 = vld [vmem:[%s5 + $0x28] sm:$0xf]
      %v8284 = vld [vmem:[%s5 + $0x2c] sm:$0xf]
      %v8285 = vld [vmem:[%s5 + $0x30] sm:$0xf]
      %v8286 = vld [vmem:[%s5 + $0x34] sm:$0xf]
      %v8287 = vld [vmem:[%s5 + $0x38] sm:$0xf]
      %v8288 = vld [vmem:[%s5 + $0x3c] sm:$0xf]
      %v8289 = vlaneseq
      %v8290 = vshrl.u32 %v8289, 7
      %v8291 = vsub.s32 0, %v8290
      %v8292 = vrot.slane %v372, %v8291
      %v8309 = vunpack.c.l.b16 %v8273
      %v8310 = vunpack.c.l.b16 %v8274
      %v8311 = vunpack.c.l.b16 %v8275
      %v8312 = vunpack.c.l.b16 %v8276
      %v8313 = vunpack.c.l.b16 %v8277
      %v8314 = vunpack.c.l.b16 %v8278
      %v8315 = vunpack.c.l.b16 %v8279
      %v8316 = vunpack.c.l.b16 %v8280
      %v8317 = vunpack.c.l.b16 %v8281
      %v8318 = vunpack.c.l.b16 %v8282
      %v8319 = vunpack.c.l.b16 %v8283
      %v8320 = vunpack.c.l.b16 %v8284
      %v8321 = vunpack.c.l.b16 %v8285
      %v8322 = vunpack.c.l.b16 %v8286
      %v8323 = vunpack.c.l.b16 %v8287
      %v8324 = vunpack.c.l.b16 %v8288
      %v8325 = vpack.c.b16 %v8310, %v8309
      %v8326 = vpack.c.b16 %v8312, %v8311
      %v8327 = vpack.c.b16 %v8314, %v8313
      %v8328 = vpack.c.b16 %v8316, %v8315
      %v8329 = vpack.c.b16 %v8318, %v8317
      %v8330 = vpack.c.b16 %v8320, %v8319
      %v8331 = vpack.c.b16 %v8322, %v8321
      %v8332 = vpack.c.b16 %v8324, %v8323
      %8341 = vmatprep.subr.bf16.mxu0 0
      %8342 = vmatpush1.bf16.msra.mxu0 %v8325
      %8343 = vmatprep.subr.bf16.mxu0 0
      %8344 = vmatpush1.bf16.msra.mxu0 %v8326
      %8345 = vmatprep.subr.bf16.mxu0 0
      %8346 = vmatpush1.bf16.msra.mxu0 %v8327
      %8347 = vmatprep.subr.bf16.mxu0 0
      %8348 = vmatpush1.bf16.msra.mxu0 %v8328
      %8349 = vmatprep.subr.bf16.mxu0 0
      %8350 = vmatpush1.bf16.msra.mxu0 %v8329
      %8351 = vmatprep.subr.bf16.mxu0 0
      %8352 = vmatpush1.bf16.msra.mxu0 %v8330
      %8353 = vmatprep.subr.bf16.mxu0 0
      %8354 = vmatpush1.bf16.msra.mxu0 %v8331
      %8355 = vmatprep.subr.bf16.mxu0 0
      %8356 = vmatpush1.bf16.msra.mxu0 %v8332
      %8357 = vmatprep.subr.bf16.mxu0 0
      %8358 = vmatpush1.bf16.msra.mxu0 0
      %8359 = vmatprep.subr.bf16.mxu0 0
      %8360 = vmatpush1.bf16.msra.mxu0 0
      %8361 = vmatprep.subr.bf16.mxu0 0
      %8362 = vmatpush1.bf16.msra.mxu0 0
      %8363 = vmatprep.subr.bf16.mxu0 0
      %8364 = vmatpush1.bf16.msra.mxu0 0
      %8365 = vmatprep.subr.bf16.mxu0 0
      %8366 = vmatpush1.bf16.msra.mxu0 0
      %8367 = vmatprep.subr.bf16.mxu0 0
      %8368 = vmatpush1.bf16.msra.mxu0 0
      %8369 = vmatprep.subr.bf16.mxu0 0
      %8370 = vmatpush1.bf16.msra.mxu0 0
      %8371 = vmatprep.subr.bf16.mxu0 0
      %8372 = vmatpush1.bf16.msra.mxu0 0
      %8373 = vmatprep.mubr.bf16.mxu0 0
      %8374 = vmatmul.mubr.bf16.gmra.mrb[0].mxu0 %v8272
      %v8375 = vpop.f32.mrb[0].mxu0
      %v8376 = vadd.f32 %v8292, %v8375
      %v8377 = vpop.f32.mrb[0].mxu0
      %v8378 = vpop.f32.mrb[0].mxu0
      %v8379 = vpop.f32.mrb[0].mxu0
      %8380 = vdwg.mxu0
      %v8381 = vmax.f32 %v8376, 0.0
      %v8382 = vpack.c.bf16 %v8381, %v8381
      %v8383 = vld [vmem:[%s6] sm:$0xf]
      %v8384 = vld [vmem:[%s6 + $0x4] sm:$0xf]
      %v8385 = vld [vmem:[%s6 + $0x8] sm:$0xf]
      %v8386 = vld [vmem:[%s6 + $0xc] sm:$0xf]
      %v8387 = vlaneseq
      %v8388 = vshrl.u32 %v8387, 7
      %v8389 = vsub.s32 0, %v8388
      %v8390 = vrot.slane %v373, %v8389
      %v8395 = vunpack.c.l.b16 %v8383
      %v8396 = vunpack.c.l.b16 %v8384
      %v8397 = vunpack.c.l.b16 %v8385
      %v8398 = vunpack.c.l.b16 %v8386
      %v8399 = vpack.c.b16 %v8396, %v8395
      %v8400 = vpack.c.b16 %v8398, %v8397
      %v8404 = vsel %vm1175, %v8382, 0
      %8406 = vmatprep.subr.bf16.mxu0 0
      %8407 = vmatpush1.bf16.msra.mxu0 %v8399
      %8408 = vmatprep.subr.bf16.mxu0 0
      %8409 = vmatpush1.bf16.msra.mxu0 %v8400
      %8410 = vmatprep.subr.bf16.mxu0 0
      %8411 = vmatpush1.bf16.msra.mxu0 0
      %8412 = vmatprep.subr.bf16.mxu0 0
      %8413 = vmatpush1.bf16.msra.mxu0 0
      %8414 = vmatprep.subr.bf16.mxu0 0
      %8415 = vmatpush1.bf16.msra.mxu0 0
      %8416 = vmatprep.subr.bf16.mxu0 0
      %8417 = vmatpush1.bf16.msra.mxu0 0
      %8418 = vmatprep.subr.bf16.mxu0 0
      %8419 = vmatpush1.bf16.msra.mxu0 0
      %8420 = vmatprep.subr.bf16.mxu0 0
      %8421 = vmatpush1.bf16.msra.mxu0 0
      %8422 = vmatprep.subr.bf16.mxu0 0
      %8423 = vmatpush1.bf16.msra.mxu0 0
      %8424 = vmatprep.subr.bf16.mxu0 0
      %8425 = vmatpush1.bf16.msra.mxu0 0
      %8426 = vmatprep.subr.bf16.mxu0 0
      %8427 = vmatpush1.bf16.msra.mxu0 0
      %8428 = vmatprep.subr.bf16.mxu0 0
      %8429 = vmatpush1.bf16.msra.mxu0 0
      %8430 = vmatprep.subr.bf16.mxu0 0
      %8431 = vmatpush1.bf16.msra.mxu0 0
      %8432 = vmatprep.subr.bf16.mxu0 0
      %8433 = vmatpush1.bf16.msra.mxu0 0
      %8434 = vmatprep.subr.bf16.mxu0 0
      %8435 = vmatpush1.bf16.msra.mxu0 0
      %8436 = vmatprep.subr.bf16.mxu0 0
      %8437 = vmatpush1.bf16.msra.mxu0 0
      %8438 = vmatprep.mubr.bf16.mxu0 0
      %8439 = vmatmul.mubr.bf16.gmra.mrb[0].mxu0 %v8404
      %v8440 = vpop.f32.mrb[0].mxu0
      %v8441 = vadd.f32 %v8390, %v8440
      %v8442 = vpop.f32.mrb[0].mxu0
      %v8443 = vpop.f32.mrb[0].mxu0
      %v8444 = vpop.f32.mrb[0].mxu0
      %8445 = vdwg.mxu0
      %v8446 = vadd.f32 %v8441, 3.0
      %v8447 = vmax.f32 %v8446, 0.0
      %v8448 = vmin.f32 %v8447, 6.0
      %v8449 = vmul.f32 %v8448, 0.16666667
      %v8450 = vld [vmem:[%s9] sm:$0xff]
      %v8451 = vld [vmem:[%s9 + $0x8] sm:$0xff]
      %v8452 = vld [vmem:[%s9 + $0x10] sm:$0xff]
      %v8453 = vld [vmem:[%s9 + $0x18] sm:$0xff]
      %v8454 = vld [vmem:[%s9 + $0x20] sm:$0xff]
      %v8455 = vld [vmem:[%s9 + $0x28] sm:$0xff]
      %v8456 = vld [vmem:[%s9 + $0x30] sm:$0xff]
      %v8457 = vld [vmem:[%s9 + $0x38] sm:$0xff]
      %v8458 = vld [vmem:[%s9 + $0x40] sm:$0xff]
      %v8459 = vld [vmem:[%s9 + $0x48] sm:$0xff]
      %v8460 = vld [vmem:[%s9 + $0x50] sm:$0xff]
      %v8461 = vld [vmem:[%s9 + $0x58] sm:$0xff]
      %v8462 = vld [vmem:[%s9 + $0x60] sm:$0xff]
      %v8463 = vld [vmem:[%s9 + $0x68] sm:$0xff]
      %v8464 = vld [vmem:[%s9 + $0x70] sm:$0xff]
      %v8465 = vld [vmem:[%s9 + $0x78] sm:$0xff]
      %v8466 = vld [vmem:[%s9 + $0x80] sm:$0xff]
      %v8468 = vsel %vm1604, %v8450, 0
      %v8471 = vsel %vm1604, %v8451, 0
      %v8474 = vsel %vm1604, %v8452, 0
      %v8477 = vsel %vm1604, %v8453, 0
      %v8480 = vsel %vm1604, %v8454, 0
      %v8483 = vsel %vm1604, %v8455, 0
      %v8486 = vsel %vm1604, %v8456, 0
      %v8489 = vsel %vm1604, %v8457, 0
      %v8492 = vsel %vm1604, %v8458, 0
      %v8495 = vsel %vm1604, %v8459, 0
      %v8498 = vsel %vm1604, %v8460, 0
      %v8501 = vsel %vm1604, %v8461, 0
      %v8504 = vsel %vm1604, %v8462, 0
      %v8507 = vsel %vm1604, %v8463, 0
      %v8510 = vsel %vm1604, %v8464, 0
      %v8513 = vsel %vm1604, %v8465, 0
      %v8516 = vsel %vm1604, %v8466, 0
      %8518 = vmatprep.subr.mxu0 0.0
      %8519 = vmatpush1.msra.mxu0 %v8449
      %8520 = vmatprep.subr.mxu0 0.0
      %8521 = vmatpush1.msra.mxu0 0.0
      %8522 = vmatprep.subr.mxu0 0.0
      %8523 = vmatpush1.msra.mxu0 0.0
      %8524 = vmatprep.subr.mxu0 0.0
      %8525 = vmatpush1.msra.mxu0 0.0
      %8526 = vmatprep.subr.mxu0 0.0
      %8527 = vmatpush1.msra.mxu0 0.0
      %8528 = vmatprep.subr.mxu0 0.0
      %8529 = vmatpush1.msra.mxu0 0.0
      %8530 = vmatprep.subr.mxu0 0.0
      %8531 = vmatpush1.msra.mxu0 0.0
      %8532 = vmatprep.subr.mxu0 0.0
      %8533 = vmatpush1.msra.mxu0 0.0
      %8534 = vmatprep.subr.mxu0 0.0
      %8535 = vmatpush1.msra.mxu0 0.0
      %8536 = vmatprep.subr.mxu0 0.0
      %8537 = vmatpush1.msra.mxu0 0.0
      %8538 = vmatprep.subr.mxu0 0.0
      %8539 = vmatpush1.msra.mxu0 0.0
      %8540 = vmatprep.subr.mxu0 0.0
      %8541 = vmatpush1.msra.mxu0 0.0
      %8542 = vmatprep.subr.mxu0 0.0
      %8543 = vmatpush1.msra.mxu0 0.0
      %8544 = vmatprep.subr.mxu0 0.0
      %8545 = vmatpush1.msra.mxu0 0.0
      %8546 = vmatprep.subr.mxu0 0.0
      %8547 = vmatpush1.msra.mxu0 0.0
      %8548 = vmatprep.subr.mxu0 0.0
      %8549 = vmatpush1.msra.mxu0 0.0
      %8550 = vmatprep.subr.mxu0 0.0
      %8551 = vmatpush1.msra.mxu0 0.0
      %8552 = vmatprep.subr.mxu0 0.0
      %8553 = vmatpush1.msra.mxu0 0.0
      %8554 = vmatprep.subr.mxu0 0.0
      %8555 = vmatpush1.msra.mxu0 0.0
      %8556 = vmatprep.subr.mxu0 0.0
      %8557 = vmatpush1.msra.mxu0 0.0
      %8558 = vmatprep.subr.mxu0 0.0
      %8559 = vmatpush1.msra.mxu0 0.0
      %8560 = vmatprep.subr.mxu0 0.0
      %8561 = vmatpush1.msra.mxu0 0.0
      %8562 = vmatprep.subr.mxu0 0.0
      %8563 = vmatpush1.msra.mxu0 0.0
      %8564 = vmatprep.subr.mxu0 0.0
      %8565 = vmatpush1.msra.mxu0 0.0
      %8566 = vmatprep.subr.mxu0 0.0
      %8567 = vmatpush1.msra.mxu0 0.0
      %8568 = vmatprep.subr.mxu0 0.0
      %8569 = vmatpush1.msra.mxu0 0.0
      %8570 = vmatprep.subr.mxu0 0.0
      %8571 = vmatpush1.msra.mxu0 0.0
      %8572 = vmatprep.subr.mxu0 0.0
      %8573 = vmatpush1.msra.mxu0 0.0
      %8574 = vmatprep.subr.mxu0 0.0
      %8575 = vmatpush1.msra.mxu0 0.0
      %8576 = vmatprep.subr.mxu0 0.0
      %8577 = vmatpush1.msra.mxu0 0.0
      %8578 = vmatprep.subr.mxu0 0.0
      %8579 = vmatpush1.msra.mxu0 0.0
      %8580 = vmatprep.subr.mxu0 0.0
      %8581 = vmatpush1.msra.mxu0 0.0
      %8582 = vmatprep.mubr.f32.mxu0 0.0
      %8583 = vmatmul.mubr.f32.gmra.mrb[0].mxu0 %v8468
      %v8584 = vpop.f32.mrb[0].mxu0
      %v8585 = vadd.f32 0.0, %v8584
      %v8586 = vpop.f32.mrb[0].mxu0
      %8587 = vmatprep.mubr.f32.mxu0 0.0
      %8588 = vmatmul.mubr.f32.gmra.mrb[0].mxu0 %v8471
      %v8589 = vpop.f32.mrb[0].mxu0
      %v8590 = vadd.f32 0.0, %v8589
      %v8591 = vpop.f32.mrb[0].mxu0
      %8592 = vmatprep.mubr.f32.mxu0 0.0
      %8593 = vmatmul.mubr.f32.gmra.mrb[0].mxu0 %v8474
      %v8594 = vpop.f32.mrb[0].mxu0
      %v8595 = vadd.f32 0.0, %v8594
      %v8596 = vpop.f32.mrb[0].mxu0
      %8597 = vmatprep.mubr.f32.mxu0 0.0
      %8598 = vmatmul.mubr.f32.gmra.mrb[0].mxu0 %v8477
      %v8599 = vpop.f32.mrb[0].mxu0
      %v8600 = vadd.f32 0.0, %v8599
      %v8601 = vpop.f32.mrb[0].mxu0
      %8602 = vmatprep.mubr.f32.mxu0 0.0
      %8603 = vmatmul.mubr.f32.gmra.mrb[0].mxu0 %v8480
      %v8604 = vpop.f32.mrb[0].mxu0
      %v8605 = vadd.f32 0.0, %v8604
      %v8606 = vpop.f32.mrb[0].mxu0
      %8607 = vmatprep.mubr.f32.mxu0 0.0
      %8608 = vmatmul.mubr.f32.gmra.mrb[0].mxu0 %v8483
      %v8609 = vpop.f32.mrb[0].mxu0
      %v8610 = vadd.f32 0.0, %v8609
      %v8611 = vpop.f32.mrb[0].mxu0
      %8612 = vmatprep.mubr.f32.mxu0 0.0
      %8613 = vmatmul.mubr.f32.gmra.mrb[0].mxu0 %v8486
      %v8614 = vpop.f32.mrb[0].mxu0
      %v8615 = vadd.f32 0.0, %v8614
      %v8616 = vpop.f32.mrb[0].mxu0
      %8617 = vmatprep.mubr.f32.mxu0 0.0
      %8618 = vmatmul.mubr.f32.gmra.mrb[0].mxu0 %v8489
      %v8619 = vpop.f32.mrb[0].mxu0
      %v8620 = vadd.f32 0.0, %v8619
      %v8621 = vpop.f32.mrb[0].mxu0
      %8622 = vmatprep.mubr.f32.mxu0 0.0
      %8623 = vmatmul.mubr.f32.gmra.mrb[0].mxu0 %v8492
      %v8624 = vpop.f32.mrb[0].mxu0
      %v8625 = vadd.f32 0.0, %v8624
      %v8626 = vpop.f32.mrb[0].mxu0
      %8627 = vmatprep.mubr.f32.mxu0 0.0
      %8628 = vmatmul.mubr.f32.gmra.mrb[0].mxu0 %v8495
      %v8629 = vpop.f32.mrb[0].mxu0
      %v8630 = vadd.f32 0.0, %v8629
      %v8631 = vpop.f32.mrb[0].mxu0
      %8632 = vmatprep.mubr.f32.mxu0 0.0
      %8633 = vmatmul.mubr.f32.gmra.mrb[0].mxu0 %v8498
      %v8634 = vpop.f32.mrb[0].mxu0
      %v8635 = vadd.f32 0.0, %v8634
      %v8636 = vpop.f32.mrb[0].mxu0
      %8637 = vmatprep.mubr.f32.mxu0 0.0
      %8638 = vmatmul.mubr.f32.gmra.mrb[0].mxu0 %v8501
      %v8639 = vpop.f32.mrb[0].mxu0
      %v8640 = vadd.f32 0.0, %v8639
      %v8641 = vpop.f32.mrb[0].mxu0
      %8642 = vmatprep.mubr.f32.mxu0 0.0
      %8643 = vmatmul.mubr.f32.gmra.mrb[0].mxu0 %v8504
      %v8644 = vpop.f32.mrb[0].mxu0
      %v8645 = vadd.f32 0.0, %v8644
      %v8646 = vpop.f32.mrb[0].mxu0
      %8647 = vmatprep.mubr.f32.mxu0 0.0
      %8648 = vmatmul.mubr.f32.gmra.mrb[0].mxu0 %v8507
      %v8649 = vpop.f32.mrb[0].mxu0
      %v8650 = vadd.f32 0.0, %v8649
      %v8651 = vpop.f32.mrb[0].mxu0
      %8652 = vmatprep.mubr.f32.mxu0 0.0
      %8653 = vmatmul.mubr.f32.gmra.mrb[0].mxu0 %v8510
      %v8654 = vpop.f32.mrb[0].mxu0
      %v8655 = vadd.f32 0.0, %v8654
      %v8656 = vpop.f32.mrb[0].mxu0
      %8657 = vmatprep.mubr.f32.mxu0 0.0
      %8658 = vmatmul.mubr.f32.gmra.mrb[0].mxu0 %v8513
      %v8659 = vpop.f32.mrb[0].mxu0
      %v8660 = vadd.f32 0.0, %v8659
      %v8661 = vpop.f32.mrb[0].mxu0
      %8662 = vmatprep.mubr.f32.mxu0 0.0
      %8663 = vmatmul.mubr.f32.gmra.mrb[0].mxu0 %v8516
      %v8664 = vpop.f32.mrb[0].mxu0
      %v8665 = vadd.f32 0.0, %v8664
      %v8666 = vpop.f32.mrb[0].mxu0
      %8667 = vdwg.mxu0
      %v8668 = vmul.f32 %v8180, %v8585
      %v8669 = vmul.f32 %v8181, %v8590
      %v8670 = vmul.f32 %v8182, %v8595
      %v8671 = vmul.f32 %v8183, %v8600
      %v8672 = vmul.f32 %v8184, %v8605
      %v8673 = vmul.f32 %v8185, %v8610
      %v8674 = vmul.f32 %v8186, %v8615
      %v8675 = vmul.f32 %v8187, %v8620
      %v8676 = vmul.f32 %v8188, %v8625
      %v8677 = vmul.f32 %v8189, %v8630
      %v8678 = vmul.f32 %v8190, %v8635
      %v8679 = vmul.f32 %v8191, %v8640
      %v8680 = vmul.f32 %v8192, %v8645
      %v8681 = vmul.f32 %v8193, %v8650
      %v8682 = vmul.f32 %v8194, %v8655
      %v8683 = vmul.f32 %v8195, %v8660
      %v8684 = vmul.f32 %v8196, %v8665
      %v8685 = vpack.c.bf16 %v8669, %v8668
      %v8686 = vpack.c.bf16 %v8671, %v8670
      %v8687 = vpack.c.bf16 %v8673, %v8672
      %v8688 = vpack.c.bf16 %v8675, %v8674
      %v8689 = vpack.c.bf16 %v8677, %v8676
      %v8690 = vpack.c.bf16 %v8679, %v8678
      %v8691 = vpack.c.bf16 %v8681, %v8680
      %v8692 = vpack.c.bf16 %v8683, %v8682
      %v8693 = vpack.c.bf16 %v8684, %v8684
      %v8694 = vld [vmem:[%s7] sm:$0xf]
      %v8695 = vld [vmem:[%s7 + $0x4] sm:$0xf]
      %v8696 = vld [vmem:[%s7 + $0x8] sm:$0xf]
      %v8697 = vld [vmem:[%s7 + $0xc] sm:$0xf]
      %v8698 = vld [vmem:[%s7 + $0x10] sm:$0xf]
      %v8699 = vld [vmem:[%s7 + $0x14] sm:$0xf]
      %v8700 = vld [vmem:[%s7 + $0x18] sm:$0xf]
      %v8701 = vld [vmem:[%s7 + $0x1c] sm:$0xf]
      %v8702 = vld [vmem:[%s7 + $0x20] sm:$0xf]
      %v8703 = vld [vmem:[%s7 + $0x24] sm:$0xf]
      %v8704 = vld [vmem:[%s7 + $0x28] sm:$0xf]
      %v8705 = vld [vmem:[%s7 + $0x2c] sm:$0xf]
      %v8706 = vld [vmem:[%s7 + $0x30] sm:$0xf]
      %v8707 = vld [vmem:[%s7 + $0x34] sm:$0xf]
      %v8708 = vld [vmem:[%s7 + $0x38] sm:$0xf]
      %v8709 = vld [vmem:[%s7 + $0x3c] sm:$0xf]
      %v8710 = vlaneseq
      %v8711 = vshrl.u32 %v8710, 7
      %v8712 = vsub.s32 0, %v8711
      %v8713 = vrot.slane %v374, %v8712
      %v8730 = vunpack.c.l.b16 %v8694
      %v8731 = vunpack.c.l.b16 %v8695
      %v8732 = vunpack.c.l.b16 %v8696
      %v8733 = vunpack.c.l.b16 %v8697
      %v8734 = vunpack.c.l.b16 %v8698
      %v8735 = vunpack.c.l.b16 %v8699
      %v8736 = vunpack.c.l.b16 %v8700
      %v8737 = vunpack.c.l.b16 %v8701
      %v8738 = vunpack.c.l.b16 %v8702
      %v8739 = vunpack.c.l.b16 %v8703
      %v8740 = vunpack.c.l.b16 %v8704
      %v8741 = vunpack.c.l.b16 %v8705
      %v8742 = vunpack.c.l.b16 %v8706
      %v8743 = vunpack.c.l.b16 %v8707
      %v8744 = vunpack.c.l.b16 %v8708
      %v8745 = vunpack.c.l.b16 %v8709
      %v8746 = vpack.c.b16 %v8731, %v8730
      %v8747 = vpack.c.b16 %v8733, %v8732
      %v8748 = vpack.c.b16 %v8735, %v8734
      %v8749 = vpack.c.b16 %v8737, %v8736
      %v8750 = vpack.c.b16 %v8739, %v8738
      %v8751 = vpack.c.b16 %v8741, %v8740
      %v8752 = vpack.c.b16 %v8743, %v8742
      %v8753 = vpack.c.b16 %v8745, %v8744
      %8762 = vmatprep.subr.bf16.mxu0 0
      %8763 = vmatpush1.bf16.msra.mxu0 %v8746
      %8764 = vmatprep.subr.bf16.mxu0 0
      %8765 = vmatpush1.bf16.msra.mxu0 %v8747
      %8766 = vmatprep.subr.bf16.mxu0 0
      %8767 = vmatpush1.bf16.msra.mxu0 %v8748
      %8768 = vmatprep.subr.bf16.mxu0 0
      %8769 = vmatpush1.bf16.msra.mxu0 %v8749
      %8770 = vmatprep.subr.bf16.mxu0 0
      %8771 = vmatpush1.bf16.msra.mxu0 %v8750
      %8772 = vmatprep.subr.bf16.mxu0 0
      %8773 = vmatpush1.bf16.msra.mxu0 %v8751
      %8774 = vmatprep.subr.bf16.mxu0 0
      %8775 = vmatpush1.bf16.msra.mxu0 %v8752
      %8776 = vmatprep.subr.bf16.mxu0 0
      %8777 = vmatpush1.bf16.msra.mxu0 %v8753
      %8778 = vmatprep.subr.bf16.mxu0 0
      %8779 = vmatpush1.bf16.msra.mxu0 0
      %8780 = vmatprep.subr.bf16.mxu0 0
      %8781 = vmatpush1.bf16.msra.mxu0 0
      %8782 = vmatprep.subr.bf16.mxu0 0
      %8783 = vmatpush1.bf16.msra.mxu0 0
      %8784 = vmatprep.subr.bf16.mxu0 0
      %8785 = vmatpush1.bf16.msra.mxu0 0
      %8786 = vmatprep.subr.bf16.mxu0 0
      %8787 = vmatpush1.bf16.msra.mxu0 0
      %8788 = vmatprep.subr.bf16.mxu0 0
      %8789 = vmatpush1.bf16.msra.mxu0 0
      %8790 = vmatprep.subr.bf16.mxu0 0
      %8791 = vmatpush1.bf16.msra.mxu0 0
      %8792 = vmatprep.subr.bf16.mxu0 0
      %8793 = vmatpush1.bf16.msra.mxu0 0
      %8794 = vmatprep.mubr.bf16.mxu0 0
      %8795 = vmatmul.mubr.bf16.gmra.mrb[0].mxu0 %v8685
      %v8796 = vpop.f32.mrb[0].mxu0
      %v8797 = vadd.f32 %v8713, %v8796
      %v8798 = vpop.f32.mrb[0].mxu0
      %v8799 = vpop.f32.mrb[0].mxu0
      %v8800 = vadd.f32 %v8713, %v8799
      %v8801 = vpop.f32.mrb[0].mxu0
      %8802 = vmatprep.mubr.bf16.mxu0 0
      %8803 = vmatmul.mubr.bf16.gmra.mrb[0].mxu0 %v8686
      %v8804 = vpop.f32.mrb[0].mxu0
      %v8805 = vadd.f32 %v8713, %v8804
      %v8806 = vpop.f32.mrb[0].mxu0
      %v8807 = vpop.f32.mrb[0].mxu0
      %v8808 = vadd.f32 %v8713, %v8807
      %v8809 = vpop.f32.mrb[0].mxu0
      %8810 = vmatprep.mubr.bf16.mxu0 0
      %8811 = vmatmul.mubr.bf16.gmra.mrb[0].mxu0 %v8687
      %v8812 = vpop.f32.mrb[0].mxu0
      %v8813 = vadd.f32 %v8713, %v8812
      %v8814 = vpop.f32.mrb[0].mxu0
      %v8815 = vpop.f32.mrb[0].mxu0
      %v8816 = vadd.f32 %v8713, %v8815
      %v8817 = vpop.f32.mrb[0].mxu0
      %8818 = vmatprep.mubr.bf16.mxu0 0
      %8819 = vmatmul.mubr.bf16.gmra.mrb[0].mxu0 %v8688
      %v8820 = vpop.f32.mrb[0].mxu0
      %v8821 = vadd.f32 %v8713, %v8820
      %v8822 = vpop.f32.mrb[0].mxu0
      %v8823 = vpop.f32.mrb[0].mxu0
      %v8824 = vadd.f32 %v8713, %v8823
      %v8825 = vpop.f32.mrb[0].mxu0
      %8826 = vmatprep.mubr.bf16.mxu0 0
      %8827 = vmatmul.mubr.bf16.gmra.mrb[0].mxu0 %v8689
      %v8828 = vpop.f32.mrb[0].mxu0
      %v8829 = vadd.f32 %v8713, %v8828
      %v8830 = vpop.f32.mrb[0].mxu0
      %v8831 = vpop.f32.mrb[0].mxu0
      %v8832 = vadd.f32 %v8713, %v8831
      %v8833 = vpop.f32.mrb[0].mxu0
      %8834 = vmatprep.mubr.bf16.mxu0 0
      %8835 = vmatmul.mubr.bf16.gmra.mrb[0].mxu0 %v8690
      %v8836 = vpop.f32.mrb[0].mxu0
      %v8837 = vadd.f32 %v8713, %v8836
      %v8838 = vpop.f32.mrb[0].mxu0
      %v8839 = vpop.f32.mrb[0].mxu0
      %v8840 = vadd.f32 %v8713, %v8839
      %v8841 = vpop.f32.mrb[0].mxu0
      %8842 = vmatprep.mubr.bf16.mxu0 0
      %8843 = vmatmul.mubr.bf16.gmra.mrb[0].mxu0 %v8691
      %v8844 = vpop.f32.mrb[0].mxu0
      %v8845 = vadd.f32 %v8713, %v8844
      %v8846 = vpop.f32.mrb[0].mxu0
      %v8847 = vpop.f32.mrb[0].mxu0
      %v8848 = vadd.f32 %v8713, %v8847
      %v8849 = vpop.f32.mrb[0].mxu0
      %8850 = vmatprep.mubr.bf16.mxu0 0
      %8851 = vmatmul.mubr.bf16.gmra.mrb[0].mxu0 %v8692
      %v8852 = vpop.f32.mrb[0].mxu0
      %v8853 = vadd.f32 %v8713, %v8852
      %v8854 = vpop.f32.mrb[0].mxu0
      %v8855 = vpop.f32.mrb[0].mxu0
      %v8856 = vadd.f32 %v8713, %v8855
      %v8857 = vpop.f32.mrb[0].mxu0
      %8858 = vmatprep.mubr.bf16.mxu0 0
      %8859 = vmatmul.mubr.bf16.gmra.mrb[0].mxu0 %v8693
      %v8860 = vpop.f32.mrb[0].mxu0
      %v8861 = vadd.f32 %v8713, %v8860
      %v8862 = vpop.f32.mrb[0].mxu0
      %v8863 = vpop.f32.mrb[0].mxu0
      %v8864 = vpop.f32.mrb[0].mxu0
      %8865 = vdwg.mxu0
      %v8866 = vadd.f32 %v7650, %v8797
      %v8867 = vadd.f32 %v7654, %v8800
      %v8868 = vadd.f32 %v7660, %v8805
      %v8869 = vadd.f32 %v7664, %v8808
      %v8870 = vadd.f32 %v7670, %v8813
      %v8871 = vadd.f32 %v7674, %v8816
      %v8872 = vadd.f32 %v7680, %v8821
      %v8873 = vadd.f32 %v7684, %v8824
      %v8874 = vadd.f32 %v7690, %v8829
      %v8875 = vadd.f32 %v7694, %v8832
      %v8876 = vadd.f32 %v7700, %v8837
      %v8877 = vadd.f32 %v7704, %v8840
      %v8878 = vadd.f32 %v7710, %v8845
      %v8879 = vadd.f32 %v7714, %v8848
      %v8880 = vadd.f32 %v7720, %v8853
      %v8881 = vadd.f32 %v7724, %v8856
      %v8882 = vadd.f32 %v7730, %v8861
      %v8883 = vsel %vm1090, 1, 0
      %v8884 = vsel %vm1091, 1, 0
      %v8885 = vsel %vm1092, 1, 0
      %v8886 = vsel %vm1093, 1, 0
      %v8887 = vsel %vm1094, 1, 0
      %v8888 = vsel %vm1095, 1, 0
      %v8889 = vsel %vm1096, 1, 0
      %v8890 = vsel %vm1097, 1, 0
      %v8891 = vsel %vm1098, 1, 0
      %v8892 = vsel %vm1099, 1, 0
      %v8893 = vsel %vm1100, 1, 0
      %v8894 = vsel %vm1101, 1, 0
      %v8895 = vsel %vm1102, 1, 0
      %v8896 = vsel %vm1103, 1, 0
      %v8897 = vsel %vm1104, 1, 0
      %v8898 = vsel %vm1105, 1, 0
      %v8899 = vsel %vm1106, 1, 0
      %vm8900 = vcmp.eq.s32.totalorder %v8883, 1
      %vm8901 = vcmp.eq.s32.totalorder %v8884, 1
      %vm8902 = vcmp.eq.s32.totalorder %v8885, 1
      %vm8903 = vcmp.eq.s32.totalorder %v8886, 1
      %vm8904 = vcmp.eq.s32.totalorder %v8887, 1
      %vm8905 = vcmp.eq.s32.totalorder %v8888, 1
      %vm8906 = vcmp.eq.s32.totalorder %v8889, 1
      %vm8907 = vcmp.eq.s32.totalorder %v8890, 1
      %vm8908 = vcmp.eq.s32.totalorder %v8891, 1
      %vm8909 = vcmp.eq.s32.totalorder %v8892, 1
      %vm8910 = vcmp.eq.s32.totalorder %v8893, 1
      %vm8911 = vcmp.eq.s32.totalorder %v8894, 1
      %vm8912 = vcmp.eq.s32.totalorder %v8895, 1
      %vm8913 = vcmp.eq.s32.totalorder %v8896, 1
      %vm8914 = vcmp.eq.s32.totalorder %v8897, 1
      %vm8915 = vcmp.eq.s32.totalorder %v8898, 1
      %vm8916 = vcmp.eq.s32.totalorder %v8899, 1
      %v8917 = vsel %vm8900, %v7536, %v8866
      %v8918 = vsel %vm8901, %v7537, %v8867
      %v8919 = vsel %vm8902, %v7538, %v8868
      %v8920 = vsel %vm8903, %v7539, %v8869
      %v8921 = vsel %vm8904, %v7540, %v8870
      %v8922 = vsel %vm8905, %v7541, %v8871
      %v8923 = vsel %vm8906, %v7542, %v8872
      %v8924 = vsel %vm8907, %v7543, %v8873
      %v8925 = vsel %vm8908, %v7544, %v8874
      %v8926 = vsel %vm8909, %v7545, %v8875
      %v8927 = vsel %vm8910, %v7546, %v8876
      %v8928 = vsel %vm8911, %v7547, %v8877
      %v8929 = vsel %vm8912, %v7548, %v8878
      %v8930 = vsel %vm8913, %v7549, %v8879
      %v8931 = vsel %vm8914, %v7550, %v8880
      %v8932 = vsel %vm8915, %v7551, %v8881
      %v8933 = vsel %vm8916, %v7552, %v8882
      %8934 = vst.msk [vmem:[%s361] sm:$0xff] %vm1175, %v8917
      %8935 = vst.msk [vmem:[%s361 + $0x8] sm:$0xff] %vm1175, %v8918
      %8936 = vst.msk [vmem:[%s361 + $0x10] sm:$0xff] %vm1175, %v8919
      %8937 = vst.msk [vmem:[%s361 + $0x18] sm:$0xff] %vm1175, %v8920
      %8938 = vst.msk [vmem:[%s361 + $0x20] sm:$0xff] %vm1175, %v8921
      %8939 = vst.msk [vmem:[%s361 + $0x28] sm:$0xff] %vm1175, %v8922
      %8940 = vst.msk [vmem:[%s361 + $0x30] sm:$0xff] %vm1175, %v8923
      %8941 = vst.msk [vmem:[%s361 + $0x38] sm:$0xff] %vm1175, %v8924
      %8942 = vst.msk [vmem:[%s361 + $0x40] sm:$0xff] %vm1175, %v8925
      %8943 = vst.msk [vmem:[%s361 + $0x48] sm:$0xff] %vm1175, %v8926
      %8944 = vst.msk [vmem:[%s361 + $0x50] sm:$0xff] %vm1175, %v8927
      %8945 = vst.msk [vmem:[%s361 + $0x58] sm:$0xff] %vm1175, %v8928
      %8946 = vst.msk [vmem:[%s361 + $0x60] sm:$0xff] %vm1175, %v8929
      %8947 = vst.msk [vmem:[%s361 + $0x68] sm:$0xff] %vm1175, %v8930
      %8948 = vst.msk [vmem:[%s361 + $0x70] sm:$0xff] %vm1175, %v8931
      %8949 = vst.msk [vmem:[%s361 + $0x78] sm:$0xff] %vm1175, %v8932
      %8950 = vst.msk [vmem:[%s361 + $0x80] sm:$0xff] %vm1175, %v8933
      %s8951 = smul.u32 17, %s21
      %p8952 = scmp.lt.s32.totalorder %s8951, 33
      %s8953 = scalar_select %p8952, %s8951, 33
      %s8954 = smul.addr %s8953, 8
      %s8955 = scalar_lea.vmem %s10, %s8954
      // Predicated region
      $region61: #{tpu_custom_call.1} parent=59 // pred_check
        %p8956 = pneg %p254
      $region62: #{tpu_custom_call.1} parent=59 // pred_check_branch
        %8958 = sbr.rel (%p8956) target = $region64
      $region63: #{tpu_custom_call.1} parent=59 // pred_region
        %s8959 = smul.u32 17, %s21
      $region64: #{tpu_custom_call.1} parent=59 // pred_fallthru
        _
    $region60: #{tpu_custom_call.1} parent=5 // pred_fallthru
      _
    %p8960 = scmp.le.s32.totalorder 2, %s16
    // Predicated region
    $region65: #{tpu_custom_call.1} parent=5 // pred_check
      %p8961 = pneg %p8960
    $region66: #{tpu_custom_call.1} parent=5 // pred_check_branch
      %8963 = sbr.rel (%p8961) target = $region68
    $region67: #{tpu_custom_call.1} parent=5 // pred_region
      %s8964 = ssub.s32 %s16, 2
      // Predicated region
      $region69: #{tpu_custom_call.1} parent=67 // pred_check
        %p8965 = pneg %p260
      $region70: #{tpu_custom_call.1} parent=67 // pred_check_branch
        %8967 = sbr.rel (%p8965) target = $region72
      $region71: #{tpu_custom_call.1} parent=67 // pred_region
        %s8968 = smul.u32 17, %s22
        %p8969 = scmp.lt.s32.totalorder %s8968, 33
        %s8970 = scalar_select %p8969, %s8968, 33
        %s8971 = smul.addr %s8970, 8
        %s8972 = scalar_lea.vmem %s10, %s8971
      $region72: #{tpu_custom_call.1} parent=67 // pred_fallthru
        _
    $region68: #{tpu_custom_call.1} parent=5 // pred_fallthru
      _
  $region6: #{tpu_custom_call.1} parent=0 // loop_footer
    %s20 = sadd.s32 1, %s16
  $region7: #{tpu_custom_call.1} parent=0 // loop_footer_branch
    %15 = sbr.rel target = $region3
  $region8: #{tpu_custom_call.1} parent=0 // loop_exit
    _

</llo_original>
